<compile_context>
chip_gen: v7x
topology: tpu7x:2x2x1
jax: 0.10.0
libtpu: 0.0.40
codegen_flags: <defaults>
</compile_context>

<pallas_src>
import functools
import math

import jax
import jax.numpy as jnp
from jax.experimental import pallas as pl
from jax.experimental.pallas import tpu as pltpu


# --------------------------------------------------------------------------- hardware-aware knobs
@functools.lru_cache(maxsize=1)
def _vmem_capacity_bytes():
    try:
        cap = int(pltpu.get_tpu_info().vmem_capacity_bytes)
        if cap > 0:
            return cap
    except Exception:
        pass
    return 64 * 1024 * 1024          # conservative default (v7x per-TC VMEM)


def _vmem_limit_bytes():
    # ~75% of physical VMEM: ~48 MiB on v7x (64 MiB), ~96 MiB on v5e/v6e (128 MiB).
    return min((_vmem_capacity_bytes() * 3) // 4, 100 * 1024 * 1024)


def _q_tile_target():
    # Smaller query tiles on v7x (64 MiB VMEM); larger on v5e/v6e (128 MiB).
    return 128 if _vmem_capacity_bytes() <= 64 * 1024 * 1024 else 256


def _pick_tile(n, target):
    """Largest divisor of n that is <= target (full dim if n <= target)."""
    if n <= target:
        return n
    for cand in range(min(target, n), 0, -1):
        if n % cand == 0:
            return cand
    return n


def _const_spec(shape, n_grid_axes, single_buffer):
    """BlockSpec for a grid-invariant (weight / bias / LN-param) block."""
    if n_grid_axes == 1:
        idx = lambda r: (0, 0)
    else:
        idx = lambda b, i: (0, 0)
    if single_buffer:
        return pl.BlockSpec(shape, idx, pipeline_mode=pl.Buffered(1))
    return pl.BlockSpec(shape, idx)


# --------------------------------------------------------------------------- attention kernels
def _project_kv(k_in_bf, v_in_bf, wk_ref, bk_ref, wv_ref, bv_ref, kT_sc, v_sc):
    """Project K/V for the whole sequence (done once per batch element).

    kT_sc : (D, Nk) bf16  -- K stored pre-transposed (Nk on the lane axis) so the per-tile
                             scores matmul contracts lhs-minor with rhs-major (no relayout).
    v_sc  : (Nk, D) bf16
    """
    f32, bf = jnp.float32, jnp.bfloat16
    kp = jnp.dot(k_in_bf, wk_ref[...], preferred_element_type=f32) + bk_ref[...]   # (Nk, D)
    vp = jnp.dot(v_in_bf, wv_ref[...], preferred_element_type=f32) + bv_ref[...]   # (Nk, D)
    kT_sc[...] = kp.T.astype(bf)
    v_sc[...] = vp.astype(bf)


def _attn_qside_ln(q_bf, resid, kT_sc, v_sc, wq_ref, bq_ref, wo_ref, bo_ref,
                   g_ref, beta_ref, o_ref, *, num_heads, c_per_head, eps):
    """Q projection + per-head attention + output projection + residual + LayerNorm for one tile.

    The per-head out-projection contribution is accumulated over full (tq, H) lanes, so there
    are no masked partial stores and no lane-dim concatenate.
    """
    f32, bf = jnp.float32, jnp.bfloat16
    nh, ch = num_heads, c_per_head
    scale = 1.0 / math.sqrt(ch)

    qp = jnp.dot(q_bf, wq_ref[...], preferred_element_type=f32) + bq_ref[...]      # (tq, D)

    attn = jnp.zeros_like(resid)                                                   # (tq, H) f32
    # TODO(synk): swap this unrolled per-head loop for batched (nh, tq, ch) dot_generals once
    #             in-kernel lane-dim head reshapes are validated on this Mosaic version.
    for h in range(nh):
        lo = h * ch
        qh = qp[:, lo:lo + ch].astype(bf)                          # (tq, ch)
        kh = kT_sc[lo:lo + ch, :]                                  # (ch, Nk) natural orientation
        s = jnp.dot(qh, kh, preferred_element_type=f32) * scale    # (tq, Nk)
        m = jnp.max(s, axis=-1, keepdims=True)
        e = jnp.exp(s - m)
        p = e * pl.reciprocal(jnp.sum(e, axis=-1, keepdims=True), approx=True)
        pv = jnp.dot(p.astype(bf), v_sc[:, lo:lo + ch],
                     preferred_element_type=f32)                   # (tq, ch)
        attn = attn + jnp.dot(pv.astype(bf), wo_ref[lo:lo + ch, :],
                              preferred_element_type=f32)          # (tq, H) full-lane accumulate

    # Fused residual add + LayerNorm (f32).
    y = resid + attn + bo_ref[...]
    mean = jnp.mean(y, axis=-1, keepdims=True)
    yc = y - mean
    var = jnp.mean(yc * yc, axis=-1, keepdims=True)
    o_ref[...] = (yc * jax.lax.rsqrt(var + eps) * g_ref[...] + beta_ref[...]).astype(o_ref.dtype)


def _self_attn_kernel(x_ref, pe_ref,
                      wq_ref, bq_ref, wk_ref, bk_ref, wv_ref, bv_ref, wo_ref, bo_ref,
                      g_ref, beta_ref, o_ref, kT_sc, v_sc,
                      *, num_heads, c_per_head, tq, eps):
    """Self-attention block: LayerNorm1(x + OutProj(MHA(x+pe, x+pe, x))) ; x == queries."""
    i = pl.program_id(1)
    bf = jnp.bfloat16

    # K/V projection hoisted: runs once per batch element (q-tile axis is "arbitrary",
    # so i == 0 executes before every other q-tile of the same batch).
    @pl.when(i == 0)
    def _():
        x = x_ref[...]                                             # (Nq, H) f32
        _project_kv((x + pe_ref[...]).astype(bf), x.astype(bf),
                    wk_ref, bk_ref, wv_ref, bv_ref, kT_sc, v_sc)

    r0 = pl.multiple_of(i * tq, tq)
    xq = x_ref[pl.ds(r0, tq), :]                                   # q base == residual tile
    q_bf = (xq + pe_ref[pl.ds(r0, tq), :]).astype(bf)
    _attn_qside_ln(q_bf, xq, kT_sc, v_sc, wq_ref, bq_ref, wo_ref, bo_ref,
                   g_ref, beta_ref, o_ref,
                   num_heads=num_heads, c_per_head=c_per_head, eps=eps)


def _cross_attn_kernel(qb_ref, qpe_ref, res_ref, kv_ref, kpe_ref,
                       wq_ref, bq_ref, wk_ref, bk_ref, wv_ref, bv_ref, wo_ref, bo_ref,
                       g_ref, beta_ref, o_ref, kT_sc, v_sc,
                       *, num_heads, c_per_head, eps):
    """Cross-attention block: LayerNorm2(resid + OutProj(MHA(qb+qpe, kv+kpe, kv)))."""
    i = pl.program_id(1)
    bf = jnp.bfloat16

    @pl.when(i == 0)
    def _():
        kv = kv_ref[...]                                           # (Nk, H) bf16 (cast in wrapper)
        _project_kv((kv + kpe_ref[...]).astype(bf), kv.astype(bf),
                    wk_ref, bk_ref, wv_ref, bv_ref, kT_sc, v_sc)

    q_bf = (qb_ref[...] + qpe_ref[...]).astype(bf)
    _attn_qside_ln(q_bf, res_ref[...], kT_sc, v_sc, wq_ref, bq_ref, wo_ref, bo_ref,
                   g_ref, beta_ref, o_ref,
                   num_heads=num_heads, c_per_head=c_per_head, eps=eps)


# --------------------------------------------------------------------------- attention wrappers
def self_attention_block(queries, query_pe, attn_p, ln_p, num_heads, *,
                         single_buffer_weights=True, eps=1e-5):
    B, Nq, H = queries.shape
    D = attn_p["wq"].shape[1]
    assert D % num_heads == 0, "num_heads must divide the internal dim"
    ch = D // num_heads
    tq = _pick_tile(Nq, _q_tile_target())
    grid = (B, Nq // tq)

    bf = jnp.bfloat16
    full_spec = pl.BlockSpec((None, Nq, H), lambda b, i: (b, 0, 0))   # one stream, sliced in-kernel
    tile_spec = pl.BlockSpec((None, tq, H), lambda b, i: (b, i, 0))
    cs = lambda shape: _const_spec(shape, 2, single_buffer_weights)

    kernel = functools.partial(_self_attn_kernel, num_heads=num_heads,
                               c_per_head=ch, tq=tq, eps=eps)
    return pl.pallas_call(
        kernel,
        out_shape=jax.ShapeDtypeStruct((B, Nq, H), queries.dtype),
        grid=grid,
        in_specs=[full_spec, full_spec,
                  cs((H, D)), cs((1, D)), cs((H, D)), cs((1, D)),
                  cs((H, D)), cs((1, D)), cs((D, H)), cs((1, H)),
                  cs((1, H)), cs((1, H))],
        out_specs=tile_spec,
        scratch_shapes=[pltpu.VMEM((D, Nq), bf),      # K^T per-batch cache
                        pltpu.VMEM((Nq, D), bf)],     # V   per-batch cache
        compiler_params=pltpu.CompilerParams(
            dimension_semantics=("parallel", "arbitrary"),
            vmem_limit_bytes=_vmem_limit_bytes()),
    )(queries, query_pe,
      attn_p["wq"].astype(bf), attn_p["bq"], attn_p["wk"].astype(bf), attn_p["bk"],
      attn_p["wv"].astype(bf), attn_p["bv"], attn_p["wo"].astype(bf), attn_p["bo"],
      ln_p["gamma"], ln_p["beta"])


def cross_attention_block(q_base, query_pe, resid, keys_bf, key_pe_bf, attn_p, ln_p,
                          num_heads, *, single_buffer_weights=True, eps=1e-5):
    B, Nq, H = q_base.shape
    _, Nk, _ = keys_bf.shape
    D = attn_p["wq"].shape[1]
    assert D % num_heads == 0, "num_heads must divide the internal dim"
    ch = D // num_heads
    tq = _pick_tile(Nq, _q_tile_target())
    grid = (B, Nq // tq)

    bf = jnp.bfloat16
    tile_spec = pl.BlockSpec((None, tq, H), lambda b, i: (b, i, 0))
    kv_spec = pl.BlockSpec((None, Nk, H), lambda b, i: (b, 0, 0))
    cs = lambda shape: _const_spec(shape, 2, single_buffer_weights)

    kernel = functools.partial(_cross_attn_kernel, num_heads=num_heads,
                               c_per_head=ch, eps=eps)
    return pl.pallas_call(
        kernel,
        out_shape=jax.ShapeDtypeStruct((B, Nq, H), q_base.dtype),
        grid=grid,
        in_specs=[tile_spec, tile_spec, tile_spec, kv_spec, kv_spec,
                  cs((H, D)), cs((1, D)), cs((H, D)), cs((1, D)),
                  cs((H, D)), cs((1, D)), cs((D, H)), cs((1, H)),
                  cs((1, H)), cs((1, H))],
        out_specs=tile_spec,
        scratch_shapes=[pltpu.VMEM((D, Nk), bf),      # K^T per-batch cache
                        pltpu.VMEM((Nk, D), bf)],     # V   per-batch cache
        compiler_params=pltpu.CompilerParams(
            dimension_semantics=("parallel", "arbitrary"),
            vmem_limit_bytes=_vmem_limit_bytes()),
    )(q_base, query_pe, resid, keys_bf, key_pe_bf,
      attn_p["wq"].astype(bf), attn_p["bq"], attn_p["wk"].astype(bf), attn_p["bk"],
      attn_p["wv"].astype(bf), attn_p["bv"], attn_p["wo"].astype(bf), attn_p["bo"],
      ln_p["gamma"], ln_p["beta"])


# --------------------------------------------------------------------------- FFN block
_FFN_RESIDENT_WEIGHT_BYTES = 16 * 1024 * 1024     # bf16 W1+W2 budget for the resident path


def _ffn_resident_kernel(x_ref, w1_ref, b1_ref, w2_ref, b2_ref, g_ref, beta_ref, o_ref, *, eps):
    bf, f32 = jnp.bfloat16, jnp.float32
    x = x_ref[...]                                                     # (TR, H) f32
    h = jnp.dot(x.astype(bf), w1_ref[...], preferred_element_type=f32) + b1_ref[...]
    h = jnp.maximum(h, 0.0)
    y = jnp.dot(h.astype(bf), w2_ref[...], preferred_element_type=f32) + b2_ref[...] + x
    mean = jnp.mean(y, axis=-1, keepdims=True)
    yc = y - mean
    var = jnp.mean(yc * yc, axis=-1, keepdims=True)
    o_ref[...] = (yc * jax.lax.rsqrt(var + eps) * g_ref[...] + beta_ref[...]).astype(o_ref.dtype)


def _ffn_tiled_kernel(x_ref, w1_ref, b1_ref, w2_ref, b2_ref, g_ref, beta_ref, o_ref, acc_ref, *, eps):
    bf, f32 = jnp.bfloat16, jnp.float32
    f = pl.program_id(1)

    @pl.when(f == 0)
    def _():
        acc_ref[...] = jnp.zeros_like(acc_ref)

    x = x_ref[...]                                                     # (TR, H) f32
    h = jnp.dot(x.astype(bf), w1_ref[...], preferred_element_type=f32) + b1_ref[...]
    h = jnp.maximum(h, 0.0)
    acc_ref[...] += jnp.dot(h.astype(bf), w2_ref[...], preferred_element_type=f32)

    @pl.when(f == pl.num_programs(1) - 1)
    def _():
        y = acc_ref[...] + b2_ref[...] + x
        mean = jnp.mean(y, axis=-1, keepdims=True)
        yc = y - mean
        var = jnp.mean(yc * yc, axis=-1, keepdims=True)
        o_ref[...] = (yc * jax.lax.rsqrt(var + eps) * g_ref[...]
                      + beta_ref[...]).astype(o_ref.dtype)


def ffn_block(x, ffn_p, ln_p, *, single_buffer_weights=True, eps=1e-5):
    B, N, H = x.shape
    F = ffn_p["w1"].shape[1]
    R = B * N
    x_flat = x.reshape(R, H)
    tr = _pick_tile(R, 256)
    bf = jnp.bfloat16
    w1 = ffn_p["w1"].astype(bf)
    w2 = ffn_p["w2"].astype(bf)

    if 2 * H * F * 2 <= _FFN_RESIDENT_WEIGHT_BYTES:
        # Weights fully VMEM-resident: single grid axis, no reduction, no accumulator scratch.
        cs = lambda shape: _const_spec(shape, 1, single_buffer_weights)
        out_flat = pl.pallas_call(
            functools.partial(_ffn_resident_kernel, eps=eps),
            out_shape=jax.ShapeDtypeStruct((R, H), x.dtype),
            grid=(R // tr,),
            in_specs=[pl.BlockSpec((tr, H), lambda r: (r, 0)),
                      cs((H, F)), cs((1, F)), cs((F, H)), cs((1, H)),
                      cs((1, H)), cs((1, H))],
            out_specs=pl.BlockSpec((tr, H), lambda r: (r, 0)),
            compiler_params=pltpu.CompilerParams(
                dimension_semantics=("parallel",),
                vmem_limit_bytes=_vmem_limit_bytes()),
        )(x_flat, w1, ffn_p["b1"], w2, ffn_p["b2"], ln_p["gamma"], ln_p["beta"])
    else:
        # Large-F fallback: stream F tiles with an f32 accumulator.
        tf = _pick_tile(F, 512)
        cs = lambda shape: _const_spec(shape, 2, single_buffer_weights)
        out_flat = pl.pallas_call(
            functools.partial(_ffn_tiled_kernel, eps=eps),
            out_shape=jax.ShapeDtypeStruct((R, H), x.dtype),
            grid=(R // tr, F // tf),
            in_specs=[pl.BlockSpec((tr, H), lambda r, f: (r, 0)),
                      pl.BlockSpec((H, tf), lambda r, f: (0, f)),
                      pl.BlockSpec((1, tf), lambda r, f: (0, f)),
                      pl.BlockSpec((tf, H), lambda r, f: (f, 0)),
                      cs((1, H)), cs((1, H)), cs((1, H))],
            out_specs=pl.BlockSpec((tr, H), lambda r, f: (r, 0)),
            scratch_shapes=[pltpu.VMEM((tr, H), jnp.float32)],
            compiler_params=pltpu.CompilerParams(
                dimension_semantics=("parallel", "arbitrary"),
                vmem_limit_bytes=_vmem_limit_bytes()),
        )(x_flat, w1, ffn_p["b1"], w2, ffn_p["b2"], ln_p["gamma"], ln_p["beta"])
    return out_flat.reshape(B, N, H)


# --------------------------------------------------------------------------- full decoder layer
def cross_attention_decoder_layer(queries, keys, query_pe, key_pe, params, num_heads,
                                  single_buffer_weights=True):
    # Block 1: x1 = LayerNorm1(queries + SelfAttn(q=k=queries+query_pe, v=queries)).
    x1 = self_attention_block(queries, query_pe, params["self_attn"], params["norm1"],
                              num_heads, single_buffer_weights=single_buffer_weights)
    # Large KV streams in bf16 (halves HBM DMA traffic and KV VMEM footprint).
    keys_bf = keys.astype(jnp.bfloat16)
    key_pe_bf = key_pe.astype(jnp.bfloat16)
    # Block 2: x2 = LayerNorm2(queries + CrossAttn(q=x1+query_pe, k=keys+key_pe, v=keys)).
    # NOTE: residual is the ORIGINAL queries, exactly as in the PyTorch module.
    x2 = cross_attention_block(x1, query_pe, queries, keys_bf, key_pe_bf,
                               params["cross_attn"], params["norm2"], num_heads,
                               single_buffer_weights=single_buffer_weights)
    # Block 3: LayerNorm3(x2 + FFN(x2)).
    return ffn_block(x2, params["ffn"], params["norm3"],
                     single_buffer_weights=single_buffer_weights)


# --------------------------------------------------------------------------- parameter init
def _init_attn(key, H):
    ks = jax.random.split(key, 8)
    s = 1.0 / math.sqrt(H)
    u = lambda k, shape: jax.random.uniform(k, shape, jnp.float32, -s, s)
    return dict(
        wq=u(ks[0], (H, H)), bq=u(ks[1], (1, H)),
        wk=u(ks[2], (H, H)), bk=u(ks[3], (1, H)),
        wv=u(ks[4], (H, H)), bv=u(ks[5], (1, H)),
        wo=u(ks[6], (H, H)), bo=u(ks[7], (1, H)),
    )


def init_params(key, H):
    k1, k2, k3 = jax.random.split(key, 3)
    kf = jax.random.split(k3, 4)
    s1 = 1.0 / math.sqrt(H)
    s2 = 1.0 / math.sqrt(4 * H)
    ln = lambda: dict(gamma=jnp.ones((1, H), jnp.float32),
                      beta=jnp.zeros((1, H), jnp.float32))
    return dict(
        self_attn=_init_attn(k1, H),
        cross_attn=_init_attn(k2, H),
        ffn=dict(
            w1=jax.random.uniform(kf[0], (H, 4 * H), jnp.float32, -s1, s1),
            b1=jax.random.uniform(kf[1], (1, 4 * H), jnp.float32, -s1, s1),
            w2=jax.random.uniform(kf[2], (4 * H, H), jnp.float32, -s2, s2),
            b2=jax.random.uniform(kf[3], (1, H), jnp.float32, -s2, s2),
        ),
        norm1=ln(), norm2=ln(), norm3=ln(),
    )


# --------------------------------------------------------------------------- pure-JAX references
def _ref_attention(q, k, v, p, nh, mm_dtype):
    f32 = jnp.float32
    mm = lambda a, b: jnp.dot(a.astype(mm_dtype), b.astype(mm_dtype),
                              preferred_element_type=f32)
    qp = mm(q, p["wq"]) + p["bq"]
    kp = mm(k, p["wk"]) + p["bk"]
    vp = mm(v, p["wv"]) + p["bv"]
    B, Nq, D = qp.shape
    Nk = kp.shape[1]
    ch = D // nh
    qh = qp.reshape(B, Nq, nh, ch).transpose(0, 2, 1, 3)
    kh = kp.reshape(B, Nk, nh, ch).transpose(0, 2, 1, 3)
    vh = vp.reshape(B, Nk, nh, ch).transpose(0, 2, 1, 3)
    s = jnp.einsum("bhqc,bhkc->bhqk", qh.astype(mm_dtype), kh.astype(mm_dtype),
                   preferred_element_type=f32) / math.sqrt(ch)
    a = jax.nn.softmax(s, axis=-1)
    o = jnp.einsum("bhqk,bhkc->bhqc", a.astype(mm_dtype), vh.astype(mm_dtype),
                   preferred_element_type=f32)
    o = o.transpose(0, 2, 1, 3).reshape(B, Nq, D)
    return mm(o, p["wo"]) + p["bo"]


def _ref_ln(x, p, eps=1e-5):
    m = x.mean(-1, keepdims=True)
    xc = x - m
    v = (xc * xc).mean(-1, keepdims=True)
    return xc * jax.lax.rsqrt(v + eps) * p["gamma"] + p["beta"]


def _ref_layer(queries, keys, query_pe, key_pe, params, nh, mm_dtype=jnp.float32):
    mm = lambda a, b: jnp.dot(a.astype(mm_dtype), b.astype(mm_dtype),
                              preferred_element_type=jnp.float32)
    q = queries + query_pe
    sa = _ref_attention(q, q, queries, params["self_attn"], nh, mm_dtype)
    x1 = _ref_ln(queries + sa, params["norm1"])
    ca = _ref_attention(x1 + query_pe, keys + key_pe, keys,
                        params["cross_attn"], nh, mm_dtype)
    x2 = _ref_ln(queries + ca, params["norm2"])
    h = jnp.maximum(mm(x2, params["ffn"]["w1"]) + params["ffn"]["b1"], 0.0)
    mlp = mm(h, params["ffn"]["w2"]) + params["ffn"]["b2"]
    return _ref_ln(mlp + x2, params["norm3"])


# --------------------------------------------------------------------------- self-test
if __name__ == "__main__":
    B, Nq, Nk, H, NUM_HEADS = 2, 8, 16, 32, 4

    key = jax.random.PRNGKey(0)
    kq, kk, kqp, kkp, kparams = jax.random.split(key, 5)
    queries = jax.random.normal(kq, (B, Nq, H), jnp.float32)
    keys = jax.random.normal(kk, (B, Nk, H), jnp.float32)
    query_pe = jax.random.normal(kqp, (B, Nq, H), jnp.float32)
    key_pe = jax.random.normal(kkp, (B, Nk, H), jnp.float32)
    params = init_params(kparams, H)

    def run(single_buffer):
        fn = jax.jit(functools.partial(cross_attention_decoder_layer,
                                       num_heads=NUM_HEADS,
                                       single_buffer_weights=single_buffer))
        return jax.block_until_ready(fn(queries, keys, query_pe, key_pe, params))

    try:
        out = run(True)      # single-buffered grid-invariant weight blocks
    except Exception:
        out = run(False)     # fall back to default double buffering if unsupported

    assert out.shape == (B, Nq, H)

    # Precision-matched reference (bf16 matmul inputs + bf16-rounded KV streams, f32 accumulate).
    keys_r = keys.astype(jnp.bfloat16).astype(jnp.float32)
    key_pe_r = key_pe.astype(jnp.bfloat16).astype(jnp.float32)
    ref_bf16 = _ref_layer(queries, keys_r, query_pe, key_pe_r, params, NUM_HEADS,
                          mm_dtype=jnp.bfloat16)
    assert jnp.allclose(out, ref_bf16, atol=4e-2, rtol=4e-2), \
        float(jnp.max(jnp.abs(out - ref_bf16)))

    # Full-f32 reference (PyTorch semantics) — loose check covering bf16 matmul error.
    ref_f32 = _ref_layer(queries, keys, query_pe, key_pe, params, NUM_HEADS,
                         mm_dtype=jnp.float32)
    assert jnp.allclose(out, ref_f32, atol=1e-1, rtol=1e-1), \
        float(jnp.max(jnp.abs(out - ref_f32)))

    print("KERNEL_OK")
</pallas_src>

<mosaic_0001>
module attributes {stable_mosaic.version = 11 : i64} {
  func.func @_cross_attn_kernel(%arg0: i32, %arg1: i32, %arg2: memref<1x8x32xf32, #tpu.memory_space<vmem>>, %arg3: memref<1x8x32xf32, #tpu.memory_space<vmem>>, %arg4: memref<1x8x32xf32, #tpu.memory_space<vmem>>, %arg5: memref<1x16x32xbf16, #tpu.memory_space<vmem>>, %arg6: memref<1x16x32xbf16, #tpu.memory_space<vmem>>, %arg7: memref<32x32xbf16, #tpu.memory_space<vmem>>, %arg8: memref<1x32xf32, #tpu.memory_space<vmem>>, %arg9: memref<32x32xbf16, #tpu.memory_space<vmem>>, %arg10: memref<1x32xf32, #tpu.memory_space<vmem>>, %arg11: memref<32x32xbf16, #tpu.memory_space<vmem>>, %arg12: memref<1x32xf32, #tpu.memory_space<vmem>>, %arg13: memref<32x32xbf16, #tpu.memory_space<vmem>>, %arg14: memref<1x32xf32, #tpu.memory_space<vmem>>, %arg15: memref<1x32xf32, #tpu.memory_space<vmem>>, %arg16: memref<1x32xf32, #tpu.memory_space<vmem>>, %arg17: memref<1x8x32xf32, #tpu.memory_space<vmem>>, %arg18: memref<32x16xbf16, #tpu.memory_space<vmem>>, %arg19: memref<16x32xbf16, #tpu.memory_space<vmem>>) attributes {dimension_semantics = [#tpu.dimension_semantics<parallel>, #tpu.dimension_semantics<arbitrary>], iteration_bounds = array<i64: 2, 1>, scalar_prefetch = 0 : i64, scratch_operands = 2 : i64, tpu.core_type = #tpu.core_type<tc>, window_params = [{transform_indices = @transform_0, window_bounds = array<i64: 1, 8, 32>}, {transform_indices = @transform_1, window_bounds = array<i64: 1, 8, 32>}, {transform_indices = @transform_2, window_bounds = array<i64: 1, 8, 32>}, {transform_indices = @transform_3, window_bounds = array<i64: 1, 16, 32>}, {transform_indices = @transform_4, window_bounds = array<i64: 1, 16, 32>}, {pipeline_mode = #tpu.pipeline_mode<synchronous>, transform_indices = @transform_5, window_bounds = array<i64: 32, 32>}, {pipeline_mode = #tpu.pipeline_mode<synchronous>, transform_indices = @transform_6, window_bounds = array<i64: 1, 32>}, {pipeline_mode = #tpu.pipeline_mode<synchronous>, transform_indices = @transform_7, window_bounds = array<i64: 32, 32>}, {pipeline_mode = #tpu.pipeline_mode<synchronous>, transform_indices = @transform_8, window_bounds = array<i64: 1, 32>}, {pipeline_mode = #tpu.pipeline_mode<synchronous>, transform_indices = @transform_9, window_bounds = array<i64: 32, 32>}, {pipeline_mode = #tpu.pipeline_mode<synchronous>, transform_indices = @transform_10, window_bounds = array<i64: 1, 32>}, {pipeline_mode = #tpu.pipeline_mode<synchronous>, transform_indices = @transform_11, window_bounds = array<i64: 32, 32>}, {pipeline_mode = #tpu.pipeline_mode<synchronous>, transform_indices = @transform_12, window_bounds = array<i64: 1, 32>}, {pipeline_mode = #tpu.pipeline_mode<synchronous>, transform_indices = @transform_13, window_bounds = array<i64: 1, 32>}, {pipeline_mode = #tpu.pipeline_mode<synchronous>, transform_indices = @transform_14, window_bounds = array<i64: 1, 32>}, {transform_indices = @transform_15, window_bounds = array<i64: 1, 8, 32>}]} {
    %c0_i32 = arith.constant 0 : i32
    %0 = arith.cmpi eq, %arg1, %c0_i32 : i32
    %1 = arith.extui %0 : i1 to i32
    %c0_i32_0 = arith.constant 0 : i32
    %2 = arith.cmpi ne, %1, %c0_i32_0 : i32
    scf.if %2 {
      %c0_73 = arith.constant 0 : index
      %c0_74 = arith.constant 0 : index
      %c0_75 = arith.constant 0 : index
      %138 = vector.load %arg5[%c0_73, %c0_74, %c0_75] : memref<1x16x32xbf16, #tpu.memory_space<vmem>>, vector<1x16x32xbf16>
      %139 = vector.shape_cast %138 : vector<1x16x32xbf16> to vector<16x32xbf16>
      %c0_76 = arith.constant 0 : index
      %c0_77 = arith.constant 0 : index
      %c0_78 = arith.constant 0 : index
      %140 = vector.load %arg6[%c0_76, %c0_77, %c0_78] : memref<1x16x32xbf16, #tpu.memory_space<vmem>>, vector<1x16x32xbf16>
      %141 = vector.shape_cast %140 : vector<1x16x32xbf16> to vector<16x32xbf16>
      %142 = arith.addf %139, %141 : vector<16x32xbf16>
      %c0_79 = arith.constant 0 : index
      %c0_80 = arith.constant 0 : index
      %143 = vector.load %arg9[%c0_79, %c0_80] : memref<32x32xbf16, #tpu.memory_space<vmem>>, vector<32x32xbf16>
      %cst_81 = arith.constant dense<0.000000e+00> : vector<16x32xf32>
      %144 = tpu.matmul %142, %143, %cst_81 {dimension_numbers = #tpu.dot_dimension_numbers<[1], [0], [0], [1], [0, 0, 1, 1], [], []>} : vector<16x32xbf16>, vector<32x32xbf16>, vector<16x32xf32> -> vector<16x32xf32>
      %c0_82 = arith.constant 0 : index
      %c0_83 = arith.constant 0 : index
      %145 = vector.load %arg10[%c0_82, %c0_83] : memref<1x32xf32, #tpu.memory_space<vmem>>, vector<1x32xf32>
      %146 = vector.broadcast %145 : vector<1x32xf32> to vector<16x32xf32>
      %147 = arith.addf %144, %146 : vector<16x32xf32>
      %c0_84 = arith.constant 0 : index
      %c0_85 = arith.constant 0 : index
      %148 = vector.load %arg11[%c0_84, %c0_85] : memref<32x32xbf16, #tpu.memory_space<vmem>>, vector<32x32xbf16>
      %cst_86 = arith.constant dense<0.000000e+00> : vector<16x32xf32>
      %149 = tpu.matmul %139, %148, %cst_86 {dimension_numbers = #tpu.dot_dimension_numbers<[1], [0], [0], [1], [0, 0, 1, 1], [], []>} : vector<16x32xbf16>, vector<32x32xbf16>, vector<16x32xf32> -> vector<16x32xf32>
      %c0_87 = arith.constant 0 : index
      %c0_88 = arith.constant 0 : index
      %150 = vector.load %arg12[%c0_87, %c0_88] : memref<1x32xf32, #tpu.memory_space<vmem>>, vector<1x32xf32>
      %151 = vector.broadcast %150 : vector<1x32xf32> to vector<16x32xf32>
      %152 = arith.addf %149, %151 : vector<16x32xf32>
      %153 = tpu.transpose %147, [1, 0] : vector<16x32xf32> -> vector<32x16xf32>
      %154 = arith.truncf %153 : vector<32x16xf32> to vector<32x16xbf16>
      %c0_89 = arith.constant 0 : index
      %c0_90 = arith.constant 0 : index
      %155 = vector.load %arg18[%c0_89, %c0_90] : memref<32x16xbf16, #tpu.memory_space<vmem>>, vector<32x16xbf16>
      tpu.vector_store %arg18[%c0_89, %c0_90], %154 {strides = array<i32>} : memref<32x16xbf16, #tpu.memory_space<vmem>>, vector<32x16xbf16>,
      %156 = arith.truncf %152 : vector<16x32xf32> to vector<16x32xbf16>
      %c0_91 = arith.constant 0 : index
      %c0_92 = arith.constant 0 : index
      %157 = vector.load %arg19[%c0_91, %c0_92] : memref<16x32xbf16, #tpu.memory_space<vmem>>, vector<16x32xbf16>
      tpu.vector_store %arg19[%c0_91, %c0_92], %156 {strides = array<i32>} : memref<16x32xbf16, #tpu.memory_space<vmem>>, vector<16x32xbf16>,
    } else {
    }
    %c0 = arith.constant 0 : index
    %c0_1 = arith.constant 0 : index
    %c0_2 = arith.constant 0 : index
    %3 = vector.load %arg2[%c0, %c0_1, %c0_2] : memref<1x8x32xf32, #tpu.memory_space<vmem>>, vector<1x8x32xf32>
    %4 = vector.shape_cast %3 : vector<1x8x32xf32> to vector<8x32xf32>
    %c0_3 = arith.constant 0 : index
    %c0_4 = arith.constant 0 : index
    %c0_5 = arith.constant 0 : index
    %5 = vector.load %arg3[%c0_3, %c0_4, %c0_5] : memref<1x8x32xf32, #tpu.memory_space<vmem>>, vector<1x8x32xf32>
    %6 = vector.shape_cast %5 : vector<1x8x32xf32> to vector<8x32xf32>
    %7 = arith.addf %4, %6 : vector<8x32xf32>
    %8 = arith.truncf %7 : vector<8x32xf32> to vector<8x32xbf16>
    %c0_6 = arith.constant 0 : index
    %c0_7 = arith.constant 0 : index
    %c0_8 = arith.constant 0 : index
    %9 = vector.load %arg4[%c0_6, %c0_7, %c0_8] : memref<1x8x32xf32, #tpu.memory_space<vmem>>, vector<1x8x32xf32>
    %10 = vector.shape_cast %9 : vector<1x8x32xf32> to vector<8x32xf32>
    %c0_9 = arith.constant 0 : index
    %c0_10 = arith.constant 0 : index
    %11 = vector.load %arg7[%c0_9, %c0_10] : memref<32x32xbf16, #tpu.memory_space<vmem>>, vector<32x32xbf16>
    %cst = arith.constant dense<0.000000e+00> : vector<8x32xf32>
    %12 = tpu.matmul %8, %11, %cst {dimension_numbers = #tpu.dot_dimension_numbers<[1], [0], [0], [1], [0, 0, 1, 1], [], []>} : vector<8x32xbf16>, vector<32x32xbf16>, vector<8x32xf32> -> vector<8x32xf32>
    %c0_11 = arith.constant 0 : index
    %c0_12 = arith.constant 0 : index
    %13 = vector.load %arg8[%c0_11, %c0_12] : memref<1x32xf32, #tpu.memory_space<vmem>>, vector<1x32xf32>
    %14 = vector.broadcast %13 : vector<1x32xf32> to vector<8x32xf32>
    %15 = arith.addf %12, %14 : vector<8x32xf32>
    %cst_13 = arith.constant 0.000000e+00 : f32
    %16 = vector.broadcast %cst_13 : f32 to vector<8x32xf32>
    %17 = vector.extract_strided_slice %15 {offsets = [0, 0], sizes = [8, 8], strides = [1, 1]} : vector<8x32xf32> to vector<8x8xf32>
    %18 = arith.truncf %17 : vector<8x8xf32> to vector<8x8xbf16>
    %c0_14 = arith.constant 0 : index
    %c0_15 = arith.constant 0 : index
    %19 = vector.load %arg18[%c0_14, %c0_15] : memref<32x16xbf16, #tpu.memory_space<vmem>>, vector<8x16xbf16>
    %cst_16 = arith.constant dense<0.000000e+00> : vector<8x16xf32>
    %20 = tpu.matmul %18, %19, %cst_16 {dimension_numbers = #tpu.dot_dimension_numbers<[1], [0], [0], [1], [0, 0, 1, 1], [], []>} : vector<8x8xbf16>, vector<8x16xbf16>, vector<8x16xf32> -> vector<8x16xf32>
    %cst_17 = arith.constant 0.353553385 : f32
    %21 = vector.broadcast %cst_17 : f32 to vector<8x16xf32>
    %22 = arith.mulf %20, %21 : vector<8x16xf32>
    %cst_18 = arith.constant dense<0xFF800000> : vector<8xf32>
    %23 = vector.multi_reduction <maximumf>, %22, %cst_18 [1] : vector<8x16xf32> to vector<8xf32>
    %24 = vector.shape_cast %23 : vector<8xf32> to vector<8x1xf32>
    %25 = vector.broadcast %24 : vector<8x1xf32> to vector<8x16xf32>
    %26 = arith.subf %22, %25 : vector<8x16xf32>
    %27 = math.exp %26 : vector<8x16xf32>
    %cst_19 = arith.constant dense<0.000000e+00> : vector<8xf32>
    %28 = vector.multi_reduction <add>, %27, %cst_19 [1] : vector<8x16xf32> to vector<8xf32>
    %29 = vector.shape_cast %28 : vector<8xf32> to vector<8x1xf32>
    %30 = tpu.reciprocal %29 {approx = true} : vector<8x1xf32> -> vector<8x1xf32>
    %31 = vector.broadcast %30 : vector<8x1xf32> to vector<8x16xf32>
    %32 = arith.mulf %27, %31 : vector<8x16xf32>
    %33 = arith.truncf %32 : vector<8x16xf32> to vector<8x16xbf16>
    %c0_20 = arith.constant 0 : index
    %c0_21 = arith.constant 0 : index
    %34 = vector.load %arg19[%c0_20, %c0_21] : memref<16x32xbf16, #tpu.memory_space<vmem>>, vector<16x8xbf16>
    %cst_22 = arith.constant dense<0.000000e+00> : vector<8x8xf32>
    %35 = tpu.matmul %33, %34, %cst_22 {dimension_numbers = #tpu.dot_dimension_numbers<[1], [0], [0], [1], [0, 0, 1, 1], [], []>} : vector<8x16xbf16>, vector<16x8xbf16>, vector<8x8xf32> -> vector<8x8xf32>
    %36 = arith.truncf %35 : vector<8x8xf32> to vector<8x8xbf16>
    %c0_23 = arith.constant 0 : index
    %c0_24 = arith.constant 0 : index
    %37 = vector.load %arg13[%c0_23, %c0_24] : memref<32x32xbf16, #tpu.memory_space<vmem>>, vector<8x32xbf16>
    %cst_25 = arith.constant dense<0.000000e+00> : vector<8x32xf32>
    %38 = tpu.matmul %36, %37, %cst_25 {dimension_numbers = #tpu.dot_dimension_numbers<[1], [0], [0], [1], [0, 0, 1, 1], [], []>} : vector<8x8xbf16>, vector<8x32xbf16>, vector<8x32xf32> -> vector<8x32xf32>
    %39 = arith.addf %16, %38 : vector<8x32xf32>
    %40 = vector.extract_strided_slice %15 {offsets = [0, 8], sizes = [8, 8], strides = [1, 1]} : vector<8x32xf32> to vector<8x8xf32>
    %41 = arith.truncf %40 : vector<8x8xf32> to vector<8x8xbf16>
    %c8 = arith.constant 8 : index
    %c0_26 = arith.constant 0 : index
    %42 = vector.load %arg18[%c8, %c0_26] : memref<32x16xbf16, #tpu.memory_space<vmem>>, vector<8x16xbf16>
    %cst_27 = arith.constant dense<0.000000e+00> : vector<8x16xf32>
    %43 = tpu.matmul %41, %42, %cst_27 {dimension_numbers = #tpu.dot_dimension_numbers<[1], [0], [0], [1], [0, 0, 1, 1], [], []>} : vector<8x8xbf16>, vector<8x16xbf16>, vector<8x16xf32> -> vector<8x16xf32>
    %cst_28 = arith.constant 0.353553385 : f32
    %44 = vector.broadcast %cst_28 : f32 to vector<8x16xf32>
    %45 = arith.mulf %43, %44 : vector<8x16xf32>
    %cst_29 = arith.constant dense<0xFF800000> : vector<8xf32>
    %46 = vector.multi_reduction <maximumf>, %45, %cst_29 [1] : vector<8x16xf32> to vector<8xf32>
    %47 = vector.shape_cast %46 : vector<8xf32> to vector<8x1xf32>
    %48 = vector.broadcast %47 : vector<8x1xf32> to vector<8x16xf32>
    %49 = arith.subf %45, %48 : vector<8x16xf32>
    %50 = math.exp %49 : vector<8x16xf32>
    %cst_30 = arith.constant dense<0.000000e+00> : vector<8xf32>
    %51 = vector.multi_reduction <add>, %50, %cst_30 [1] : vector<8x16xf32> to vector<8xf32>
    %52 = vector.shape_cast %51 : vector<8xf32> to vector<8x1xf32>
    %53 = tpu.reciprocal %52 {approx = true} : vector<8x1xf32> -> vector<8x1xf32>
    %54 = vector.broadcast %53 : vector<8x1xf32> to vector<8x16xf32>
    %55 = arith.mulf %50, %54 : vector<8x16xf32>
    %56 = arith.truncf %55 : vector<8x16xf32> to vector<8x16xbf16>
    %c0_31 = arith.constant 0 : index
    %c8_32 = arith.constant 8 : index
    %57 = vector.load %arg19[%c0_31, %c8_32] : memref<16x32xbf16, #tpu.memory_space<vmem>>, vector<16x8xbf16>
    %cst_33 = arith.constant dense<0.000000e+00> : vector<8x8xf32>
    %58 = tpu.matmul %56, %57, %cst_33 {dimension_numbers = #tpu.dot_dimension_numbers<[1], [0], [0], [1], [0, 0, 1, 1], [], []>} : vector<8x16xbf16>, vector<16x8xbf16>, vector<8x8xf32> -> vector<8x8xf32>
    %59 = arith.truncf %58 : vector<8x8xf32> to vector<8x8xbf16>
    %c8_34 = arith.constant 8 : index
    %c0_35 = arith.constant 0 : index
    %60 = vector.load %arg13[%c8_34, %c0_35] : memref<32x32xbf16, #tpu.memory_space<vmem>>, vector<8x32xbf16>
    %cst_36 = arith.constant dense<0.000000e+00> : vector<8x32xf32>
    %61 = tpu.matmul %59, %60, %cst_36 {dimension_numbers = #tpu.dot_dimension_numbers<[1], [0], [0], [1], [0, 0, 1, 1], [], []>} : vector<8x8xbf16>, vector<8x32xbf16>, vector<8x32xf32> -> vector<8x32xf32>
    %62 = arith.addf %39, %61 : vector<8x32xf32>
    %63 = vector.extract_strided_slice %15 {offsets = [0, 16], sizes = [8, 8], strides = [1, 1]} : vector<8x32xf32> to vector<8x8xf32>
    %64 = arith.truncf %63 : vector<8x8xf32> to vector<8x8xbf16>
    %c16 = arith.constant 16 : index
    %c0_37 = arith.constant 0 : index
    %65 = vector.load %arg18[%c16, %c0_37] : memref<32x16xbf16, #tpu.memory_space<vmem>>, vector<8x16xbf16>
    %cst_38 = arith.constant dense<0.000000e+00> : vector<8x16xf32>
    %66 = tpu.matmul %64, %65, %cst_38 {dimension_numbers = #tpu.dot_dimension_numbers<[1], [0], [0], [1], [0, 0, 1, 1], [], []>} : vector<8x8xbf16>, vector<8x16xbf16>, vector<8x16xf32> -> vector<8x16xf32>
    %cst_39 = arith.constant 0.353553385 : f32
    %67 = vector.broadcast %cst_39 : f32 to vector<8x16xf32>
    %68 = arith.mulf %66, %67 : vector<8x16xf32>
    %cst_40 = arith.constant dense<0xFF800000> : vector<8xf32>
    %69 = vector.multi_reduction <maximumf>, %68, %cst_40 [1] : vector<8x16xf32> to vector<8xf32>
    %70 = vector.shape_cast %69 : vector<8xf32> to vector<8x1xf32>
    %71 = vector.broadcast %70 : vector<8x1xf32> to vector<8x16xf32>
    %72 = arith.subf %68, %71 : vector<8x16xf32>
    %73 = math.exp %72 : vector<8x16xf32>
    %cst_41 = arith.constant dense<0.000000e+00> : vector<8xf32>
    %74 = vector.multi_reduction <add>, %73, %cst_41 [1] : vector<8x16xf32> to vector<8xf32>
    %75 = vector.shape_cast %74 : vector<8xf32> to vector<8x1xf32>
    %76 = tpu.reciprocal %75 {approx = true} : vector<8x1xf32> -> vector<8x1xf32>
    %77 = vector.broadcast %76 : vector<8x1xf32> to vector<8x16xf32>
    %78 = arith.mulf %73, %77 : vector<8x16xf32>
    %79 = arith.truncf %78 : vector<8x16xf32> to vector<8x16xbf16>
    %c0_42 = arith.constant 0 : index
    %c16_43 = arith.constant 16 : index
    %80 = vector.load %arg19[%c0_42, %c16_43] : memref<16x32xbf16, #tpu.memory_space<vmem>>, vector<16x8xbf16>
    %cst_44 = arith.constant dense<0.000000e+00> : vector<8x8xf32>
    %81 = tpu.matmul %79, %80, %cst_44 {dimension_numbers = #tpu.dot_dimension_numbers<[1], [0], [0], [1], [0, 0, 1, 1], [], []>} : vector<8x16xbf16>, vector<16x8xbf16>, vector<8x8xf32> -> vector<8x8xf32>
    %82 = arith.truncf %81 : vector<8x8xf32> to vector<8x8xbf16>
    %c16_45 = arith.constant 16 : index
    %c0_46 = arith.constant 0 : index
    %83 = vector.load %arg13[%c16_45, %c0_46] : memref<32x32xbf16, #tpu.memory_space<vmem>>, vector<8x32xbf16>
    %cst_47 = arith.constant dense<0.000000e+00> : vector<8x32xf32>
    %84 = tpu.matmul %82, %83, %cst_47 {dimension_numbers = #tpu.dot_dimension_numbers<[1], [0], [0], [1], [0, 0, 1, 1], [], []>} : vector<8x8xbf16>, vector<8x32xbf16>, vector<8x32xf32> -> vector<8x32xf32>
    %85 = arith.addf %62, %84 : vector<8x32xf32>
    %86 = vector.extract_strided_slice %15 {offsets = [0, 24], sizes = [8, 8], strides = [1, 1]} : vector<8x32xf32> to vector<8x8xf32>
    %87 = arith.truncf %86 : vector<8x8xf32> to vector<8x8xbf16>
    %c24 = arith.constant 24 : index
    %c0_48 = arith.constant 0 : index
    %88 = vector.load %arg18[%c24, %c0_48] : memref<32x16xbf16, #tpu.memory_space<vmem>>, vector<8x16xbf16>
    %cst_49 = arith.constant dense<0.000000e+00> : vector<8x16xf32>
    %89 = tpu.matmul %87, %88, %cst_49 {dimension_numbers = #tpu.dot_dimension_numbers<[1], [0], [0], [1], [0, 0, 1, 1], [], []>} : vector<8x8xbf16>, vector<8x16xbf16>, vector<8x16xf32> -> vector<8x16xf32>
    %cst_50 = arith.constant 0.353553385 : f32
    %90 = vector.broadcast %cst_50 : f32 to vector<8x16xf32>
    %91 = arith.mulf %89, %90 : vector<8x16xf32>
    %cst_51 = arith.constant dense<0xFF800000> : vector<8xf32>
    %92 = vector.multi_reduction <maximumf>, %91, %cst_51 [1] : vector<8x16xf32> to vector<8xf32>
    %93 = vector.shape_cast %92 : vector<8xf32> to vector<8x1xf32>
    %94 = vector.broadcast %93 : vector<8x1xf32> to vector<8x16xf32>
    %95 = arith.subf %91, %94 : vector<8x16xf32>
    %96 = math.exp %95 : vector<8x16xf32>
    %cst_52 = arith.constant dense<0.000000e+00> : vector<8xf32>
    %97 = vector.multi_reduction <add>, %96, %cst_52 [1] : vector<8x16xf32> to vector<8xf32>
    %98 = vector.shape_cast %97 : vector<8xf32> to vector<8x1xf32>
    %99 = tpu.reciprocal %98 {approx = true} : vector<8x1xf32> -> vector<8x1xf32>
    %100 = vector.broadcast %99 : vector<8x1xf32> to vector<8x16xf32>
    %101 = arith.mulf %96, %100 : vector<8x16xf32>
    %102 = arith.truncf %101 : vector<8x16xf32> to vector<8x16xbf16>
    %c0_53 = arith.constant 0 : index
    %c24_54 = arith.constant 24 : index
    %103 = vector.load %arg19[%c0_53, %c24_54] : memref<16x32xbf16, #tpu.memory_space<vmem>>, vector<16x8xbf16>
    %cst_55 = arith.constant dense<0.000000e+00> : vector<8x8xf32>
    %104 = tpu.matmul %102, %103, %cst_55 {dimension_numbers = #tpu.dot_dimension_numbers<[1], [0], [0], [1], [0, 0, 1, 1], [], []>} : vector<8x16xbf16>, vector<16x8xbf16>, vector<8x8xf32> -> vector<8x8xf32>
    %105 = arith.truncf %104 : vector<8x8xf32> to vector<8x8xbf16>
    %c24_56 = arith.constant 24 : index
    %c0_57 = arith.constant 0 : index
    %106 = vector.load %arg13[%c24_56, %c0_57] : memref<32x32xbf16, #tpu.memory_space<vmem>>, vector<8x32xbf16>
    %cst_58 = arith.constant dense<0.000000e+00> : vector<8x32xf32>
    %107 = tpu.matmul %105, %106, %cst_58 {dimension_numbers = #tpu.dot_dimension_numbers<[1], [0], [0], [1], [0, 0, 1, 1], [], []>} : vector<8x8xbf16>, vector<8x32xbf16>, vector<8x32xf32> -> vector<8x32xf32>
    %108 = arith.addf %85, %107 : vector<8x32xf32>
    %109 = arith.addf %10, %108 : vector<8x32xf32>
    %c0_59 = arith.constant 0 : index
    %c0_60 = arith.constant 0 : index
    %110 = vector.load %arg14[%c0_59, %c0_60] : memref<1x32xf32, #tpu.memory_space<vmem>>, vector<1x32xf32>
    %111 = vector.broadcast %110 : vector<1x32xf32> to vector<8x32xf32>
    %112 = arith.addf %109, %111 : vector<8x32xf32>
    %cst_61 = arith.constant dense<0.000000e+00> : vector<8xf32>
    %113 = vector.multi_reduction <add>, %112, %cst_61 [1] : vector<8x32xf32> to vector<8xf32>
    %114 = vector.shape_cast %113 : vector<8xf32> to vector<8x1xf32>
    %cst_62 = arith.constant 3.200000e+01 : f32
    %115 = vector.broadcast %cst_62 : f32 to vector<8x1xf32>
    %116 = arith.divf %114, %115 : vector<8x1xf32>
    %117 = vector.broadcast %116 : vector<8x1xf32> to vector<8x32xf32>
    %118 = arith.subf %112, %117 : vector<8x32xf32>
    %119 = arith.mulf %118, %118 : vector<8x32xf32>
    %cst_63 = arith.constant dense<0.000000e+00> : vector<8xf32>
    %120 = vector.multi_reduction <add>, %119, %cst_63 [1] : vector<8x32xf32> to vector<8xf32>
    %121 = vector.shape_cast %120 : vector<8xf32> to vector<8x1xf32>
    %cst_64 = arith.constant 3.200000e+01 : f32
    %122 = vector.broadcast %cst_64 : f32 to vector<8x1xf32>
    %123 = arith.divf %121, %122 : vector<8x1xf32>
    %cst_65 = arith.constant 9.99999974E-6 : f32
    %124 = vector.broadcast %cst_65 : f32 to vector<8x1xf32>
    %125 = arith.addf %123, %124 : vector<8x1xf32>
    %126 = math.rsqrt %125 : vector<8x1xf32>
    %127 = vector.broadcast %126 : vector<8x1xf32> to vector<8x32xf32>
    %128 = arith.mulf %118, %127 : vector<8x32xf32>
    %c0_66 = arith.constant 0 : index
    %c0_67 = arith.constant 0 : index
    %129 = vector.load %arg15[%c0_66, %c0_67] : memref<1x32xf32, #tpu.memory_space<vmem>>, vector<1x32xf32>
    %130 = vector.broadcast %129 : vector<1x32xf32> to vector<8x32xf32>
    %131 = arith.mulf %128, %130 : vector<8x32xf32>
    %c0_68 = arith.constant 0 : index
    %c0_69 = arith.constant 0 : index
    %132 = vector.load %arg16[%c0_68, %c0_69] : memref<1x32xf32, #tpu.memory_space<vmem>>, vector<1x32xf32>
    %133 = vector.broadcast %132 : vector<1x32xf32> to vector<8x32xf32>
    %134 = arith.addf %131, %133 : vector<8x32xf32>
    %c0_70 = arith.constant 0 : index
    %c0_71 = arith.constant 0 : index
    %c0_72 = arith.constant 0 : index
    %135 = vector.load %arg17[%c0_70, %c0_71, %c0_72] : memref<1x8x32xf32, #tpu.memory_space<vmem>>, vector<1x8x32xf32>
    %136 = vector.shape_cast %135 : vector<1x8x32xf32> to vector<8x32xf32>
    %137 = vector.shape_cast %134 : vector<8x32xf32> to vector<1x8x32xf32>
    tpu.vector_store %arg17[%c0_70, %c0_71, %c0_72], %137 {strides = array<i32>} : memref<1x8x32xf32, #tpu.memory_space<vmem>>, vector<1x8x32xf32>,
    return
  }
  func.func @transform_0(%arg0: i32, %arg1: i32) -> (i32, i32, i32) {
    %c0_i32 = arith.constant 0 : i32
    %c0_i32_0 = arith.constant 0 : i32
    return %arg0, %arg1, %c0_i32 : i32, i32, i32
  }
  func.func @transform_1(%arg0: i32, %arg1: i32) -> (i32, i32, i32) {
    %c0_i32 = arith.constant 0 : i32
    %c0_i32_0 = arith.constant 0 : i32
    return %arg0, %arg1, %c0_i32 : i32, i32, i32
  }
  func.func @transform_2(%arg0: i32, %arg1: i32) -> (i32, i32, i32) {
    %c0_i32 = arith.constant 0 : i32
    %c0_i32_0 = arith.constant 0 : i32
    return %arg0, %arg1, %c0_i32 : i32, i32, i32
  }
  func.func @transform_3(%arg0: i32, %arg1: i32) -> (i32, i32, i32) {
    %c0_i32 = arith.constant 0 : i32
    %c0_i32_0 = arith.constant 0 : i32
    %c0_i32_1 = arith.constant 0 : i32
    return %arg0, %c0_i32, %c0_i32_0 : i32, i32, i32
  }
  func.func @transform_4(%arg0: i32, %arg1: i32) -> (i32, i32, i32) {
    %c0_i32 = arith.constant 0 : i32
    %c0_i32_0 = arith.constant 0 : i32
    %c0_i32_1 = arith.constant 0 : i32
    return %arg0, %c0_i32, %c0_i32_0 : i32, i32, i32
  }
  func.func @transform_5(%arg0: i32, %arg1: i32) -> (i32, i32) {
    %c0_i32 = arith.constant 0 : i32
    %c0_i32_0 = arith.constant 0 : i32
    %c0_i32_1 = arith.constant 0 : i32
    return %c0_i32, %c0_i32_0 : i32, i32
  }
  func.func @transform_6(%arg0: i32, %arg1: i32) -> (i32, i32) {
    %c0_i32 = arith.constant 0 : i32
    %c0_i32_0 = arith.constant 0 : i32
    %c0_i32_1 = arith.constant 0 : i32
    return %c0_i32, %c0_i32_0 : i32, i32
  }
  func.func @transform_7(%arg0: i32, %arg1: i32) -> (i32, i32) {
    %c0_i32 = arith.constant 0 : i32
    %c0_i32_0 = arith.constant 0 : i32
    %c0_i32_1 = arith.constant 0 : i32
    return %c0_i32, %c0_i32_0 : i32, i32
  }
  func.func @transform_8(%arg0: i32, %arg1: i32) -> (i32, i32) {
    %c0_i32 = arith.constant 0 : i32
    %c0_i32_0 = arith.constant 0 : i32
    %c0_i32_1 = arith.constant 0 : i32
    return %c0_i32, %c0_i32_0 : i32, i32
  }
  func.func @transform_9(%arg0: i32, %arg1: i32) -> (i32, i32) {
    %c0_i32 = arith.constant 0 : i32
    %c0_i32_0 = arith.constant 0 : i32
    %c0_i32_1 = arith.constant 0 : i32
    return %c0_i32, %c0_i32_0 : i32, i32
  }
  func.func @transform_10(%arg0: i32, %arg1: i32) -> (i32, i32) {
    %c0_i32 = arith.constant 0 : i32
    %c0_i32_0 = arith.constant 0 : i32
    %c0_i32_1 = arith.constant 0 : i32
    return %c0_i32, %c0_i32_0 : i32, i32
  }
  func.func @transform_11(%arg0: i32, %arg1: i32) -> (i32, i32) {
    %c0_i32 = arith.constant 0 : i32
    %c0_i32_0 = arith.constant 0 : i32
    %c0_i32_1 = arith.constant 0 : i32
    return %c0_i32, %c0_i32_0 : i32, i32
  }
  func.func @transform_12(%arg0: i32, %arg1: i32) -> (i32, i32) {
    %c0_i32 = arith.constant 0 : i32
    %c0_i32_0 = arith.constant 0 : i32
    %c0_i32_1 = arith.constant 0 : i32
    return %c0_i32, %c0_i32_0 : i32, i32
  }
  func.func @transform_13(%arg0: i32, %arg1: i32) -> (i32, i32) {
    %c0_i32 = arith.constant 0 : i32
    %c0_i32_0 = arith.constant 0 : i32
    %c0_i32_1 = arith.constant 0 : i32
    return %c0_i32, %c0_i32_0 : i32, i32
  }
  func.func @transform_14(%arg0: i32, %arg1: i32) -> (i32, i32) {
    %c0_i32 = arith.constant 0 : i32
    %c0_i32_0 = arith.constant 0 : i32
    %c0_i32_1 = arith.constant 0 : i32
    return %c0_i32, %c0_i32_0 : i32, i32
  }
  func.func @transform_15(%arg0: i32, %arg1: i32) -> (i32, i32, i32) {
    %c0_i32 = arith.constant 0 : i32
    %c0_i32_0 = arith.constant 0 : i32
    return %arg0, %arg1, %c0_i32 : i32, i32, i32
  }
}

module attributes {stable_mosaic.version = 11 : i64} {
  func.func @_self_attn_kernel(%arg0: i32, %arg1: i32, %arg2: memref<1x8x32xf32, #tpu.memory_space<vmem>>, %arg3: memref<1x8x32xf32, #tpu.memory_space<vmem>>, %arg4: memref<32x32xbf16, #tpu.memory_space<vmem>>, %arg5: memref<1x32xf32, #tpu.memory_space<vmem>>, %arg6: memref<32x32xbf16, #tpu.memory_space<vmem>>, %arg7: memref<1x32xf32, #tpu.memory_space<vmem>>, %arg8: memref<32x32xbf16, #tpu.memory_space<vmem>>, %arg9: memref<1x32xf32, #tpu.memory_space<vmem>>, %arg10: memref<32x32xbf16, #tpu.memory_space<vmem>>, %arg11: memref<1x32xf32, #tpu.memory_space<vmem>>, %arg12: memref<1x32xf32, #tpu.memory_space<vmem>>, %arg13: memref<1x32xf32, #tpu.memory_space<vmem>>, %arg14: memref<1x8x32xf32, #tpu.memory_space<vmem>>, %arg15: memref<32x8xbf16, #tpu.memory_space<vmem>>, %arg16: memref<8x32xbf16, #tpu.memory_space<vmem>>) attributes {dimension_semantics = [#tpu.dimension_semantics<parallel>, #tpu.dimension_semantics<arbitrary>], iteration_bounds = array<i64: 2, 1>, scalar_prefetch = 0 : i64, scratch_operands = 2 : i64, tpu.core_type = #tpu.core_type<tc>, window_params = [{transform_indices = @transform_0, window_bounds = array<i64: 1, 8, 32>}, {transform_indices = @transform_1, window_bounds = array<i64: 1, 8, 32>}, {pipeline_mode = #tpu.pipeline_mode<synchronous>, transform_indices = @transform_2, window_bounds = array<i64: 32, 32>}, {pipeline_mode = #tpu.pipeline_mode<synchronous>, transform_indices = @transform_3, window_bounds = array<i64: 1, 32>}, {pipeline_mode = #tpu.pipeline_mode<synchronous>, transform_indices = @transform_4, window_bounds = array<i64: 32, 32>}, {pipeline_mode = #tpu.pipeline_mode<synchronous>, transform_indices = @transform_5, window_bounds = array<i64: 1, 32>}, {pipeline_mode = #tpu.pipeline_mode<synchronous>, transform_indices = @transform_6, window_bounds = array<i64: 32, 32>}, {pipeline_mode = #tpu.pipeline_mode<synchronous>, transform_indices = @transform_7, window_bounds = array<i64: 1, 32>}, {pipeline_mode = #tpu.pipeline_mode<synchronous>, transform_indices = @transform_8, window_bounds = array<i64: 32, 32>}, {pipeline_mode = #tpu.pipeline_mode<synchronous>, transform_indices = @transform_9, window_bounds = array<i64: 1, 32>}, {pipeline_mode = #tpu.pipeline_mode<synchronous>, transform_indices = @transform_10, window_bounds = array<i64: 1, 32>}, {pipeline_mode = #tpu.pipeline_mode<synchronous>, transform_indices = @transform_11, window_bounds = array<i64: 1, 32>}, {transform_indices = @transform_12, window_bounds = array<i64: 1, 8, 32>}]} {
    %c0_i32 = arith.constant 0 : i32
    %0 = arith.cmpi eq, %arg1, %c0_i32 : i32
    %1 = arith.extui %0 : i1 to i32
    %c0_i32_0 = arith.constant 0 : i32
    %2 = arith.cmpi ne, %1, %c0_i32_0 : i32
    scf.if %2 {
      %c0_68 = arith.constant 0 : index
      %c0_69 = arith.constant 0 : index
      %c0_70 = arith.constant 0 : index
      %140 = vector.load %arg2[%c0_68, %c0_69, %c0_70] : memref<1x8x32xf32, #tpu.memory_space<vmem>>, vector<1x8x32xf32>
      %141 = vector.shape_cast %140 : vector<1x8x32xf32> to vector<8x32xf32>
      %c0_71 = arith.constant 0 : index
      %c0_72 = arith.constant 0 : index
      %c0_73 = arith.constant 0 : index
      %142 = vector.load %arg3[%c0_71, %c0_72, %c0_73] : memref<1x8x32xf32, #tpu.memory_space<vmem>>, vector<1x8x32xf32>
      %143 = vector.shape_cast %142 : vector<1x8x32xf32> to vector<8x32xf32>
      %144 = arith.addf %141, %143 : vector<8x32xf32>
      %145 = arith.truncf %144 : vector<8x32xf32> to vector<8x32xbf16>
      %146 = arith.truncf %141 : vector<8x32xf32> to vector<8x32xbf16>
      %c0_74 = arith.constant 0 : index
      %c0_75 = arith.constant 0 : index
      %147 = vector.load %arg6[%c0_74, %c0_75] : memref<32x32xbf16, #tpu.memory_space<vmem>>, vector<32x32xbf16>
      %cst_76 = arith.constant dense<0.000000e+00> : vector<8x32xf32>
      %148 = tpu.matmul %145, %147, %cst_76 {dimension_numbers = #tpu.dot_dimension_numbers<[1], [0], [0], [1], [0, 0, 1, 1], [], []>} : vector<8x32xbf16>, vector<32x32xbf16>, vector<8x32xf32> -> vector<8x32xf32>
      %c0_77 = arith.constant 0 : index
      %c0_78 = arith.constant 0 : index
      %149 = vector.load %arg7[%c0_77, %c0_78] : memref<1x32xf32, #tpu.memory_space<vmem>>, vector<1x32xf32>
      %150 = vector.broadcast %149 : vector<1x32xf32> to vector<8x32xf32>
      %151 = arith.addf %148, %150 : vector<8x32xf32>
      %c0_79 = arith.constant 0 : index
      %c0_80 = arith.constant 0 : index
      %152 = vector.load %arg8[%c0_79, %c0_80] : memref<32x32xbf16, #tpu.memory_space<vmem>>, vector<32x32xbf16>
      %cst_81 = arith.constant dense<0.000000e+00> : vector<8x32xf32>
      %153 = tpu.matmul %146, %152, %cst_81 {dimension_numbers = #tpu.dot_dimension_numbers<[1], [0], [0], [1], [0, 0, 1, 1], [], []>} : vector<8x32xbf16>, vector<32x32xbf16>, vector<8x32xf32> -> vector<8x32xf32>
      %c0_82 = arith.constant 0 : index
      %c0_83 = arith.constant 0 : index
      %154 = vector.load %arg9[%c0_82, %c0_83] : memref<1x32xf32, #tpu.memory_space<vmem>>, vector<1x32xf32>
      %155 = vector.broadcast %154 : vector<1x32xf32> to vector<8x32xf32>
      %156 = arith.addf %153, %155 : vector<8x32xf32>
      %157 = tpu.transpose %151, [1, 0] : vector<8x32xf32> -> vector<32x8xf32>
      %158 = arith.truncf %157 : vector<32x8xf32> to vector<32x8xbf16>
      %c0_84 = arith.constant 0 : index
      %c0_85 = arith.constant 0 : index
      %159 = vector.load %arg15[%c0_84, %c0_85] : memref<32x8xbf16, #tpu.memory_space<vmem>>, vector<32x8xbf16>
      tpu.vector_store %arg15[%c0_84, %c0_85], %158 {strides = array<i32>} : memref<32x8xbf16, #tpu.memory_space<vmem>>, vector<32x8xbf16>,
      %160 = arith.truncf %156 : vector<8x32xf32> to vector<8x32xbf16>
      %c0_86 = arith.constant 0 : index
      %c0_87 = arith.constant 0 : index
      %161 = vector.load %arg16[%c0_86, %c0_87] : memref<8x32xbf16, #tpu.memory_space<vmem>>, vector<8x32xbf16>
      tpu.vector_store %arg16[%c0_86, %c0_87], %160 {strides = array<i32>} : memref<8x32xbf16, #tpu.memory_space<vmem>>, vector<8x32xbf16>,
    } else {
    }
    %c8_i32 = arith.constant 8 : i32
    %3 = arith.muli %arg1, %c8_i32 : i32
    %4 = tpu.assume_multiple %3, 8 : i32
    %c0 = arith.constant 0 : index
    %5 = arith.index_cast %4 : i32 to index
    %c0_1 = arith.constant 0 : index
    %6 = vector.load %arg2[%c0, %5, %c0_1] : memref<1x8x32xf32, #tpu.memory_space<vmem>>, vector<1x8x32xf32>
    %7 = vector.shape_cast %6 : vector<1x8x32xf32> to vector<8x32xf32>
    %c0_2 = arith.constant 0 : index
    %8 = arith.index_cast %4 : i32 to index
    %c0_3 = arith.constant 0 : index
    %9 = vector.load %arg3[%c0_2, %8, %c0_3] : memref<1x8x32xf32, #tpu.memory_space<vmem>>, vector<1x8x32xf32>
    %10 = vector.shape_cast %9 : vector<1x8x32xf32> to vector<8x32xf32>
    %11 = arith.addf %7, %10 : vector<8x32xf32>
    %12 = arith.truncf %11 : vector<8x32xf32> to vector<8x32xbf16>
    %c0_4 = arith.constant 0 : index
    %c0_5 = arith.constant 0 : index
    %13 = vector.load %arg4[%c0_4, %c0_5] : memref<32x32xbf16, #tpu.memory_space<vmem>>, vector<32x32xbf16>
    %cst = arith.constant dense<0.000000e+00> : vector<8x32xf32>
    %14 = tpu.matmul %12, %13, %cst {dimension_numbers = #tpu.dot_dimension_numbers<[1], [0], [0], [1], [0, 0, 1, 1], [], []>} : vector<8x32xbf16>, vector<32x32xbf16>, vector<8x32xf32> -> vector<8x32xf32>
    %c0_6 = arith.constant 0 : index
    %c0_7 = arith.constant 0 : index
    %15 = vector.load %arg5[%c0_6, %c0_7] : memref<1x32xf32, #tpu.memory_space<vmem>>, vector<1x32xf32>
    %16 = vector.broadcast %15 : vector<1x32xf32> to vector<8x32xf32>
    %17 = arith.addf %14, %16 : vector<8x32xf32>
    %cst_8 = arith.constant 0.000000e+00 : f32
    %18 = vector.broadcast %cst_8 : f32 to vector<8x32xf32>
    %19 = vector.extract_strided_slice %17 {offsets = [0, 0], sizes = [8, 8], strides = [1, 1]} : vector<8x32xf32> to vector<8x8xf32>
    %20 = arith.truncf %19 : vector<8x8xf32> to vector<8x8xbf16>
    %c0_9 = arith.constant 0 : index
    %c0_10 = arith.constant 0 : index
    %21 = vector.load %arg15[%c0_9, %c0_10] : memref<32x8xbf16, #tpu.memory_space<vmem>>, vector<8x8xbf16>
    %cst_11 = arith.constant dense<0.000000e+00> : vector<8x8xf32>
    %22 = tpu.matmul %20, %21, %cst_11 {dimension_numbers = #tpu.dot_dimension_numbers<[1], [0], [0], [1], [0, 0, 1, 1], [], []>} : vector<8x8xbf16>, vector<8x8xbf16>, vector<8x8xf32> -> vector<8x8xf32>
    %cst_12 = arith.constant 0.353553385 : f32
    %23 = vector.broadcast %cst_12 : f32 to vector<8x8xf32>
    %24 = arith.mulf %22, %23 : vector<8x8xf32>
    %cst_13 = arith.constant dense<0xFF800000> : vector<8xf32>
    %25 = vector.multi_reduction <maximumf>, %24, %cst_13 [1] : vector<8x8xf32> to vector<8xf32>
    %26 = vector.shape_cast %25 : vector<8xf32> to vector<8x1xf32>
    %27 = vector.broadcast %26 : vector<8x1xf32> to vector<8x8xf32>
    %28 = arith.subf %24, %27 : vector<8x8xf32>
    %29 = math.exp %28 : vector<8x8xf32>
    %cst_14 = arith.constant dense<0.000000e+00> : vector<8xf32>
    %30 = vector.multi_reduction <add>, %29, %cst_14 [1] : vector<8x8xf32> to vector<8xf32>
    %31 = vector.shape_cast %30 : vector<8xf32> to vector<8x1xf32>
    %32 = tpu.reciprocal %31 {approx = true} : vector<8x1xf32> -> vector<8x1xf32>
    %33 = vector.broadcast %32 : vector<8x1xf32> to vector<8x8xf32>
    %34 = arith.mulf %29, %33 : vector<8x8xf32>
    %35 = arith.truncf %34 : vector<8x8xf32> to vector<8x8xbf16>
    %c0_15 = arith.constant 0 : index
    %c0_16 = arith.constant 0 : index
    %36 = vector.load %arg16[%c0_15, %c0_16] : memref<8x32xbf16, #tpu.memory_space<vmem>>, vector<8x8xbf16>
    %cst_17 = arith.constant dense<0.000000e+00> : vector<8x8xf32>
    %37 = tpu.matmul %35, %36, %cst_17 {dimension_numbers = #tpu.dot_dimension_numbers<[1], [0], [0], [1], [0, 0, 1, 1], [], []>} : vector<8x8xbf16>, vector<8x8xbf16>, vector<8x8xf32> -> vector<8x8xf32>
    %38 = arith.truncf %37 : vector<8x8xf32> to vector<8x8xbf16>
    %c0_18 = arith.constant 0 : index
    %c0_19 = arith.constant 0 : index
    %39 = vector.load %arg10[%c0_18, %c0_19] : memref<32x32xbf16, #tpu.memory_space<vmem>>, vector<8x32xbf16>
    %cst_20 = arith.constant dense<0.000000e+00> : vector<8x32xf32>
    %40 = tpu.matmul %38, %39, %cst_20 {dimension_numbers = #tpu.dot_dimension_numbers<[1], [0], [0], [1], [0, 0, 1, 1], [], []>} : vector<8x8xbf16>, vector<8x32xbf16>, vector<8x32xf32> -> vector<8x32xf32>
    %41 = arith.addf %18, %40 : vector<8x32xf32>
    %42 = vector.extract_strided_slice %17 {offsets = [0, 8], sizes = [8, 8], strides = [1, 1]} : vector<8x32xf32> to vector<8x8xf32>
    %43 = arith.truncf %42 : vector<8x8xf32> to vector<8x8xbf16>
    %c8 = arith.constant 8 : index
    %c0_21 = arith.constant 0 : index
    %44 = vector.load %arg15[%c8, %c0_21] : memref<32x8xbf16, #tpu.memory_space<vmem>>, vector<8x8xbf16>
    %cst_22 = arith.constant dense<0.000000e+00> : vector<8x8xf32>
    %45 = tpu.matmul %43, %44, %cst_22 {dimension_numbers = #tpu.dot_dimension_numbers<[1], [0], [0], [1], [0, 0, 1, 1], [], []>} : vector<8x8xbf16>, vector<8x8xbf16>, vector<8x8xf32> -> vector<8x8xf32>
    %cst_23 = arith.constant 0.353553385 : f32
    %46 = vector.broadcast %cst_23 : f32 to vector<8x8xf32>
    %47 = arith.mulf %45, %46 : vector<8x8xf32>
    %cst_24 = arith.constant dense<0xFF800000> : vector<8xf32>
    %48 = vector.multi_reduction <maximumf>, %47, %cst_24 [1] : vector<8x8xf32> to vector<8xf32>
    %49 = vector.shape_cast %48 : vector<8xf32> to vector<8x1xf32>
    %50 = vector.broadcast %49 : vector<8x1xf32> to vector<8x8xf32>
    %51 = arith.subf %47, %50 : vector<8x8xf32>
    %52 = math.exp %51 : vector<8x8xf32>
    %cst_25 = arith.constant dense<0.000000e+00> : vector<8xf32>
    %53 = vector.multi_reduction <add>, %52, %cst_25 [1] : vector<8x8xf32> to vector<8xf32>
    %54 = vector.shape_cast %53 : vector<8xf32> to vector<8x1xf32>
    %55 = tpu.reciprocal %54 {approx = true} : vector<8x1xf32> -> vector<8x1xf32>
    %56 = vector.broadcast %55 : vector<8x1xf32> to vector<8x8xf32>
    %57 = arith.mulf %52, %56 : vector<8x8xf32>
    %58 = arith.truncf %57 : vector<8x8xf32> to vector<8x8xbf16>
    %c0_26 = arith.constant 0 : index
    %c8_27 = arith.constant 8 : index
    %59 = vector.load %arg16[%c0_26, %c8_27] : memref<8x32xbf16, #tpu.memory_space<vmem>>, vector<8x8xbf16>
    %cst_28 = arith.constant dense<0.000000e+00> : vector<8x8xf32>
    %60 = tpu.matmul %58, %59, %cst_28 {dimension_numbers = #tpu.dot_dimension_numbers<[1], [0], [0], [1], [0, 0, 1, 1], [], []>} : vector<8x8xbf16>, vector<8x8xbf16>, vector<8x8xf32> -> vector<8x8xf32>
    %61 = arith.truncf %60 : vector<8x8xf32> to vector<8x8xbf16>
    %c8_29 = arith.constant 8 : index
    %c0_30 = arith.constant 0 : index
    %62 = vector.load %arg10[%c8_29, %c0_30] : memref<32x32xbf16, #tpu.memory_space<vmem>>, vector<8x32xbf16>
    %cst_31 = arith.constant dense<0.000000e+00> : vector<8x32xf32>
    %63 = tpu.matmul %61, %62, %cst_31 {dimension_numbers = #tpu.dot_dimension_numbers<[1], [0], [0], [1], [0, 0, 1, 1], [], []>} : vector<8x8xbf16>, vector<8x32xbf16>, vector<8x32xf32> -> vector<8x32xf32>
    %64 = arith.addf %41, %63 : vector<8x32xf32>
    %65 = vector.extract_strided_slice %17 {offsets = [0, 16], sizes = [8, 8], strides = [1, 1]} : vector<8x32xf32> to vector<8x8xf32>
    %66 = arith.truncf %65 : vector<8x8xf32> to vector<8x8xbf16>
    %c16 = arith.constant 16 : index
    %c0_32 = arith.constant 0 : index
    %67 = vector.load %arg15[%c16, %c0_32] : memref<32x8xbf16, #tpu.memory_space<vmem>>, vector<8x8xbf16>
    %cst_33 = arith.constant dense<0.000000e+00> : vector<8x8xf32>
    %68 = tpu.matmul %66, %67, %cst_33 {dimension_numbers = #tpu.dot_dimension_numbers<[1], [0], [0], [1], [0, 0, 1, 1], [], []>} : vector<8x8xbf16>, vector<8x8xbf16>, vector<8x8xf32> -> vector<8x8xf32>
    %cst_34 = arith.constant 0.353553385 : f32
    %69 = vector.broadcast %cst_34 : f32 to vector<8x8xf32>
    %70 = arith.mulf %68, %69 : vector<8x8xf32>
    %cst_35 = arith.constant dense<0xFF800000> : vector<8xf32>
    %71 = vector.multi_reduction <maximumf>, %70, %cst_35 [1] : vector<8x8xf32> to vector<8xf32>
    %72 = vector.shape_cast %71 : vector<8xf32> to vector<8x1xf32>
    %73 = vector.broadcast %72 : vector<8x1xf32> to vector<8x8xf32>
    %74 = arith.subf %70, %73 : vector<8x8xf32>
    %75 = math.exp %74 : vector<8x8xf32>
    %cst_36 = arith.constant dense<0.000000e+00> : vector<8xf32>
    %76 = vector.multi_reduction <add>, %75, %cst_36 [1] : vector<8x8xf32> to vector<8xf32>
    %77 = vector.shape_cast %76 : vector<8xf32> to vector<8x1xf32>
    %78 = tpu.reciprocal %77 {approx = true} : vector<8x1xf32> -> vector<8x1xf32>
    %79 = vector.broadcast %78 : vector<8x1xf32> to vector<8x8xf32>
    %80 = arith.mulf %75, %79 : vector<8x8xf32>
    %81 = arith.truncf %80 : vector<8x8xf32> to vector<8x8xbf16>
    %c0_37 = arith.constant 0 : index
    %c16_38 = arith.constant 16 : index
    %82 = vector.load %arg16[%c0_37, %c16_38] : memref<8x32xbf16, #tpu.memory_space<vmem>>, vector<8x8xbf16>
    %cst_39 = arith.constant dense<0.000000e+00> : vector<8x8xf32>
    %83 = tpu.matmul %81, %82, %cst_39 {dimension_numbers = #tpu.dot_dimension_numbers<[1], [0], [0], [1], [0, 0, 1, 1], [], []>} : vector<8x8xbf16>, vector<8x8xbf16>, vector<8x8xf32> -> vector<8x8xf32>
    %84 = arith.truncf %83 : vector<8x8xf32> to vector<8x8xbf16>
    %c16_40 = arith.constant 16 : index
    %c0_41 = arith.constant 0 : index
    %85 = vector.load %arg10[%c16_40, %c0_41] : memref<32x32xbf16, #tpu.memory_space<vmem>>, vector<8x32xbf16>
    %cst_42 = arith.constant dense<0.000000e+00> : vector<8x32xf32>
    %86 = tpu.matmul %84, %85, %cst_42 {dimension_numbers = #tpu.dot_dimension_numbers<[1], [0], [0], [1], [0, 0, 1, 1], [], []>} : vector<8x8xbf16>, vector<8x32xbf16>, vector<8x32xf32> -> vector<8x32xf32>
    %87 = arith.addf %64, %86 : vector<8x32xf32>
    %88 = vector.extract_strided_slice %17 {offsets = [0, 24], sizes = [8, 8], strides = [1, 1]} : vector<8x32xf32> to vector<8x8xf32>
    %89 = arith.truncf %88 : vector<8x8xf32> to vector<8x8xbf16>
    %c24 = arith.constant 24 : index
    %c0_43 = arith.constant 0 : index
    %90 = vector.load %arg15[%c24, %c0_43] : memref<32x8xbf16, #tpu.memory_space<vmem>>, vector<8x8xbf16>
    %cst_44 = arith.constant dense<0.000000e+00> : vector<8x8xf32>
    %91 = tpu.matmul %89, %90, %cst_44 {dimension_numbers = #tpu.dot_dimension_numbers<[1], [0], [0], [1], [0, 0, 1, 1], [], []>} : vector<8x8xbf16>, vector<8x8xbf16>, vector<8x8xf32> -> vector<8x8xf32>
    %cst_45 = arith.constant 0.353553385 : f32
    %92 = vector.broadcast %cst_45 : f32 to vector<8x8xf32>
    %93 = arith.mulf %91, %92 : vector<8x8xf32>
    %cst_46 = arith.constant dense<0xFF800000> : vector<8xf32>
    %94 = vector.multi_reduction <maximumf>, %93, %cst_46 [1] : vector<8x8xf32> to vector<8xf32>
    %95 = vector.shape_cast %94 : vector<8xf32> to vector<8x1xf32>
    %96 = vector.broadcast %95 : vector<8x1xf32> to vector<8x8xf32>
    %97 = arith.subf %93, %96 : vector<8x8xf32>
    %98 = math.exp %97 : vector<8x8xf32>
    %cst_47 = arith.constant dense<0.000000e+00> : vector<8xf32>
    %99 = vector.multi_reduction <add>, %98, %cst_47 [1] : vector<8x8xf32> to vector<8xf32>
    %100 = vector.shape_cast %99 : vector<8xf32> to vector<8x1xf32>
    %101 = tpu.reciprocal %100 {approx = true} : vector<8x1xf32> -> vector<8x1xf32>
    %102 = vector.broadcast %101 : vector<8x1xf32> to vector<8x8xf32>
    %103 = arith.mulf %98, %102 : vector<8x8xf32>
    %104 = arith.truncf %103 : vector<8x8xf32> to vector<8x8xbf16>
    %c0_48 = arith.constant 0 : index
    %c24_49 = arith.constant 24 : index
    %105 = vector.load %arg16[%c0_48, %c24_49] : memref<8x32xbf16, #tpu.memory_space<vmem>>, vector<8x8xbf16>
    %cst_50 = arith.constant dense<0.000000e+00> : vector<8x8xf32>
    %106 = tpu.matmul %104, %105, %cst_50 {dimension_numbers = #tpu.dot_dimension_numbers<[1], [0], [0], [1], [0, 0, 1, 1], [], []>} : vector<8x8xbf16>, vector<8x8xbf16>, vector<8x8xf32> -> vector<8x8xf32>
    %107 = arith.truncf %106 : vector<8x8xf32> to vector<8x8xbf16>
    %c24_51 = arith.constant 24 : index
    %c0_52 = arith.constant 0 : index
    %108 = vector.load %arg10[%c24_51, %c0_52] : memref<32x32xbf16, #tpu.memory_space<vmem>>, vector<8x32xbf16>
    %cst_53 = arith.constant dense<0.000000e+00> : vector<8x32xf32>
    %109 = tpu.matmul %107, %108, %cst_53 {dimension_numbers = #tpu.dot_dimension_numbers<[1], [0], [0], [1], [0, 0, 1, 1], [], []>} : vector<8x8xbf16>, vector<8x32xbf16>, vector<8x32xf32> -> vector<8x32xf32>
    %110 = arith.addf %87, %109 : vector<8x32xf32>
    %111 = arith.addf %7, %110 : vector<8x32xf32>
    %c0_54 = arith.constant 0 : index
    %c0_55 = arith.constant 0 : index
    %112 = vector.load %arg11[%c0_54, %c0_55] : memref<1x32xf32, #tpu.memory_space<vmem>>, vector<1x32xf32>
    %113 = vector.broadcast %112 : vector<1x32xf32> to vector<8x32xf32>
    %114 = arith.addf %111, %113 : vector<8x32xf32>
    %cst_56 = arith.constant dense<0.000000e+00> : vector<8xf32>
    %115 = vector.multi_reduction <add>, %114, %cst_56 [1] : vector<8x32xf32> to vector<8xf32>
    %116 = vector.shape_cast %115 : vector<8xf32> to vector<8x1xf32>
    %cst_57 = arith.constant 3.200000e+01 : f32
    %117 = vector.broadcast %cst_57 : f32 to vector<8x1xf32>
    %118 = arith.divf %116, %117 : vector<8x1xf32>
    %119 = vector.broadcast %118 : vector<8x1xf32> to vector<8x32xf32>
    %120 = arith.subf %114, %119 : vector<8x32xf32>
    %121 = arith.mulf %120, %120 : vector<8x32xf32>
    %cst_58 = arith.constant dense<0.000000e+00> : vector<8xf32>
    %122 = vector.multi_reduction <add>, %121, %cst_58 [1] : vector<8x32xf32> to vector<8xf32>
    %123 = vector.shape_cast %122 : vector<8xf32> to vector<8x1xf32>
    %cst_59 = arith.constant 3.200000e+01 : f32
    %124 = vector.broadcast %cst_59 : f32 to vector<8x1xf32>
    %125 = arith.divf %123, %124 : vector<8x1xf32>
    %cst_60 = arith.constant 9.99999974E-6 : f32
    %126 = vector.broadcast %cst_60 : f32 to vector<8x1xf32>
    %127 = arith.addf %125, %126 : vector<8x1xf32>
    %128 = math.rsqrt %127 : vector<8x1xf32>
    %129 = vector.broadcast %128 : vector<8x1xf32> to vector<8x32xf32>
    %130 = arith.mulf %120, %129 : vector<8x32xf32>
    %c0_61 = arith.constant 0 : index
    %c0_62 = arith.constant 0 : index
    %131 = vector.load %arg12[%c0_61, %c0_62] : memref<1x32xf32, #tpu.memory_space<vmem>>, vector<1x32xf32>
    %132 = vector.broadcast %131 : vector<1x32xf32> to vector<8x32xf32>
    %133 = arith.mulf %130, %132 : vector<8x32xf32>
    %c0_63 = arith.constant 0 : index
    %c0_64 = arith.constant 0 : index
    %134 = vector.load %arg13[%c0_63, %c0_64] : memref<1x32xf32, #tpu.memory_space<vmem>>, vector<1x32xf32>
    %135 = vector.broadcast %134 : vector<1x32xf32> to vector<8x32xf32>
    %136 = arith.addf %133, %135 : vector<8x32xf32>
    %c0_65 = arith.constant 0 : index
    %c0_66 = arith.constant 0 : index
    %c0_67 = arith.constant 0 : index
    %137 = vector.load %arg14[%c0_65, %c0_66, %c0_67] : memref<1x8x32xf32, #tpu.memory_space<vmem>>, vector<1x8x32xf32>
    %138 = vector.shape_cast %137 : vector<1x8x32xf32> to vector<8x32xf32>
    %139 = vector.shape_cast %136 : vector<8x32xf32> to vector<1x8x32xf32>
    tpu.vector_store %arg14[%c0_65, %c0_66, %c0_67], %139 {strides = array<i32>} : memref<1x8x32xf32, #tpu.memory_space<vmem>>, vector<1x8x32xf32>,
    return
  }
  func.func @transform_0(%arg0: i32, %arg1: i32) -> (i32, i32, i32) {
    %c0_i32 = arith.constant 0 : i32
    %c0_i32_0 = arith.constant 0 : i32
    %c0_i32_1 = arith.constant 0 : i32
    return %arg0, %c0_i32, %c0_i32_0 : i32, i32, i32
  }
  func.func @transform_1(%arg0: i32, %arg1: i32) -> (i32, i32, i32) {
    %c0_i32 = arith.constant 0 : i32
    %c0_i32_0 = arith.constant 0 : i32
    %c0_i32_1 = arith.constant 0 : i32
    return %arg0, %c0_i32, %c0_i32_0 : i32, i32, i32
  }
  func.func @transform_2(%arg0: i32, %arg1: i32) -> (i32, i32) {
    %c0_i32 = arith.constant 0 : i32
    %c0_i32_0 = arith.constant 0 : i32
    %c0_i32_1 = arith.constant 0 : i32
    return %c0_i32, %c0_i32_0 : i32, i32
  }
  func.func @transform_3(%arg0: i32, %arg1: i32) -> (i32, i32) {
    %c0_i32 = arith.constant 0 : i32
    %c0_i32_0 = arith.constant 0 : i32
    %c0_i32_1 = arith.constant 0 : i32
    return %c0_i32, %c0_i32_0 : i32, i32
  }
  func.func @transform_4(%arg0: i32, %arg1: i32) -> (i32, i32) {
    %c0_i32 = arith.constant 0 : i32
    %c0_i32_0 = arith.constant 0 : i32
    %c0_i32_1 = arith.constant 0 : i32
    return %c0_i32, %c0_i32_0 : i32, i32
  }
  func.func @transform_5(%arg0: i32, %arg1: i32) -> (i32, i32) {
    %c0_i32 = arith.constant 0 : i32
    %c0_i32_0 = arith.constant 0 : i32
    %c0_i32_1 = arith.constant 0 : i32
    return %c0_i32, %c0_i32_0 : i32, i32
  }
  func.func @transform_6(%arg0: i32, %arg1: i32) -> (i32, i32) {
    %c0_i32 = arith.constant 0 : i32
    %c0_i32_0 = arith.constant 0 : i32
    %c0_i32_1 = arith.constant 0 : i32
    return %c0_i32, %c0_i32_0 : i32, i32
  }
  func.func @transform_7(%arg0: i32, %arg1: i32) -> (i32, i32) {
    %c0_i32 = arith.constant 0 : i32
    %c0_i32_0 = arith.constant 0 : i32
    %c0_i32_1 = arith.constant 0 : i32
    return %c0_i32, %c0_i32_0 : i32, i32
  }
  func.func @transform_8(%arg0: i32, %arg1: i32) -> (i32, i32) {
    %c0_i32 = arith.constant 0 : i32
    %c0_i32_0 = arith.constant 0 : i32
    %c0_i32_1 = arith.constant 0 : i32
    return %c0_i32, %c0_i32_0 : i32, i32
  }
  func.func @transform_9(%arg0: i32, %arg1: i32) -> (i32, i32) {
    %c0_i32 = arith.constant 0 : i32
    %c0_i32_0 = arith.constant 0 : i32
    %c0_i32_1 = arith.constant 0 : i32
    return %c0_i32, %c0_i32_0 : i32, i32
  }
  func.func @transform_10(%arg0: i32, %arg1: i32) -> (i32, i32) {
    %c0_i32 = arith.constant 0 : i32
    %c0_i32_0 = arith.constant 0 : i32
    %c0_i32_1 = arith.constant 0 : i32
    return %c0_i32, %c0_i32_0 : i32, i32
  }
  func.func @transform_11(%arg0: i32, %arg1: i32) -> (i32, i32) {
    %c0_i32 = arith.constant 0 : i32
    %c0_i32_0 = arith.constant 0 : i32
    %c0_i32_1 = arith.constant 0 : i32
    return %c0_i32, %c0_i32_0 : i32, i32
  }
  func.func @transform_12(%arg0: i32, %arg1: i32) -> (i32, i32, i32) {
    %c0_i32 = arith.constant 0 : i32
    %c0_i32_0 = arith.constant 0 : i32
    return %arg0, %arg1, %c0_i32 : i32, i32, i32
  }
}

module attributes {stable_mosaic.version = 11 : i64} {
  func.func @_ffn_resident_kernel(%arg0: i32, %arg1: memref<16x32xf32, #tpu.memory_space<vmem>>, %arg2: memref<32x128xbf16, #tpu.memory_space<vmem>>, %arg3: memref<1x128xf32, #tpu.memory_space<vmem>>, %arg4: memref<128x32xbf16, #tpu.memory_space<vmem>>, %arg5: memref<1x32xf32, #tpu.memory_space<vmem>>, %arg6: memref<1x32xf32, #tpu.memory_space<vmem>>, %arg7: memref<1x32xf32, #tpu.memory_space<vmem>>, %arg8: memref<16x32xf32, #tpu.memory_space<vmem>>) attributes {dimension_semantics = [#tpu.dimension_semantics<parallel>], iteration_bounds = array<i64: 1>, scalar_prefetch = 0 : i64, scratch_operands = 0 : i64, tpu.core_type = #tpu.core_type<tc>, window_params = [{transform_indices = @transform_0, window_bounds = array<i64: 16, 32>}, {pipeline_mode = #tpu.pipeline_mode<synchronous>, transform_indices = @transform_1, window_bounds = array<i64: 32, 128>}, {pipeline_mode = #tpu.pipeline_mode<synchronous>, transform_indices = @transform_2, window_bounds = array<i64: 1, 128>}, {pipeline_mode = #tpu.pipeline_mode<synchronous>, transform_indices = @transform_3, window_bounds = array<i64: 128, 32>}, {pipeline_mode = #tpu.pipeline_mode<synchronous>, transform_indices = @transform_4, window_bounds = array<i64: 1, 32>}, {pipeline_mode = #tpu.pipeline_mode<synchronous>, transform_indices = @transform_5, window_bounds = array<i64: 1, 32>}, {pipeline_mode = #tpu.pipeline_mode<synchronous>, transform_indices = @transform_6, window_bounds = array<i64: 1, 32>}, {transform_indices = @transform_7, window_bounds = array<i64: 16, 32>}]} {
    %c0 = arith.constant 0 : index
    %c0_0 = arith.constant 0 : index
    %0 = vector.load %arg1[%c0, %c0_0] : memref<16x32xf32, #tpu.memory_space<vmem>>, vector<16x32xf32>
    %1 = arith.truncf %0 : vector<16x32xf32> to vector<16x32xbf16>
    %c0_1 = arith.constant 0 : index
    %c0_2 = arith.constant 0 : index
    %2 = vector.load %arg2[%c0_1, %c0_2] : memref<32x128xbf16, #tpu.memory_space<vmem>>, vector<32x128xbf16>
    %cst = arith.constant dense<0.000000e+00> : vector<16x128xf32>
    %3 = tpu.matmul %1, %2, %cst {dimension_numbers = #tpu.dot_dimension_numbers<[1], [0], [0], [1], [0, 0, 1, 1], [], []>} : vector<16x32xbf16>, vector<32x128xbf16>, vector<16x128xf32> -> vector<16x128xf32>
    %c0_3 = arith.constant 0 : index
    %c0_4 = arith.constant 0 : index
    %4 = vector.load %arg3[%c0_3, %c0_4] : memref<1x128xf32, #tpu.memory_space<vmem>>, vector<1x128xf32>
    %5 = vector.broadcast %4 : vector<1x128xf32> to vector<16x128xf32>
    %6 = arith.addf %3, %5 : vector<16x128xf32>
    %cst_5 = arith.constant 0.000000e+00 : f32
    %7 = vector.broadcast %cst_5 : f32 to vector<16x128xf32>
    %8 = arith.maximumf %6, %7 : vector<16x128xf32>
    %9 = arith.truncf %8 : vector<16x128xf32> to vector<16x128xbf16>
    %c0_6 = arith.constant 0 : index
    %c0_7 = arith.constant 0 : index
    %10 = vector.load %arg4[%c0_6, %c0_7] : memref<128x32xbf16, #tpu.memory_space<vmem>>, vector<128x32xbf16>
    %cst_8 = arith.constant dense<0.000000e+00> : vector<16x32xf32>
    %11 = tpu.matmul %9, %10, %cst_8 {dimension_numbers = #tpu.dot_dimension_numbers<[1], [0], [0], [1], [0, 0, 1, 1], [], []>} : vector<16x128xbf16>, vector<128x32xbf16>, vector<16x32xf32> -> vector<16x32xf32>
    %c0_9 = arith.constant 0 : index
    %c0_10 = arith.constant 0 : index
    %12 = vector.load %arg5[%c0_9, %c0_10] : memref<1x32xf32, #tpu.memory_space<vmem>>, vector<1x32xf32>
    %13 = vector.broadcast %12 : vector<1x32xf32> to vector<16x32xf32>
    %14 = arith.addf %11, %13 : vector<16x32xf32>
    %15 = arith.addf %14, %0 : vector<16x32xf32>
    %cst_11 = arith.constant dense<0.000000e+00> : vector<16xf32>
    %16 = vector.multi_reduction <add>, %15, %cst_11 [1] : vector<16x32xf32> to vector<16xf32>
    %17 = vector.shape_cast %16 : vector<16xf32> to vector<16x1xf32>
    %cst_12 = arith.constant 3.200000e+01 : f32
    %18 = vector.broadcast %cst_12 : f32 to vector<16x1xf32>
    %19 = arith.divf %17, %18 : vector<16x1xf32>
    %20 = vector.broadcast %19 : vector<16x1xf32> to vector<16x32xf32>
    %21 = arith.subf %15, %20 : vector<16x32xf32>
    %22 = arith.mulf %21, %21 : vector<16x32xf32>
    %cst_13 = arith.constant dense<0.000000e+00> : vector<16xf32>
    %23 = vector.multi_reduction <add>, %22, %cst_13 [1] : vector<16x32xf32> to vector<16xf32>
    %24 = vector.shape_cast %23 : vector<16xf32> to vector<16x1xf32>
    %cst_14 = arith.constant 3.200000e+01 : f32
    %25 = vector.broadcast %cst_14 : f32 to vector<16x1xf32>
    %26 = arith.divf %24, %25 : vector<16x1xf32>
    %cst_15 = arith.constant 9.99999974E-6 : f32
    %27 = vector.broadcast %cst_15 : f32 to vector<16x1xf32>
    %28 = arith.addf %26, %27 : vector<16x1xf32>
    %29 = math.rsqrt %28 : vector<16x1xf32>
    %30 = vector.broadcast %29 : vector<16x1xf32> to vector<16x32xf32>
    %31 = arith.mulf %21, %30 : vector<16x32xf32>
    %c0_16 = arith.constant 0 : index
    %c0_17 = arith.constant 0 : index
    %32 = vector.load %arg6[%c0_16, %c0_17] : memref<1x32xf32, #tpu.memory_space<vmem>>, vector<1x32xf32>
    %33 = vector.broadcast %32 : vector<1x32xf32> to vector<16x32xf32>
    %34 = arith.mulf %31, %33 : vector<16x32xf32>
    %c0_18 = arith.constant 0 : index
    %c0_19 = arith.constant 0 : index
    %35 = vector.load %arg7[%c0_18, %c0_19] : memref<1x32xf32, #tpu.memory_space<vmem>>, vector<1x32xf32>
    %36 = vector.broadcast %35 : vector<1x32xf32> to vector<16x32xf32>
    %37 = arith.addf %34, %36 : vector<16x32xf32>
    %c0_20 = arith.constant 0 : index
    %c0_21 = arith.constant 0 : index
    %38 = vector.load %arg8[%c0_20, %c0_21] : memref<16x32xf32, #tpu.memory_space<vmem>>, vector<16x32xf32>
    tpu.vector_store %arg8[%c0_20, %c0_21], %37 {strides = array<i32>} : memref<16x32xf32, #tpu.memory_space<vmem>>, vector<16x32xf32>,
    return
  }
  func.func @transform_0(%arg0: i32) -> (i32, i32) {
    %c0_i32 = arith.constant 0 : i32
    %c0_i32_0 = arith.constant 0 : i32
    return %arg0, %c0_i32 : i32, i32
  }
  func.func @transform_1(%arg0: i32) -> (i32, i32) {
    %c0_i32 = arith.constant 0 : i32
    %c0_i32_0 = arith.constant 0 : i32
    %c0_i32_1 = arith.constant 0 : i32
    return %c0_i32, %c0_i32_0 : i32, i32
  }
  func.func @transform_2(%arg0: i32) -> (i32, i32) {
    %c0_i32 = arith.constant 0 : i32
    %c0_i32_0 = arith.constant 0 : i32
    %c0_i32_1 = arith.constant 0 : i32
    return %c0_i32, %c0_i32_0 : i32, i32
  }
  func.func @transform_3(%arg0: i32) -> (i32, i32) {
    %c0_i32 = arith.constant 0 : i32
    %c0_i32_0 = arith.constant 0 : i32
    %c0_i32_1 = arith.constant 0 : i32
    return %c0_i32, %c0_i32_0 : i32, i32
  }
  func.func @transform_4(%arg0: i32) -> (i32, i32) {
    %c0_i32 = arith.constant 0 : i32
    %c0_i32_0 = arith.constant 0 : i32
    %c0_i32_1 = arith.constant 0 : i32
    return %c0_i32, %c0_i32_0 : i32, i32
  }
  func.func @transform_5(%arg0: i32) -> (i32, i32) {
    %c0_i32 = arith.constant 0 : i32
    %c0_i32_0 = arith.constant 0 : i32
    %c0_i32_1 = arith.constant 0 : i32
    return %c0_i32, %c0_i32_0 : i32, i32
  }
  func.func @transform_6(%arg0: i32) -> (i32, i32) {
    %c0_i32 = arith.constant 0 : i32
    %c0_i32_0 = arith.constant 0 : i32
    %c0_i32_1 = arith.constant 0 : i32
    return %c0_i32, %c0_i32_0 : i32, i32
  }
  func.func @transform_7(%arg0: i32) -> (i32, i32) {
    %c0_i32 = arith.constant 0 : i32
    %c0_i32_0 = arith.constant 0 : i32
    return %arg0, %c0_i32 : i32, i32
  }
}

module attributes {stable_mosaic.version = 11 : i64} {
  func.func @_self_attn_kernel(%arg0: i32, %arg1: i32, %arg2: memref<1x8x32xf32, #tpu.memory_space<vmem>>, %arg3: memref<1x8x32xf32, #tpu.memory_space<vmem>>, %arg4: memref<32x32xbf16, #tpu.memory_space<vmem>>, %arg5: memref<1x32xf32, #tpu.memory_space<vmem>>, %arg6: memref<32x32xbf16, #tpu.memory_space<vmem>>, %arg7: memref<1x32xf32, #tpu.memory_space<vmem>>, %arg8: memref<32x32xbf16, #tpu.memory_space<vmem>>, %arg9: memref<1x32xf32, #tpu.memory_space<vmem>>, %arg10: memref<32x32xbf16, #tpu.memory_space<vmem>>, %arg11: memref<1x32xf32, #tpu.memory_space<vmem>>, %arg12: memref<1x32xf32, #tpu.memory_space<vmem>>, %arg13: memref<1x32xf32, #tpu.memory_space<vmem>>, %arg14: memref<1x8x32xf32, #tpu.memory_space<vmem>>, %arg15: memref<32x8xbf16, #tpu.memory_space<vmem>>, %arg16: memref<8x32xbf16, #tpu.memory_space<vmem>>) attributes {dimension_semantics = [#tpu.dimension_semantics<parallel>, #tpu.dimension_semantics<arbitrary>], iteration_bounds = array<i64: 2, 1>, scalar_prefetch = 0 : i64, scratch_operands = 2 : i64, tpu.core_type = #tpu.core_type<tc>, window_params = [{transform_indices = @transform_0, window_bounds = array<i64: 1, 8, 32>}, {transform_indices = @transform_1, window_bounds = array<i64: 1, 8, 32>}, {pipeline_mode = #tpu.pipeline_mode<synchronous>, transform_indices = @transform_2, window_bounds = array<i64: 32, 32>}, {pipeline_mode = #tpu.pipeline_mode<synchronous>, transform_indices = @transform_3, window_bounds = array<i64: 1, 32>}, {pipeline_mode = #tpu.pipeline_mode<synchronous>, transform_indices = @transform_4, window_bounds = array<i64: 32, 32>}, {pipeline_mode = #tpu.pipeline_mode<synchronous>, transform_indices = @transform_5, window_bounds = array<i64: 1, 32>}, {pipeline_mode = #tpu.pipeline_mode<synchronous>, transform_indices = @transform_6, window_bounds = array<i64: 32, 32>}, {pipeline_mode = #tpu.pipeline_mode<synchronous>, transform_indices = @transform_7, window_bounds = array<i64: 1, 32>}, {pipeline_mode = #tpu.pipeline_mode<synchronous>, transform_indices = @transform_8, window_bounds = array<i64: 32, 32>}, {pipeline_mode = #tpu.pipeline_mode<synchronous>, transform_indices = @transform_9, window_bounds = array<i64: 1, 32>}, {pipeline_mode = #tpu.pipeline_mode<synchronous>, transform_indices = @transform_10, window_bounds = array<i64: 1, 32>}, {pipeline_mode = #tpu.pipeline_mode<synchronous>, transform_indices = @transform_11, window_bounds = array<i64: 1, 32>}, {transform_indices = @transform_12, window_bounds = array<i64: 1, 8, 32>}]} {
    %c0_i32 = arith.constant 0 : i32
    %0 = arith.cmpi eq, %arg1, %c0_i32 : i32
    %1 = arith.extui %0 : i1 to i32
    %c0_i32_0 = arith.constant 0 : i32
    %2 = arith.cmpi ne, %1, %c0_i32_0 : i32
    scf.if %2 {
      %c0_68 = arith.constant 0 : index
      %c0_69 = arith.constant 0 : index
      %c0_70 = arith.constant 0 : index
      %140 = vector.load %arg2[%c0_68, %c0_69, %c0_70] : memref<1x8x32xf32, #tpu.memory_space<vmem>>, vector<1x8x32xf32>
      %141 = vector.shape_cast %140 : vector<1x8x32xf32> to vector<8x32xf32>
      %c0_71 = arith.constant 0 : index
      %c0_72 = arith.constant 0 : index
      %c0_73 = arith.constant 0 : index
      %142 = vector.load %arg3[%c0_71, %c0_72, %c0_73] : memref<1x8x32xf32, #tpu.memory_space<vmem>>, vector<1x8x32xf32>
      %143 = vector.shape_cast %142 : vector<1x8x32xf32> to vector<8x32xf32>
      %144 = arith.addf %141, %143 : vector<8x32xf32>
      %145 = arith.truncf %144 : vector<8x32xf32> to vector<8x32xbf16>
      %146 = arith.truncf %141 : vector<8x32xf32> to vector<8x32xbf16>
      %c0_74 = arith.constant 0 : index
      %c0_75 = arith.constant 0 : index
      %147 = vector.load %arg6[%c0_74, %c0_75] : memref<32x32xbf16, #tpu.memory_space<vmem>>, vector<32x32xbf16>
      %cst_76 = arith.constant dense<0.000000e+00> : vector<8x32xf32>
      %148 = tpu.matmul %145, %147, %cst_76 {dimension_numbers = #tpu.dot_dimension_numbers<[1], [0], [0], [1], [0, 0, 1, 1], [], []>} : vector<8x32xbf16>, vector<32x32xbf16>, vector<8x32xf32> -> vector<8x32xf32>
      %c0_77 = arith.constant 0 : index
      %c0_78 = arith.constant 0 : index
      %149 = vector.load %arg7[%c0_77, %c0_78] : memref<1x32xf32, #tpu.memory_space<vmem>>, vector<1x32xf32>
      %150 = vector.broadcast %149 : vector<1x32xf32> to vector<8x32xf32>
      %151 = arith.addf %148, %150 : vector<8x32xf32>
      %c0_79 = arith.constant 0 : index
      %c0_80 = arith.constant 0 : index
      %152 = vector.load %arg8[%c0_79, %c0_80] : memref<32x32xbf16, #tpu.memory_space<vmem>>, vector<32x32xbf16>
      %cst_81 = arith.constant dense<0.000000e+00> : vector<8x32xf32>
      %153 = tpu.matmul %146, %152, %cst_81 {dimension_numbers = #tpu.dot_dimension_numbers<[1], [0], [0], [1], [0, 0, 1, 1], [], []>} : vector<8x32xbf16>, vector<32x32xbf16>, vector<8x32xf32> -> vector<8x32xf32>
      %c0_82 = arith.constant 0 : index
      %c0_83 = arith.constant 0 : index
      %154 = vector.load %arg9[%c0_82, %c0_83] : memref<1x32xf32, #tpu.memory_space<vmem>>, vector<1x32xf32>
      %155 = vector.broadcast %154 : vector<1x32xf32> to vector<8x32xf32>
      %156 = arith.addf %153, %155 : vector<8x32xf32>
      %157 = tpu.transpose %151, [1, 0] : vector<8x32xf32> -> vector<32x8xf32>
      %158 = arith.truncf %157 : vector<32x8xf32> to vector<32x8xbf16>
      %c0_84 = arith.constant 0 : index
      %c0_85 = arith.constant 0 : index
      %159 = vector.load %arg15[%c0_84, %c0_85] : memref<32x8xbf16, #tpu.memory_space<vmem>>, vector<32x8xbf16>
      tpu.vector_store %arg15[%c0_84, %c0_85], %158 {strides = array<i32>} : memref<32x8xbf16, #tpu.memory_space<vmem>>, vector<32x8xbf16>,
      %160 = arith.truncf %156 : vector<8x32xf32> to vector<8x32xbf16>
      %c0_86 = arith.constant 0 : index
      %c0_87 = arith.constant 0 : index
      %161 = vector.load %arg16[%c0_86, %c0_87] : memref<8x32xbf16, #tpu.memory_space<vmem>>, vector<8x32xbf16>
      tpu.vector_store %arg16[%c0_86, %c0_87], %160 {strides = array<i32>} : memref<8x32xbf16, #tpu.memory_space<vmem>>, vector<8x32xbf16>,
    } else {
    }
    %c8_i32 = arith.constant 8 : i32
    %3 = arith.muli %arg1, %c8_i32 : i32
    %4 = tpu.assume_multiple %3, 8 : i32
    %c0 = arith.constant 0 : index
    %5 = arith.index_cast %4 : i32 to index
    %c0_1 = arith.constant 0 : index
    %6 = vector.load %arg2[%c0, %5, %c0_1] : memref<1x8x32xf32, #tpu.memory_space<vmem>>, vector<1x8x32xf32>
    %7 = vector.shape_cast %6 : vector<1x8x32xf32> to vector<8x32xf32>
    %c0_2 = arith.constant 0 : index
    %8 = arith.index_cast %4 : i32 to index
    %c0_3 = arith.constant 0 : index
    %9 = vector.load %arg3[%c0_2, %8, %c0_3] : memref<1x8x32xf32, #tpu.memory_space<vmem>>, vector<1x8x32xf32>
    %10 = vector.shape_cast %9 : vector<1x8x32xf32> to vector<8x32xf32>
    %11 = arith.addf %7, %10 : vector<8x32xf32>
    %12 = arith.truncf %11 : vector<8x32xf32> to vector<8x32xbf16>
    %c0_4 = arith.constant 0 : index
    %c0_5 = arith.constant 0 : index
    %13 = vector.load %arg4[%c0_4, %c0_5] : memref<32x32xbf16, #tpu.memory_space<vmem>>, vector<32x32xbf16>
    %cst = arith.constant dense<0.000000e+00> : vector<8x32xf32>
    %14 = tpu.matmul %12, %13, %cst {dimension_numbers = #tpu.dot_dimension_numbers<[1], [0], [0], [1], [0, 0, 1, 1], [], []>} : vector<8x32xbf16>, vector<32x32xbf16>, vector<8x32xf32> -> vector<8x32xf32>
    %c0_6 = arith.constant 0 : index
    %c0_7 = arith.constant 0 : index
    %15 = vector.load %arg5[%c0_6, %c0_7] : memref<1x32xf32, #tpu.memory_space<vmem>>, vector<1x32xf32>
    %16 = vector.broadcast %15 : vector<1x32xf32> to vector<8x32xf32>
    %17 = arith.addf %14, %16 : vector<8x32xf32>
    %cst_8 = arith.constant 0.000000e+00 : f32
    %18 = vector.broadcast %cst_8 : f32 to vector<8x32xf32>
    %19 = vector.extract_strided_slice %17 {offsets = [0, 0], sizes = [8, 8], strides = [1, 1]} : vector<8x32xf32> to vector<8x8xf32>
    %20 = arith.truncf %19 : vector<8x8xf32> to vector<8x8xbf16>
    %c0_9 = arith.constant 0 : index
    %c0_10 = arith.constant 0 : index
    %21 = vector.load %arg15[%c0_9, %c0_10] : memref<32x8xbf16, #tpu.memory_space<vmem>>, vector<8x8xbf16>
    %cst_11 = arith.constant dense<0.000000e+00> : vector<8x8xf32>
    %22 = tpu.matmul %20, %21, %cst_11 {dimension_numbers = #tpu.dot_dimension_numbers<[1], [0], [0], [1], [0, 0, 1, 1], [], []>} : vector<8x8xbf16>, vector<8x8xbf16>, vector<8x8xf32> -> vector<8x8xf32>
    %cst_12 = arith.constant 0.353553385 : f32
    %23 = vector.broadcast %cst_12 : f32 to vector<8x8xf32>
    %24 = arith.mulf %22, %23 : vector<8x8xf32>
    %cst_13 = arith.constant dense<0xFF800000> : vector<8xf32>
    %25 = vector.multi_reduction <maximumf>, %24, %cst_13 [1] : vector<8x8xf32> to vector<8xf32>
    %26 = vector.shape_cast %25 : vector<8xf32> to vector<8x1xf32>
    %27 = vector.broadcast %26 : vector<8x1xf32> to vector<8x8xf32>
    %28 = arith.subf %24, %27 : vector<8x8xf32>
    %29 = math.exp %28 : vector<8x8xf32>
    %cst_14 = arith.constant dense<0.000000e+00> : vector<8xf32>
    %30 = vector.multi_reduction <add>, %29, %cst_14 [1] : vector<8x8xf32> to vector<8xf32>
    %31 = vector.shape_cast %30 : vector<8xf32> to vector<8x1xf32>
    %32 = tpu.reciprocal %31 {approx = true} : vector<8x1xf32> -> vector<8x1xf32>
    %33 = vector.broadcast %32 : vector<8x1xf32> to vector<8x8xf32>
    %34 = arith.mulf %29, %33 : vector<8x8xf32>
    %35 = arith.truncf %34 : vector<8x8xf32> to vector<8x8xbf16>
    %c0_15 = arith.constant 0 : index
    %c0_16 = arith.constant 0 : index
    %36 = vector.load %arg16[%c0_15, %c0_16] : memref<8x32xbf16, #tpu.memory_space<vmem>>, vector<8x8xbf16>
    %cst_17 = arith.constant dense<0.000000e+00> : vector<8x8xf32>
    %37 = tpu.matmul %35, %36, %cst_17 {dimension_numbers = #tpu.dot_dimension_numbers<[1], [0], [0], [1], [0, 0, 1, 1], [], []>} : vector<8x8xbf16>, vector<8x8xbf16>, vector<8x8xf32> -> vector<8x8xf32>
    %38 = arith.truncf %37 : vector<8x8xf32> to vector<8x8xbf16>
    %c0_18 = arith.constant 0 : index
    %c0_19 = arith.constant 0 : index
    %39 = vector.load %arg10[%c0_18, %c0_19] : memref<32x32xbf16, #tpu.memory_space<vmem>>, vector<8x32xbf16>
    %cst_20 = arith.constant dense<0.000000e+00> : vector<8x32xf32>
    %40 = tpu.matmul %38, %39, %cst_20 {dimension_numbers = #tpu.dot_dimension_numbers<[1], [0], [0], [1], [0, 0, 1, 1], [], []>} : vector<8x8xbf16>, vector<8x32xbf16>, vector<8x32xf32> -> vector<8x32xf32>
    %41 = arith.addf %18, %40 : vector<8x32xf32>
    %42 = vector.extract_strided_slice %17 {offsets = [0, 8], sizes = [8, 8], strides = [1, 1]} : vector<8x32xf32> to vector<8x8xf32>
    %43 = arith.truncf %42 : vector<8x8xf32> to vector<8x8xbf16>
    %c8 = arith.constant 8 : index
    %c0_21 = arith.constant 0 : index
    %44 = vector.load %arg15[%c8, %c0_21] : memref<32x8xbf16, #tpu.memory_space<vmem>>, vector<8x8xbf16>
    %cst_22 = arith.constant dense<0.000000e+00> : vector<8x8xf32>
    %45 = tpu.matmul %43, %44, %cst_22 {dimension_numbers = #tpu.dot_dimension_numbers<[1], [0], [0], [1], [0, 0, 1, 1], [], []>} : vector<8x8xbf16>, vector<8x8xbf16>, vector<8x8xf32> -> vector<8x8xf32>
    %cst_23 = arith.constant 0.353553385 : f32
    %46 = vector.broadcast %cst_23 : f32 to vector<8x8xf32>
    %47 = arith.mulf %45, %46 : vector<8x8xf32>
    %cst_24 = arith.constant dense<0xFF800000> : vector<8xf32>
    %48 = vector.multi_reduction <maximumf>, %47, %cst_24 [1] : vector<8x8xf32> to vector<8xf32>
    %49 = vector.shape_cast %48 : vector<8xf32> to vector<8x1xf32>
    %50 = vector.broadcast %49 : vector<8x1xf32> to vector<8x8xf32>
    %51 = arith.subf %47, %50 : vector<8x8xf32>
    %52 = math.exp %51 : vector<8x8xf32>
    %cst_25 = arith.constant dense<0.000000e+00> : vector<8xf32>
    %53 = vector.multi_reduction <add>, %52, %cst_25 [1] : vector<8x8xf32> to vector<8xf32>
    %54 = vector.shape_cast %53 : vector<8xf32> to vector<8x1xf32>
    %55 = tpu.reciprocal %54 {approx = true} : vector<8x1xf32> -> vector<8x1xf32>
    %56 = vector.broadcast %55 : vector<8x1xf32> to vector<8x8xf32>
    %57 = arith.mulf %52, %56 : vector<8x8xf32>
    %58 = arith.truncf %57 : vector<8x8xf32> to vector<8x8xbf16>
    %c0_26 = arith.constant 0 : index
    %c8_27 = arith.constant 8 : index
    %59 = vector.load %arg16[%c0_26, %c8_27] : memref<8x32xbf16, #tpu.memory_space<vmem>>, vector<8x8xbf16>
    %cst_28 = arith.constant dense<0.000000e+00> : vector<8x8xf32>
    %60 = tpu.matmul %58, %59, %cst_28 {dimension_numbers = #tpu.dot_dimension_numbers<[1], [0], [0], [1], [0, 0, 1, 1], [], []>} : vector<8x8xbf16>, vector<8x8xbf16>, vector<8x8xf32> -> vector<8x8xf32>
    %61 = arith.truncf %60 : vector<8x8xf32> to vector<8x8xbf16>
    %c8_29 = arith.constant 8 : index
    %c0_30 = arith.constant 0 : index
    %62 = vector.load %arg10[%c8_29, %c0_30] : memref<32x32xbf16, #tpu.memory_space<vmem>>, vector<8x32xbf16>
    %cst_31 = arith.constant dense<0.000000e+00> : vector<8x32xf32>
    %63 = tpu.matmul %61, %62, %cst_31 {dimension_numbers = #tpu.dot_dimension_numbers<[1], [0], [0], [1], [0, 0, 1, 1], [], []>} : vector<8x8xbf16>, vector<8x32xbf16>, vector<8x32xf32> -> vector<8x32xf32>
    %64 = arith.addf %41, %63 : vector<8x32xf32>
    %65 = vector.extract_strided_slice %17 {offsets = [0, 16], sizes = [8, 8], strides = [1, 1]} : vector<8x32xf32> to vector<8x8xf32>
    %66 = arith.truncf %65 : vector<8x8xf32> to vector<8x8xbf16>
    %c16 = arith.constant 16 : index
    %c0_32 = arith.constant 0 : index
    %67 = vector.load %arg15[%c16, %c0_32] : memref<32x8xbf16, #tpu.memory_space<vmem>>, vector<8x8xbf16>
    %cst_33 = arith.constant dense<0.000000e+00> : vector<8x8xf32>
    %68 = tpu.matmul %66, %67, %cst_33 {dimension_numbers = #tpu.dot_dimension_numbers<[1], [0], [0], [1], [0, 0, 1, 1], [], []>} : vector<8x8xbf16>, vector<8x8xbf16>, vector<8x8xf32> -> vector<8x8xf32>
    %cst_34 = arith.constant 0.353553385 : f32
    %69 = vector.broadcast %cst_34 : f32 to vector<8x8xf32>
    %70 = arith.mulf %68, %69 : vector<8x8xf32>
    %cst_35 = arith.constant dense<0xFF800000> : vector<8xf32>
    %71 = vector.multi_reduction <maximumf>, %70, %cst_35 [1] : vector<8x8xf32> to vector<8xf32>
    %72 = vector.shape_cast %71 : vector<8xf32> to vector<8x1xf32>
    %73 = vector.broadcast %72 : vector<8x1xf32> to vector<8x8xf32>
    %74 = arith.subf %70, %73 : vector<8x8xf32>
    %75 = math.exp %74 : vector<8x8xf32>
    %cst_36 = arith.constant dense<0.000000e+00> : vector<8xf32>
    %76 = vector.multi_reduction <add>, %75, %cst_36 [1] : vector<8x8xf32> to vector<8xf32>
    %77 = vector.shape_cast %76 : vector<8xf32> to vector<8x1xf32>
    %78 = tpu.reciprocal %77 {approx = true} : vector<8x1xf32> -> vector<8x1xf32>
    %79 = vector.broadcast %78 : vector<8x1xf32> to vector<8x8xf32>
    %80 = arith.mulf %75, %79 : vector<8x8xf32>
    %81 = arith.truncf %80 : vector<8x8xf32> to vector<8x8xbf16>
    %c0_37 = arith.constant 0 : index
    %c16_38 = arith.constant 16 : index
    %82 = vector.load %arg16[%c0_37, %c16_38] : memref<8x32xbf16, #tpu.memory_space<vmem>>, vector<8x8xbf16>
    %cst_39 = arith.constant dense<0.000000e+00> : vector<8x8xf32>
    %83 = tpu.matmul %81, %82, %cst_39 {dimension_numbers = #tpu.dot_dimension_numbers<[1], [0], [0], [1], [0, 0, 1, 1], [], []>} : vector<8x8xbf16>, vector<8x8xbf16>, vector<8x8xf32> -> vector<8x8xf32>
    %84 = arith.truncf %83 : vector<8x8xf32> to vector<8x8xbf16>
    %c16_40 = arith.constant 16 : index
    %c0_41 = arith.constant 0 : index
    %85 = vector.load %arg10[%c16_40, %c0_41] : memref<32x32xbf16, #tpu.memory_space<vmem>>, vector<8x32xbf16>
    %cst_42 = arith.constant dense<0.000000e+00> : vector<8x32xf32>
    %86 = tpu.matmul %84, %85, %cst_42 {dimension_numbers = #tpu.dot_dimension_numbers<[1], [0], [0], [1], [0, 0, 1, 1], [], []>} : vector<8x8xbf16>, vector<8x32xbf16>, vector<8x32xf32> -> vector<8x32xf32>
    %87 = arith.addf %64, %86 : vector<8x32xf32>
    %88 = vector.extract_strided_slice %17 {offsets = [0, 24], sizes = [8, 8], strides = [1, 1]} : vector<8x32xf32> to vector<8x8xf32>
    %89 = arith.truncf %88 : vector<8x8xf32> to vector<8x8xbf16>
    %c24 = arith.constant 24 : index
    %c0_43 = arith.constant 0 : index
    %90 = vector.load %arg15[%c24, %c0_43] : memref<32x8xbf16, #tpu.memory_space<vmem>>, vector<8x8xbf16>
    %cst_44 = arith.constant dense<0.000000e+00> : vector<8x8xf32>
    %91 = tpu.matmul %89, %90, %cst_44 {dimension_numbers = #tpu.dot_dimension_numbers<[1], [0], [0], [1], [0, 0, 1, 1], [], []>} : vector<8x8xbf16>, vector<8x8xbf16>, vector<8x8xf32> -> vector<8x8xf32>
    %cst_45 = arith.constant 0.353553385 : f32
    %92 = vector.broadcast %cst_45 : f32 to vector<8x8xf32>
    %93 = arith.mulf %91, %92 : vector<8x8xf32>
    %cst_46 = arith.constant dense<0xFF800000> : vector<8xf32>
    %94 = vector.multi_reduction <maximumf>, %93, %cst_46 [1] : vector<8x8xf32> to vector<8xf32>
    %95 = vector.shape_cast %94 : vector<8xf32> to vector<8x1xf32>
    %96 = vector.broadcast %95 : vector<8x1xf32> to vector<8x8xf32>
    %97 = arith.subf %93, %96 : vector<8x8xf32>
    %98 = math.exp %97 : vector<8x8xf32>
    %cst_47 = arith.constant dense<0.000000e+00> : vector<8xf32>
    %99 = vector.multi_reduction <add>, %98, %cst_47 [1] : vector<8x8xf32> to vector<8xf32>
    %100 = vector.shape_cast %99 : vector<8xf32> to vector<8x1xf32>
    %101 = tpu.reciprocal %100 {approx = true} : vector<8x1xf32> -> vector<8x1xf32>
    %102 = vector.broadcast %101 : vector<8x1xf32> to vector<8x8xf32>
    %103 = arith.mulf %98, %102 : vector<8x8xf32>
    %104 = arith.truncf %103 : vector<8x8xf32> to vector<8x8xbf16>
    %c0_48 = arith.constant 0 : index
    %c24_49 = arith.constant 24 : index
    %105 = vector.load %arg16[%c0_48, %c24_49] : memref<8x32xbf16, #tpu.memory_space<vmem>>, vector<8x8xbf16>
    %cst_50 = arith.constant dense<0.000000e+00> : vector<8x8xf32>
    %106 = tpu.matmul %104, %105, %cst_50 {dimension_numbers = #tpu.dot_dimension_numbers<[1], [0], [0], [1], [0, 0, 1, 1], [], []>} : vector<8x8xbf16>, vector<8x8xbf16>, vector<8x8xf32> -> vector<8x8xf32>
    %107 = arith.truncf %106 : vector<8x8xf32> to vector<8x8xbf16>
    %c24_51 = arith.constant 24 : index
    %c0_52 = arith.constant 0 : index
    %108 = vector.load %arg10[%c24_51, %c0_52] : memref<32x32xbf16, #tpu.memory_space<vmem>>, vector<8x32xbf16>
    %cst_53 = arith.constant dense<0.000000e+00> : vector<8x32xf32>
    %109 = tpu.matmul %107, %108, %cst_53 {dimension_numbers = #tpu.dot_dimension_numbers<[1], [0], [0], [1], [0, 0, 1, 1], [], []>} : vector<8x8xbf16>, vector<8x32xbf16>, vector<8x32xf32> -> vector<8x32xf32>
    %110 = arith.addf %87, %109 : vector<8x32xf32>
    %111 = arith.addf %7, %110 : vector<8x32xf32>
    %c0_54 = arith.constant 0 : index
    %c0_55 = arith.constant 0 : index
    %112 = vector.load %arg11[%c0_54, %c0_55] : memref<1x32xf32, #tpu.memory_space<vmem>>, vector<1x32xf32>
    %113 = vector.broadcast %112 : vector<1x32xf32> to vector<8x32xf32>
    %114 = arith.addf %111, %113 : vector<8x32xf32>
    %cst_56 = arith.constant dense<0.000000e+00> : vector<8xf32>
    %115 = vector.multi_reduction <add>, %114, %cst_56 [1] : vector<8x32xf32> to vector<8xf32>
    %116 = vector.shape_cast %115 : vector<8xf32> to vector<8x1xf32>
    %cst_57 = arith.constant 3.200000e+01 : f32
    %117 = vector.broadcast %cst_57 : f32 to vector<8x1xf32>
    %118 = arith.divf %116, %117 : vector<8x1xf32>
    %119 = vector.broadcast %118 : vector<8x1xf32> to vector<8x32xf32>
    %120 = arith.subf %114, %119 : vector<8x32xf32>
    %121 = arith.mulf %120, %120 : vector<8x32xf32>
    %cst_58 = arith.constant dense<0.000000e+00> : vector<8xf32>
    %122 = vector.multi_reduction <add>, %121, %cst_58 [1] : vector<8x32xf32> to vector<8xf32>
    %123 = vector.shape_cast %122 : vector<8xf32> to vector<8x1xf32>
    %cst_59 = arith.constant 3.200000e+01 : f32
    %124 = vector.broadcast %cst_59 : f32 to vector<8x1xf32>
    %125 = arith.divf %123, %124 : vector<8x1xf32>
    %cst_60 = arith.constant 9.99999974E-6 : f32
    %126 = vector.broadcast %cst_60 : f32 to vector<8x1xf32>
    %127 = arith.addf %125, %126 : vector<8x1xf32>
    %128 = math.rsqrt %127 : vector<8x1xf32>
    %129 = vector.broadcast %128 : vector<8x1xf32> to vector<8x32xf32>
    %130 = arith.mulf %120, %129 : vector<8x32xf32>
    %c0_61 = arith.constant 0 : index
    %c0_62 = arith.constant 0 : index
    %131 = vector.load %arg12[%c0_61, %c0_62] : memref<1x32xf32, #tpu.memory_space<vmem>>, vector<1x32xf32>
    %132 = vector.broadcast %131 : vector<1x32xf32> to vector<8x32xf32>
    %133 = arith.mulf %130, %132 : vector<8x32xf32>
    %c0_63 = arith.constant 0 : index
    %c0_64 = arith.constant 0 : index
    %134 = vector.load %arg13[%c0_63, %c0_64] : memref<1x32xf32, #tpu.memory_space<vmem>>, vector<1x32xf32>
    %135 = vector.broadcast %134 : vector<1x32xf32> to vector<8x32xf32>
    %136 = arith.addf %133, %135 : vector<8x32xf32>
    %c0_65 = arith.constant 0 : index
    %c0_66 = arith.constant 0 : index
    %c0_67 = arith.constant 0 : index
    %137 = vector.load %arg14[%c0_65, %c0_66, %c0_67] : memref<1x8x32xf32, #tpu.memory_space<vmem>>, vector<1x8x32xf32>
    %138 = vector.shape_cast %137 : vector<1x8x32xf32> to vector<8x32xf32>
    %139 = vector.shape_cast %136 : vector<8x32xf32> to vector<1x8x32xf32>
    tpu.vector_store %arg14[%c0_65, %c0_66, %c0_67], %139 {strides = array<i32>} : memref<1x8x32xf32, #tpu.memory_space<vmem>>, vector<1x8x32xf32>,
    return
  }
  func.func @transform_0(%arg0: i32, %arg1: i32) -> (i32, i32, i32) {
    %c0_i32 = arith.constant 0 : i32
    %c0_i32_0 = arith.constant 0 : i32
    %c0_i32_1 = arith.constant 0 : i32
    return %arg0, %c0_i32, %c0_i32_0 : i32, i32, i32
  }
  func.func @transform_1(%arg0: i32, %arg1: i32) -> (i32, i32, i32) {
    %c0_i32 = arith.constant 0 : i32
    %c0_i32_0 = arith.constant 0 : i32
    %c0_i32_1 = arith.constant 0 : i32
    return %arg0, %c0_i32, %c0_i32_0 : i32, i32, i32
  }
  func.func @transform_2(%arg0: i32, %arg1: i32) -> (i32, i32) {
    %c0_i32 = arith.constant 0 : i32
    %c0_i32_0 = arith.constant 0 : i32
    %c0_i32_1 = arith.constant 0 : i32
    return %c0_i32, %c0_i32_0 : i32, i32
  }
  func.func @transform_3(%arg0: i32, %arg1: i32) -> (i32, i32) {
    %c0_i32 = arith.constant 0 : i32
    %c0_i32_0 = arith.constant 0 : i32
    %c0_i32_1 = arith.constant 0 : i32
    return %c0_i32, %c0_i32_0 : i32, i32
  }
  func.func @transform_4(%arg0: i32, %arg1: i32) -> (i32, i32) {
    %c0_i32 = arith.constant 0 : i32
    %c0_i32_0 = arith.constant 0 : i32
    %c0_i32_1 = arith.constant 0 : i32
    return %c0_i32, %c0_i32_0 : i32, i32
  }
  func.func @transform_5(%arg0: i32, %arg1: i32) -> (i32, i32) {
    %c0_i32 = arith.constant 0 : i32
    %c0_i32_0 = arith.constant 0 : i32
    %c0_i32_1 = arith.constant 0 : i32
    return %c0_i32, %c0_i32_0 : i32, i32
  }
  func.func @transform_6(%arg0: i32, %arg1: i32) -> (i32, i32) {
    %c0_i32 = arith.constant 0 : i32
    %c0_i32_0 = arith.constant 0 : i32
    %c0_i32_1 = arith.constant 0 : i32
    return %c0_i32, %c0_i32_0 : i32, i32
  }
  func.func @transform_7(%arg0: i32, %arg1: i32) -> (i32, i32) {
    %c0_i32 = arith.constant 0 : i32
    %c0_i32_0 = arith.constant 0 : i32
    %c0_i32_1 = arith.constant 0 : i32
    return %c0_i32, %c0_i32_0 : i32, i32
  }
  func.func @transform_8(%arg0: i32, %arg1: i32) -> (i32, i32) {
    %c0_i32 = arith.constant 0 : i32
    %c0_i32_0 = arith.constant 0 : i32
    %c0_i32_1 = arith.constant 0 : i32
    return %c0_i32, %c0_i32_0 : i32, i32
  }
  func.func @transform_9(%arg0: i32, %arg1: i32) -> (i32, i32) {
    %c0_i32 = arith.constant 0 : i32
    %c0_i32_0 = arith.constant 0 : i32
    %c0_i32_1 = arith.constant 0 : i32
    return %c0_i32, %c0_i32_0 : i32, i32
  }
  func.func @transform_10(%arg0: i32, %arg1: i32) -> (i32, i32) {
    %c0_i32 = arith.constant 0 : i32
    %c0_i32_0 = arith.constant 0 : i32
    %c0_i32_1 = arith.constant 0 : i32
    return %c0_i32, %c0_i32_0 : i32, i32
  }
  func.func @transform_11(%arg0: i32, %arg1: i32) -> (i32, i32) {
    %c0_i32 = arith.constant 0 : i32
    %c0_i32_0 = arith.constant 0 : i32
    %c0_i32_1 = arith.constant 0 : i32
    return %c0_i32, %c0_i32_0 : i32, i32
  }
  func.func @transform_12(%arg0: i32, %arg1: i32) -> (i32, i32, i32) {
    %c0_i32 = arith.constant 0 : i32
    %c0_i32_0 = arith.constant 0 : i32
    return %arg0, %arg1, %c0_i32 : i32, i32, i32
  }
}

module attributes {stable_mosaic.version = 11 : i64} {
  func.func @_cross_attn_kernel(%arg0: i32, %arg1: i32, %arg2: memref<1x8x32xf32, #tpu.memory_space<vmem>>, %arg3: memref<1x8x32xf32, #tpu.memory_space<vmem>>, %arg4: memref<1x8x32xf32, #tpu.memory_space<vmem>>, %arg5: memref<1x16x32xbf16, #tpu.memory_space<vmem>>, %arg6: memref<1x16x32xbf16, #tpu.memory_space<vmem>>, %arg7: memref<32x32xbf16, #tpu.memory_space<vmem>>, %arg8: memref<1x32xf32, #tpu.memory_space<vmem>>, %arg9: memref<32x32xbf16, #tpu.memory_space<vmem>>, %arg10: memref<1x32xf32, #tpu.memory_space<vmem>>, %arg11: memref<32x32xbf16, #tpu.memory_space<vmem>>, %arg12: memref<1x32xf32, #tpu.memory_space<vmem>>, %arg13: memref<32x32xbf16, #tpu.memory_space<vmem>>, %arg14: memref<1x32xf32, #tpu.memory_space<vmem>>, %arg15: memref<1x32xf32, #tpu.memory_space<vmem>>, %arg16: memref<1x32xf32, #tpu.memory_space<vmem>>, %arg17: memref<1x8x32xf32, #tpu.memory_space<vmem>>, %arg18: memref<32x16xbf16, #tpu.memory_space<vmem>>, %arg19: memref<16x32xbf16, #tpu.memory_space<vmem>>) attributes {dimension_semantics = [#tpu.dimension_semantics<parallel>, #tpu.dimension_semantics<arbitrary>], iteration_bounds = array<i64: 2, 1>, scalar_prefetch = 0 : i64, scratch_operands = 2 : i64, tpu.core_type = #tpu.core_type<tc>, window_params = [{transform_indices = @transform_0, window_bounds = array<i64: 1, 8, 32>}, {transform_indices = @transform_1, window_bounds = array<i64: 1, 8, 32>}, {transform_indices = @transform_2, window_bounds = array<i64: 1, 8, 32>}, {transform_indices = @transform_3, window_bounds = array<i64: 1, 16, 32>}, {transform_indices = @transform_4, window_bounds = array<i64: 1, 16, 32>}, {pipeline_mode = #tpu.pipeline_mode<synchronous>, transform_indices = @transform_5, window_bounds = array<i64: 32, 32>}, {pipeline_mode = #tpu.pipeline_mode<synchronous>, transform_indices = @transform_6, window_bounds = array<i64: 1, 32>}, {pipeline_mode = #tpu.pipeline_mode<synchronous>, transform_indices = @transform_7, window_bounds = array<i64: 32, 32>}, {pipeline_mode = #tpu.pipeline_mode<synchronous>, transform_indices = @transform_8, window_bounds = array<i64: 1, 32>}, {pipeline_mode = #tpu.pipeline_mode<synchronous>, transform_indices = @transform_9, window_bounds = array<i64: 32, 32>}, {pipeline_mode = #tpu.pipeline_mode<synchronous>, transform_indices = @transform_10, window_bounds = array<i64: 1, 32>}, {pipeline_mode = #tpu.pipeline_mode<synchronous>, transform_indices = @transform_11, window_bounds = array<i64: 32, 32>}, {pipeline_mode = #tpu.pipeline_mode<synchronous>, transform_indices = @transform_12, window_bounds = array<i64: 1, 32>}, {pipeline_mode = #tpu.pipeline_mode<synchronous>, transform_indices = @transform_13, window_bounds = array<i64: 1, 32>}, {pipeline_mode = #tpu.pipeline_mode<synchronous>, transform_indices = @transform_14, window_bounds = array<i64: 1, 32>}, {transform_indices = @transform_15, window_bounds = array<i64: 1, 8, 32>}]} {
    %c0_i32 = arith.constant 0 : i32
    %0 = arith.cmpi eq, %arg1, %c0_i32 : i32
    %1 = arith.extui %0 : i1 to i32
    %c0_i32_0 = arith.constant 0 : i32
    %2 = arith.cmpi ne, %1, %c0_i32_0 : i32
    scf.if %2 {
      %c0_73 = arith.constant 0 : index
      %c0_74 = arith.constant 0 : index
      %c0_75 = arith.constant 0 : index
      %138 = vector.load %arg5[%c0_73, %c0_74, %c0_75] : memref<1x16x32xbf16, #tpu.memory_space<vmem>>, vector<1x16x32xbf16>
      %139 = vector.shape_cast %138 : vector<1x16x32xbf16> to vector<16x32xbf16>
      %c0_76 = arith.constant 0 : index
      %c0_77 = arith.constant 0 : index
      %c0_78 = arith.constant 0 : index
      %140 = vector.load %arg6[%c0_76, %c0_77, %c0_78] : memref<1x16x32xbf16, #tpu.memory_space<vmem>>, vector<1x16x32xbf16>
      %141 = vector.shape_cast %140 : vector<1x16x32xbf16> to vector<16x32xbf16>
      %142 = arith.addf %139, %141 : vector<16x32xbf16>
      %c0_79 = arith.constant 0 : index
      %c0_80 = arith.constant 0 : index
      %143 = vector.load %arg9[%c0_79, %c0_80] : memref<32x32xbf16, #tpu.memory_space<vmem>>, vector<32x32xbf16>
      %cst_81 = arith.constant dense<0.000000e+00> : vector<16x32xf32>
      %144 = tpu.matmul %142, %143, %cst_81 {dimension_numbers = #tpu.dot_dimension_numbers<[1], [0], [0], [1], [0, 0, 1, 1], [], []>} : vector<16x32xbf16>, vector<32x32xbf16>, vector<16x32xf32> -> vector<16x32xf32>
      %c0_82 = arith.constant 0 : index
      %c0_83 = arith.constant 0 : index
      %145 = vector.load %arg10[%c0_82, %c0_83] : memref<1x32xf32, #tpu.memory_space<vmem>>, vector<1x32xf32>
      %146 = vector.broadcast %145 : vector<1x32xf32> to vector<16x32xf32>
      %147 = arith.addf %144, %146 : vector<16x32xf32>
      %c0_84 = arith.constant 0 : index
      %c0_85 = arith.constant 0 : index
      %148 = vector.load %arg11[%c0_84, %c0_85] : memref<32x32xbf16, #tpu.memory_space<vmem>>, vector<32x32xbf16>
      %cst_86 = arith.constant dense<0.000000e+00> : vector<16x32xf32>
      %149 = tpu.matmul %139, %148, %cst_86 {dimension_numbers = #tpu.dot_dimension_numbers<[1], [0], [0], [1], [0, 0, 1, 1], [], []>} : vector<16x32xbf16>, vector<32x32xbf16>, vector<16x32xf32> -> vector<16x32xf32>
      %c0_87 = arith.constant 0 : index
      %c0_88 = arith.constant 0 : index
      %150 = vector.load %arg12[%c0_87, %c0_88] : memref<1x32xf32, #tpu.memory_space<vmem>>, vector<1x32xf32>
      %151 = vector.broadcast %150 : vector<1x32xf32> to vector<16x32xf32>
      %152 = arith.addf %149, %151 : vector<16x32xf32>
      %153 = tpu.transpose %147, [1, 0] : vector<16x32xf32> -> vector<32x16xf32>
      %154 = arith.truncf %153 : vector<32x16xf32> to vector<32x16xbf16>
      %c0_89 = arith.constant 0 : index
      %c0_90 = arith.constant 0 : index
      %155 = vector.load %arg18[%c0_89, %c0_90] : memref<32x16xbf16, #tpu.memory_space<vmem>>, vector<32x16xbf16>
      tpu.vector_store %arg18[%c0_89, %c0_90], %154 {strides = array<i32>} : memref<32x16xbf16, #tpu.memory_space<vmem>>, vector<32x16xbf16>,
      %156 = arith.truncf %152 : vector<16x32xf32> to vector<16x32xbf16>
      %c0_91 = arith.constant 0 : index
      %c0_92 = arith.constant 0 : index
      %157 = vector.load %arg19[%c0_91, %c0_92] : memref<16x32xbf16, #tpu.memory_space<vmem>>, vector<16x32xbf16>
      tpu.vector_store %arg19[%c0_91, %c0_92], %156 {strides = array<i32>} : memref<16x32xbf16, #tpu.memory_space<vmem>>, vector<16x32xbf16>,
    } else {
    }
    %c0 = arith.constant 0 : index
    %c0_1 = arith.constant 0 : index
    %c0_2 = arith.constant 0 : index
    %3 = vector.load %arg2[%c0, %c0_1, %c0_2] : memref<1x8x32xf32, #tpu.memory_space<vmem>>, vector<1x8x32xf32>
    %4 = vector.shape_cast %3 : vector<1x8x32xf32> to vector<8x32xf32>
    %c0_3 = arith.constant 0 : index
    %c0_4 = arith.constant 0 : index
    %c0_5 = arith.constant 0 : index
    %5 = vector.load %arg3[%c0_3, %c0_4, %c0_5] : memref<1x8x32xf32, #tpu.memory_space<vmem>>, vector<1x8x32xf32>
    %6 = vector.shape_cast %5 : vector<1x8x32xf32> to vector<8x32xf32>
    %7 = arith.addf %4, %6 : vector<8x32xf32>
    %8 = arith.truncf %7 : vector<8x32xf32> to vector<8x32xbf16>
    %c0_6 = arith.constant 0 : index
    %c0_7 = arith.constant 0 : index
    %c0_8 = arith.constant 0 : index
    %9 = vector.load %arg4[%c0_6, %c0_7, %c0_8] : memref<1x8x32xf32, #tpu.memory_space<vmem>>, vector<1x8x32xf32>
    %10 = vector.shape_cast %9 : vector<1x8x32xf32> to vector<8x32xf32>
    %c0_9 = arith.constant 0 : index
    %c0_10 = arith.constant 0 : index
    %11 = vector.load %arg7[%c0_9, %c0_10] : memref<32x32xbf16, #tpu.memory_space<vmem>>, vector<32x32xbf16>
    %cst = arith.constant dense<0.000000e+00> : vector<8x32xf32>
    %12 = tpu.matmul %8, %11, %cst {dimension_numbers = #tpu.dot_dimension_numbers<[1], [0], [0], [1], [0, 0, 1, 1], [], []>} : vector<8x32xbf16>, vector<32x32xbf16>, vector<8x32xf32> -> vector<8x32xf32>
    %c0_11 = arith.constant 0 : index
    %c0_12 = arith.constant 0 : index
    %13 = vector.load %arg8[%c0_11, %c0_12] : memref<1x32xf32, #tpu.memory_space<vmem>>, vector<1x32xf32>
    %14 = vector.broadcast %13 : vector<1x32xf32> to vector<8x32xf32>
    %15 = arith.addf %12, %14 : vector<8x32xf32>
    %cst_13 = arith.constant 0.000000e+00 : f32
    %16 = vector.broadcast %cst_13 : f32 to vector<8x32xf32>
    %17 = vector.extract_strided_slice %15 {offsets = [0, 0], sizes = [8, 8], strides = [1, 1]} : vector<8x32xf32> to vector<8x8xf32>
    %18 = arith.truncf %17 : vector<8x8xf32> to vector<8x8xbf16>
    %c0_14 = arith.constant 0 : index
    %c0_15 = arith.constant 0 : index
    %19 = vector.load %arg18[%c0_14, %c0_15] : memref<32x16xbf16, #tpu.memory_space<vmem>>, vector<8x16xbf16>
    %cst_16 = arith.constant dense<0.000000e+00> : vector<8x16xf32>
    %20 = tpu.matmul %18, %19, %cst_16 {dimension_numbers = #tpu.dot_dimension_numbers<[1], [0], [0], [1], [0, 0, 1, 1], [], []>} : vector<8x8xbf16>, vector<8x16xbf16>, vector<8x16xf32> -> vector<8x16xf32>
    %cst_17 = arith.constant 0.353553385 : f32
    %21 = vector.broadcast %cst_17 : f32 to vector<8x16xf32>
    %22 = arith.mulf %20, %21 : vector<8x16xf32>
    %cst_18 = arith.constant dense<0xFF800000> : vector<8xf32>
    %23 = vector.multi_reduction <maximumf>, %22, %cst_18 [1] : vector<8x16xf32> to vector<8xf32>
    %24 = vector.shape_cast %23 : vector<8xf32> to vector<8x1xf32>
    %25 = vector.broadcast %24 : vector<8x1xf32> to vector<8x16xf32>
    %26 = arith.subf %22, %25 : vector<8x16xf32>
    %27 = math.exp %26 : vector<8x16xf32>
    %cst_19 = arith.constant dense<0.000000e+00> : vector<8xf32>
    %28 = vector.multi_reduction <add>, %27, %cst_19 [1] : vector<8x16xf32> to vector<8xf32>
    %29 = vector.shape_cast %28 : vector<8xf32> to vector<8x1xf32>
    %30 = tpu.reciprocal %29 {approx = true} : vector<8x1xf32> -> vector<8x1xf32>
    %31 = vector.broadcast %30 : vector<8x1xf32> to vector<8x16xf32>
    %32 = arith.mulf %27, %31 : vector<8x16xf32>
    %33 = arith.truncf %32 : vector<8x16xf32> to vector<8x16xbf16>
    %c0_20 = arith.constant 0 : index
    %c0_21 = arith.constant 0 : index
    %34 = vector.load %arg19[%c0_20, %c0_21] : memref<16x32xbf16, #tpu.memory_space<vmem>>, vector<16x8xbf16>
    %cst_22 = arith.constant dense<0.000000e+00> : vector<8x8xf32>
    %35 = tpu.matmul %33, %34, %cst_22 {dimension_numbers = #tpu.dot_dimension_numbers<[1], [0], [0], [1], [0, 0, 1, 1], [], []>} : vector<8x16xbf16>, vector<16x8xbf16>, vector<8x8xf32> -> vector<8x8xf32>
    %36 = arith.truncf %35 : vector<8x8xf32> to vector<8x8xbf16>
    %c0_23 = arith.constant 0 : index
    %c0_24 = arith.constant 0 : index
    %37 = vector.load %arg13[%c0_23, %c0_24] : memref<32x32xbf16, #tpu.memory_space<vmem>>, vector<8x32xbf16>
    %cst_25 = arith.constant dense<0.000000e+00> : vector<8x32xf32>
    %38 = tpu.matmul %36, %37, %cst_25 {dimension_numbers = #tpu.dot_dimension_numbers<[1], [0], [0], [1], [0, 0, 1, 1], [], []>} : vector<8x8xbf16>, vector<8x32xbf16>, vector<8x32xf32> -> vector<8x32xf32>
    %39 = arith.addf %16, %38 : vector<8x32xf32>
    %40 = vector.extract_strided_slice %15 {offsets = [0, 8], sizes = [8, 8], strides = [1, 1]} : vector<8x32xf32> to vector<8x8xf32>
    %41 = arith.truncf %40 : vector<8x8xf32> to vector<8x8xbf16>
    %c8 = arith.constant 8 : index
    %c0_26 = arith.constant 0 : index
    %42 = vector.load %arg18[%c8, %c0_26] : memref<32x16xbf16, #tpu.memory_space<vmem>>, vector<8x16xbf16>
    %cst_27 = arith.constant dense<0.000000e+00> : vector<8x16xf32>
    %43 = tpu.matmul %41, %42, %cst_27 {dimension_numbers = #tpu.dot_dimension_numbers<[1], [0], [0], [1], [0, 0, 1, 1], [], []>} : vector<8x8xbf16>, vector<8x16xbf16>, vector<8x16xf32> -> vector<8x16xf32>
    %cst_28 = arith.constant 0.353553385 : f32
    %44 = vector.broadcast %cst_28 : f32 to vector<8x16xf32>
    %45 = arith.mulf %43, %44 : vector<8x16xf32>
    %cst_29 = arith.constant dense<0xFF800000> : vector<8xf32>
    %46 = vector.multi_reduction <maximumf>, %45, %cst_29 [1] : vector<8x16xf32> to vector<8xf32>
    %47 = vector.shape_cast %46 : vector<8xf32> to vector<8x1xf32>
    %48 = vector.broadcast %47 : vector<8x1xf32> to vector<8x16xf32>
    %49 = arith.subf %45, %48 : vector<8x16xf32>
    %50 = math.exp %49 : vector<8x16xf32>
    %cst_30 = arith.constant dense<0.000000e+00> : vector<8xf32>
    %51 = vector.multi_reduction <add>, %50, %cst_30 [1] : vector<8x16xf32> to vector<8xf32>
    %52 = vector.shape_cast %51 : vector<8xf32> to vector<8x1xf32>
    %53 = tpu.reciprocal %52 {approx = true} : vector<8x1xf32> -> vector<8x1xf32>
    %54 = vector.broadcast %53 : vector<8x1xf32> to vector<8x16xf32>
    %55 = arith.mulf %50, %54 : vector<8x16xf32>
    %56 = arith.truncf %55 : vector<8x16xf32> to vector<8x16xbf16>
    %c0_31 = arith.constant 0 : index
    %c8_32 = arith.constant 8 : index
    %57 = vector.load %arg19[%c0_31, %c8_32] : memref<16x32xbf16, #tpu.memory_space<vmem>>, vector<16x8xbf16>
    %cst_33 = arith.constant dense<0.000000e+00> : vector<8x8xf32>
    %58 = tpu.matmul %56, %57, %cst_33 {dimension_numbers = #tpu.dot_dimension_numbers<[1], [0], [0], [1], [0, 0, 1, 1], [], []>} : vector<8x16xbf16>, vector<16x8xbf16>, vector<8x8xf32> -> vector<8x8xf32>
    %59 = arith.truncf %58 : vector<8x8xf32> to vector<8x8xbf16>
    %c8_34 = arith.constant 8 : index
    %c0_35 = arith.constant 0 : index
    %60 = vector.load %arg13[%c8_34, %c0_35] : memref<32x32xbf16, #tpu.memory_space<vmem>>, vector<8x32xbf16>
    %cst_36 = arith.constant dense<0.000000e+00> : vector<8x32xf32>
    %61 = tpu.matmul %59, %60, %cst_36 {dimension_numbers = #tpu.dot_dimension_numbers<[1], [0], [0], [1], [0, 0, 1, 1], [], []>} : vector<8x8xbf16>, vector<8x32xbf16>, vector<8x32xf32> -> vector<8x32xf32>
    %62 = arith.addf %39, %61 : vector<8x32xf32>
    %63 = vector.extract_strided_slice %15 {offsets = [0, 16], sizes = [8, 8], strides = [1, 1]} : vector<8x32xf32> to vector<8x8xf32>
    %64 = arith.truncf %63 : vector<8x8xf32> to vector<8x8xbf16>
    %c16 = arith.constant 16 : index
    %c0_37 = arith.constant 0 : index
    %65 = vector.load %arg18[%c16, %c0_37] : memref<32x16xbf16, #tpu.memory_space<vmem>>, vector<8x16xbf16>
    %cst_38 = arith.constant dense<0.000000e+00> : vector<8x16xf32>
    %66 = tpu.matmul %64, %65, %cst_38 {dimension_numbers = #tpu.dot_dimension_numbers<[1], [0], [0], [1], [0, 0, 1, 1], [], []>} : vector<8x8xbf16>, vector<8x16xbf16>, vector<8x16xf32> -> vector<8x16xf32>
    %cst_39 = arith.constant 0.353553385 : f32
    %67 = vector.broadcast %cst_39 : f32 to vector<8x16xf32>
    %68 = arith.mulf %66, %67 : vector<8x16xf32>
    %cst_40 = arith.constant dense<0xFF800000> : vector<8xf32>
    %69 = vector.multi_reduction <maximumf>, %68, %cst_40 [1] : vector<8x16xf32> to vector<8xf32>
    %70 = vector.shape_cast %69 : vector<8xf32> to vector<8x1xf32>
    %71 = vector.broadcast %70 : vector<8x1xf32> to vector<8x16xf32>
    %72 = arith.subf %68, %71 : vector<8x16xf32>
    %73 = math.exp %72 : vector<8x16xf32>
    %cst_41 = arith.constant dense<0.000000e+00> : vector<8xf32>
    %74 = vector.multi_reduction <add>, %73, %cst_41 [1] : vector<8x16xf32> to vector<8xf32>
    %75 = vector.shape_cast %74 : vector<8xf32> to vector<8x1xf32>
    %76 = tpu.reciprocal %75 {approx = true} : vector<8x1xf32> -> vector<8x1xf32>
    %77 = vector.broadcast %76 : vector<8x1xf32> to vector<8x16xf32>
    %78 = arith.mulf %73, %77 : vector<8x16xf32>
    %79 = arith.truncf %78 : vector<8x16xf32> to vector<8x16xbf16>
    %c0_42 = arith.constant 0 : index
    %c16_43 = arith.constant 16 : index
    %80 = vector.load %arg19[%c0_42, %c16_43] : memref<16x32xbf16, #tpu.memory_space<vmem>>, vector<16x8xbf16>
    %cst_44 = arith.constant dense<0.000000e+00> : vector<8x8xf32>
    %81 = tpu.matmul %79, %80, %cst_44 {dimension_numbers = #tpu.dot_dimension_numbers<[1], [0], [0], [1], [0, 0, 1, 1], [], []>} : vector<8x16xbf16>, vector<16x8xbf16>, vector<8x8xf32> -> vector<8x8xf32>
    %82 = arith.truncf %81 : vector<8x8xf32> to vector<8x8xbf16>
    %c16_45 = arith.constant 16 : index
    %c0_46 = arith.constant 0 : index
    %83 = vector.load %arg13[%c16_45, %c0_46] : memref<32x32xbf16, #tpu.memory_space<vmem>>, vector<8x32xbf16>
    %cst_47 = arith.constant dense<0.000000e+00> : vector<8x32xf32>
    %84 = tpu.matmul %82, %83, %cst_47 {dimension_numbers = #tpu.dot_dimension_numbers<[1], [0], [0], [1], [0, 0, 1, 1], [], []>} : vector<8x8xbf16>, vector<8x32xbf16>, vector<8x32xf32> -> vector<8x32xf32>
    %85 = arith.addf %62, %84 : vector<8x32xf32>
    %86 = vector.extract_strided_slice %15 {offsets = [0, 24], sizes = [8, 8], strides = [1, 1]} : vector<8x32xf32> to vector<8x8xf32>
    %87 = arith.truncf %86 : vector<8x8xf32> to vector<8x8xbf16>
    %c24 = arith.constant 24 : index
    %c0_48 = arith.constant 0 : index
    %88 = vector.load %arg18[%c24, %c0_48] : memref<32x16xbf16, #tpu.memory_space<vmem>>, vector<8x16xbf16>
    %cst_49 = arith.constant dense<0.000000e+00> : vector<8x16xf32>
    %89 = tpu.matmul %87, %88, %cst_49 {dimension_numbers = #tpu.dot_dimension_numbers<[1], [0], [0], [1], [0, 0, 1, 1], [], []>} : vector<8x8xbf16>, vector<8x16xbf16>, vector<8x16xf32> -> vector<8x16xf32>
    %cst_50 = arith.constant 0.353553385 : f32
    %90 = vector.broadcast %cst_50 : f32 to vector<8x16xf32>
    %91 = arith.mulf %89, %90 : vector<8x16xf32>
    %cst_51 = arith.constant dense<0xFF800000> : vector<8xf32>
    %92 = vector.multi_reduction <maximumf>, %91, %cst_51 [1] : vector<8x16xf32> to vector<8xf32>
    %93 = vector.shape_cast %92 : vector<8xf32> to vector<8x1xf32>
    %94 = vector.broadcast %93 : vector<8x1xf32> to vector<8x16xf32>
    %95 = arith.subf %91, %94 : vector<8x16xf32>
    %96 = math.exp %95 : vector<8x16xf32>
    %cst_52 = arith.constant dense<0.000000e+00> : vector<8xf32>
    %97 = vector.multi_reduction <add>, %96, %cst_52 [1] : vector<8x16xf32> to vector<8xf32>
    %98 = vector.shape_cast %97 : vector<8xf32> to vector<8x1xf32>
    %99 = tpu.reciprocal %98 {approx = true} : vector<8x1xf32> -> vector<8x1xf32>
    %100 = vector.broadcast %99 : vector<8x1xf32> to vector<8x16xf32>
    %101 = arith.mulf %96, %100 : vector<8x16xf32>
    %102 = arith.truncf %101 : vector<8x16xf32> to vector<8x16xbf16>
    %c0_53 = arith.constant 0 : index
    %c24_54 = arith.constant 24 : index
    %103 = vector.load %arg19[%c0_53, %c24_54] : memref<16x32xbf16, #tpu.memory_space<vmem>>, vector<16x8xbf16>
    %cst_55 = arith.constant dense<0.000000e+00> : vector<8x8xf32>
    %104 = tpu.matmul %102, %103, %cst_55 {dimension_numbers = #tpu.dot_dimension_numbers<[1], [0], [0], [1], [0, 0, 1, 1], [], []>} : vector<8x16xbf16>, vector<16x8xbf16>, vector<8x8xf32> -> vector<8x8xf32>
    %105 = arith.truncf %104 : vector<8x8xf32> to vector<8x8xbf16>
    %c24_56 = arith.constant 24 : index
    %c0_57 = arith.constant 0 : index
    %106 = vector.load %arg13[%c24_56, %c0_57] : memref<32x32xbf16, #tpu.memory_space<vmem>>, vector<8x32xbf16>
    %cst_58 = arith.constant dense<0.000000e+00> : vector<8x32xf32>
    %107 = tpu.matmul %105, %106, %cst_58 {dimension_numbers = #tpu.dot_dimension_numbers<[1], [0], [0], [1], [0, 0, 1, 1], [], []>} : vector<8x8xbf16>, vector<8x32xbf16>, vector<8x32xf32> -> vector<8x32xf32>
    %108 = arith.addf %85, %107 : vector<8x32xf32>
    %109 = arith.addf %10, %108 : vector<8x32xf32>
    %c0_59 = arith.constant 0 : index
    %c0_60 = arith.constant 0 : index
    %110 = vector.load %arg14[%c0_59, %c0_60] : memref<1x32xf32, #tpu.memory_space<vmem>>, vector<1x32xf32>
    %111 = vector.broadcast %110 : vector<1x32xf32> to vector<8x32xf32>
    %112 = arith.addf %109, %111 : vector<8x32xf32>
    %cst_61 = arith.constant dense<0.000000e+00> : vector<8xf32>
    %113 = vector.multi_reduction <add>, %112, %cst_61 [1] : vector<8x32xf32> to vector<8xf32>
    %114 = vector.shape_cast %113 : vector<8xf32> to vector<8x1xf32>
    %cst_62 = arith.constant 3.200000e+01 : f32
    %115 = vector.broadcast %cst_62 : f32 to vector<8x1xf32>
    %116 = arith.divf %114, %115 : vector<8x1xf32>
    %117 = vector.broadcast %116 : vector<8x1xf32> to vector<8x32xf32>
    %118 = arith.subf %112, %117 : vector<8x32xf32>
    %119 = arith.mulf %118, %118 : vector<8x32xf32>
    %cst_63 = arith.constant dense<0.000000e+00> : vector<8xf32>
    %120 = vector.multi_reduction <add>, %119, %cst_63 [1] : vector<8x32xf32> to vector<8xf32>
    %121 = vector.shape_cast %120 : vector<8xf32> to vector<8x1xf32>
    %cst_64 = arith.constant 3.200000e+01 : f32
    %122 = vector.broadcast %cst_64 : f32 to vector<8x1xf32>
    %123 = arith.divf %121, %122 : vector<8x1xf32>
    %cst_65 = arith.constant 9.99999974E-6 : f32
    %124 = vector.broadcast %cst_65 : f32 to vector<8x1xf32>
    %125 = arith.addf %123, %124 : vector<8x1xf32>
    %126 = math.rsqrt %125 : vector<8x1xf32>
    %127 = vector.broadcast %126 : vector<8x1xf32> to vector<8x32xf32>
    %128 = arith.mulf %118, %127 : vector<8x32xf32>
    %c0_66 = arith.constant 0 : index
    %c0_67 = arith.constant 0 : index
    %129 = vector.load %arg15[%c0_66, %c0_67] : memref<1x32xf32, #tpu.memory_space<vmem>>, vector<1x32xf32>
    %130 = vector.broadcast %129 : vector<1x32xf32> to vector<8x32xf32>
    %131 = arith.mulf %128, %130 : vector<8x32xf32>
    %c0_68 = arith.constant 0 : index
    %c0_69 = arith.constant 0 : index
    %132 = vector.load %arg16[%c0_68, %c0_69] : memref<1x32xf32, #tpu.memory_space<vmem>>, vector<1x32xf32>
    %133 = vector.broadcast %132 : vector<1x32xf32> to vector<8x32xf32>
    %134 = arith.addf %131, %133 : vector<8x32xf32>
    %c0_70 = arith.constant 0 : index
    %c0_71 = arith.constant 0 : index
    %c0_72 = arith.constant 0 : index
    %135 = vector.load %arg17[%c0_70, %c0_71, %c0_72] : memref<1x8x32xf32, #tpu.memory_space<vmem>>, vector<1x8x32xf32>
    %136 = vector.shape_cast %135 : vector<1x8x32xf32> to vector<8x32xf32>
    %137 = vector.shape_cast %134 : vector<8x32xf32> to vector<1x8x32xf32>
    tpu.vector_store %arg17[%c0_70, %c0_71, %c0_72], %137 {strides = array<i32>} : memref<1x8x32xf32, #tpu.memory_space<vmem>>, vector<1x8x32xf32>,
    return
  }
  func.func @transform_0(%arg0: i32, %arg1: i32) -> (i32, i32, i32) {
    %c0_i32 = arith.constant 0 : i32
    %c0_i32_0 = arith.constant 0 : i32
    return %arg0, %arg1, %c0_i32 : i32, i32, i32
  }
  func.func @transform_1(%arg0: i32, %arg1: i32) -> (i32, i32, i32) {
    %c0_i32 = arith.constant 0 : i32
    %c0_i32_0 = arith.constant 0 : i32
    return %arg0, %arg1, %c0_i32 : i32, i32, i32
  }
  func.func @transform_2(%arg0: i32, %arg1: i32) -> (i32, i32, i32) {
    %c0_i32 = arith.constant 0 : i32
    %c0_i32_0 = arith.constant 0 : i32
    return %arg0, %arg1, %c0_i32 : i32, i32, i32
  }
  func.func @transform_3(%arg0: i32, %arg1: i32) -> (i32, i32, i32) {
    %c0_i32 = arith.constant 0 : i32
    %c0_i32_0 = arith.constant 0 : i32
    %c0_i32_1 = arith.constant 0 : i32
    return %arg0, %c0_i32, %c0_i32_0 : i32, i32, i32
  }
  func.func @transform_4(%arg0: i32, %arg1: i32) -> (i32, i32, i32) {
    %c0_i32 = arith.constant 0 : i32
    %c0_i32_0 = arith.constant 0 : i32
    %c0_i32_1 = arith.constant 0 : i32
    return %arg0, %c0_i32, %c0_i32_0 : i32, i32, i32
  }
  func.func @transform_5(%arg0: i32, %arg1: i32) -> (i32, i32) {
    %c0_i32 = arith.constant 0 : i32
    %c0_i32_0 = arith.constant 0 : i32
    %c0_i32_1 = arith.constant 0 : i32
    return %c0_i32, %c0_i32_0 : i32, i32
  }
  func.func @transform_6(%arg0: i32, %arg1: i32) -> (i32, i32) {
    %c0_i32 = arith.constant 0 : i32
    %c0_i32_0 = arith.constant 0 : i32
    %c0_i32_1 = arith.constant 0 : i32
    return %c0_i32, %c0_i32_0 : i32, i32
  }
  func.func @transform_7(%arg0: i32, %arg1: i32) -> (i32, i32) {
    %c0_i32 = arith.constant 0 : i32
    %c0_i32_0 = arith.constant 0 : i32
    %c0_i32_1 = arith.constant 0 : i32
    return %c0_i32, %c0_i32_0 : i32, i32
  }
  func.func @transform_8(%arg0: i32, %arg1: i32) -> (i32, i32) {
    %c0_i32 = arith.constant 0 : i32
    %c0_i32_0 = arith.constant 0 : i32
    %c0_i32_1 = arith.constant 0 : i32
    return %c0_i32, %c0_i32_0 : i32, i32
  }
  func.func @transform_9(%arg0: i32, %arg1: i32) -> (i32, i32) {
    %c0_i32 = arith.constant 0 : i32
    %c0_i32_0 = arith.constant 0 : i32
    %c0_i32_1 = arith.constant 0 : i32
    return %c0_i32, %c0_i32_0 : i32, i32
  }
  func.func @transform_10(%arg0: i32, %arg1: i32) -> (i32, i32) {
    %c0_i32 = arith.constant 0 : i32
    %c0_i32_0 = arith.constant 0 : i32
    %c0_i32_1 = arith.constant 0 : i32
    return %c0_i32, %c0_i32_0 : i32, i32
  }
  func.func @transform_11(%arg0: i32, %arg1: i32) -> (i32, i32) {
    %c0_i32 = arith.constant 0 : i32
    %c0_i32_0 = arith.constant 0 : i32
    %c0_i32_1 = arith.constant 0 : i32
    return %c0_i32, %c0_i32_0 : i32, i32
  }
  func.func @transform_12(%arg0: i32, %arg1: i32) -> (i32, i32) {
    %c0_i32 = arith.constant 0 : i32
    %c0_i32_0 = arith.constant 0 : i32
    %c0_i32_1 = arith.constant 0 : i32
    return %c0_i32, %c0_i32_0 : i32, i32
  }
  func.func @transform_13(%arg0: i32, %arg1: i32) -> (i32, i32) {
    %c0_i32 = arith.constant 0 : i32
    %c0_i32_0 = arith.constant 0 : i32
    %c0_i32_1 = arith.constant 0 : i32
    return %c0_i32, %c0_i32_0 : i32, i32
  }
  func.func @transform_14(%arg0: i32, %arg1: i32) -> (i32, i32) {
    %c0_i32 = arith.constant 0 : i32
    %c0_i32_0 = arith.constant 0 : i32
    %c0_i32_1 = arith.constant 0 : i32
    return %c0_i32, %c0_i32_0 : i32, i32
  }
  func.func @transform_15(%arg0: i32, %arg1: i32) -> (i32, i32, i32) {
    %c0_i32 = arith.constant 0 : i32
    %c0_i32_0 = arith.constant 0 : i32
    return %arg0, %arg1, %c0_i32 : i32, i32, i32
  }
}

module attributes {stable_mosaic.version = 11 : i64} {
  func.func @_ffn_resident_kernel(%arg0: i32, %arg1: memref<16x32xf32, #tpu.memory_space<vmem>>, %arg2: memref<32x128xbf16, #tpu.memory_space<vmem>>, %arg3: memref<1x128xf32, #tpu.memory_space<vmem>>, %arg4: memref<128x32xbf16, #tpu.memory_space<vmem>>, %arg5: memref<1x32xf32, #tpu.memory_space<vmem>>, %arg6: memref<1x32xf32, #tpu.memory_space<vmem>>, %arg7: memref<1x32xf32, #tpu.memory_space<vmem>>, %arg8: memref<16x32xf32, #tpu.memory_space<vmem>>) attributes {dimension_semantics = [#tpu.dimension_semantics<parallel>], iteration_bounds = array<i64: 1>, scalar_prefetch = 0 : i64, scratch_operands = 0 : i64, tpu.core_type = #tpu.core_type<tc>, window_params = [{transform_indices = @transform_0, window_bounds = array<i64: 16, 32>}, {pipeline_mode = #tpu.pipeline_mode<synchronous>, transform_indices = @transform_1, window_bounds = array<i64: 32, 128>}, {pipeline_mode = #tpu.pipeline_mode<synchronous>, transform_indices = @transform_2, window_bounds = array<i64: 1, 128>}, {pipeline_mode = #tpu.pipeline_mode<synchronous>, transform_indices = @transform_3, window_bounds = array<i64: 128, 32>}, {pipeline_mode = #tpu.pipeline_mode<synchronous>, transform_indices = @transform_4, window_bounds = array<i64: 1, 32>}, {pipeline_mode = #tpu.pipeline_mode<synchronous>, transform_indices = @transform_5, window_bounds = array<i64: 1, 32>}, {pipeline_mode = #tpu.pipeline_mode<synchronous>, transform_indices = @transform_6, window_bounds = array<i64: 1, 32>}, {transform_indices = @transform_7, window_bounds = array<i64: 16, 32>}]} {
    %c0 = arith.constant 0 : index
    %c0_0 = arith.constant 0 : index
    %0 = vector.load %arg1[%c0, %c0_0] : memref<16x32xf32, #tpu.memory_space<vmem>>, vector<16x32xf32>
    %1 = arith.truncf %0 : vector<16x32xf32> to vector<16x32xbf16>
    %c0_1 = arith.constant 0 : index
    %c0_2 = arith.constant 0 : index
    %2 = vector.load %arg2[%c0_1, %c0_2] : memref<32x128xbf16, #tpu.memory_space<vmem>>, vector<32x128xbf16>
    %cst = arith.constant dense<0.000000e+00> : vector<16x128xf32>
    %3 = tpu.matmul %1, %2, %cst {dimension_numbers = #tpu.dot_dimension_numbers<[1], [0], [0], [1], [0, 0, 1, 1], [], []>} : vector<16x32xbf16>, vector<32x128xbf16>, vector<16x128xf32> -> vector<16x128xf32>
    %c0_3 = arith.constant 0 : index
    %c0_4 = arith.constant 0 : index
    %4 = vector.load %arg3[%c0_3, %c0_4] : memref<1x128xf32, #tpu.memory_space<vmem>>, vector<1x128xf32>
    %5 = vector.broadcast %4 : vector<1x128xf32> to vector<16x128xf32>
    %6 = arith.addf %3, %5 : vector<16x128xf32>
    %cst_5 = arith.constant 0.000000e+00 : f32
    %7 = vector.broadcast %cst_5 : f32 to vector<16x128xf32>
    %8 = arith.maximumf %6, %7 : vector<16x128xf32>
    %9 = arith.truncf %8 : vector<16x128xf32> to vector<16x128xbf16>
    %c0_6 = arith.constant 0 : index
    %c0_7 = arith.constant 0 : index
    %10 = vector.load %arg4[%c0_6, %c0_7] : memref<128x32xbf16, #tpu.memory_space<vmem>>, vector<128x32xbf16>
    %cst_8 = arith.constant dense<0.000000e+00> : vector<16x32xf32>
    %11 = tpu.matmul %9, %10, %cst_8 {dimension_numbers = #tpu.dot_dimension_numbers<[1], [0], [0], [1], [0, 0, 1, 1], [], []>} : vector<16x128xbf16>, vector<128x32xbf16>, vector<16x32xf32> -> vector<16x32xf32>
    %c0_9 = arith.constant 0 : index
    %c0_10 = arith.constant 0 : index
    %12 = vector.load %arg5[%c0_9, %c0_10] : memref<1x32xf32, #tpu.memory_space<vmem>>, vector<1x32xf32>
    %13 = vector.broadcast %12 : vector<1x32xf32> to vector<16x32xf32>
    %14 = arith.addf %11, %13 : vector<16x32xf32>
    %15 = arith.addf %14, %0 : vector<16x32xf32>
    %cst_11 = arith.constant dense<0.000000e+00> : vector<16xf32>
    %16 = vector.multi_reduction <add>, %15, %cst_11 [1] : vector<16x32xf32> to vector<16xf32>
    %17 = vector.shape_cast %16 : vector<16xf32> to vector<16x1xf32>
    %cst_12 = arith.constant 3.200000e+01 : f32
    %18 = vector.broadcast %cst_12 : f32 to vector<16x1xf32>
    %19 = arith.divf %17, %18 : vector<16x1xf32>
    %20 = vector.broadcast %19 : vector<16x1xf32> to vector<16x32xf32>
    %21 = arith.subf %15, %20 : vector<16x32xf32>
    %22 = arith.mulf %21, %21 : vector<16x32xf32>
    %cst_13 = arith.constant dense<0.000000e+00> : vector<16xf32>
    %23 = vector.multi_reduction <add>, %22, %cst_13 [1] : vector<16x32xf32> to vector<16xf32>
    %24 = vector.shape_cast %23 : vector<16xf32> to vector<16x1xf32>
    %cst_14 = arith.constant 3.200000e+01 : f32
    %25 = vector.broadcast %cst_14 : f32 to vector<16x1xf32>
    %26 = arith.divf %24, %25 : vector<16x1xf32>
    %cst_15 = arith.constant 9.99999974E-6 : f32
    %27 = vector.broadcast %cst_15 : f32 to vector<16x1xf32>
    %28 = arith.addf %26, %27 : vector<16x1xf32>
    %29 = math.rsqrt %28 : vector<16x1xf32>
    %30 = vector.broadcast %29 : vector<16x1xf32> to vector<16x32xf32>
    %31 = arith.mulf %21, %30 : vector<16x32xf32>
    %c0_16 = arith.constant 0 : index
    %c0_17 = arith.constant 0 : index
    %32 = vector.load %arg6[%c0_16, %c0_17] : memref<1x32xf32, #tpu.memory_space<vmem>>, vector<1x32xf32>
    %33 = vector.broadcast %32 : vector<1x32xf32> to vector<16x32xf32>
    %34 = arith.mulf %31, %33 : vector<16x32xf32>
    %c0_18 = arith.constant 0 : index
    %c0_19 = arith.constant 0 : index
    %35 = vector.load %arg7[%c0_18, %c0_19] : memref<1x32xf32, #tpu.memory_space<vmem>>, vector<1x32xf32>
    %36 = vector.broadcast %35 : vector<1x32xf32> to vector<16x32xf32>
    %37 = arith.addf %34, %36 : vector<16x32xf32>
    %c0_20 = arith.constant 0 : index
    %c0_21 = arith.constant 0 : index
    %38 = vector.load %arg8[%c0_20, %c0_21] : memref<16x32xf32, #tpu.memory_space<vmem>>, vector<16x32xf32>
    tpu.vector_store %arg8[%c0_20, %c0_21], %37 {strides = array<i32>} : memref<16x32xf32, #tpu.memory_space<vmem>>, vector<16x32xf32>,
    return
  }
  func.func @transform_0(%arg0: i32) -> (i32, i32) {
    %c0_i32 = arith.constant 0 : i32
    %c0_i32_0 = arith.constant 0 : i32
    return %arg0, %c0_i32 : i32, i32
  }
  func.func @transform_1(%arg0: i32) -> (i32, i32) {
    %c0_i32 = arith.constant 0 : i32
    %c0_i32_0 = arith.constant 0 : i32
    %c0_i32_1 = arith.constant 0 : i32
    return %c0_i32, %c0_i32_0 : i32, i32
  }
  func.func @transform_2(%arg0: i32) -> (i32, i32) {
    %c0_i32 = arith.constant 0 : i32
    %c0_i32_0 = arith.constant 0 : i32
    %c0_i32_1 = arith.constant 0 : i32
    return %c0_i32, %c0_i32_0 : i32, i32
  }
  func.func @transform_3(%arg0: i32) -> (i32, i32) {
    %c0_i32 = arith.constant 0 : i32
    %c0_i32_0 = arith.constant 0 : i32
    %c0_i32_1 = arith.constant 0 : i32
    return %c0_i32, %c0_i32_0 : i32, i32
  }
  func.func @transform_4(%arg0: i32) -> (i32, i32) {
    %c0_i32 = arith.constant 0 : i32
    %c0_i32_0 = arith.constant 0 : i32
    %c0_i32_1 = arith.constant 0 : i32
    return %c0_i32, %c0_i32_0 : i32, i32
  }
  func.func @transform_5(%arg0: i32) -> (i32, i32) {
    %c0_i32 = arith.constant 0 : i32
    %c0_i32_0 = arith.constant 0 : i32
    %c0_i32_1 = arith.constant 0 : i32
    return %c0_i32, %c0_i32_0 : i32, i32
  }
  func.func @transform_6(%arg0: i32) -> (i32, i32) {
    %c0_i32 = arith.constant 0 : i32
    %c0_i32_0 = arith.constant 0 : i32
    %c0_i32_1 = arith.constant 0 : i32
    return %c0_i32, %c0_i32_0 : i32, i32
  }
  func.func @transform_7(%arg0: i32) -> (i32, i32) {
    %c0_i32 = arith.constant 0 : i32
    %c0_i32_0 = arith.constant 0 : i32
    return %arg0, %c0_i32 : i32, i32
  }
}

</mosaic_0001>

<llo_original>
// kernel: cross_attention_decoder_layer.5
$region0: #{cross_attention_decoder_layer.5}
  #allocation0 [shape = 'u32[]', space=smem, size = 0x4, offset = 0x4, fixed_abs, tag = 'smem constant byte address 0x4 - core index']
  #allocation1 [shape = 'u32[144,128]{1,0:T(1,128)}', space=vmem, size = 0x12000, scoped, tag = 'internal scratch']
  %s0 = inlined_call_operand.vmem [shape: f32[16,32], index: 0, kind: input, shape index: {}]
  %s1 = inlined_call_operand.vmem [shape: bf16[32,128], index: 1, kind: input, shape index: {}]
  %s2 = inlined_call_operand.vmem [shape: f32[1,128], index: 2, kind: input, shape index: {}]
  %s3 = inlined_call_operand.vmem [shape: bf16[128,32], index: 3, kind: input, shape index: {}]
  %s4 = inlined_call_operand.vmem [shape: f32[1,32], index: 4, kind: input, shape index: {}]
  %s5 = inlined_call_operand.vmem [shape: f32[1,32], index: 5, kind: input, shape index: {}]
  %s6 = inlined_call_operand.vmem [shape: f32[1,32], index: 6, kind: input, shape index: {}]
  %s7 = inlined_call_operand.hbm [shape: f32[16,32], index: 7, kind: output, shape index: {}]
  %s8 = sld [smem:[#allocation0]]
  $region38: #{cross_attention_decoder_layer.5} parent=0
    _
  %s10 = ssub.s32 1, %s8
  %s11 = scalar_select 0, %s10, %s8
  $region1: #{cross_attention_decoder_layer.5} parent=0
    #allocation2 [shape = 'u8[8192]{0}', space=vmem, size = 0x2000, scoped, tag = 'output window, operand 0, single buffered']
    #allocation3 [shape = 's32[1]{0}', space=sflag, size = 0x4, scoped, tag = 'scoped memory for cross_attention_decoder_layer.5']
    %12 = vsyncpa [#allocation3], 0
    // Predicated region
    $region2: #{cross_attention_decoder_layer.5} parent=1 // pred_check
      _
    $region3: #{cross_attention_decoder_layer.5} parent=1 // pred_check_branch
      %14 = sbr.rel (0) target = $region5
    $region4: #{cross_attention_decoder_layer.5} parent=1 // pred_region
      _
    $region5: #{cross_attention_decoder_layer.5} parent=1 // pred_fallthru
      _
    // Predicated region
    $region6: #{cross_attention_decoder_layer.5} parent=1 // pred_check
      _
    $region7: #{cross_attention_decoder_layer.5} parent=1 // pred_check_branch
      %16 = sbr.rel (0) target = $region9
    $region8: #{cross_attention_decoder_layer.5} parent=1 // pred_region
      _
    $region9: #{cross_attention_decoder_layer.5} parent=1 // pred_fallthru
      _
    // Predicated region
    $region10: #{cross_attention_decoder_layer.5} parent=1 // pred_check
      _
    $region11: #{cross_attention_decoder_layer.5} parent=1 // pred_check_branch
      %18 = sbr.rel (0) target = $region13
    $region12: #{cross_attention_decoder_layer.5} parent=1 // pred_region
      _
    $region13: #{cross_attention_decoder_layer.5} parent=1 // pred_fallthru
      _
    // Predicated region
    $region14: #{cross_attention_decoder_layer.5} parent=1 // pred_check
      _
    $region15: #{cross_attention_decoder_layer.5} parent=1 // pred_check_branch
      %20 = sbr.rel (0) target = $region17
    $region16: #{cross_attention_decoder_layer.5} parent=1 // pred_region
      _
    $region17: #{cross_attention_decoder_layer.5} parent=1 // pred_fallthru
      _
    // Predicated region
    $region18: #{cross_attention_decoder_layer.5} parent=1 // pred_check
      _
    $region19: #{cross_attention_decoder_layer.5} parent=1 // pred_check_branch
      %22 = sbr.rel (0) target = $region21
    $region20: #{cross_attention_decoder_layer.5} parent=1 // pred_region
      _
    $region21: #{cross_attention_decoder_layer.5} parent=1 // pred_fallthru
      _
    // Predicated region
    $region22: #{cross_attention_decoder_layer.5} parent=1 // pred_check
      _
    $region23: #{cross_attention_decoder_layer.5} parent=1 // pred_check_branch
      %24 = sbr.rel (0) target = $region25
    $region24: #{cross_attention_decoder_layer.5} parent=1 // pred_region
      _
    $region25: #{cross_attention_decoder_layer.5} parent=1 // pred_fallthru
      _
    // Predicated region
    $region26: #{cross_attention_decoder_layer.5} parent=1 // pred_check
      _
    $region27: #{cross_attention_decoder_layer.5} parent=1 // pred_check_branch
      %26 = sbr.rel (0) target = $region29
    $region28: #{cross_attention_decoder_layer.5} parent=1 // pred_region
      _
    $region29: #{cross_attention_decoder_layer.5} parent=1 // pred_fallthru
      _
    %v28 = vld [vmem:[%s0] sm:$0xff]
    %v29 = vld [vmem:[%s0 + $0x8] sm:$0xff]
    %v30 = vpack.c.bf16 %v29, %v28
    %v31 = vld [vmem:[%s1] sm:$0xf]
    %v32 = vld [vmem:[%s1 + $0x4] sm:$0xf]
    %v33 = vld [vmem:[%s1 + $0x8] sm:$0xf]
    %v34 = vld [vmem:[%s1 + $0xc] sm:$0xf]
    %v35 = vld [vmem:[%s2] sm:$0x1]
    %v37 = vlaneseq
    %v38 = vshrl.u32 %v37, 7
    %v39 = vsub.s32 0, %v38
    %v40 = vrot.slane %v35, %v39
    %v46 = vunpack.c.l.b16 %v31
    %v47 = vunpack.c.l.b16 %v32
    %v48 = vunpack.c.l.b16 %v33
    %v49 = vunpack.c.l.b16 %v34
    %v50 = vpack.c.b16 %v47, %v46
    %v51 = vpack.c.b16 %v49, %v48
    %vm54 = vcmask 261120
    %v56 = vsel %vm54, %v30, 0
    %58 = vmatprep.subr.bf16.mxu0 0
    %59 = vmatpush1.bf16.msra.mxu0 %v50
    %60 = vmatprep.subr.bf16.mxu0 0
    %61 = vmatpush1.bf16.msra.mxu0 %v51
    %62 = vmatprep.subr.bf16.mxu0 0
    %63 = vmatpush1.bf16.msra.mxu0 0
    %64 = vmatprep.subr.bf16.mxu0 0
    %65 = vmatpush1.bf16.msra.mxu0 0
    %66 = vmatprep.subr.bf16.mxu0 0
    %67 = vmatpush1.bf16.msra.mxu0 0
    %68 = vmatprep.subr.bf16.mxu0 0
    %69 = vmatpush1.bf16.msra.mxu0 0
    %70 = vmatprep.subr.bf16.mxu0 0
    %71 = vmatpush1.bf16.msra.mxu0 0
    %72 = vmatprep.subr.bf16.mxu0 0
    %73 = vmatpush1.bf16.msra.mxu0 0
    %74 = vmatprep.subr.bf16.mxu0 0
    %75 = vmatpush1.bf16.msra.mxu0 0
    %76 = vmatprep.subr.bf16.mxu0 0
    %77 = vmatpush1.bf16.msra.mxu0 0
    %78 = vmatprep.subr.bf16.mxu0 0
    %79 = vmatpush1.bf16.msra.mxu0 0
    %80 = vmatprep.subr.bf16.mxu0 0
    %81 = vmatpush1.bf16.msra.mxu0 0
    %82 = vmatprep.subr.bf16.mxu0 0
    %83 = vmatpush1.bf16.msra.mxu0 0
    %84 = vmatprep.subr.bf16.mxu0 0
    %85 = vmatpush1.bf16.msra.mxu0 0
    %86 = vmatprep.subr.bf16.mxu0 0
    %87 = vmatpush1.bf16.msra.mxu0 0
    %88 = vmatprep.subr.bf16.mxu0 0
    %89 = vmatpush1.bf16.msra.mxu0 0
    %90 = vmatprep.mubr.bf16.mxu0 0
    %91 = vmatmul.mubr.bf16.gmra.mrb[0].mxu0 %v56
    %v92 = vpop.f32.mrb[0].mxu0
    %v93 = vadd.f32 %v40, %v92
    %v94 = vpop.f32.mrb[0].mxu0
    %v95 = vpop.f32.mrb[0].mxu0
    %v96 = vadd.f32 %v40, %v95
    %v97 = vpop.f32.mrb[0].mxu0
    %98 = vdwg.mxu0
    %v99 = vmax.f32 %v93, 0.0
    %v100 = vmax.f32 %v96, 0.0
    %v101 = vpack.c.bf16 %v100, %v99
    %v102 = vld [vmem:[%s3] sm:$0xf]
    %v103 = vld [vmem:[%s3 + $0x4] sm:$0xf]
    %v104 = vld [vmem:[%s3 + $0x8] sm:$0xf]
    %v105 = vld [vmem:[%s3 + $0xc] sm:$0xf]
    %v106 = vld [vmem:[%s3 + $0x10] sm:$0xf]
    %v107 = vld [vmem:[%s3 + $0x14] sm:$0xf]
    %v108 = vld [vmem:[%s3 + $0x18] sm:$0xf]
    %v109 = vld [vmem:[%s3 + $0x1c] sm:$0xf]
    %v110 = vld [vmem:[%s3 + $0x20] sm:$0xf]
    %v111 = vld [vmem:[%s3 + $0x24] sm:$0xf]
    %v112 = vld [vmem:[%s3 + $0x28] sm:$0xf]
    %v113 = vld [vmem:[%s3 + $0x2c] sm:$0xf]
    %v114 = vld [vmem:[%s3 + $0x30] sm:$0xf]
    %v115 = vld [vmem:[%s3 + $0x34] sm:$0xf]
    %v116 = vld [vmem:[%s3 + $0x38] sm:$0xf]
    %v117 = vld [vmem:[%s3 + $0x3c] sm:$0xf]
    %v118 = vld [vmem:[%s4] sm:$0x1]
    %v120 = vlaneseq
    %v121 = vshrl.u32 %v120, 7
    %v122 = vsub.s32 0, %v121
    %v123 = vrot.slane %v118, %v122
    %v141 = vunpack.c.l.b16 %v102
    %v142 = vunpack.c.l.b16 %v103
    %v143 = vunpack.c.l.b16 %v104
    %v144 = vunpack.c.l.b16 %v105
    %v145 = vunpack.c.l.b16 %v106
    %v146 = vunpack.c.l.b16 %v107
    %v147 = vunpack.c.l.b16 %v108
    %v148 = vunpack.c.l.b16 %v109
    %v149 = vunpack.c.l.b16 %v110
    %v150 = vunpack.c.l.b16 %v111
    %v151 = vunpack.c.l.b16 %v112
    %v152 = vunpack.c.l.b16 %v113
    %v153 = vunpack.c.l.b16 %v114
    %v154 = vunpack.c.l.b16 %v115
    %v155 = vunpack.c.l.b16 %v116
    %v156 = vunpack.c.l.b16 %v117
    %v157 = vpack.c.b16 %v142, %v141
    %v158 = vpack.c.b16 %v144, %v143
    %v159 = vpack.c.b16 %v146, %v145
    %v160 = vpack.c.b16 %v148, %v147
    %v161 = vpack.c.b16 %v150, %v149
    %v162 = vpack.c.b16 %v152, %v151
    %v163 = vpack.c.b16 %v154, %v153
    %v164 = vpack.c.b16 %v156, %v155
    %173 = vmatprep.subr.bf16.mxu0 0
    %174 = vmatpush1.bf16.msra.mxu0 %v157
    %175 = vmatprep.subr.bf16.mxu0 0
    %176 = vmatpush1.bf16.msra.mxu0 %v158
    %177 = vmatprep.subr.bf16.mxu0 0
    %178 = vmatpush1.bf16.msra.mxu0 %v159
    %179 = vmatprep.subr.bf16.mxu0 0
    %180 = vmatpush1.bf16.msra.mxu0 %v160
    %181 = vmatprep.subr.bf16.mxu0 0
    %182 = vmatpush1.bf16.msra.mxu0 %v161
    %183 = vmatprep.subr.bf16.mxu0 0
    %184 = vmatpush1.bf16.msra.mxu0 %v162
    %185 = vmatprep.subr.bf16.mxu0 0
    %186 = vmatpush1.bf16.msra.mxu0 %v163
    %187 = vmatprep.subr.bf16.mxu0 0
    %188 = vmatpush1.bf16.msra.mxu0 %v164
    %189 = vmatprep.subr.bf16.mxu0 0
    %190 = vmatpush1.bf16.msra.mxu0 0
    %191 = vmatprep.subr.bf16.mxu0 0
    %192 = vmatpush1.bf16.msra.mxu0 0
    %193 = vmatprep.subr.bf16.mxu0 0
    %194 = vmatpush1.bf16.msra.mxu0 0
    %195 = vmatprep.subr.bf16.mxu0 0
    %196 = vmatpush1.bf16.msra.mxu0 0
    %197 = vmatprep.subr.bf16.mxu0 0
    %198 = vmatpush1.bf16.msra.mxu0 0
    %199 = vmatprep.subr.bf16.mxu0 0
    %200 = vmatpush1.bf16.msra.mxu0 0
    %201 = vmatprep.subr.bf16.mxu0 0
    %202 = vmatpush1.bf16.msra.mxu0 0
    %203 = vmatprep.subr.bf16.mxu0 0
    %204 = vmatpush1.bf16.msra.mxu0 0
    %205 = vmatprep.mubr.bf16.mxu0 0
    %206 = vmatmul.mubr.bf16.gmra.mrb[0].mxu0 %v101
    %v207 = vpop.f32.mrb[0].mxu0
    %v208 = vadd.f32 %v123, %v207
    %v209 = vpop.f32.mrb[0].mxu0
    %v210 = vpop.f32.mrb[0].mxu0
    %v211 = vadd.f32 %v123, %v210
    %v212 = vpop.f32.mrb[0].mxu0
    %213 = vdwg.mxu0
    %v214 = vadd.f32 %v208, %v28
    %v215 = vadd.f32 %v211, %v29
    %v216 = vsel %vm54, %v214, 0.0
    %217 = vadd.xlane.f32.xlu0 %v216
    %v218 = vpop.xlane.xlu0 %217
    %v219 = vsel %vm54, %v215, 0.0
    %220 = vadd.xlane.f32.xlu0 %v219
    %v221 = vpop.xlane.xlu0 %220
    %v222 = vrcp.pop 32.0
    %v223 = vmul.f32 %v218, %v222
    %v224 = vmul.f32 %v221, %v222
    %v225 = vsub.f32 %v214, %v223
    %v226 = vsub.f32 %v215, %v224
    %v227 = vmul.f32 %v225, %v225
    %v228 = vmul.f32 %v226, %v226
    %v229 = vsel %vm54, %v227, 0.0
    %230 = vadd.xlane.f32.xlu0 %v229
    %v231 = vpop.xlane.xlu0 %230
    %v232 = vsel %vm54, %v228, 0.0
    %233 = vadd.xlane.f32.xlu0 %v232
    %v234 = vpop.xlane.xlu0 %233
    %v235 = vmul.f32 %v231, %v222
    %v236 = vmul.f32 %v234, %v222
    %v237 = vadd.f32 %v235, 1e-05
    %v238 = vadd.f32 %v236, 1e-05
    %v239 = vrsqrt.pop %v237
    %v240 = vrsqrt.pop %v238
    %v241 = vmul.f32 %v225, %v239
    %v242 = vmul.f32 %v226, %v240
    %v243 = vld [vmem:[%s5] sm:$0x1]
    %v245 = vlaneseq
    %v246 = vshrl.u32 %v245, 7
    %v247 = vsub.s32 0, %v246
    %v248 = vrot.slane %v243, %v247
    %v250 = vmul.f32 %v241, %v248
    %v251 = vmul.f32 %v242, %v248
    %v252 = vld [vmem:[%s6] sm:$0x1]
    %v254 = vlaneseq
    %v255 = vshrl.u32 %v254, 7
    %v256 = vsub.s32 0, %v255
    %v257 = vrot.slane %v252, %v256
    %v259 = vadd.f32 %v250, %v257
    %v260 = vadd.f32 %v251, %v257
    %261 = vst.msk [vmem:[#allocation2] sm:$0xff] %vm54, %v259
    %262 = vst.msk [vmem:[#allocation2 + $0x8] sm:$0xff] %vm54, %v260
    // Predicated region
    $region30: #{cross_attention_decoder_layer.5} parent=1 // pred_check
      _
    $region31: #{cross_attention_decoder_layer.5} parent=1 // pred_check_branch
      %264 = sbr.rel (0) target = $region33
    $region32: #{cross_attention_decoder_layer.5} parent=1 // pred_region
      %s266 = ssub.s32 256, 256
      %267 = vsyncadd [#allocation3], %s266
      %s268 = sshll.u32 [#allocation2], 4
      %s269 = int_to_ptr.vmem [resolvable:$true] %s268
      %274 = dma.vmem_to_hbm [thread:$0]  %s269, 256, %s7, [#allocation3], 128, 128, 8
    $region33: #{cross_attention_decoder_layer.5} parent=1 // pred_fallthru
      _
    // Predicated region
    $region34: #{cross_attention_decoder_layer.5} parent=1 // pred_check
      _
    $region35: #{cross_attention_decoder_layer.5} parent=1 // pred_check_branch
      %276 = sbr.rel (0) target = $region37
    $region36: #{cross_attention_decoder_layer.5} parent=1 // pred_region
      %277 = dma.done [#allocation3], 256
    $region37: #{cross_attention_decoder_layer.5} parent=1 // pred_fallthru
      _
    %278 = vsyncpa [#allocation3], 1

// kernel: cross_attention_decoder_layer.4
$region0: #{cross_attention_decoder_layer.4}
  #allocation0 [shape = 'u32[]', space=smem, size = 0x4, offset = 0x4, fixed_abs, tag = 'smem constant byte address 0x4 - core index']
  #allocation1 [shape = 'u32[144,128]{1,0:T(1,128)}', space=vmem, size = 0x12000, scoped, tag = 'internal scratch']
  #allocation2 [shape = 'bf16[32,16]{1,0:T(16,128)(2,1)}', space=vmem, size = 0x2000, scoped, tag = 'scratch operand']
  #allocation3 [shape = 'bf16[16,32]{1,0:T(16,128)(2,1)}', space=vmem, size = 0x1000, scoped, tag = 'scratch operand']
  %s0 = inlined_call_operand.vmem [shape: f32[2,8,32], index: 0, kind: input, shape index: {}]
  %s1 = inlined_call_operand.vmem [shape: f32[2,8,32], index: 1, kind: input, shape index: {}]
  %s2 = inlined_call_operand.vmem [shape: f32[2,8,32], index: 2, kind: input, shape index: {}]
  %s3 = inlined_call_operand.vmem [shape: bf16[2,16,32], index: 3, kind: input, shape index: {}]
  %s4 = inlined_call_operand.vmem [shape: bf16[2,16,32], index: 4, kind: input, shape index: {}]
  %s5 = inlined_call_operand.vmem [shape: bf16[32,32], index: 5, kind: input, shape index: {}]
  %s6 = inlined_call_operand.vmem [shape: f32[1,32], index: 6, kind: input, shape index: {}]
  %s7 = inlined_call_operand.vmem [shape: bf16[32,32], index: 7, kind: input, shape index: {}]
  %s8 = inlined_call_operand.vmem [shape: f32[1,32], index: 8, kind: input, shape index: {}]
  %s9 = inlined_call_operand.vmem [shape: bf16[32,32], index: 9, kind: input, shape index: {}]
  %s10 = inlined_call_operand.vmem [shape: f32[1,32], index: 10, kind: input, shape index: {}]
  %s11 = inlined_call_operand.vmem [shape: bf16[32,32], index: 11, kind: input, shape index: {}]
  %s12 = inlined_call_operand.vmem [shape: f32[1,32], index: 12, kind: input, shape index: {}]
  %s13 = inlined_call_operand.vmem [shape: f32[1,32], index: 13, kind: input, shape index: {}]
  %s14 = inlined_call_operand.vmem [shape: f32[1,32], index: 14, kind: input, shape index: {}]
  %s15 = inlined_call_operand.vmem [shape: f32[2,8,32], index: 15, kind: output, shape index: {}]
  %s16 = sld [smem:[#allocation0]]
  $region97: #{cross_attention_decoder_layer.4} parent=0
    _
  %s18 = ssub.s32 1, %s16
  %s19 = scalar_select 0, %s18, %s16
  loop: start=0, step=1, limit=4
  $region2: #{cross_attention_decoder_layer.4} parent=0 // loop_pre_header
    _
  $region3: #{cross_attention_decoder_layer.4} parent=0 // loop_header
    %s21 = sphi 0, %s25
    %p22 = scmp.ge.s32.totalorder %s21, 4
    %s28 = sphi 0, %s40
    %s29 = sphi 0, %s36
    %s30 = sphi 0, %s28
    %s31 = sphi 0, %s29
    %s32 = sphi 0, %s30
    %s33 = sphi 0, %s31
    %s45 = sphi 0, %s47
    %s48 = sphi 0, %s45
    %s49 = sphi 0, %s48
    %s65 = sphi 0, %s49
    %s73 = sphi 0, %s75
    %s76 = sphi 0, %s73
    %s77 = sphi 0, %s76
    %s93 = sphi 0, %s77
    %s101 = sphi 0, %s103
    %s104 = sphi 0, %s101
    %s105 = sphi 0, %s104
    %s121 = sphi 0, %s105
    %s127 = sphi 0, %s129
    %s130 = sphi 0, %s127
    %s131 = sphi 0, %s130
    %s147 = sphi 0, %s131
    %s153 = sphi 0, %s155
    %s156 = sphi 0, %s153
    %s157 = sphi 0, %s156
    %s173 = sphi 0, %s157
    %s177 = sphi 0, %s177
    %s179 = sphi 0, %s177
    %s180 = sphi 0, %s179
    %s194 = sphi 0, %s180
    %s198 = sphi 0, %s198
    %s200 = sphi 0, %s198
    %s201 = sphi 0, %s200
    %s215 = sphi 0, %s201
    %s219 = sphi 0, %s219
    %s221 = sphi 0, %s219
    %s222 = sphi 0, %s221
    %s236 = sphi 0, %s222
    %s240 = sphi 0, %s240
    %s242 = sphi 0, %s240
    %s243 = sphi 0, %s242
    %s257 = sphi 0, %s243
    %s261 = sphi 0, %s261
    %s263 = sphi 0, %s261
    %s264 = sphi 0, %s263
    %s278 = sphi 0, %s264
    %s282 = sphi 0, %s282
    %s284 = sphi 0, %s282
    %s285 = sphi 0, %s284
    %s299 = sphi 0, %s285
    %s303 = sphi 0, %s303
    %s305 = sphi 0, %s303
    %s306 = sphi 0, %s305
    %s320 = sphi 0, %s306
    %s324 = sphi 0, %s324
    %s326 = sphi 0, %s324
    %s327 = sphi 0, %s326
    %s341 = sphi 0, %s327
    %s345 = sphi 0, %s345
    %s347 = sphi 0, %s345
    %s348 = sphi 0, %s347
    %s362 = sphi 0, %s348
    %s366 = sphi 0, %s366
    %s368 = sphi 0, %s366
    %s369 = sphi 0, %s368
    %s383 = sphi 0, %s369
    %s391 = sphi 0, %s393
    %s394 = sphi 0, %s391
    %s395 = sphi 0, %s394
    %s411 = sphi 0, %s395
  $region4: #{cross_attention_decoder_layer.4} parent=0 // loop_header_branch
    %24 = sbr.rel (%p22) target = $region8
  $region5: #{cross_attention_decoder_layer.4} parent=0 // loop_body
    %s26 = ssub.s32 %s21, 1
    %s27 = ssub.s32 %s21, 2
    %s34 = sadd.s32 1, %s29
    %p35 = scmp.ge.s32.totalorder %s34, 1
    %s36 = scalar_select %p35, 0, %s34
    %s37 = sadd.s32 1, %s28
    %s38 = scalar_select %p35, %s37, %s28
    %p39 = scmp.ge.s32.totalorder %s38, 2
    %s40 = scalar_select %p39, 0, %s38
    %s41 = ssub.s32 %s28, %s40
    %s42 = ssub.s32 %s29, %s36
    %s43 = sor.u32 %s41, %s42
    %p44 = scmp.eq.s32.totalorder %s43, 0
    %s46 = sadd.s32 %s45, 1
    %s47 = scalar_select %p44, %s45, %s46
    %p50 = pneg %p44
    %p51 = scmp.eq.s32.totalorder %s21, 1
    %p52 = por %p50, %p51
    %p53 = scmp.ne.s32.totalorder %s45, %s48
    %p54 = scmp.eq.s32.totalorder %s21, 0
    %p55 = por %p53, %p54
    %p56 = scmp.ne.s32.totalorder %s45, %s48
    %p57 = scmp.eq.s32.totalorder %s26, 1
    %p58 = por %p56, %p57
    %p59 = scmp.ne.s32.totalorder %s48, %s49
    %p60 = scmp.eq.s32.totalorder %s26, 0
    %p61 = por %p59, %p60
    %p62 = scmp.ne.s32.totalorder %s48, %s49
    %p63 = scmp.eq.s32.totalorder %s27, 1
    %p64 = por %p62, %p63
    %p66 = scmp.ne.s32.totalorder %s49, %s65
    %p67 = scmp.eq.s32.totalorder %s27, 0
    %p68 = por %p66, %p67
    %s69 = ssub.s32 %s28, %s40
    %s70 = ssub.s32 %s29, %s36
    %s71 = sor.u32 %s69, %s70
    %p72 = scmp.eq.s32.totalorder %s71, 0
    %s74 = sadd.s32 %s73, 1
    %s75 = scalar_select %p72, %s73, %s74
    %p78 = pneg %p72
    %p79 = scmp.eq.s32.totalorder %s21, 1
    %p80 = por %p78, %p79
    %p81 = scmp.ne.s32.totalorder %s73, %s76
    %p82 = scmp.eq.s32.totalorder %s21, 0
    %p83 = por %p81, %p82
    %p84 = scmp.ne.s32.totalorder %s73, %s76
    %p85 = scmp.eq.s32.totalorder %s26, 1
    %p86 = por %p84, %p85
    %p87 = scmp.ne.s32.totalorder %s76, %s77
    %p88 = scmp.eq.s32.totalorder %s26, 0
    %p89 = por %p87, %p88
    %p90 = scmp.ne.s32.totalorder %s76, %s77
    %p91 = scmp.eq.s32.totalorder %s27, 1
    %p92 = por %p90, %p91
    %p94 = scmp.ne.s32.totalorder %s77, %s93
    %p95 = scmp.eq.s32.totalorder %s27, 0
    %p96 = por %p94, %p95
    %s97 = ssub.s32 %s28, %s40
    %s98 = ssub.s32 %s29, %s36
    %s99 = sor.u32 %s97, %s98
    %p100 = scmp.eq.s32.totalorder %s99, 0
    %s102 = sadd.s32 %s101, 1
    %s103 = scalar_select %p100, %s101, %s102
    %p106 = pneg %p100
    %p107 = scmp.eq.s32.totalorder %s21, 1
    %p108 = por %p106, %p107
    %p109 = scmp.ne.s32.totalorder %s101, %s104
    %p110 = scmp.eq.s32.totalorder %s21, 0
    %p111 = por %p109, %p110
    %p112 = scmp.ne.s32.totalorder %s101, %s104
    %p113 = scmp.eq.s32.totalorder %s26, 1
    %p114 = por %p112, %p113
    %p115 = scmp.ne.s32.totalorder %s104, %s105
    %p116 = scmp.eq.s32.totalorder %s26, 0
    %p117 = por %p115, %p116
    %p118 = scmp.ne.s32.totalorder %s104, %s105
    %p119 = scmp.eq.s32.totalorder %s27, 1
    %p120 = por %p118, %p119
    %p122 = scmp.ne.s32.totalorder %s105, %s121
    %p123 = scmp.eq.s32.totalorder %s27, 0
    %p124 = por %p122, %p123
    %s125 = ssub.s32 %s28, %s40
    %p126 = scmp.eq.s32.totalorder %s125, 0
    %s128 = sadd.s32 %s127, 1
    %s129 = scalar_select %p126, %s127, %s128
    %p132 = pneg %p126
    %p133 = scmp.eq.s32.totalorder %s21, 1
    %p134 = por %p132, %p133
    %p135 = scmp.ne.s32.totalorder %s127, %s130
    %p136 = scmp.eq.s32.totalorder %s21, 0
    %p137 = por %p135, %p136
    %p138 = scmp.ne.s32.totalorder %s127, %s130
    %p139 = scmp.eq.s32.totalorder %s26, 1
    %p140 = por %p138, %p139
    %p141 = scmp.ne.s32.totalorder %s130, %s131
    %p142 = scmp.eq.s32.totalorder %s26, 0
    %p143 = por %p141, %p142
    %p144 = scmp.ne.s32.totalorder %s130, %s131
    %p145 = scmp.eq.s32.totalorder %s27, 1
    %p146 = por %p144, %p145
    %p148 = scmp.ne.s32.totalorder %s131, %s147
    %p149 = scmp.eq.s32.totalorder %s27, 0
    %p150 = por %p148, %p149
    %s151 = ssub.s32 %s28, %s40
    %p152 = scmp.eq.s32.totalorder %s151, 0
    %s154 = sadd.s32 %s153, 1
    %s155 = scalar_select %p152, %s153, %s154
    %p158 = pneg %p152
    %p159 = scmp.eq.s32.totalorder %s21, 1
    %p160 = por %p158, %p159
    %p161 = scmp.ne.s32.totalorder %s153, %s156
    %p162 = scmp.eq.s32.totalorder %s21, 0
    %p163 = por %p161, %p162
    %p164 = scmp.ne.s32.totalorder %s153, %s156
    %p165 = scmp.eq.s32.totalorder %s26, 1
    %p166 = por %p164, %p165
    %p167 = scmp.ne.s32.totalorder %s156, %s157
    %p168 = scmp.eq.s32.totalorder %s26, 0
    %p169 = por %p167, %p168
    %p170 = scmp.ne.s32.totalorder %s156, %s157
    %p171 = scmp.eq.s32.totalorder %s27, 1
    %p172 = por %p170, %p171
    %p174 = scmp.ne.s32.totalorder %s157, %s173
    %p175 = scmp.eq.s32.totalorder %s27, 0
    %p176 = por %p174, %p175
    %s178 = sadd.s32 %s177, 1
    %p181 = scmp.eq.s32.totalorder %s21, 1
    %p182 = scmp.ne.s32.totalorder %s177, %s179
    %p183 = scmp.eq.s32.totalorder %s21, 0
    %p184 = por %p182, %p183
    %p185 = scmp.ne.s32.totalorder %s177, %s179
    %p186 = scmp.eq.s32.totalorder %s26, 1
    %p187 = por %p185, %p186
    %p188 = scmp.ne.s32.totalorder %s179, %s180
    %p189 = scmp.eq.s32.totalorder %s26, 0
    %p190 = por %p188, %p189
    %p191 = scmp.ne.s32.totalorder %s179, %s180
    %p192 = scmp.eq.s32.totalorder %s27, 1
    %p193 = por %p191, %p192
    %p195 = scmp.ne.s32.totalorder %s180, %s194
    %p196 = scmp.eq.s32.totalorder %s27, 0
    %p197 = por %p195, %p196
    %s199 = sadd.s32 %s198, 1
    %p202 = scmp.eq.s32.totalorder %s21, 1
    %p203 = scmp.ne.s32.totalorder %s198, %s200
    %p204 = scmp.eq.s32.totalorder %s21, 0
    %p205 = por %p203, %p204
    %p206 = scmp.ne.s32.totalorder %s198, %s200
    %p207 = scmp.eq.s32.totalorder %s26, 1
    %p208 = por %p206, %p207
    %p209 = scmp.ne.s32.totalorder %s200, %s201
    %p210 = scmp.eq.s32.totalorder %s26, 0
    %p211 = por %p209, %p210
    %p212 = scmp.ne.s32.totalorder %s200, %s201
    %p213 = scmp.eq.s32.totalorder %s27, 1
    %p214 = por %p212, %p213
    %p216 = scmp.ne.s32.totalorder %s201, %s215
    %p217 = scmp.eq.s32.totalorder %s27, 0
    %p218 = por %p216, %p217
    %s220 = sadd.s32 %s219, 1
    %p223 = scmp.eq.s32.totalorder %s21, 1
    %p224 = scmp.ne.s32.totalorder %s219, %s221
    %p225 = scmp.eq.s32.totalorder %s21, 0
    %p226 = por %p224, %p225
    %p227 = scmp.ne.s32.totalorder %s219, %s221
    %p228 = scmp.eq.s32.totalorder %s26, 1
    %p229 = por %p227, %p228
    %p230 = scmp.ne.s32.totalorder %s221, %s222
    %p231 = scmp.eq.s32.totalorder %s26, 0
    %p232 = por %p230, %p231
    %p233 = scmp.ne.s32.totalorder %s221, %s222
    %p234 = scmp.eq.s32.totalorder %s27, 1
    %p235 = por %p233, %p234
    %p237 = scmp.ne.s32.totalorder %s222, %s236
    %p238 = scmp.eq.s32.totalorder %s27, 0
    %p239 = por %p237, %p238
    %s241 = sadd.s32 %s240, 1
    %p244 = scmp.eq.s32.totalorder %s21, 1
    %p245 = scmp.ne.s32.totalorder %s240, %s242
    %p246 = scmp.eq.s32.totalorder %s21, 0
    %p247 = por %p245, %p246
    %p248 = scmp.ne.s32.totalorder %s240, %s242
    %p249 = scmp.eq.s32.totalorder %s26, 1
    %p250 = por %p248, %p249
    %p251 = scmp.ne.s32.totalorder %s242, %s243
    %p252 = scmp.eq.s32.totalorder %s26, 0
    %p253 = por %p251, %p252
    %p254 = scmp.ne.s32.totalorder %s242, %s243
    %p255 = scmp.eq.s32.totalorder %s27, 1
    %p256 = por %p254, %p255
    %p258 = scmp.ne.s32.totalorder %s243, %s257
    %p259 = scmp.eq.s32.totalorder %s27, 0
    %p260 = por %p258, %p259
    %s262 = sadd.s32 %s261, 1
    %p265 = scmp.eq.s32.totalorder %s21, 1
    %p266 = scmp.ne.s32.totalorder %s261, %s263
    %p267 = scmp.eq.s32.totalorder %s21, 0
    %p268 = por %p266, %p267
    %p269 = scmp.ne.s32.totalorder %s261, %s263
    %p270 = scmp.eq.s32.totalorder %s26, 1
    %p271 = por %p269, %p270
    %p272 = scmp.ne.s32.totalorder %s263, %s264
    %p273 = scmp.eq.s32.totalorder %s26, 0
    %p274 = por %p272, %p273
    %p275 = scmp.ne.s32.totalorder %s263, %s264
    %p276 = scmp.eq.s32.totalorder %s27, 1
    %p277 = por %p275, %p276
    %p279 = scmp.ne.s32.totalorder %s264, %s278
    %p280 = scmp.eq.s32.totalorder %s27, 0
    %p281 = por %p279, %p280
    %s283 = sadd.s32 %s282, 1
    %p286 = scmp.eq.s32.totalorder %s21, 1
    %p287 = scmp.ne.s32.totalorder %s282, %s284
    %p288 = scmp.eq.s32.totalorder %s21, 0
    %p289 = por %p287, %p288
    %p290 = scmp.ne.s32.totalorder %s282, %s284
    %p291 = scmp.eq.s32.totalorder %s26, 1
    %p292 = por %p290, %p291
    %p293 = scmp.ne.s32.totalorder %s284, %s285
    %p294 = scmp.eq.s32.totalorder %s26, 0
    %p295 = por %p293, %p294
    %p296 = scmp.ne.s32.totalorder %s284, %s285
    %p297 = scmp.eq.s32.totalorder %s27, 1
    %p298 = por %p296, %p297
    %p300 = scmp.ne.s32.totalorder %s285, %s299
    %p301 = scmp.eq.s32.totalorder %s27, 0
    %p302 = por %p300, %p301
    %s304 = sadd.s32 %s303, 1
    %p307 = scmp.eq.s32.totalorder %s21, 1
    %p308 = scmp.ne.s32.totalorder %s303, %s305
    %p309 = scmp.eq.s32.totalorder %s21, 0
    %p310 = por %p308, %p309
    %p311 = scmp.ne.s32.totalorder %s303, %s305
    %p312 = scmp.eq.s32.totalorder %s26, 1
    %p313 = por %p311, %p312
    %p314 = scmp.ne.s32.totalorder %s305, %s306
    %p315 = scmp.eq.s32.totalorder %s26, 0
    %p316 = por %p314, %p315
    %p317 = scmp.ne.s32.totalorder %s305, %s306
    %p318 = scmp.eq.s32.totalorder %s27, 1
    %p319 = por %p317, %p318
    %p321 = scmp.ne.s32.totalorder %s306, %s320
    %p322 = scmp.eq.s32.totalorder %s27, 0
    %p323 = por %p321, %p322
    %s325 = sadd.s32 %s324, 1
    %p328 = scmp.eq.s32.totalorder %s21, 1
    %p329 = scmp.ne.s32.totalorder %s324, %s326
    %p330 = scmp.eq.s32.totalorder %s21, 0
    %p331 = por %p329, %p330
    %p332 = scmp.ne.s32.totalorder %s324, %s326
    %p333 = scmp.eq.s32.totalorder %s26, 1
    %p334 = por %p332, %p333
    %p335 = scmp.ne.s32.totalorder %s326, %s327
    %p336 = scmp.eq.s32.totalorder %s26, 0
    %p337 = por %p335, %p336
    %p338 = scmp.ne.s32.totalorder %s326, %s327
    %p339 = scmp.eq.s32.totalorder %s27, 1
    %p340 = por %p338, %p339
    %p342 = scmp.ne.s32.totalorder %s327, %s341
    %p343 = scmp.eq.s32.totalorder %s27, 0
    %p344 = por %p342, %p343
    %s346 = sadd.s32 %s345, 1
    %p349 = scmp.eq.s32.totalorder %s21, 1
    %p350 = scmp.ne.s32.totalorder %s345, %s347
    %p351 = scmp.eq.s32.totalorder %s21, 0
    %p352 = por %p350, %p351
    %p353 = scmp.ne.s32.totalorder %s345, %s347
    %p354 = scmp.eq.s32.totalorder %s26, 1
    %p355 = por %p353, %p354
    %p356 = scmp.ne.s32.totalorder %s347, %s348
    %p357 = scmp.eq.s32.totalorder %s26, 0
    %p358 = por %p356, %p357
    %p359 = scmp.ne.s32.totalorder %s347, %s348
    %p360 = scmp.eq.s32.totalorder %s27, 1
    %p361 = por %p359, %p360
    %p363 = scmp.ne.s32.totalorder %s348, %s362
    %p364 = scmp.eq.s32.totalorder %s27, 0
    %p365 = por %p363, %p364
    %s367 = sadd.s32 %s366, 1
    %p370 = scmp.eq.s32.totalorder %s21, 1
    %p371 = scmp.ne.s32.totalorder %s366, %s368
    %p372 = scmp.eq.s32.totalorder %s21, 0
    %p373 = por %p371, %p372
    %p374 = scmp.ne.s32.totalorder %s366, %s368
    %p375 = scmp.eq.s32.totalorder %s26, 1
    %p376 = por %p374, %p375
    %p377 = scmp.ne.s32.totalorder %s368, %s369
    %p378 = scmp.eq.s32.totalorder %s26, 0
    %p379 = por %p377, %p378
    %p380 = scmp.ne.s32.totalorder %s368, %s369
    %p381 = scmp.eq.s32.totalorder %s27, 1
    %p382 = por %p380, %p381
    %p384 = scmp.ne.s32.totalorder %s369, %s383
    %p385 = scmp.eq.s32.totalorder %s27, 0
    %p386 = por %p384, %p385
    %s387 = ssub.s32 %s28, %s40
    %s388 = ssub.s32 %s29, %s36
    %s389 = sor.u32 %s387, %s388
    %p390 = scmp.eq.s32.totalorder %s389, 0
    %s392 = sadd.s32 %s391, 1
    %s393 = scalar_select %p390, %s391, %s392
    %p396 = pneg %p390
    %p397 = scmp.eq.s32.totalorder %s21, 1
    %p398 = por %p396, %p397
    %p399 = scmp.ne.s32.totalorder %s391, %s394
    %p400 = scmp.eq.s32.totalorder %s21, 0
    %p401 = por %p399, %p400
    %p402 = scmp.ne.s32.totalorder %s391, %s394
    %p403 = scmp.eq.s32.totalorder %s26, 1
    %p404 = por %p402, %p403
    %p405 = scmp.ne.s32.totalorder %s394, %s395
    %p406 = scmp.eq.s32.totalorder %s26, 0
    %p407 = por %p405, %p406
    %p408 = scmp.ne.s32.totalorder %s394, %s395
    %p409 = scmp.eq.s32.totalorder %s27, 1
    %p410 = por %p408, %p409
    %p412 = scmp.ne.s32.totalorder %s395, %s411
    %p413 = scmp.eq.s32.totalorder %s27, 0
    %p414 = por %p412, %p413
    %p415 = scmp.le.s32.totalorder 1, %s21
    %p416 = scmp.lt.s32.totalorder %s21, 3
    %p417 = pnand %p415, %p416
    %p418 = pneg %p417
    // Predicated region
    $region9: #{cross_attention_decoder_layer.4} parent=5 // pred_check
      _
    $region10: #{cross_attention_decoder_layer.4} parent=5 // pred_check_branch
      %420 = sbr.rel (%p417) target = $region12
    $region11: #{cross_attention_decoder_layer.4} parent=5 // pred_region
      %s421 = ssub.s32 %s21, 1
      // Predicated region
      $region13: #{cross_attention_decoder_layer.4} parent=11 // pred_check
        %p422 = pneg %p190
      $region14: #{cross_attention_decoder_layer.4} parent=11 // pred_check_branch
        %424 = sbr.rel (%p422) target = $region16
      $region15: #{cross_attention_decoder_layer.4} parent=11 // pred_region
        _
      $region16: #{cross_attention_decoder_layer.4} parent=11 // pred_fallthru
        _
      // Predicated region
      $region17: #{cross_attention_decoder_layer.4} parent=11 // pred_check
        %p425 = pneg %p211
      $region18: #{cross_attention_decoder_layer.4} parent=11 // pred_check_branch
        %427 = sbr.rel (%p425) target = $region20
      $region19: #{cross_attention_decoder_layer.4} parent=11 // pred_region
        _
      $region20: #{cross_attention_decoder_layer.4} parent=11 // pred_fallthru
        _
      // Predicated region
      $region21: #{cross_attention_decoder_layer.4} parent=11 // pred_check
        %p428 = pneg %p232
      $region22: #{cross_attention_decoder_layer.4} parent=11 // pred_check_branch
        %430 = sbr.rel (%p428) target = $region24
      $region23: #{cross_attention_decoder_layer.4} parent=11 // pred_region
        _
      $region24: #{cross_attention_decoder_layer.4} parent=11 // pred_fallthru
        _
      // Predicated region
      $region25: #{cross_attention_decoder_layer.4} parent=11 // pred_check
        %p431 = pneg %p253
      $region26: #{cross_attention_decoder_layer.4} parent=11 // pred_check_branch
        %433 = sbr.rel (%p431) target = $region28
      $region27: #{cross_attention_decoder_layer.4} parent=11 // pred_region
        _
      $region28: #{cross_attention_decoder_layer.4} parent=11 // pred_fallthru
        _
      // Predicated region
      $region29: #{cross_attention_decoder_layer.4} parent=11 // pred_check
        %p434 = pneg %p274
      $region30: #{cross_attention_decoder_layer.4} parent=11 // pred_check_branch
        %436 = sbr.rel (%p434) target = $region32
      $region31: #{cross_attention_decoder_layer.4} parent=11 // pred_region
        _
      $region32: #{cross_attention_decoder_layer.4} parent=11 // pred_fallthru
        _
      // Predicated region
      $region33: #{cross_attention_decoder_layer.4} parent=11 // pred_check
        %p437 = pneg %p295
      $region34: #{cross_attention_decoder_layer.4} parent=11 // pred_check_branch
        %439 = sbr.rel (%p437) target = $region36
      $region35: #{cross_attention_decoder_layer.4} parent=11 // pred_region
        _
      $region36: #{cross_attention_decoder_layer.4} parent=11 // pred_fallthru
        _
      // Predicated region
      $region37: #{cross_attention_decoder_layer.4} parent=11 // pred_check
        %p440 = pneg %p316
      $region38: #{cross_attention_decoder_layer.4} parent=11 // pred_check_branch
        %442 = sbr.rel (%p440) target = $region40
      $region39: #{cross_attention_decoder_layer.4} parent=11 // pred_region
        _
      $region40: #{cross_attention_decoder_layer.4} parent=11 // pred_fallthru
        _
      // Predicated region
      $region41: #{cross_attention_decoder_layer.4} parent=11 // pred_check
        %p443 = pneg %p337
      $region42: #{cross_attention_decoder_layer.4} parent=11 // pred_check_branch
        %445 = sbr.rel (%p443) target = $region44
      $region43: #{cross_attention_decoder_layer.4} parent=11 // pred_region
        _
      $region44: #{cross_attention_decoder_layer.4} parent=11 // pred_fallthru
        _
      // Predicated region
      $region45: #{cross_attention_decoder_layer.4} parent=11 // pred_check
        %p446 = pneg %p358
      $region46: #{cross_attention_decoder_layer.4} parent=11 // pred_check_branch
        %448 = sbr.rel (%p446) target = $region48
      $region47: #{cross_attention_decoder_layer.4} parent=11 // pred_region
        _
      $region48: #{cross_attention_decoder_layer.4} parent=11 // pred_fallthru
        _
      // Predicated region
      $region49: #{cross_attention_decoder_layer.4} parent=11 // pred_check
        %p449 = pneg %p379
      $region50: #{cross_attention_decoder_layer.4} parent=11 // pred_check_branch
        %451 = sbr.rel (%p449) target = $region52
      $region51: #{cross_attention_decoder_layer.4} parent=11 // pred_region
        _
      $region52: #{cross_attention_decoder_layer.4} parent=11 // pred_fallthru
        _
    $region12: #{cross_attention_decoder_layer.4} parent=5 // pred_fallthru
      _
    %p452 = scmp.lt.s32.totalorder %s21, 2
    // Predicated region
    $region53: #{cross_attention_decoder_layer.4} parent=5 // pred_check
      %p453 = pneg %p452
    $region54: #{cross_attention_decoder_layer.4} parent=5 // pred_check_branch
      %455 = sbr.rel (%p453) target = $region56
    $region55: #{cross_attention_decoder_layer.4} parent=5 // pred_region
      // Predicated region
      $region57: #{cross_attention_decoder_layer.4} parent=55 // pred_check
        %p456 = pneg %p55
      $region58: #{cross_attention_decoder_layer.4} parent=55 // pred_check_branch
        %458 = sbr.rel (%p456) target = $region60
      $region59: #{cross_attention_decoder_layer.4} parent=55 // pred_region
        %p459 = scmp.lt.s32.totalorder %s28, 1
        %s460 = scalar_select %p459, %s28, 1
        %p461 = scmp.lt.s32.totalorder %s29, 0
        %s462 = scalar_select %p461, %s29, 0
        %s463 = sadd.s32 %s462, %s460
        %s464 = smul.addr %s463, 8
        %s465 = scalar_lea.vmem %s0, %s464
      $region60: #{cross_attention_decoder_layer.4} parent=55 // pred_fallthru
        _
      // Predicated region
      $region61: #{cross_attention_decoder_layer.4} parent=55 // pred_check
        %p466 = pneg %p83
      $region62: #{cross_attention_decoder_layer.4} parent=55 // pred_check_branch
        %468 = sbr.rel (%p466) target = $region64
      $region63: #{cross_attention_decoder_layer.4} parent=55 // pred_region
        %p469 = scmp.lt.s32.totalorder %s28, 1
        %s470 = scalar_select %p469, %s28, 1
        %p471 = scmp.lt.s32.totalorder %s29, 0
        %s472 = scalar_select %p471, %s29, 0
        %s473 = sadd.s32 %s472, %s470
        %s474 = smul.addr %s473, 8
        %s475 = scalar_lea.vmem %s1, %s474
      $region64: #{cross_attention_decoder_layer.4} parent=55 // pred_fallthru
        _
      // Predicated region
      $region65: #{cross_attention_decoder_layer.4} parent=55 // pred_check
        %p476 = pneg %p111
      $region66: #{cross_attention_decoder_layer.4} parent=55 // pred_check_branch
        %478 = sbr.rel (%p476) target = $region68
      $region67: #{cross_attention_decoder_layer.4} parent=55 // pred_region
        %p479 = scmp.lt.s32.totalorder %s28, 1
        %s480 = scalar_select %p479, %s28, 1
        %p481 = scmp.lt.s32.totalorder %s29, 0
        %s482 = scalar_select %p481, %s29, 0
        %s483 = sadd.s32 %s482, %s480
        %s484 = smul.addr %s483, 8
        %s485 = scalar_lea.vmem %s2, %s484
      $region68: #{cross_attention_decoder_layer.4} parent=55 // pred_fallthru
        _
      // Predicated region
      $region69: #{cross_attention_decoder_layer.4} parent=55 // pred_check
        %p486 = pneg %p137
      $region70: #{cross_attention_decoder_layer.4} parent=55 // pred_check_branch
        %488 = sbr.rel (%p486) target = $region72
      $region71: #{cross_attention_decoder_layer.4} parent=55 // pred_region
        %p489 = scmp.lt.s32.totalorder %s28, 1
        %s490 = scalar_select %p489, %s28, 1
        %s491 = smul.addr %s490, 2
        %s492 = smul.addr %s491, 4
        %s493 = scalar_lea.vmem %s3, %s492
      $region72: #{cross_attention_decoder_layer.4} parent=55 // pred_fallthru
        _
      // Predicated region
      $region73: #{cross_attention_decoder_layer.4} parent=55 // pred_check
        %p494 = pneg %p163
      $region74: #{cross_attention_decoder_layer.4} parent=55 // pred_check_branch
        %496 = sbr.rel (%p494) target = $region76
      $region75: #{cross_attention_decoder_layer.4} parent=55 // pred_region
        %p497 = scmp.lt.s32.totalorder %s28, 1
        %s498 = scalar_select %p497, %s28, 1
        %s499 = smul.addr %s498, 2
        %s500 = smul.addr %s499, 4
        %s501 = scalar_lea.vmem %s4, %s500
      $region76: #{cross_attention_decoder_layer.4} parent=55 // pred_fallthru
        _
    $region56: #{cross_attention_decoder_layer.4} parent=5 // pred_fallthru
      _
    %p502 = scmp.le.s32.totalorder 1, %s21
    %p503 = scmp.lt.s32.totalorder %s21, 3
    %p504 = pnand %p502, %p503
    %p505 = pneg %p504
    // Predicated region
    $region77: #{cross_attention_decoder_layer.4} parent=5 // pred_check
      _
    $region78: #{cross_attention_decoder_layer.4} parent=5 // pred_check_branch
      %507 = sbr.rel (%p504) target = $region80
    $region79: #{cross_attention_decoder_layer.4} parent=5 // pred_region
      %s508 = ssub.s32 %s21, 1
      %p509 = scmp.lt.s32.totalorder %s30, 1
      %s510 = scalar_select %p509, %s30, 1
      %p511 = scmp.lt.s32.totalorder %s31, 0
      %s512 = scalar_select %p511, %s31, 0
      %s513 = sadd.s32 %s512, %s510
      %s514 = smul.addr %s513, 8
      %s515 = scalar_lea.vmem %s0, %s514
      %p516 = pneg %p61
      %p517 = pneg %p58
      %p518 = scmp.lt.s32.totalorder %s30, 1
      %s519 = scalar_select %p518, %s30, 1
      %p520 = scmp.lt.s32.totalorder %s31, 0
      %s521 = scalar_select %p520, %s31, 0
      %s522 = sadd.s32 %s521, %s519
      %s523 = smul.addr %s522, 8
      %s524 = scalar_lea.vmem %s1, %s523
      %p525 = pneg %p89
      %p526 = pneg %p86
      %p527 = scmp.lt.s32.totalorder %s30, 1
      %s528 = scalar_select %p527, %s30, 1
      %p529 = scmp.lt.s32.totalorder %s31, 0
      %s530 = scalar_select %p529, %s31, 0
      %s531 = sadd.s32 %s530, %s528
      %s532 = smul.addr %s531, 8
      %s533 = scalar_lea.vmem %s2, %s532
      %p534 = pneg %p117
      %p535 = pneg %p114
      %p536 = scmp.lt.s32.totalorder %s30, 1
      %s537 = scalar_select %p536, %s30, 1
      %s538 = smul.addr %s537, 2
      %s539 = smul.addr %s538, 4
      %s540 = scalar_lea.vmem %s3, %s539
      %p541 = pneg %p143
      %p542 = pneg %p140
      %p543 = scmp.lt.s32.totalorder %s30, 1
      %s544 = scalar_select %p543, %s30, 1
      %s545 = smul.addr %s544, 2
      %s546 = smul.addr %s545, 4
      %s547 = scalar_lea.vmem %s4, %s546
      %p548 = pneg %p169
      %p549 = pneg %p166
      %p550 = pneg %p190
      %p551 = pneg %p187
      %p552 = pneg %p211
      %p553 = pneg %p208
      %p554 = pneg %p232
      %p555 = pneg %p229
      %p556 = pneg %p253
      %p557 = pneg %p250
      %p558 = pneg %p274
      %p559 = pneg %p271
      %p560 = pneg %p295
      %p561 = pneg %p292
      %p562 = pneg %p316
      %p563 = pneg %p313
      %p564 = pneg %p337
      %p565 = pneg %p334
      %p566 = pneg %p358
      %p567 = pneg %p355
      %p568 = pneg %p379
      %p569 = pneg %p376
      %p570 = pneg %p407
      %p571 = pneg %p404
      %p572 = scmp.lt.s32.totalorder %s30, 1
      %s573 = scalar_select %p572, %s30, 1
      %p574 = scmp.lt.s32.totalorder %s31, 0
      %s575 = scalar_select %p574, %s31, 0
      %s576 = sadd.s32 %s575, %s573
      %s577 = smul.addr %s576, 8
      %s578 = scalar_lea.vmem %s15, %s577
      %p579 = scmp.lt.s32.totalorder %s30, 1
      %s580 = scalar_select %p579, %s30, 1
      %p581 = scmp.lt.s32.totalorder %s31, 0
      %s582 = scalar_select %p581, %s31, 0
      %s583 = sadd.s32 %s582, %s580
      %s584 = smul.addr %s583, 8
      %s585 = scalar_lea.vmem %s0, %s584
      %p586 = scmp.lt.s32.totalorder %s30, 1
      %s587 = scalar_select %p586, %s30, 1
      %p588 = scmp.lt.s32.totalorder %s31, 0
      %s589 = scalar_select %p588, %s31, 0
      %s590 = sadd.s32 %s589, %s587
      %s591 = smul.addr %s590, 8
      %s592 = scalar_lea.vmem %s1, %s591
      %p593 = scmp.lt.s32.totalorder %s30, 1
      %s594 = scalar_select %p593, %s30, 1
      %p595 = scmp.lt.s32.totalorder %s31, 0
      %s596 = scalar_select %p595, %s31, 0
      %s597 = sadd.s32 %s596, %s594
      %s598 = smul.addr %s597, 8
      %s599 = scalar_lea.vmem %s2, %s598
      %p600 = scmp.lt.s32.totalorder %s30, 1
      %s601 = scalar_select %p600, %s30, 1
      %s602 = smul.addr %s601, 2
      %s603 = smul.addr %s602, 4
      %s604 = scalar_lea.vmem %s3, %s603
      %p605 = scmp.lt.s32.totalorder %s30, 1
      %s606 = scalar_select %p605, %s30, 1
      %s607 = smul.addr %s606, 2
      %s608 = smul.addr %s607, 4
      %s609 = scalar_lea.vmem %s4, %s608
      %p610 = scmp.lt.s32.totalorder %s30, 1
      %s611 = scalar_select %p610, %s30, 1
      %p612 = scmp.lt.s32.totalorder %s31, 0
      %s613 = scalar_select %p612, %s31, 0
      %s614 = sadd.s32 %s613, %s611
      %s615 = smul.addr %s614, 8
      %s616 = scalar_lea.vmem %s15, %s615
      %p618 = scmp.eq.s32.totalorder %s31, 0
      // Predicated region
      $region81: #{cross_attention_decoder_layer.4} parent=79 // pred_check
        %p619 = pneg %p618
      $region82: #{cross_attention_decoder_layer.4} parent=79 // pred_check_branch
        %621 = sbr.rel (%p619) target = $region84
      $region83: #{cross_attention_decoder_layer.4} parent=79 // pred_region
        %v622 = vld [vmem:[%s604] sm:$0xf]
        %v623 = vld [vmem:[%s604 + $0x4] sm:$0xf]
        %v624 = vld [vmem:[%s609] sm:$0xf]
        %v625 = vld [vmem:[%s609 + $0x4] sm:$0xf]
        %v626 = vadd.bf16 %v622, %v624
        %v627 = vadd.bf16 %v623, %v625
        %v628 = vld [vmem:[%s7] sm:$0xf]
        %v629 = vld [vmem:[%s7 + $0x4] sm:$0xf]
        %v630 = vld [vmem:[%s7 + $0x8] sm:$0xf]
        %v631 = vld [vmem:[%s7 + $0xc] sm:$0xf]
        %v632 = vld [vmem:[%s8] sm:$0x1]
        %v634 = vlaneseq
        %v635 = vshrl.u32 %v634, 7
        %v636 = vsub.s32 0, %v635
        %v637 = vrot.slane %v632, %v636
        %v641 = vunpack.c.l.b16 %v626
        %v642 = vunpack.c.l.b16 %v627
        %v643 = vpack.c.b16 %v642, %v641
        %v648 = vunpack.c.l.b16 %v628
        %v649 = vunpack.c.l.b16 %v629
        %v650 = vunpack.c.l.b16 %v630
        %v651 = vunpack.c.l.b16 %v631
        %v652 = vpack.c.b16 %v649, %v648
        %v653 = vpack.c.b16 %v651, %v650
        %vm656 = vcmask 261120
        %v658 = vsel %vm656, %v643, 0
        %660 = vmatprep.subr.bf16.mxu0 0
        %661 = vmatpush1.bf16.msra.mxu0 %v652
        %662 = vmatprep.subr.bf16.mxu0 0
        %663 = vmatpush1.bf16.msra.mxu0 %v653
        %664 = vmatprep.subr.bf16.mxu0 0
        %665 = vmatpush1.bf16.msra.mxu0 0
        %666 = vmatprep.subr.bf16.mxu0 0
        %667 = vmatpush1.bf16.msra.mxu0 0
        %668 = vmatprep.subr.bf16.mxu0 0
        %669 = vmatpush1.bf16.msra.mxu0 0
        %670 = vmatprep.subr.bf16.mxu0 0
        %671 = vmatpush1.bf16.msra.mxu0 0
        %672 = vmatprep.subr.bf16.mxu0 0
        %673 = vmatpush1.bf16.msra.mxu0 0
        %674 = vmatprep.subr.bf16.mxu0 0
        %675 = vmatpush1.bf16.msra.mxu0 0
        %676 = vmatprep.subr.bf16.mxu0 0
        %677 = vmatpush1.bf16.msra.mxu0 0
        %678 = vmatprep.subr.bf16.mxu0 0
        %679 = vmatpush1.bf16.msra.mxu0 0
        %680 = vmatprep.subr.bf16.mxu0 0
        %681 = vmatpush1.bf16.msra.mxu0 0
        %682 = vmatprep.subr.bf16.mxu0 0
        %683 = vmatpush1.bf16.msra.mxu0 0
        %684 = vmatprep.subr.bf16.mxu0 0
        %685 = vmatpush1.bf16.msra.mxu0 0
        %686 = vmatprep.subr.bf16.mxu0 0
        %687 = vmatpush1.bf16.msra.mxu0 0
        %688 = vmatprep.subr.bf16.mxu0 0
        %689 = vmatpush1.bf16.msra.mxu0 0
        %690 = vmatprep.subr.bf16.mxu0 0
        %691 = vmatpush1.bf16.msra.mxu0 0
        %692 = vmatprep.mubr.bf16.mxu0 0
        %693 = vmatmul.mubr.bf16.gmra.mrb[0].mxu0 %v658
        %v694 = vpop.f32.mrb[0].mxu0
        %v695 = vadd.f32 %v637, %v694
        %v696 = vpop.f32.mrb[0].mxu0
        %v697 = vpop.f32.mrb[0].mxu0
        %v698 = vadd.f32 %v637, %v697
        %v699 = vpop.f32.mrb[0].mxu0
        %700 = vdwg.mxu0
        %v701 = vld [vmem:[%s9] sm:$0xf]
        %v702 = vld [vmem:[%s9 + $0x4] sm:$0xf]
        %v703 = vld [vmem:[%s9 + $0x8] sm:$0xf]
        %v704 = vld [vmem:[%s9 + $0xc] sm:$0xf]
        %v705 = vld [vmem:[%s10] sm:$0x1]
        %v707 = vlaneseq
        %v708 = vshrl.u32 %v707, 7
        %v709 = vsub.s32 0, %v708
        %v710 = vrot.slane %v705, %v709
        %v714 = vunpack.c.l.b16 %v622
        %v715 = vunpack.c.l.b16 %v623
        %v716 = vpack.c.b16 %v715, %v714
        %v721 = vunpack.c.l.b16 %v701
        %v722 = vunpack.c.l.b16 %v702
        %v723 = vunpack.c.l.b16 %v703
        %v724 = vunpack.c.l.b16 %v704
        %v725 = vpack.c.b16 %v722, %v721
        %v726 = vpack.c.b16 %v724, %v723
        %v730 = vsel %vm656, %v716, 0
        %732 = vmatprep.subr.bf16.mxu0 0
        %733 = vmatpush1.bf16.msra.mxu0 %v725
        %734 = vmatprep.subr.bf16.mxu0 0
        %735 = vmatpush1.bf16.msra.mxu0 %v726
        %736 = vmatprep.subr.bf16.mxu0 0
        %737 = vmatpush1.bf16.msra.mxu0 0
        %738 = vmatprep.subr.bf16.mxu0 0
        %739 = vmatpush1.bf16.msra.mxu0 0
        %740 = vmatprep.subr.bf16.mxu0 0
        %741 = vmatpush1.bf16.msra.mxu0 0
        %742 = vmatprep.subr.bf16.mxu0 0
        %743 = vmatpush1.bf16.msra.mxu0 0
        %744 = vmatprep.subr.bf16.mxu0 0
        %745 = vmatpush1.bf16.msra.mxu0 0
        %746 = vmatprep.subr.bf16.mxu0 0
        %747 = vmatpush1.bf16.msra.mxu0 0
        %748 = vmatprep.subr.bf16.mxu0 0
        %749 = vmatpush1.bf16.msra.mxu0 0
        %750 = vmatprep.subr.bf16.mxu0 0
        %751 = vmatpush1.bf16.msra.mxu0 0
        %752 = vmatprep.subr.bf16.mxu0 0
        %753 = vmatpush1.bf16.msra.mxu0 0
        %754 = vmatprep.subr.bf16.mxu0 0
        %755 = vmatpush1.bf16.msra.mxu0 0
        %756 = vmatprep.subr.bf16.mxu0 0
        %757 = vmatpush1.bf16.msra.mxu0 0
        %758 = vmatprep.subr.bf16.mxu0 0
        %759 = vmatpush1.bf16.msra.mxu0 0
        %760 = vmatprep.subr.bf16.mxu0 0
        %761 = vmatpush1.bf16.msra.mxu0 0
        %762 = vmatprep.subr.bf16.mxu0 0
        %763 = vmatpush1.bf16.msra.mxu0 0
        %764 = vmatprep.mubr.bf16.mxu0 0
        %765 = vmatmul.mubr.bf16.gmra.mrb[0].mxu0 %v730
        %v766 = vpop.f32.mrb[0].mxu0
        %v767 = vadd.f32 %v710, %v766
        %v768 = vpop.f32.mrb[0].mxu0
        %v769 = vpop.f32.mrb[0].mxu0
        %v770 = vadd.f32 %v710, %v769
        %v771 = vpop.f32.mrb[0].mxu0
        %772 = vdwg.mxu0
        %773 = vxpose.xlu0.b32.start [1/16] %v695, 128
        %774 = vxpose.xlu0.b32.cont [2/16] %v698, 128
        %775 = vxpose.xlu0.b32.cont [3/16] 0.0, 128
        %776 = vxpose.xlu0.b32.cont [4/16] 0.0, 128
        %777 = vxpose.xlu0.b32.cont [5/16] 0.0, 128
        %778 = vxpose.xlu0.b32.cont [6/16] 0.0, 128
        %779 = vxpose.xlu0.b32.cont [7/16] 0.0, 128
        %780 = vxpose.xlu0.b32.cont [8/16] 0.0, 128
        %781 = vxpose.xlu0.b32.cont [9/16] 0.0, 128
        %782 = vxpose.xlu0.b32.cont [10/16] 0.0, 128
        %783 = vxpose.xlu0.b32.cont [11/16] 0.0, 128
        %784 = vxpose.xlu0.b32.cont [12/16] 0.0, 128
        %785 = vxpose.xlu0.b32.cont [13/16] 0.0, 128
        %786 = vxpose.xlu0.b32.cont [14/16] 0.0, 128
        %787 = vxpose.xlu0.b32.cont [15/16] 0.0, 128
        %788 = vxpose.xlu0.b32.end [16/16] 0.0, 128
        %v789 = vpop.trf.xlu0
        %v790 = vpop.trf.xlu0
        %v791 = vpop.trf.xlu0
        %v792 = vpop.trf.xlu0
        %v793 = vpop.trf.xlu0
        %v794 = vpop.trf.xlu0
        %v795 = vpop.trf.xlu0
        %v796 = vpop.trf.xlu0
        %v797 = vpop.trf.xlu0
        %v798 = vpop.trf.xlu0
        %v799 = vpop.trf.xlu0
        %v800 = vpop.trf.xlu0
        %v801 = vpop.trf.xlu0
        %v802 = vpop.trf.xlu0
        %v803 = vpop.trf.xlu0
        %v804 = vpop.trf.xlu0
        %v805 = vpack.c.bf16 %v790, %v789
        %v806 = vpack.c.bf16 %v792, %v791
        %vm807 = vcmask 130048
        %808 = vst.msk [vmem:[#allocation2] sm:$0xff] %vm807, %v805
        %809 = vst.msk [vmem:[#allocation2 + $0x8] sm:$0xff] %vm807, %v806
        %v810 = vpack.c.bf16 %v770, %v767
        %811 = vst.msk [vmem:[#allocation3] sm:$0xff] %vm656, %v810
      $region84: #{cross_attention_decoder_layer.4} parent=79 // pred_fallthru
        _
      %v812 = vld [vmem:[%s585] sm:$0xff]
      %v813 = vld [vmem:[%s592] sm:$0xff]
      %v814 = vadd.f32 %v812, %v813
      %v815 = vpack.c.bf16 %v814, %v814
      %v816 = vld [vmem:[%s599] sm:$0xff]
      %v817 = vld [vmem:[%s5] sm:$0xf]
      %v818 = vld [vmem:[%s5 + $0x4] sm:$0xf]
      %v819 = vld [vmem:[%s5 + $0x8] sm:$0xf]
      %v820 = vld [vmem:[%s5 + $0xc] sm:$0xf]
      %v821 = vld [vmem:[%s6] sm:$0x1]
      %v823 = vlaneseq
      %v824 = vshrl.u32 %v823, 7
      %v825 = vsub.s32 0, %v824
      %v826 = vrot.slane %v821, %v825
      %v832 = vunpack.c.l.b16 %v817
      %v833 = vunpack.c.l.b16 %v818
      %v834 = vunpack.c.l.b16 %v819
      %v835 = vunpack.c.l.b16 %v820
      %v836 = vpack.c.b16 %v833, %v832
      %v837 = vpack.c.b16 %v835, %v834
      %vm840 = vcmask 261120
      %v842 = vsel %vm840, %v815, 0
      %844 = vmatprep.subr.bf16.mxu0 0
      %845 = vmatpush1.bf16.msra.mxu0 %v836
      %846 = vmatprep.subr.bf16.mxu0 0
      %847 = vmatpush1.bf16.msra.mxu0 %v837
      %848 = vmatprep.subr.bf16.mxu0 0
      %849 = vmatpush1.bf16.msra.mxu0 0
      %850 = vmatprep.subr.bf16.mxu0 0
      %851 = vmatpush1.bf16.msra.mxu0 0
      %852 = vmatprep.subr.bf16.mxu0 0
      %853 = vmatpush1.bf16.msra.mxu0 0
      %854 = vmatprep.subr.bf16.mxu0 0
      %855 = vmatpush1.bf16.msra.mxu0 0
      %856 = vmatprep.subr.bf16.mxu0 0
      %857 = vmatpush1.bf16.msra.mxu0 0
      %858 = vmatprep.subr.bf16.mxu0 0
      %859 = vmatpush1.bf16.msra.mxu0 0
      %860 = vmatprep.subr.bf16.mxu0 0
      %861 = vmatpush1.bf16.msra.mxu0 0
      %862 = vmatprep.subr.bf16.mxu0 0
      %863 = vmatpush1.bf16.msra.mxu0 0
      %864 = vmatprep.subr.bf16.mxu0 0
      %865 = vmatpush1.bf16.msra.mxu0 0
      %866 = vmatprep.subr.bf16.mxu0 0
      %867 = vmatpush1.bf16.msra.mxu0 0
      %868 = vmatprep.subr.bf16.mxu0 0
      %869 = vmatpush1.bf16.msra.mxu0 0
      %870 = vmatprep.subr.bf16.mxu0 0
      %871 = vmatpush1.bf16.msra.mxu0 0
      %872 = vmatprep.subr.bf16.mxu0 0
      %873 = vmatpush1.bf16.msra.mxu0 0
      %874 = vmatprep.subr.bf16.mxu0 0
      %875 = vmatpush1.bf16.msra.mxu0 0
      %876 = vmatprep.mubr.bf16.mxu0 0
      %877 = vmatmul.mubr.bf16.gmra.mrb[0].mxu0 %v842
      %v878 = vpop.f32.mrb[0].mxu0
      %v879 = vadd.f32 %v826, %v878
      %v880 = vpop.f32.mrb[0].mxu0
      %v881 = vpop.f32.mrb[0].mxu0
      %v882 = vpop.f32.mrb[0].mxu0
      %883 = vdwg.mxu0
      %v884 = vpack.c.bf16 %v879, %v879
      %v885 = vld [vmem:[#allocation2] sm:$0xf]
      %vm886 = vcmask 64512
      %v888 = vsel %vm886, %v884, 0
      %vm890 = vcmask 1043456
      %v892 = vsel %vm890, %v885, 0
      %894 = vmatprep.subr.bf16.mxu0 0
      %895 = vmatpush1.bf16.msra.mxu0 %v892
      %896 = vmatprep.subr.bf16.mxu0 0
      %897 = vmatpush1.bf16.msra.mxu0 0
      %898 = vmatprep.subr.bf16.mxu0 0
      %899 = vmatpush1.bf16.msra.mxu0 0
      %900 = vmatprep.subr.bf16.mxu0 0
      %901 = vmatpush1.bf16.msra.mxu0 0
      %902 = vmatprep.subr.bf16.mxu0 0
      %903 = vmatpush1.bf16.msra.mxu0 0
      %904 = vmatprep.subr.bf16.mxu0 0
      %905 = vmatpush1.bf16.msra.mxu0 0
      %906 = vmatprep.subr.bf16.mxu0 0
      %907 = vmatpush1.bf16.msra.mxu0 0
      %908 = vmatprep.subr.bf16.mxu0 0
      %909 = vmatpush1.bf16.msra.mxu0 0
      %910 = vmatprep.subr.bf16.mxu0 0
      %911 = vmatpush1.bf16.msra.mxu0 0
      %912 = vmatprep.subr.bf16.mxu0 0
      %913 = vmatpush1.bf16.msra.mxu0 0
      %914 = vmatprep.subr.bf16.mxu0 0
      %915 = vmatpush1.bf16.msra.mxu0 0
      %916 = vmatprep.subr.bf16.mxu0 0
      %917 = vmatpush1.bf16.msra.mxu0 0
      %918 = vmatprep.subr.bf16.mxu0 0
      %919 = vmatpush1.bf16.msra.mxu0 0
      %920 = vmatprep.subr.bf16.mxu0 0
      %921 = vmatpush1.bf16.msra.mxu0 0
      %922 = vmatprep.subr.bf16.mxu0 0
      %923 = vmatpush1.bf16.msra.mxu0 0
      %924 = vmatprep.subr.bf16.mxu0 0
      %925 = vmatpush1.bf16.msra.mxu0 0
      %926 = vmatprep.mubr.bf16.mxu0 0
      %927 = vmatmul.mubr.bf16.gmra.mrb[0].mxu0 %v888
      %v928 = vpop.f32.mrb[0].mxu0
      %v929 = vadd.f32 0.0, %v928
      %v930 = vpop.f32.mrb[0].mxu0
      %v931 = vpop.f32.mrb[0].mxu0
      %v932 = vpop.f32.mrb[0].mxu0
      %933 = vdwg.mxu0
      %v934 = vmul.f32 %v929, 0.35355338
      %vm935 = vcmask 130048
      %v936 = vsel %vm935, %v934, -inf
      %937 = vmax.xlane.f32.xlu0 %v936
      %v938 = vpop.xlane.xlu0 %937
      %v939 = vsub.f32 %v934, %v938
      %v940 = vmul.f32 %v939, 1.442695
      %v941 = vpow.pop %v940
      %v942 = vsel %vm935, %v941, 0.0
      %943 = vadd.xlane.f32.xlu0 %v942
      %v944 = vpop.xlane.xlu0 %943
      %v945 = vrcp.pop %v944
      %v946 = vmul.f32 %v941, %v945
      %v947 = vpack.c.bf16 %v946, %v946
      %v948 = vld [vmem:[#allocation3] sm:$0xff]
      %v950 = vsel %vm935, %v947, 0
      %952 = vmatprep.subr.bf16.mxu0 0
      %953 = vmatpush1.bf16.msra.mxu0 %v948
      %954 = vmatprep.subr.bf16.mxu0 0
      %955 = vmatpush1.bf16.msra.mxu0 0
      %956 = vmatprep.subr.bf16.mxu0 0
      %957 = vmatpush1.bf16.msra.mxu0 0
      %958 = vmatprep.subr.bf16.mxu0 0
      %959 = vmatpush1.bf16.msra.mxu0 0
      %960 = vmatprep.subr.bf16.mxu0 0
      %961 = vmatpush1.bf16.msra.mxu0 0
      %962 = vmatprep.subr.bf16.mxu0 0
      %963 = vmatpush1.bf16.msra.mxu0 0
      %964 = vmatprep.subr.bf16.mxu0 0
      %965 = vmatpush1.bf16.msra.mxu0 0
      %966 = vmatprep.subr.bf16.mxu0 0
      %967 = vmatpush1.bf16.msra.mxu0 0
      %968 = vmatprep.subr.bf16.mxu0 0
      %969 = vmatpush1.bf16.msra.mxu0 0
      %970 = vmatprep.subr.bf16.mxu0 0
      %971 = vmatpush1.bf16.msra.mxu0 0
      %972 = vmatprep.subr.bf16.mxu0 0
      %973 = vmatpush1.bf16.msra.mxu0 0
      %974 = vmatprep.subr.bf16.mxu0 0
      %975 = vmatpush1.bf16.msra.mxu0 0
      %976 = vmatprep.subr.bf16.mxu0 0
      %977 = vmatpush1.bf16.msra.mxu0 0
      %978 = vmatprep.subr.bf16.mxu0 0
      %979 = vmatpush1.bf16.msra.mxu0 0
      %980 = vmatprep.subr.bf16.mxu0 0
      %981 = vmatpush1.bf16.msra.mxu0 0
      %982 = vmatprep.subr.bf16.mxu0 0
      %983 = vmatpush1.bf16.msra.mxu0 0
      %984 = vmatprep.mubr.bf16.mxu0 0
      %985 = vmatmul.mubr.bf16.gmra.mrb[0].mxu0 %v950
      %v986 = vpop.f32.mrb[0].mxu0
      %v987 = vadd.f32 0.0, %v986
      %v988 = vpop.f32.mrb[0].mxu0
      %v989 = vpop.f32.mrb[0].mxu0
      %v990 = vpop.f32.mrb[0].mxu0
      %991 = vdwg.mxu0
      %v992 = vpack.c.bf16 %v987, %v987
      %v993 = vld [vmem:[%s11] sm:$0xf]
      %v994 = vld [vmem:[#allocation2] sm:$0xf0]
      %996 = vrot.lane.b32.xlu0 %v884, 120
      %v997 = vpop.permute.xlu0 %996
      %v999 = vrot.slane %v994, 4
      %v1001 = vsel %vm886, %v997, 0
      %v1004 = vsel %vm890, %v999, 0
      %1006 = vmatprep.subr.bf16.mxu0 0
      %1007 = vmatpush1.bf16.msra.mxu0 %v1004
      %1008 = vmatprep.subr.bf16.mxu0 0
      %1009 = vmatpush1.bf16.msra.mxu0 0
      %1010 = vmatprep.subr.bf16.mxu0 0
      %1011 = vmatpush1.bf16.msra.mxu0 0
      %1012 = vmatprep.subr.bf16.mxu0 0
      %1013 = vmatpush1.bf16.msra.mxu0 0
      %1014 = vmatprep.subr.bf16.mxu0 0
      %1015 = vmatpush1.bf16.msra.mxu0 0
      %1016 = vmatprep.subr.bf16.mxu0 0
      %1017 = vmatpush1.bf16.msra.mxu0 0
      %1018 = vmatprep.subr.bf16.mxu0 0
      %1019 = vmatpush1.bf16.msra.mxu0 0
      %1020 = vmatprep.subr.bf16.mxu0 0
      %1021 = vmatpush1.bf16.msra.mxu0 0
      %1022 = vmatprep.subr.bf16.mxu0 0
      %1023 = vmatpush1.bf16.msra.mxu0 0
      %1024 = vmatprep.subr.bf16.mxu0 0
      %1025 = vmatpush1.bf16.msra.mxu0 0
      %1026 = vmatprep.subr.bf16.mxu0 0
      %1027 = vmatpush1.bf16.msra.mxu0 0
      %1028 = vmatprep.subr.bf16.mxu0 0
      %1029 = vmatpush1.bf16.msra.mxu0 0
      %1030 = vmatprep.subr.bf16.mxu0 0
      %1031 = vmatpush1.bf16.msra.mxu0 0
      %1032 = vmatprep.subr.bf16.mxu0 0
      %1033 = vmatpush1.bf16.msra.mxu0 0
      %1034 = vmatprep.subr.bf16.mxu0 0
      %1035 = vmatpush1.bf16.msra.mxu0 0
      %1036 = vmatprep.subr.bf16.mxu0 0
      %1037 = vmatpush1.bf16.msra.mxu0 0
      %1038 = vmatprep.mubr.bf16.mxu0 0
      %1039 = vmatmul.mubr.bf16.gmra.mrb[0].mxu0 %v1001
      %v1040 = vpop.f32.mrb[0].mxu0
      %v1041 = vadd.f32 0.0, %v1040
      %v1042 = vpop.f32.mrb[0].mxu0
      %v1043 = vpop.f32.mrb[0].mxu0
      %v1044 = vpop.f32.mrb[0].mxu0
      %1045 = vdwg.mxu0
      %v1046 = vmul.f32 %v1041, 0.35355338
      %v1047 = vsel %vm935, %v1046, -inf
      %1048 = vmax.xlane.f32.xlu0 %v1047
      %v1049 = vpop.xlane.xlu0 %1048
      %v1050 = vsub.f32 %v1046, %v1049
      %v1051 = vmul.f32 %v1050, 1.442695
      %v1052 = vpow.pop %v1051
      %v1053 = vsel %vm935, %v1052, 0.0
      %1054 = vadd.xlane.f32.xlu0 %v1053
      %v1055 = vpop.xlane.xlu0 %1054
      %v1056 = vrcp.pop %v1055
      %v1057 = vmul.f32 %v1052, %v1056
      %v1058 = vpack.c.bf16 %v1057, %v1057
      %1060 = vrot.lane.b32.xlu0 %v948, 120
      %v1061 = vpop.permute.xlu0 %1060
      %v1064 = vsel %vm935, %v1058, 0
      %1066 = vmatprep.subr.bf16.mxu0 0
      %1067 = vmatpush1.bf16.msra.mxu0 %v1061
      %1068 = vmatprep.subr.bf16.mxu0 0
      %1069 = vmatpush1.bf16.msra.mxu0 0
      %1070 = vmatprep.subr.bf16.mxu0 0
      %1071 = vmatpush1.bf16.msra.mxu0 0
      %1072 = vmatprep.subr.bf16.mxu0 0
      %1073 = vmatpush1.bf16.msra.mxu0 0
      %1074 = vmatprep.subr.bf16.mxu0 0
      %1075 = vmatpush1.bf16.msra.mxu0 0
      %1076 = vmatprep.subr.bf16.mxu0 0
      %1077 = vmatpush1.bf16.msra.mxu0 0
      %1078 = vmatprep.subr.bf16.mxu0 0
      %1079 = vmatpush1.bf16.msra.mxu0 0
      %1080 = vmatprep.subr.bf16.mxu0 0
      %1081 = vmatpush1.bf16.msra.mxu0 0
      %1082 = vmatprep.subr.bf16.mxu0 0
      %1083 = vmatpush1.bf16.msra.mxu0 0
      %1084 = vmatprep.subr.bf16.mxu0 0
      %1085 = vmatpush1.bf16.msra.mxu0 0
      %1086 = vmatprep.subr.bf16.mxu0 0
      %1087 = vmatpush1.bf16.msra.mxu0 0
      %1088 = vmatprep.subr.bf16.mxu0 0
      %1089 = vmatpush1.bf16.msra.mxu0 0
      %1090 = vmatprep.subr.bf16.mxu0 0
      %1091 = vmatpush1.bf16.msra.mxu0 0
      %1092 = vmatprep.subr.bf16.mxu0 0
      %1093 = vmatpush1.bf16.msra.mxu0 0
      %1094 = vmatprep.subr.bf16.mxu0 0
      %1095 = vmatpush1.bf16.msra.mxu0 0
      %1096 = vmatprep.subr.bf16.mxu0 0
      %1097 = vmatpush1.bf16.msra.mxu0 0
      %1098 = vmatprep.mubr.bf16.mxu0 0
      %1099 = vmatmul.mubr.bf16.gmra.mrb[0].mxu0 %v1064
      %v1100 = vpop.f32.mrb[0].mxu0
      %v1101 = vadd.f32 0.0, %v1100
      %v1102 = vpop.f32.mrb[0].mxu0
      %v1103 = vpop.f32.mrb[0].mxu0
      %v1104 = vpop.f32.mrb[0].mxu0
      %1105 = vdwg.mxu0
      %v1106 = vpack.c.bf16 %v1101, %v1101
      %v1107 = vld [vmem:[%s11 + $0x4] sm:$0xf]
      %v1109 = vsel %vm886, %v1106, 0
      %v1112 = vsel %vm890, %v1107, 0
      %1114 = vmatprep.subr.bf16.mxu0 0
      %1115 = vmatpush1.bf16.msra.mxu0 %v1112
      %1116 = vmatprep.subr.bf16.mxu0 0
      %1117 = vmatpush1.bf16.msra.mxu0 0
      %1118 = vmatprep.subr.bf16.mxu0 0
      %1119 = vmatpush1.bf16.msra.mxu0 0
      %1120 = vmatprep.subr.bf16.mxu0 0
      %1121 = vmatpush1.bf16.msra.mxu0 0
      %1122 = vmatprep.subr.bf16.mxu0 0
      %1123 = vmatpush1.bf16.msra.mxu0 0
      %1124 = vmatprep.subr.bf16.mxu0 0
      %1125 = vmatpush1.bf16.msra.mxu0 0
      %1126 = vmatprep.subr.bf16.mxu0 0
      %1127 = vmatpush1.bf16.msra.mxu0 0
      %1128 = vmatprep.subr.bf16.mxu0 0
      %1129 = vmatpush1.bf16.msra.mxu0 0
      %1130 = vmatprep.subr.bf16.mxu0 0
      %1131 = vmatpush1.bf16.msra.mxu0 0
      %1132 = vmatprep.subr.bf16.mxu0 0
      %1133 = vmatpush1.bf16.msra.mxu0 0
      %1134 = vmatprep.subr.bf16.mxu0 0
      %1135 = vmatpush1.bf16.msra.mxu0 0
      %1136 = vmatprep.subr.bf16.mxu0 0
      %1137 = vmatpush1.bf16.msra.mxu0 0
      %1138 = vmatprep.subr.bf16.mxu0 0
      %1139 = vmatpush1.bf16.msra.mxu0 0
      %1140 = vmatprep.subr.bf16.mxu0 0
      %1141 = vmatpush1.bf16.msra.mxu0 0
      %1142 = vmatprep.subr.bf16.mxu0 0
      %1143 = vmatpush1.bf16.msra.mxu0 0
      %1144 = vmatprep.subr.bf16.mxu0 0
      %1145 = vmatpush1.bf16.msra.mxu0 0
      %1146 = vmatprep.mubr.bf16.mxu0 0
      %1147 = vmatmul.mubr.bf16.gmra.mrb[0].mxu0 %v1109
      %v1148 = vpop.f32.mrb[0].mxu0
      %v1149 = vadd.f32 0.0, %v1148
      %v1150 = vpop.f32.mrb[0].mxu0
      %v1151 = vpop.f32.mrb[0].mxu0
      %v1152 = vpop.f32.mrb[0].mxu0
      %1153 = vdwg.mxu0
      %v1155 = vsel %vm886, %v992, 0
      %v1158 = vsel %vm890, %v993, 0
      %1160 = vmatprep.subr.bf16.mxu0 0
      %1161 = vmatpush1.bf16.msra.mxu0 %v1158
      %1162 = vmatprep.subr.bf16.mxu0 0
      %1163 = vmatpush1.bf16.msra.mxu0 0
      %1164 = vmatprep.subr.bf16.mxu0 0
      %1165 = vmatpush1.bf16.msra.mxu0 0
      %1166 = vmatprep.subr.bf16.mxu0 0
      %1167 = vmatpush1.bf16.msra.mxu0 0
      %1168 = vmatprep.subr.bf16.mxu0 0
      %1169 = vmatpush1.bf16.msra.mxu0 0
      %1170 = vmatprep.subr.bf16.mxu0 0
      %1171 = vmatpush1.bf16.msra.mxu0 0
      %1172 = vmatprep.subr.bf16.mxu0 0
      %1173 = vmatpush1.bf16.msra.mxu0 0
      %1174 = vmatprep.subr.bf16.mxu0 0
      %1175 = vmatpush1.bf16.msra.mxu0 0
      %1176 = vmatprep.subr.bf16.mxu0 0
      %1177 = vmatpush1.bf16.msra.mxu0 0
      %1178 = vmatprep.subr.bf16.mxu0 0
      %1179 = vmatpush1.bf16.msra.mxu0 0
      %1180 = vmatprep.subr.bf16.mxu0 0
      %1181 = vmatpush1.bf16.msra.mxu0 0
      %1182 = vmatprep.subr.bf16.mxu0 0
      %1183 = vmatpush1.bf16.msra.mxu0 0
      %1184 = vmatprep.subr.bf16.mxu0 0
      %1185 = vmatpush1.bf16.msra.mxu0 0
      %1186 = vmatprep.subr.bf16.mxu0 0
      %1187 = vmatpush1.bf16.msra.mxu0 0
      %1188 = vmatprep.subr.bf16.mxu0 0
      %1189 = vmatpush1.bf16.msra.mxu0 0
      %1190 = vmatprep.subr.bf16.mxu0 0
      %1191 = vmatpush1.bf16.msra.mxu0 0
      %1192 = vmatprep.mubr.bf16.mxu0 0
      %1193 = vmatmul.mubr.bf16.gmra.mrb[0].mxu0 %v1155
      %v1194 = vpop.f32.mrb[0].mxu0
      %v1195 = vadd.f32 %v1149, %v1194
      %v1196 = vpop.f32.mrb[0].mxu0
      %v1197 = vpop.f32.mrb[0].mxu0
      %v1198 = vpop.f32.mrb[0].mxu0
      %1199 = vdwg.mxu0
      %v1200 = vld [vmem:[#allocation2 + $0x8] sm:$0xf]
      %1201 = vrot.lane.b32.xlu0 %v884, 112
      %v1202 = vpop.permute.xlu0 %1201
      %v1204 = vsel %vm886, %v1202, 0
      %v1207 = vsel %vm890, %v1200, 0
      %1209 = vmatprep.subr.bf16.mxu0 0
      %1210 = vmatpush1.bf16.msra.mxu0 %v1207
      %1211 = vmatprep.subr.bf16.mxu0 0
      %1212 = vmatpush1.bf16.msra.mxu0 0
      %1213 = vmatprep.subr.bf16.mxu0 0
      %1214 = vmatpush1.bf16.msra.mxu0 0
      %1215 = vmatprep.subr.bf16.mxu0 0
      %1216 = vmatpush1.bf16.msra.mxu0 0
      %1217 = vmatprep.subr.bf16.mxu0 0
      %1218 = vmatpush1.bf16.msra.mxu0 0
      %1219 = vmatprep.subr.bf16.mxu0 0
      %1220 = vmatpush1.bf16.msra.mxu0 0
      %1221 = vmatprep.subr.bf16.mxu0 0
      %1222 = vmatpush1.bf16.msra.mxu0 0
      %1223 = vmatprep.subr.bf16.mxu0 0
      %1224 = vmatpush1.bf16.msra.mxu0 0
      %1225 = vmatprep.subr.bf16.mxu0 0
      %1226 = vmatpush1.bf16.msra.mxu0 0
      %1227 = vmatprep.subr.bf16.mxu0 0
      %1228 = vmatpush1.bf16.msra.mxu0 0
      %1229 = vmatprep.subr.bf16.mxu0 0
      %1230 = vmatpush1.bf16.msra.mxu0 0
      %1231 = vmatprep.subr.bf16.mxu0 0
      %1232 = vmatpush1.bf16.msra.mxu0 0
      %1233 = vmatprep.subr.bf16.mxu0 0
      %1234 = vmatpush1.bf16.msra.mxu0 0
      %1235 = vmatprep.subr.bf16.mxu0 0
      %1236 = vmatpush1.bf16.msra.mxu0 0
      %1237 = vmatprep.subr.bf16.mxu0 0
      %1238 = vmatpush1.bf16.msra.mxu0 0
      %1239 = vmatprep.subr.bf16.mxu0 0
      %1240 = vmatpush1.bf16.msra.mxu0 0
      %1241 = vmatprep.mubr.bf16.mxu0 0
      %1242 = vmatmul.mubr.bf16.gmra.mrb[0].mxu0 %v1204
      %v1243 = vpop.f32.mrb[0].mxu0
      %v1244 = vadd.f32 0.0, %v1243
      %v1245 = vpop.f32.mrb[0].mxu0
      %v1246 = vpop.f32.mrb[0].mxu0
      %v1247 = vpop.f32.mrb[0].mxu0
      %1248 = vdwg.mxu0
      %v1249 = vmul.f32 %v1244, 0.35355338
      %v1250 = vsel %vm935, %v1249, -inf
      %1251 = vmax.xlane.f32.xlu0 %v1250
      %v1252 = vpop.xlane.xlu0 %1251
      %v1253 = vsub.f32 %v1249, %v1252
      %v1254 = vmul.f32 %v1253, 1.442695
      %v1255 = vpow.pop %v1254
      %v1256 = vsel %vm935, %v1255, 0.0
      %1257 = vadd.xlane.f32.xlu0 %v1256
      %v1258 = vpop.xlane.xlu0 %1257
      %v1259 = vrcp.pop %v1258
      %v1260 = vmul.f32 %v1255, %v1259
      %v1261 = vpack.c.bf16 %v1260, %v1260
      %1262 = vrot.lane.b32.xlu0 %v948, 112
      %v1263 = vpop.permute.xlu0 %1262
      %v1266 = vsel %vm935, %v1261, 0
      %1268 = vmatprep.subr.bf16.mxu0 0
      %1269 = vmatpush1.bf16.msra.mxu0 %v1263
      %1270 = vmatprep.subr.bf16.mxu0 0
      %1271 = vmatpush1.bf16.msra.mxu0 0
      %1272 = vmatprep.subr.bf16.mxu0 0
      %1273 = vmatpush1.bf16.msra.mxu0 0
      %1274 = vmatprep.subr.bf16.mxu0 0
      %1275 = vmatpush1.bf16.msra.mxu0 0
      %1276 = vmatprep.subr.bf16.mxu0 0
      %1277 = vmatpush1.bf16.msra.mxu0 0
      %1278 = vmatprep.subr.bf16.mxu0 0
      %1279 = vmatpush1.bf16.msra.mxu0 0
      %1280 = vmatprep.subr.bf16.mxu0 0
      %1281 = vmatpush1.bf16.msra.mxu0 0
      %1282 = vmatprep.subr.bf16.mxu0 0
      %1283 = vmatpush1.bf16.msra.mxu0 0
      %1284 = vmatprep.subr.bf16.mxu0 0
      %1285 = vmatpush1.bf16.msra.mxu0 0
      %1286 = vmatprep.subr.bf16.mxu0 0
      %1287 = vmatpush1.bf16.msra.mxu0 0
      %1288 = vmatprep.subr.bf16.mxu0 0
      %1289 = vmatpush1.bf16.msra.mxu0 0
      %1290 = vmatprep.subr.bf16.mxu0 0
      %1291 = vmatpush1.bf16.msra.mxu0 0
      %1292 = vmatprep.subr.bf16.mxu0 0
      %1293 = vmatpush1.bf16.msra.mxu0 0
      %1294 = vmatprep.subr.bf16.mxu0 0
      %1295 = vmatpush1.bf16.msra.mxu0 0
      %1296 = vmatprep.subr.bf16.mxu0 0
      %1297 = vmatpush1.bf16.msra.mxu0 0
      %1298 = vmatprep.subr.bf16.mxu0 0
      %1299 = vmatpush1.bf16.msra.mxu0 0
      %1300 = vmatprep.mubr.bf16.mxu0 0
      %1301 = vmatmul.mubr.bf16.gmra.mrb[0].mxu0 %v1266
      %v1302 = vpop.f32.mrb[0].mxu0
      %v1303 = vadd.f32 0.0, %v1302
      %v1304 = vpop.f32.mrb[0].mxu0
      %v1305 = vpop.f32.mrb[0].mxu0
      %v1306 = vpop.f32.mrb[0].mxu0
      %1307 = vdwg.mxu0
      %v1308 = vpack.c.bf16 %v1303, %v1303
      %v1309 = vld [vmem:[%s11 + $0x8] sm:$0xf]
      %v1311 = vsel %vm886, %v1308, 0
      %v1314 = vsel %vm890, %v1309, 0
      %1316 = vmatprep.subr.bf16.mxu0 0
      %1317 = vmatpush1.bf16.msra.mxu0 %v1314
      %1318 = vmatprep.subr.bf16.mxu0 0
      %1319 = vmatpush1.bf16.msra.mxu0 0
      %1320 = vmatprep.subr.bf16.mxu0 0
      %1321 = vmatpush1.bf16.msra.mxu0 0
      %1322 = vmatprep.subr.bf16.mxu0 0
      %1323 = vmatpush1.bf16.msra.mxu0 0
      %1324 = vmatprep.subr.bf16.mxu0 0
      %1325 = vmatpush1.bf16.msra.mxu0 0
      %1326 = vmatprep.subr.bf16.mxu0 0
      %1327 = vmatpush1.bf16.msra.mxu0 0
      %1328 = vmatprep.subr.bf16.mxu0 0
      %1329 = vmatpush1.bf16.msra.mxu0 0
      %1330 = vmatprep.subr.bf16.mxu0 0
      %1331 = vmatpush1.bf16.msra.mxu0 0
      %1332 = vmatprep.subr.bf16.mxu0 0
      %1333 = vmatpush1.bf16.msra.mxu0 0
      %1334 = vmatprep.subr.bf16.mxu0 0
      %1335 = vmatpush1.bf16.msra.mxu0 0
      %1336 = vmatprep.subr.bf16.mxu0 0
      %1337 = vmatpush1.bf16.msra.mxu0 0
      %1338 = vmatprep.subr.bf16.mxu0 0
      %1339 = vmatpush1.bf16.msra.mxu0 0
      %1340 = vmatprep.subr.bf16.mxu0 0
      %1341 = vmatpush1.bf16.msra.mxu0 0
      %1342 = vmatprep.subr.bf16.mxu0 0
      %1343 = vmatpush1.bf16.msra.mxu0 0
      %1344 = vmatprep.subr.bf16.mxu0 0
      %1345 = vmatpush1.bf16.msra.mxu0 0
      %1346 = vmatprep.subr.bf16.mxu0 0
      %1347 = vmatpush1.bf16.msra.mxu0 0
      %1348 = vmatprep.mubr.bf16.mxu0 0
      %1349 = vmatmul.mubr.bf16.gmra.mrb[0].mxu0 %v1311
      %v1350 = vpop.f32.mrb[0].mxu0
      %v1351 = vadd.f32 0.0, %v1350
      %v1352 = vpop.f32.mrb[0].mxu0
      %v1353 = vpop.f32.mrb[0].mxu0
      %v1354 = vpop.f32.mrb[0].mxu0
      %1355 = vdwg.mxu0
      %v1356 = vadd.f32 %v1195, %v1351
      %v1357 = vld [vmem:[#allocation2 + $0x8] sm:$0xf0]
      %1358 = vrot.lane.b32.xlu0 %v884, 104
      %v1359 = vpop.permute.xlu0 %1358
      %v1361 = vrot.slane %v1357, 4
      %v1363 = vsel %vm886, %v1359, 0
      %v1366 = vsel %vm890, %v1361, 0
      %1368 = vmatprep.subr.bf16.mxu0 0
      %1369 = vmatpush1.bf16.msra.mxu0 %v1366
      %1370 = vmatprep.subr.bf16.mxu0 0
      %1371 = vmatpush1.bf16.msra.mxu0 0
      %1372 = vmatprep.subr.bf16.mxu0 0
      %1373 = vmatpush1.bf16.msra.mxu0 0
      %1374 = vmatprep.subr.bf16.mxu0 0
      %1375 = vmatpush1.bf16.msra.mxu0 0
      %1376 = vmatprep.subr.bf16.mxu0 0
      %1377 = vmatpush1.bf16.msra.mxu0 0
      %1378 = vmatprep.subr.bf16.mxu0 0
      %1379 = vmatpush1.bf16.msra.mxu0 0
      %1380 = vmatprep.subr.bf16.mxu0 0
      %1381 = vmatpush1.bf16.msra.mxu0 0
      %1382 = vmatprep.subr.bf16.mxu0 0
      %1383 = vmatpush1.bf16.msra.mxu0 0
      %1384 = vmatprep.subr.bf16.mxu0 0
      %1385 = vmatpush1.bf16.msra.mxu0 0
      %1386 = vmatprep.subr.bf16.mxu0 0
      %1387 = vmatpush1.bf16.msra.mxu0 0
      %1388 = vmatprep.subr.bf16.mxu0 0
      %1389 = vmatpush1.bf16.msra.mxu0 0
      %1390 = vmatprep.subr.bf16.mxu0 0
      %1391 = vmatpush1.bf16.msra.mxu0 0
      %1392 = vmatprep.subr.bf16.mxu0 0
      %1393 = vmatpush1.bf16.msra.mxu0 0
      %1394 = vmatprep.subr.bf16.mxu0 0
      %1395 = vmatpush1.bf16.msra.mxu0 0
      %1396 = vmatprep.subr.bf16.mxu0 0
      %1397 = vmatpush1.bf16.msra.mxu0 0
      %1398 = vmatprep.subr.bf16.mxu0 0
      %1399 = vmatpush1.bf16.msra.mxu0 0
      %1400 = vmatprep.mubr.bf16.mxu0 0
      %1401 = vmatmul.mubr.bf16.gmra.mrb[0].mxu0 %v1363
      %v1402 = vpop.f32.mrb[0].mxu0
      %v1403 = vadd.f32 0.0, %v1402
      %v1404 = vpop.f32.mrb[0].mxu0
      %v1405 = vpop.f32.mrb[0].mxu0
      %v1406 = vpop.f32.mrb[0].mxu0
      %1407 = vdwg.mxu0
      %v1408 = vmul.f32 %v1403, 0.35355338
      %v1409 = vsel %vm935, %v1408, -inf
      %1410 = vmax.xlane.f32.xlu0 %v1409
      %v1411 = vpop.xlane.xlu0 %1410
      %v1412 = vsub.f32 %v1408, %v1411
      %v1413 = vmul.f32 %v1412, 1.442695
      %v1414 = vpow.pop %v1413
      %v1415 = vsel %vm935, %v1414, 0.0
      %1416 = vadd.xlane.f32.xlu0 %v1415
      %v1417 = vpop.xlane.xlu0 %1416
      %v1418 = vrcp.pop %v1417
      %v1419 = vmul.f32 %v1414, %v1418
      %v1420 = vpack.c.bf16 %v1419, %v1419
      %1421 = vrot.lane.b32.xlu0 %v948, 104
      %v1422 = vpop.permute.xlu0 %1421
      %v1425 = vsel %vm935, %v1420, 0
      %1427 = vmatprep.subr.bf16.mxu0 0
      %1428 = vmatpush1.bf16.msra.mxu0 %v1422
      %1429 = vmatprep.subr.bf16.mxu0 0
      %1430 = vmatpush1.bf16.msra.mxu0 0
      %1431 = vmatprep.subr.bf16.mxu0 0
      %1432 = vmatpush1.bf16.msra.mxu0 0
      %1433 = vmatprep.subr.bf16.mxu0 0
      %1434 = vmatpush1.bf16.msra.mxu0 0
      %1435 = vmatprep.subr.bf16.mxu0 0
      %1436 = vmatpush1.bf16.msra.mxu0 0
      %1437 = vmatprep.subr.bf16.mxu0 0
      %1438 = vmatpush1.bf16.msra.mxu0 0
      %1439 = vmatprep.subr.bf16.mxu0 0
      %1440 = vmatpush1.bf16.msra.mxu0 0
      %1441 = vmatprep.subr.bf16.mxu0 0
      %1442 = vmatpush1.bf16.msra.mxu0 0
      %1443 = vmatprep.subr.bf16.mxu0 0
      %1444 = vmatpush1.bf16.msra.mxu0 0
      %1445 = vmatprep.subr.bf16.mxu0 0
      %1446 = vmatpush1.bf16.msra.mxu0 0
      %1447 = vmatprep.subr.bf16.mxu0 0
      %1448 = vmatpush1.bf16.msra.mxu0 0
      %1449 = vmatprep.subr.bf16.mxu0 0
      %1450 = vmatpush1.bf16.msra.mxu0 0
      %1451 = vmatprep.subr.bf16.mxu0 0
      %1452 = vmatpush1.bf16.msra.mxu0 0
      %1453 = vmatprep.subr.bf16.mxu0 0
      %1454 = vmatpush1.bf16.msra.mxu0 0
      %1455 = vmatprep.subr.bf16.mxu0 0
      %1456 = vmatpush1.bf16.msra.mxu0 0
      %1457 = vmatprep.subr.bf16.mxu0 0
      %1458 = vmatpush1.bf16.msra.mxu0 0
      %1459 = vmatprep.mubr.bf16.mxu0 0
      %1460 = vmatmul.mubr.bf16.gmra.mrb[0].mxu0 %v1425
      %v1461 = vpop.f32.mrb[0].mxu0
      %v1462 = vadd.f32 0.0, %v1461
      %v1463 = vpop.f32.mrb[0].mxu0
      %v1464 = vpop.f32.mrb[0].mxu0
      %v1465 = vpop.f32.mrb[0].mxu0
      %1466 = vdwg.mxu0
      %v1467 = vpack.c.bf16 %v1462, %v1462
      %v1468 = vld [vmem:[%s11 + $0xc] sm:$0xf]
      %v1470 = vsel %vm886, %v1467, 0
      %v1473 = vsel %vm890, %v1468, 0
      %1475 = vmatprep.subr.bf16.mxu0 0
      %1476 = vmatpush1.bf16.msra.mxu0 %v1473
      %1477 = vmatprep.subr.bf16.mxu0 0
      %1478 = vmatpush1.bf16.msra.mxu0 0
      %1479 = vmatprep.subr.bf16.mxu0 0
      %1480 = vmatpush1.bf16.msra.mxu0 0
      %1481 = vmatprep.subr.bf16.mxu0 0
      %1482 = vmatpush1.bf16.msra.mxu0 0
      %1483 = vmatprep.subr.bf16.mxu0 0
      %1484 = vmatpush1.bf16.msra.mxu0 0
      %1485 = vmatprep.subr.bf16.mxu0 0
      %1486 = vmatpush1.bf16.msra.mxu0 0
      %1487 = vmatprep.subr.bf16.mxu0 0
      %1488 = vmatpush1.bf16.msra.mxu0 0
      %1489 = vmatprep.subr.bf16.mxu0 0
      %1490 = vmatpush1.bf16.msra.mxu0 0
      %1491 = vmatprep.subr.bf16.mxu0 0
      %1492 = vmatpush1.bf16.msra.mxu0 0
      %1493 = vmatprep.subr.bf16.mxu0 0
      %1494 = vmatpush1.bf16.msra.mxu0 0
      %1495 = vmatprep.subr.bf16.mxu0 0
      %1496 = vmatpush1.bf16.msra.mxu0 0
      %1497 = vmatprep.subr.bf16.mxu0 0
      %1498 = vmatpush1.bf16.msra.mxu0 0
      %1499 = vmatprep.subr.bf16.mxu0 0
      %1500 = vmatpush1.bf16.msra.mxu0 0
      %1501 = vmatprep.subr.bf16.mxu0 0
      %1502 = vmatpush1.bf16.msra.mxu0 0
      %1503 = vmatprep.subr.bf16.mxu0 0
      %1504 = vmatpush1.bf16.msra.mxu0 0
      %1505 = vmatprep.subr.bf16.mxu0 0
      %1506 = vmatpush1.bf16.msra.mxu0 0
      %1507 = vmatprep.mubr.bf16.mxu0 0
      %1508 = vmatmul.mubr.bf16.gmra.mrb[0].mxu0 %v1470
      %v1509 = vpop.f32.mrb[0].mxu0
      %v1510 = vadd.f32 0.0, %v1509
      %v1511 = vpop.f32.mrb[0].mxu0
      %v1512 = vpop.f32.mrb[0].mxu0
      %v1513 = vpop.f32.mrb[0].mxu0
      %1514 = vdwg.mxu0
      %v1515 = vadd.f32 %v1356, %v1510
      %v1516 = vadd.f32 %v816, %v1515
      %v1517 = vld [vmem:[%s12] sm:$0x1]
      %v1519 = vlaneseq
      %v1520 = vshrl.u32 %v1519, 7
      %v1521 = vsub.s32 0, %v1520
      %v1522 = vrot.slane %v1517, %v1521
      %v1524 = vadd.f32 %v1516, %v1522
      %v1525 = vsel %vm840, %v1524, 0.0
      %1526 = vadd.xlane.f32.xlu0 %v1525
      %v1527 = vpop.xlane.xlu0 %1526
      %v1528 = vrcp.pop 32.0
      %v1529 = vmul.f32 %v1527, %v1528
      %v1530 = vsub.f32 %v1524, %v1529
      %v1531 = vmul.f32 %v1530, %v1530
      %v1532 = vsel %vm840, %v1531, 0.0
      %1533 = vadd.xlane.f32.xlu0 %v1532
      %v1534 = vpop.xlane.xlu0 %1533
      %v1535 = vmul.f32 %v1534, %v1528
      %v1536 = vadd.f32 %v1535, 1e-05
      %v1537 = vrsqrt.pop %v1536
      %v1538 = vmul.f32 %v1530, %v1537
      %v1539 = vld [vmem:[%s13] sm:$0x1]
      %v1541 = vlaneseq
      %v1542 = vshrl.u32 %v1541, 7
      %v1543 = vsub.s32 0, %v1542
      %v1544 = vrot.slane %v1539, %v1543
      %v1546 = vmul.f32 %v1538, %v1544
      %v1547 = vld [vmem:[%s14] sm:$0x1]
      %v1549 = vlaneseq
      %v1550 = vshrl.u32 %v1549, 7
      %v1551 = vsub.s32 0, %v1550
      %v1552 = vrot.slane %v1547, %v1551
      %v1554 = vadd.f32 %v1546, %v1552
      %1555 = vst.msk [vmem:[%s616] sm:$0xff] %vm840, %v1554
      %p1556 = scmp.lt.s32.totalorder %s30, 1
      %s1557 = scalar_select %p1556, %s30, 1
      %p1558 = scmp.lt.s32.totalorder %s31, 0
      %s1559 = scalar_select %p1558, %s31, 0
      %s1560 = sadd.s32 %s1559, %s1557
      %s1561 = smul.addr %s1560, 8
      %s1562 = scalar_lea.vmem %s15, %s1561
      // Predicated region
      $region85: #{cross_attention_decoder_layer.4} parent=79 // pred_check
        %p1563 = pneg %p404
      $region86: #{cross_attention_decoder_layer.4} parent=79 // pred_check_branch
        %1565 = sbr.rel (%p1563) target = $region88
      $region87: #{cross_attention_decoder_layer.4} parent=79 // pred_region
        _
      $region88: #{cross_attention_decoder_layer.4} parent=79 // pred_fallthru
        _
    $region80: #{cross_attention_decoder_layer.4} parent=5 // pred_fallthru
      _
    %p1566 = scmp.le.s32.totalorder 2, %s21
    // Predicated region
    $region89: #{cross_attention_decoder_layer.4} parent=5 // pred_check
      %p1567 = pneg %p1566
    $region90: #{cross_attention_decoder_layer.4} parent=5 // pred_check_branch
      %1569 = sbr.rel (%p1567) target = $region92
    $region91: #{cross_attention_decoder_layer.4} parent=5 // pred_region
      %s1570 = ssub.s32 %s21, 2
      // Predicated region
      $region93: #{cross_attention_decoder_layer.4} parent=91 // pred_check
        %p1571 = pneg %p410
      $region94: #{cross_attention_decoder_layer.4} parent=91 // pred_check_branch
        %1573 = sbr.rel (%p1571) target = $region96
      $region95: #{cross_attention_decoder_layer.4} parent=91 // pred_region
        %p1574 = scmp.lt.s32.totalorder %s32, 1
        %s1575 = scalar_select %p1574, %s32, 1
        %p1576 = scmp.lt.s32.totalorder %s33, 0
        %s1577 = scalar_select %p1576, %s33, 0
        %s1578 = sadd.s32 %s1577, %s1575
        %s1579 = smul.addr %s1578, 8
        %s1580 = scalar_lea.vmem %s15, %s1579
      $region96: #{cross_attention_decoder_layer.4} parent=91 // pred_fallthru
        _
    $region92: #{cross_attention_decoder_layer.4} parent=5 // pred_fallthru
      _
  $region6: #{cross_attention_decoder_layer.4} parent=0 // loop_footer
    %s25 = sadd.s32 1, %s21
  $region7: #{cross_attention_decoder_layer.4} parent=0 // loop_footer_branch
    %20 = sbr.rel target = $region3
  $region8: #{cross_attention_decoder_layer.4} parent=0 // loop_exit
    _

// kernel: cross_attention_decoder_layer.3
$region0: #{cross_attention_decoder_layer.3}
  #allocation0 [shape = 'u32[]', space=smem, size = 0x4, offset = 0x4, fixed_abs, tag = 'smem constant byte address 0x4 - core index']
  #allocation1 [shape = 'u32[144,128]{1,0:T(1,128)}', space=vmem, size = 0x12000, scoped, tag = 'internal scratch']
  #allocation2 [shape = 'bf16[32,8]{1,0:T(16,128)(2,1)}', space=vmem, size = 0x2000, scoped, tag = 'scratch operand']
  #allocation3 [shape = 'bf16[8,32]{1,0:T(8,128)(2,1)}', space=vmem, size = 0x800, scoped, tag = 'scratch operand']
  %s0 = inlined_call_operand.vmem [shape: f32[2,8,32], index: 0, kind: input, shape index: {}]
  %s1 = inlined_call_operand.vmem [shape: f32[2,8,32], index: 1, kind: input, shape index: {}]
  %s2 = inlined_call_operand.vmem [shape: bf16[32,32], index: 2, kind: input, shape index: {}]
  %s3 = inlined_call_operand.vmem [shape: f32[1,32], index: 3, kind: input, shape index: {}]
  %s4 = inlined_call_operand.vmem [shape: bf16[32,32], index: 4, kind: input, shape index: {}]
  %s5 = inlined_call_operand.vmem [shape: f32[1,32], index: 5, kind: input, shape index: {}]
  %s6 = inlined_call_operand.vmem [shape: bf16[32,32], index: 6, kind: input, shape index: {}]
  %s7 = inlined_call_operand.vmem [shape: f32[1,32], index: 7, kind: input, shape index: {}]
  %s8 = inlined_call_operand.vmem [shape: bf16[32,32], index: 8, kind: input, shape index: {}]
  %s9 = inlined_call_operand.vmem [shape: f32[1,32], index: 9, kind: input, shape index: {}]
  %s10 = inlined_call_operand.vmem [shape: f32[1,32], index: 10, kind: input, shape index: {}]
  %s11 = inlined_call_operand.vmem [shape: f32[1,32], index: 11, kind: input, shape index: {}]
  %s12 = inlined_call_operand.vmem [shape: f32[2,8,32], index: 12, kind: output, shape index: {}]
  %s13 = sld [smem:[#allocation0]]
  $region85: #{cross_attention_decoder_layer.3} parent=0
    _
  %s15 = ssub.s32 1, %s13
  %s16 = scalar_select 0, %s15, %s13
  loop: start=0, step=1, limit=4
  $region2: #{cross_attention_decoder_layer.3} parent=0 // loop_pre_header
    _
  $region3: #{cross_attention_decoder_layer.3} parent=0 // loop_header
    %s18 = sphi 0, %s22
    %p19 = scmp.ge.s32.totalorder %s18, 4
    %s25 = sphi 0, %s37
    %s26 = sphi 0, %s33
    %s27 = sphi 0, %s25
    %s28 = sphi 0, %s26
    %s29 = sphi 0, %s27
    %s30 = sphi 0, %s28
    %s40 = sphi 0, %s42
    %s43 = sphi 0, %s40
    %s44 = sphi 0, %s43
    %s60 = sphi 0, %s44
    %s66 = sphi 0, %s68
    %s69 = sphi 0, %s66
    %s70 = sphi 0, %s69
    %s86 = sphi 0, %s70
    %s90 = sphi 0, %s90
    %s92 = sphi 0, %s90
    %s93 = sphi 0, %s92
    %s107 = sphi 0, %s93
    %s111 = sphi 0, %s111
    %s113 = sphi 0, %s111
    %s114 = sphi 0, %s113
    %s128 = sphi 0, %s114
    %s132 = sphi 0, %s132
    %s134 = sphi 0, %s132
    %s135 = sphi 0, %s134
    %s149 = sphi 0, %s135
    %s153 = sphi 0, %s153
    %s155 = sphi 0, %s153
    %s156 = sphi 0, %s155
    %s170 = sphi 0, %s156
    %s174 = sphi 0, %s174
    %s176 = sphi 0, %s174
    %s177 = sphi 0, %s176
    %s191 = sphi 0, %s177
    %s195 = sphi 0, %s195
    %s197 = sphi 0, %s195
    %s198 = sphi 0, %s197
    %s212 = sphi 0, %s198
    %s216 = sphi 0, %s216
    %s218 = sphi 0, %s216
    %s219 = sphi 0, %s218
    %s233 = sphi 0, %s219
    %s237 = sphi 0, %s237
    %s239 = sphi 0, %s237
    %s240 = sphi 0, %s239
    %s254 = sphi 0, %s240
    %s258 = sphi 0, %s258
    %s260 = sphi 0, %s258
    %s261 = sphi 0, %s260
    %s275 = sphi 0, %s261
    %s279 = sphi 0, %s279
    %s281 = sphi 0, %s279
    %s282 = sphi 0, %s281
    %s296 = sphi 0, %s282
    %s304 = sphi 0, %s306
    %s307 = sphi 0, %s304
    %s308 = sphi 0, %s307
    %s324 = sphi 0, %s308
  $region4: #{cross_attention_decoder_layer.3} parent=0 // loop_header_branch
    %21 = sbr.rel (%p19) target = $region8
  $region5: #{cross_attention_decoder_layer.3} parent=0 // loop_body
    %s23 = ssub.s32 %s18, 1
    %s24 = ssub.s32 %s18, 2
    %s31 = sadd.s32 1, %s26
    %p32 = scmp.ge.s32.totalorder %s31, 1
    %s33 = scalar_select %p32, 0, %s31
    %s34 = sadd.s32 1, %s25
    %s35 = scalar_select %p32, %s34, %s25
    %p36 = scmp.ge.s32.totalorder %s35, 2
    %s37 = scalar_select %p36, 0, %s35
    %s38 = ssub.s32 %s25, %s37
    %p39 = scmp.eq.s32.totalorder %s38, 0
    %s41 = sadd.s32 %s40, 1
    %s42 = scalar_select %p39, %s40, %s41
    %p45 = pneg %p39
    %p46 = scmp.eq.s32.totalorder %s18, 1
    %p47 = por %p45, %p46
    %p48 = scmp.ne.s32.totalorder %s40, %s43
    %p49 = scmp.eq.s32.totalorder %s18, 0
    %p50 = por %p48, %p49
    %p51 = scmp.ne.s32.totalorder %s40, %s43
    %p52 = scmp.eq.s32.totalorder %s23, 1
    %p53 = por %p51, %p52
    %p54 = scmp.ne.s32.totalorder %s43, %s44
    %p55 = scmp.eq.s32.totalorder %s23, 0
    %p56 = por %p54, %p55
    %p57 = scmp.ne.s32.totalorder %s43, %s44
    %p58 = scmp.eq.s32.totalorder %s24, 1
    %p59 = por %p57, %p58
    %p61 = scmp.ne.s32.totalorder %s44, %s60
    %p62 = scmp.eq.s32.totalorder %s24, 0
    %p63 = por %p61, %p62
    %s64 = ssub.s32 %s25, %s37
    %p65 = scmp.eq.s32.totalorder %s64, 0
    %s67 = sadd.s32 %s66, 1
    %s68 = scalar_select %p65, %s66, %s67
    %p71 = pneg %p65
    %p72 = scmp.eq.s32.totalorder %s18, 1
    %p73 = por %p71, %p72
    %p74 = scmp.ne.s32.totalorder %s66, %s69
    %p75 = scmp.eq.s32.totalorder %s18, 0
    %p76 = por %p74, %p75
    %p77 = scmp.ne.s32.totalorder %s66, %s69
    %p78 = scmp.eq.s32.totalorder %s23, 1
    %p79 = por %p77, %p78
    %p80 = scmp.ne.s32.totalorder %s69, %s70
    %p81 = scmp.eq.s32.totalorder %s23, 0
    %p82 = por %p80, %p81
    %p83 = scmp.ne.s32.totalorder %s69, %s70
    %p84 = scmp.eq.s32.totalorder %s24, 1
    %p85 = por %p83, %p84
    %p87 = scmp.ne.s32.totalorder %s70, %s86
    %p88 = scmp.eq.s32.totalorder %s24, 0
    %p89 = por %p87, %p88
    %s91 = sadd.s32 %s90, 1
    %p94 = scmp.eq.s32.totalorder %s18, 1
    %p95 = scmp.ne.s32.totalorder %s90, %s92
    %p96 = scmp.eq.s32.totalorder %s18, 0
    %p97 = por %p95, %p96
    %p98 = scmp.ne.s32.totalorder %s90, %s92
    %p99 = scmp.eq.s32.totalorder %s23, 1
    %p100 = por %p98, %p99
    %p101 = scmp.ne.s32.totalorder %s92, %s93
    %p102 = scmp.eq.s32.totalorder %s23, 0
    %p103 = por %p101, %p102
    %p104 = scmp.ne.s32.totalorder %s92, %s93
    %p105 = scmp.eq.s32.totalorder %s24, 1
    %p106 = por %p104, %p105
    %p108 = scmp.ne.s32.totalorder %s93, %s107
    %p109 = scmp.eq.s32.totalorder %s24, 0
    %p110 = por %p108, %p109
    %s112 = sadd.s32 %s111, 1
    %p115 = scmp.eq.s32.totalorder %s18, 1
    %p116 = scmp.ne.s32.totalorder %s111, %s113
    %p117 = scmp.eq.s32.totalorder %s18, 0
    %p118 = por %p116, %p117
    %p119 = scmp.ne.s32.totalorder %s111, %s113
    %p120 = scmp.eq.s32.totalorder %s23, 1
    %p121 = por %p119, %p120
    %p122 = scmp.ne.s32.totalorder %s113, %s114
    %p123 = scmp.eq.s32.totalorder %s23, 0
    %p124 = por %p122, %p123
    %p125 = scmp.ne.s32.totalorder %s113, %s114
    %p126 = scmp.eq.s32.totalorder %s24, 1
    %p127 = por %p125, %p126
    %p129 = scmp.ne.s32.totalorder %s114, %s128
    %p130 = scmp.eq.s32.totalorder %s24, 0
    %p131 = por %p129, %p130
    %s133 = sadd.s32 %s132, 1
    %p136 = scmp.eq.s32.totalorder %s18, 1
    %p137 = scmp.ne.s32.totalorder %s132, %s134
    %p138 = scmp.eq.s32.totalorder %s18, 0
    %p139 = por %p137, %p138
    %p140 = scmp.ne.s32.totalorder %s132, %s134
    %p141 = scmp.eq.s32.totalorder %s23, 1
    %p142 = por %p140, %p141
    %p143 = scmp.ne.s32.totalorder %s134, %s135
    %p144 = scmp.eq.s32.totalorder %s23, 0
    %p145 = por %p143, %p144
    %p146 = scmp.ne.s32.totalorder %s134, %s135
    %p147 = scmp.eq.s32.totalorder %s24, 1
    %p148 = por %p146, %p147
    %p150 = scmp.ne.s32.totalorder %s135, %s149
    %p151 = scmp.eq.s32.totalorder %s24, 0
    %p152 = por %p150, %p151
    %s154 = sadd.s32 %s153, 1
    %p157 = scmp.eq.s32.totalorder %s18, 1
    %p158 = scmp.ne.s32.totalorder %s153, %s155
    %p159 = scmp.eq.s32.totalorder %s18, 0
    %p160 = por %p158, %p159
    %p161 = scmp.ne.s32.totalorder %s153, %s155
    %p162 = scmp.eq.s32.totalorder %s23, 1
    %p163 = por %p161, %p162
    %p164 = scmp.ne.s32.totalorder %s155, %s156
    %p165 = scmp.eq.s32.totalorder %s23, 0
    %p166 = por %p164, %p165
    %p167 = scmp.ne.s32.totalorder %s155, %s156
    %p168 = scmp.eq.s32.totalorder %s24, 1
    %p169 = por %p167, %p168
    %p171 = scmp.ne.s32.totalorder %s156, %s170
    %p172 = scmp.eq.s32.totalorder %s24, 0
    %p173 = por %p171, %p172
    %s175 = sadd.s32 %s174, 1
    %p178 = scmp.eq.s32.totalorder %s18, 1
    %p179 = scmp.ne.s32.totalorder %s174, %s176
    %p180 = scmp.eq.s32.totalorder %s18, 0
    %p181 = por %p179, %p180
    %p182 = scmp.ne.s32.totalorder %s174, %s176
    %p183 = scmp.eq.s32.totalorder %s23, 1
    %p184 = por %p182, %p183
    %p185 = scmp.ne.s32.totalorder %s176, %s177
    %p186 = scmp.eq.s32.totalorder %s23, 0
    %p187 = por %p185, %p186
    %p188 = scmp.ne.s32.totalorder %s176, %s177
    %p189 = scmp.eq.s32.totalorder %s24, 1
    %p190 = por %p188, %p189
    %p192 = scmp.ne.s32.totalorder %s177, %s191
    %p193 = scmp.eq.s32.totalorder %s24, 0
    %p194 = por %p192, %p193
    %s196 = sadd.s32 %s195, 1
    %p199 = scmp.eq.s32.totalorder %s18, 1
    %p200 = scmp.ne.s32.totalorder %s195, %s197
    %p201 = scmp.eq.s32.totalorder %s18, 0
    %p202 = por %p200, %p201
    %p203 = scmp.ne.s32.totalorder %s195, %s197
    %p204 = scmp.eq.s32.totalorder %s23, 1
    %p205 = por %p203, %p204
    %p206 = scmp.ne.s32.totalorder %s197, %s198
    %p207 = scmp.eq.s32.totalorder %s23, 0
    %p208 = por %p206, %p207
    %p209 = scmp.ne.s32.totalorder %s197, %s198
    %p210 = scmp.eq.s32.totalorder %s24, 1
    %p211 = por %p209, %p210
    %p213 = scmp.ne.s32.totalorder %s198, %s212
    %p214 = scmp.eq.s32.totalorder %s24, 0
    %p215 = por %p213, %p214
    %s217 = sadd.s32 %s216, 1
    %p220 = scmp.eq.s32.totalorder %s18, 1
    %p221 = scmp.ne.s32.totalorder %s216, %s218
    %p222 = scmp.eq.s32.totalorder %s18, 0
    %p223 = por %p221, %p222
    %p224 = scmp.ne.s32.totalorder %s216, %s218
    %p225 = scmp.eq.s32.totalorder %s23, 1
    %p226 = por %p224, %p225
    %p227 = scmp.ne.s32.totalorder %s218, %s219
    %p228 = scmp.eq.s32.totalorder %s23, 0
    %p229 = por %p227, %p228
    %p230 = scmp.ne.s32.totalorder %s218, %s219
    %p231 = scmp.eq.s32.totalorder %s24, 1
    %p232 = por %p230, %p231
    %p234 = scmp.ne.s32.totalorder %s219, %s233
    %p235 = scmp.eq.s32.totalorder %s24, 0
    %p236 = por %p234, %p235
    %s238 = sadd.s32 %s237, 1
    %p241 = scmp.eq.s32.totalorder %s18, 1
    %p242 = scmp.ne.s32.totalorder %s237, %s239
    %p243 = scmp.eq.s32.totalorder %s18, 0
    %p244 = por %p242, %p243
    %p245 = scmp.ne.s32.totalorder %s237, %s239
    %p246 = scmp.eq.s32.totalorder %s23, 1
    %p247 = por %p245, %p246
    %p248 = scmp.ne.s32.totalorder %s239, %s240
    %p249 = scmp.eq.s32.totalorder %s23, 0
    %p250 = por %p248, %p249
    %p251 = scmp.ne.s32.totalorder %s239, %s240
    %p252 = scmp.eq.s32.totalorder %s24, 1
    %p253 = por %p251, %p252
    %p255 = scmp.ne.s32.totalorder %s240, %s254
    %p256 = scmp.eq.s32.totalorder %s24, 0
    %p257 = por %p255, %p256
    %s259 = sadd.s32 %s258, 1
    %p262 = scmp.eq.s32.totalorder %s18, 1
    %p263 = scmp.ne.s32.totalorder %s258, %s260
    %p264 = scmp.eq.s32.totalorder %s18, 0
    %p265 = por %p263, %p264
    %p266 = scmp.ne.s32.totalorder %s258, %s260
    %p267 = scmp.eq.s32.totalorder %s23, 1
    %p268 = por %p266, %p267
    %p269 = scmp.ne.s32.totalorder %s260, %s261
    %p270 = scmp.eq.s32.totalorder %s23, 0
    %p271 = por %p269, %p270
    %p272 = scmp.ne.s32.totalorder %s260, %s261
    %p273 = scmp.eq.s32.totalorder %s24, 1
    %p274 = por %p272, %p273
    %p276 = scmp.ne.s32.totalorder %s261, %s275
    %p277 = scmp.eq.s32.totalorder %s24, 0
    %p278 = por %p276, %p277
    %s280 = sadd.s32 %s279, 1
    %p283 = scmp.eq.s32.totalorder %s18, 1
    %p284 = scmp.ne.s32.totalorder %s279, %s281
    %p285 = scmp.eq.s32.totalorder %s18, 0
    %p286 = por %p284, %p285
    %p287 = scmp.ne.s32.totalorder %s279, %s281
    %p288 = scmp.eq.s32.totalorder %s23, 1
    %p289 = por %p287, %p288
    %p290 = scmp.ne.s32.totalorder %s281, %s282
    %p291 = scmp.eq.s32.totalorder %s23, 0
    %p292 = por %p290, %p291
    %p293 = scmp.ne.s32.totalorder %s281, %s282
    %p294 = scmp.eq.s32.totalorder %s24, 1
    %p295 = por %p293, %p294
    %p297 = scmp.ne.s32.totalorder %s282, %s296
    %p298 = scmp.eq.s32.totalorder %s24, 0
    %p299 = por %p297, %p298
    %s300 = ssub.s32 %s25, %s37
    %s301 = ssub.s32 %s26, %s33
    %s302 = sor.u32 %s300, %s301
    %p303 = scmp.eq.s32.totalorder %s302, 0
    %s305 = sadd.s32 %s304, 1
    %s306 = scalar_select %p303, %s304, %s305
    %p309 = pneg %p303
    %p310 = scmp.eq.s32.totalorder %s18, 1
    %p311 = por %p309, %p310
    %p312 = scmp.ne.s32.totalorder %s304, %s307
    %p313 = scmp.eq.s32.totalorder %s18, 0
    %p314 = por %p312, %p313
    %p315 = scmp.ne.s32.totalorder %s304, %s307
    %p316 = scmp.eq.s32.totalorder %s23, 1
    %p317 = por %p315, %p316
    %p318 = scmp.ne.s32.totalorder %s307, %s308
    %p319 = scmp.eq.s32.totalorder %s23, 0
    %p320 = por %p318, %p319
    %p321 = scmp.ne.s32.totalorder %s307, %s308
    %p322 = scmp.eq.s32.totalorder %s24, 1
    %p323 = por %p321, %p322
    %p325 = scmp.ne.s32.totalorder %s308, %s324
    %p326 = scmp.eq.s32.totalorder %s24, 0
    %p327 = por %p325, %p326
    %p328 = scmp.le.s32.totalorder 1, %s18
    %p329 = scmp.lt.s32.totalorder %s18, 3
    %p330 = pnand %p328, %p329
    %p331 = pneg %p330
    // Predicated region
    $region9: #{cross_attention_decoder_layer.3} parent=5 // pred_check
      _
    $region10: #{cross_attention_decoder_layer.3} parent=5 // pred_check_branch
      %333 = sbr.rel (%p330) target = $region12
    $region11: #{cross_attention_decoder_layer.3} parent=5 // pred_region
      %s334 = ssub.s32 %s18, 1
      // Predicated region
      $region13: #{cross_attention_decoder_layer.3} parent=11 // pred_check
        %p335 = pneg %p103
      $region14: #{cross_attention_decoder_layer.3} parent=11 // pred_check_branch
        %337 = sbr.rel (%p335) target = $region16
      $region15: #{cross_attention_decoder_layer.3} parent=11 // pred_region
        _
      $region16: #{cross_attention_decoder_layer.3} parent=11 // pred_fallthru
        _
      // Predicated region
      $region17: #{cross_attention_decoder_layer.3} parent=11 // pred_check
        %p338 = pneg %p124
      $region18: #{cross_attention_decoder_layer.3} parent=11 // pred_check_branch
        %340 = sbr.rel (%p338) target = $region20
      $region19: #{cross_attention_decoder_layer.3} parent=11 // pred_region
        _
      $region20: #{cross_attention_decoder_layer.3} parent=11 // pred_fallthru
        _
      // Predicated region
      $region21: #{cross_attention_decoder_layer.3} parent=11 // pred_check
        %p341 = pneg %p145
      $region22: #{cross_attention_decoder_layer.3} parent=11 // pred_check_branch
        %343 = sbr.rel (%p341) target = $region24
      $region23: #{cross_attention_decoder_layer.3} parent=11 // pred_region
        _
      $region24: #{cross_attention_decoder_layer.3} parent=11 // pred_fallthru
        _
      // Predicated region
      $region25: #{cross_attention_decoder_layer.3} parent=11 // pred_check
        %p344 = pneg %p166
      $region26: #{cross_attention_decoder_layer.3} parent=11 // pred_check_branch
        %346 = sbr.rel (%p344) target = $region28
      $region27: #{cross_attention_decoder_layer.3} parent=11 // pred_region
        _
      $region28: #{cross_attention_decoder_layer.3} parent=11 // pred_fallthru
        _
      // Predicated region
      $region29: #{cross_attention_decoder_layer.3} parent=11 // pred_check
        %p347 = pneg %p187
      $region30: #{cross_attention_decoder_layer.3} parent=11 // pred_check_branch
        %349 = sbr.rel (%p347) target = $region32
      $region31: #{cross_attention_decoder_layer.3} parent=11 // pred_region
        _
      $region32: #{cross_attention_decoder_layer.3} parent=11 // pred_fallthru
        _
      // Predicated region
      $region33: #{cross_attention_decoder_layer.3} parent=11 // pred_check
        %p350 = pneg %p208
      $region34: #{cross_attention_decoder_layer.3} parent=11 // pred_check_branch
        %352 = sbr.rel (%p350) target = $region36
      $region35: #{cross_attention_decoder_layer.3} parent=11 // pred_region
        _
      $region36: #{cross_attention_decoder_layer.3} parent=11 // pred_fallthru
        _
      // Predicated region
      $region37: #{cross_attention_decoder_layer.3} parent=11 // pred_check
        %p353 = pneg %p229
      $region38: #{cross_attention_decoder_layer.3} parent=11 // pred_check_branch
        %355 = sbr.rel (%p353) target = $region40
      $region39: #{cross_attention_decoder_layer.3} parent=11 // pred_region
        _
      $region40: #{cross_attention_decoder_layer.3} parent=11 // pred_fallthru
        _
      // Predicated region
      $region41: #{cross_attention_decoder_layer.3} parent=11 // pred_check
        %p356 = pneg %p250
      $region42: #{cross_attention_decoder_layer.3} parent=11 // pred_check_branch
        %358 = sbr.rel (%p356) target = $region44
      $region43: #{cross_attention_decoder_layer.3} parent=11 // pred_region
        _
      $region44: #{cross_attention_decoder_layer.3} parent=11 // pred_fallthru
        _
      // Predicated region
      $region45: #{cross_attention_decoder_layer.3} parent=11 // pred_check
        %p359 = pneg %p271
      $region46: #{cross_attention_decoder_layer.3} parent=11 // pred_check_branch
        %361 = sbr.rel (%p359) target = $region48
      $region47: #{cross_attention_decoder_layer.3} parent=11 // pred_region
        _
      $region48: #{cross_attention_decoder_layer.3} parent=11 // pred_fallthru
        _
      // Predicated region
      $region49: #{cross_attention_decoder_layer.3} parent=11 // pred_check
        %p362 = pneg %p292
      $region50: #{cross_attention_decoder_layer.3} parent=11 // pred_check_branch
        %364 = sbr.rel (%p362) target = $region52
      $region51: #{cross_attention_decoder_layer.3} parent=11 // pred_region
        _
      $region52: #{cross_attention_decoder_layer.3} parent=11 // pred_fallthru
        _
    $region12: #{cross_attention_decoder_layer.3} parent=5 // pred_fallthru
      _
    %p365 = scmp.lt.s32.totalorder %s18, 2
    // Predicated region
    $region53: #{cross_attention_decoder_layer.3} parent=5 // pred_check
      %p366 = pneg %p365
    $region54: #{cross_attention_decoder_layer.3} parent=5 // pred_check_branch
      %368 = sbr.rel (%p366) target = $region56
    $region55: #{cross_attention_decoder_layer.3} parent=5 // pred_region
      // Predicated region
      $region57: #{cross_attention_decoder_layer.3} parent=55 // pred_check
        %p369 = pneg %p50
      $region58: #{cross_attention_decoder_layer.3} parent=55 // pred_check_branch
        %371 = sbr.rel (%p369) target = $region60
      $region59: #{cross_attention_decoder_layer.3} parent=55 // pred_region
        %p372 = scmp.lt.s32.totalorder %s25, 1
        %s373 = scalar_select %p372, %s25, 1
        %s374 = smul.addr %s373, 8
        %s375 = scalar_lea.vmem %s0, %s374
      $region60: #{cross_attention_decoder_layer.3} parent=55 // pred_fallthru
        _
      // Predicated region
      $region61: #{cross_attention_decoder_layer.3} parent=55 // pred_check
        %p376 = pneg %p76
      $region62: #{cross_attention_decoder_layer.3} parent=55 // pred_check_branch
        %378 = sbr.rel (%p376) target = $region64
      $region63: #{cross_attention_decoder_layer.3} parent=55 // pred_region
        %p379 = scmp.lt.s32.totalorder %s25, 1
        %s380 = scalar_select %p379, %s25, 1
        %s381 = smul.addr %s380, 8
        %s382 = scalar_lea.vmem %s1, %s381
      $region64: #{cross_attention_decoder_layer.3} parent=55 // pred_fallthru
        _
    $region56: #{cross_attention_decoder_layer.3} parent=5 // pred_fallthru
      _
    %p383 = scmp.le.s32.totalorder 1, %s18
    %p384 = scmp.lt.s32.totalorder %s18, 3
    %p385 = pnand %p383, %p384
    %p386 = pneg %p385
    // Predicated region
    $region65: #{cross_attention_decoder_layer.3} parent=5 // pred_check
      _
    $region66: #{cross_attention_decoder_layer.3} parent=5 // pred_check_branch
      %388 = sbr.rel (%p385) target = $region68
    $region67: #{cross_attention_decoder_layer.3} parent=5 // pred_region
      %s389 = ssub.s32 %s18, 1
      %p390 = scmp.lt.s32.totalorder %s27, 1
      %s391 = scalar_select %p390, %s27, 1
      %s392 = smul.addr %s391, 8
      %s393 = scalar_lea.vmem %s0, %s392
      %p394 = pneg %p56
      %p395 = pneg %p53
      %p396 = scmp.lt.s32.totalorder %s27, 1
      %s397 = scalar_select %p396, %s27, 1
      %s398 = smul.addr %s397, 8
      %s399 = scalar_lea.vmem %s1, %s398
      %p400 = pneg %p82
      %p401 = pneg %p79
      %p402 = pneg %p103
      %p403 = pneg %p100
      %p404 = pneg %p124
      %p405 = pneg %p121
      %p406 = pneg %p145
      %p407 = pneg %p142
      %p408 = pneg %p166
      %p409 = pneg %p163
      %p410 = pneg %p187
      %p411 = pneg %p184
      %p412 = pneg %p208
      %p413 = pneg %p205
      %p414 = pneg %p229
      %p415 = pneg %p226
      %p416 = pneg %p250
      %p417 = pneg %p247
      %p418 = pneg %p271
      %p419 = pneg %p268
      %p420 = pneg %p292
      %p421 = pneg %p289
      %p422 = pneg %p320
      %p423 = pneg %p317
      %p424 = scmp.lt.s32.totalorder %s27, 1
      %s425 = scalar_select %p424, %s27, 1
      %p426 = scmp.lt.s32.totalorder %s28, 0
      %s427 = scalar_select %p426, %s28, 0
      %s428 = sadd.s32 %s427, %s425
      %s429 = smul.addr %s428, 8
      %s430 = scalar_lea.vmem %s12, %s429
      %p431 = scmp.lt.s32.totalorder %s27, 1
      %s432 = scalar_select %p431, %s27, 1
      %s433 = smul.addr %s432, 8
      %s434 = scalar_lea.vmem %s0, %s433
      %p435 = scmp.lt.s32.totalorder %s27, 1
      %s436 = scalar_select %p435, %s27, 1
      %s437 = smul.addr %s436, 8
      %s438 = scalar_lea.vmem %s1, %s437
      %p439 = scmp.lt.s32.totalorder %s27, 1
      %s440 = scalar_select %p439, %s27, 1
      %p441 = scmp.lt.s32.totalorder %s28, 0
      %s442 = scalar_select %p441, %s28, 0
      %s443 = sadd.s32 %s442, %s440
      %s444 = smul.addr %s443, 8
      %s445 = scalar_lea.vmem %s12, %s444
      %p447 = scmp.eq.s32.totalorder %s28, 0
      // Predicated region
      $region69: #{cross_attention_decoder_layer.3} parent=67 // pred_check
        %p448 = pneg %p447
      $region70: #{cross_attention_decoder_layer.3} parent=67 // pred_check_branch
        %450 = sbr.rel (%p448) target = $region72
      $region71: #{cross_attention_decoder_layer.3} parent=67 // pred_region
        %v451 = vld [vmem:[%s434] sm:$0xff]
        %v452 = vld [vmem:[%s438] sm:$0xff]
        %v453 = vadd.f32 %v451, %v452
        %v454 = vpack.c.bf16 %v453, %v453
        %v455 = vpack.c.bf16 %v451, %v451
        %v456 = vld [vmem:[%s4] sm:$0xf]
        %v457 = vld [vmem:[%s4 + $0x4] sm:$0xf]
        %v458 = vld [vmem:[%s4 + $0x8] sm:$0xf]
        %v459 = vld [vmem:[%s4 + $0xc] sm:$0xf]
        %v460 = vld [vmem:[%s5] sm:$0x1]
        %v462 = vlaneseq
        %v463 = vshrl.u32 %v462, 7
        %v464 = vsub.s32 0, %v463
        %v465 = vrot.slane %v460, %v464
        %v471 = vunpack.c.l.b16 %v456
        %v472 = vunpack.c.l.b16 %v457
        %v473 = vunpack.c.l.b16 %v458
        %v474 = vunpack.c.l.b16 %v459
        %v475 = vpack.c.b16 %v472, %v471
        %v476 = vpack.c.b16 %v474, %v473
        %vm479 = vcmask 261120
        %v481 = vsel %vm479, %v454, 0
        %483 = vmatprep.subr.bf16.mxu0 0
        %484 = vmatpush1.bf16.msra.mxu0 %v475
        %485 = vmatprep.subr.bf16.mxu0 0
        %486 = vmatpush1.bf16.msra.mxu0 %v476
        %487 = vmatprep.subr.bf16.mxu0 0
        %488 = vmatpush1.bf16.msra.mxu0 0
        %489 = vmatprep.subr.bf16.mxu0 0
        %490 = vmatpush1.bf16.msra.mxu0 0
        %491 = vmatprep.subr.bf16.mxu0 0
        %492 = vmatpush1.bf16.msra.mxu0 0
        %493 = vmatprep.subr.bf16.mxu0 0
        %494 = vmatpush1.bf16.msra.mxu0 0
        %495 = vmatprep.subr.bf16.mxu0 0
        %496 = vmatpush1.bf16.msra.mxu0 0
        %497 = vmatprep.subr.bf16.mxu0 0
        %498 = vmatpush1.bf16.msra.mxu0 0
        %499 = vmatprep.subr.bf16.mxu0 0
        %500 = vmatpush1.bf16.msra.mxu0 0
        %501 = vmatprep.subr.bf16.mxu0 0
        %502 = vmatpush1.bf16.msra.mxu0 0
        %503 = vmatprep.subr.bf16.mxu0 0
        %504 = vmatpush1.bf16.msra.mxu0 0
        %505 = vmatprep.subr.bf16.mxu0 0
        %506 = vmatpush1.bf16.msra.mxu0 0
        %507 = vmatprep.subr.bf16.mxu0 0
        %508 = vmatpush1.bf16.msra.mxu0 0
        %509 = vmatprep.subr.bf16.mxu0 0
        %510 = vmatpush1.bf16.msra.mxu0 0
        %511 = vmatprep.subr.bf16.mxu0 0
        %512 = vmatpush1.bf16.msra.mxu0 0
        %513 = vmatprep.subr.bf16.mxu0 0
        %514 = vmatpush1.bf16.msra.mxu0 0
        %515 = vmatprep.mubr.bf16.mxu0 0
        %516 = vmatmul.mubr.bf16.gmra.mrb[0].mxu0 %v481
        %v517 = vpop.f32.mrb[0].mxu0
        %v518 = vadd.f32 %v465, %v517
        %v519 = vpop.f32.mrb[0].mxu0
        %v520 = vpop.f32.mrb[0].mxu0
        %v521 = vpop.f32.mrb[0].mxu0
        %522 = vdwg.mxu0
        %v523 = vld [vmem:[%s6] sm:$0xf]
        %v524 = vld [vmem:[%s6 + $0x4] sm:$0xf]
        %v525 = vld [vmem:[%s6 + $0x8] sm:$0xf]
        %v526 = vld [vmem:[%s6 + $0xc] sm:$0xf]
        %v527 = vld [vmem:[%s7] sm:$0x1]
        %v529 = vlaneseq
        %v530 = vshrl.u32 %v529, 7
        %v531 = vsub.s32 0, %v530
        %v532 = vrot.slane %v527, %v531
        %v538 = vunpack.c.l.b16 %v523
        %v539 = vunpack.c.l.b16 %v524
        %v540 = vunpack.c.l.b16 %v525
        %v541 = vunpack.c.l.b16 %v526
        %v542 = vpack.c.b16 %v539, %v538
        %v543 = vpack.c.b16 %v541, %v540
        %v547 = vsel %vm479, %v455, 0
        %549 = vmatprep.subr.bf16.mxu0 0
        %550 = vmatpush1.bf16.msra.mxu0 %v542
        %551 = vmatprep.subr.bf16.mxu0 0
        %552 = vmatpush1.bf16.msra.mxu0 %v543
        %553 = vmatprep.subr.bf16.mxu0 0
        %554 = vmatpush1.bf16.msra.mxu0 0
        %555 = vmatprep.subr.bf16.mxu0 0
        %556 = vmatpush1.bf16.msra.mxu0 0
        %557 = vmatprep.subr.bf16.mxu0 0
        %558 = vmatpush1.bf16.msra.mxu0 0
        %559 = vmatprep.subr.bf16.mxu0 0
        %560 = vmatpush1.bf16.msra.mxu0 0
        %561 = vmatprep.subr.bf16.mxu0 0
        %562 = vmatpush1.bf16.msra.mxu0 0
        %563 = vmatprep.subr.bf16.mxu0 0
        %564 = vmatpush1.bf16.msra.mxu0 0
        %565 = vmatprep.subr.bf16.mxu0 0
        %566 = vmatpush1.bf16.msra.mxu0 0
        %567 = vmatprep.subr.bf16.mxu0 0
        %568 = vmatpush1.bf16.msra.mxu0 0
        %569 = vmatprep.subr.bf16.mxu0 0
        %570 = vmatpush1.bf16.msra.mxu0 0
        %571 = vmatprep.subr.bf16.mxu0 0
        %572 = vmatpush1.bf16.msra.mxu0 0
        %573 = vmatprep.subr.bf16.mxu0 0
        %574 = vmatpush1.bf16.msra.mxu0 0
        %575 = vmatprep.subr.bf16.mxu0 0
        %576 = vmatpush1.bf16.msra.mxu0 0
        %577 = vmatprep.subr.bf16.mxu0 0
        %578 = vmatpush1.bf16.msra.mxu0 0
        %579 = vmatprep.subr.bf16.mxu0 0
        %580 = vmatpush1.bf16.msra.mxu0 0
        %581 = vmatprep.mubr.bf16.mxu0 0
        %582 = vmatmul.mubr.bf16.gmra.mrb[0].mxu0 %v547
        %v583 = vpop.f32.mrb[0].mxu0
        %v584 = vadd.f32 %v532, %v583
        %v585 = vpop.f32.mrb[0].mxu0
        %v586 = vpop.f32.mrb[0].mxu0
        %v587 = vpop.f32.mrb[0].mxu0
        %588 = vdwg.mxu0
        %589 = vxpose.xlu0.b32.start [1/16] %v518, 128
        %590 = vxpose.xlu0.b32.cont [2/16] 0.0, 128
        %591 = vxpose.xlu0.b32.cont [3/16] 0.0, 128
        %592 = vxpose.xlu0.b32.cont [4/16] 0.0, 128
        %593 = vxpose.xlu0.b32.cont [5/16] 0.0, 128
        %594 = vxpose.xlu0.b32.cont [6/16] 0.0, 128
        %595 = vxpose.xlu0.b32.cont [7/16] 0.0, 128
        %596 = vxpose.xlu0.b32.cont [8/16] 0.0, 128
        %597 = vxpose.xlu0.b32.cont [9/16] 0.0, 128
        %598 = vxpose.xlu0.b32.cont [10/16] 0.0, 128
        %599 = vxpose.xlu0.b32.cont [11/16] 0.0, 128
        %600 = vxpose.xlu0.b32.cont [12/16] 0.0, 128
        %601 = vxpose.xlu0.b32.cont [13/16] 0.0, 128
        %602 = vxpose.xlu0.b32.cont [14/16] 0.0, 128
        %603 = vxpose.xlu0.b32.cont [15/16] 0.0, 128
        %604 = vxpose.xlu0.b32.end [16/16] 0.0, 128
        %v605 = vpop.trf.xlu0
        %v606 = vpop.trf.xlu0
        %v607 = vpop.trf.xlu0
        %v608 = vpop.trf.xlu0
        %v609 = vpop.trf.xlu0
        %v610 = vpop.trf.xlu0
        %v611 = vpop.trf.xlu0
        %v612 = vpop.trf.xlu0
        %v613 = vpop.trf.xlu0
        %v614 = vpop.trf.xlu0
        %v615 = vpop.trf.xlu0
        %v616 = vpop.trf.xlu0
        %v617 = vpop.trf.xlu0
        %v618 = vpop.trf.xlu0
        %v619 = vpop.trf.xlu0
        %v620 = vpop.trf.xlu0
        %v621 = vpack.c.bf16 %v606, %v605
        %v622 = vpack.c.bf16 %v608, %v607
        %vm623 = vcmask 64512
        %624 = vst.msk [vmem:[#allocation2] sm:$0xff] %vm623, %v621
        %625 = vst.msk [vmem:[#allocation2 + $0x8] sm:$0xff] %vm623, %v622
        %v626 = vpack.c.bf16 %v584, %v584
        %vm627 = vcmask 257024
        %628 = vst.msk [vmem:[#allocation3] sm:$0xf] %vm627, %v626
      $region72: #{cross_attention_decoder_layer.3} parent=67 // pred_fallthru
        _
      %s629 = smul.u32 %s28, 8
      %s630 = scalar_lea.vmem %s434, %s629
      %v631 = vld [vmem:[%s630] sm:$0xff]
      %s632 = scalar_lea.vmem %s438, %s629
      %v633 = vld [vmem:[%s632] sm:$0xff]
      %v634 = vadd.f32 %v631, %v633
      %v635 = vpack.c.bf16 %v634, %v634
      %v636 = vld [vmem:[%s2] sm:$0xf]
      %v637 = vld [vmem:[%s2 + $0x4] sm:$0xf]
      %v638 = vld [vmem:[%s2 + $0x8] sm:$0xf]
      %v639 = vld [vmem:[%s2 + $0xc] sm:$0xf]
      %v640 = vld [vmem:[%s3] sm:$0x1]
      %v642 = vlaneseq
      %v643 = vshrl.u32 %v642, 7
      %v644 = vsub.s32 0, %v643
      %v645 = vrot.slane %v640, %v644
      %v651 = vunpack.c.l.b16 %v636
      %v652 = vunpack.c.l.b16 %v637
      %v653 = vunpack.c.l.b16 %v638
      %v654 = vunpack.c.l.b16 %v639
      %v655 = vpack.c.b16 %v652, %v651
      %v656 = vpack.c.b16 %v654, %v653
      %vm659 = vcmask 261120
      %v661 = vsel %vm659, %v635, 0
      %663 = vmatprep.subr.bf16.mxu0 0
      %664 = vmatpush1.bf16.msra.mxu0 %v655
      %665 = vmatprep.subr.bf16.mxu0 0
      %666 = vmatpush1.bf16.msra.mxu0 %v656
      %667 = vmatprep.subr.bf16.mxu0 0
      %668 = vmatpush1.bf16.msra.mxu0 0
      %669 = vmatprep.subr.bf16.mxu0 0
      %670 = vmatpush1.bf16.msra.mxu0 0
      %671 = vmatprep.subr.bf16.mxu0 0
      %672 = vmatpush1.bf16.msra.mxu0 0
      %673 = vmatprep.subr.bf16.mxu0 0
      %674 = vmatpush1.bf16.msra.mxu0 0
      %675 = vmatprep.subr.bf16.mxu0 0
      %676 = vmatpush1.bf16.msra.mxu0 0
      %677 = vmatprep.subr.bf16.mxu0 0
      %678 = vmatpush1.bf16.msra.mxu0 0
      %679 = vmatprep.subr.bf16.mxu0 0
      %680 = vmatpush1.bf16.msra.mxu0 0
      %681 = vmatprep.subr.bf16.mxu0 0
      %682 = vmatpush1.bf16.msra.mxu0 0
      %683 = vmatprep.subr.bf16.mxu0 0
      %684 = vmatpush1.bf16.msra.mxu0 0
      %685 = vmatprep.subr.bf16.mxu0 0
      %686 = vmatpush1.bf16.msra.mxu0 0
      %687 = vmatprep.subr.bf16.mxu0 0
      %688 = vmatpush1.bf16.msra.mxu0 0
      %689 = vmatprep.subr.bf16.mxu0 0
      %690 = vmatpush1.bf16.msra.mxu0 0
      %691 = vmatprep.subr.bf16.mxu0 0
      %692 = vmatpush1.bf16.msra.mxu0 0
      %693 = vmatprep.subr.bf16.mxu0 0
      %694 = vmatpush1.bf16.msra.mxu0 0
      %695 = vmatprep.mubr.bf16.mxu0 0
      %696 = vmatmul.mubr.bf16.gmra.mrb[0].mxu0 %v661
      %v697 = vpop.f32.mrb[0].mxu0
      %v698 = vadd.f32 %v645, %v697
      %v699 = vpop.f32.mrb[0].mxu0
      %v700 = vpop.f32.mrb[0].mxu0
      %v701 = vpop.f32.mrb[0].mxu0
      %702 = vdwg.mxu0
      %v703 = vpack.c.bf16 %v698, %v698
      %v704 = vld [vmem:[#allocation2] sm:$0xf]
      %vm705 = vcmask 64512
      %v707 = vsel %vm705, %v703, 0
      %vm709 = vcmask 1043456
      %v711 = vsel %vm709, %v704, 0
      %713 = vmatprep.subr.bf16.mxu0 0
      %714 = vmatpush1.bf16.msra.mxu0 %v711
      %715 = vmatprep.subr.bf16.mxu0 0
      %716 = vmatpush1.bf16.msra.mxu0 0
      %717 = vmatprep.subr.bf16.mxu0 0
      %718 = vmatpush1.bf16.msra.mxu0 0
      %719 = vmatprep.subr.bf16.mxu0 0
      %720 = vmatpush1.bf16.msra.mxu0 0
      %721 = vmatprep.subr.bf16.mxu0 0
      %722 = vmatpush1.bf16.msra.mxu0 0
      %723 = vmatprep.subr.bf16.mxu0 0
      %724 = vmatpush1.bf16.msra.mxu0 0
      %725 = vmatprep.subr.bf16.mxu0 0
      %726 = vmatpush1.bf16.msra.mxu0 0
      %727 = vmatprep.subr.bf16.mxu0 0
      %728 = vmatpush1.bf16.msra.mxu0 0
      %729 = vmatprep.subr.bf16.mxu0 0
      %730 = vmatpush1.bf16.msra.mxu0 0
      %731 = vmatprep.subr.bf16.mxu0 0
      %732 = vmatpush1.bf16.msra.mxu0 0
      %733 = vmatprep.subr.bf16.mxu0 0
      %734 = vmatpush1.bf16.msra.mxu0 0
      %735 = vmatprep.subr.bf16.mxu0 0
      %736 = vmatpush1.bf16.msra.mxu0 0
      %737 = vmatprep.subr.bf16.mxu0 0
      %738 = vmatpush1.bf16.msra.mxu0 0
      %739 = vmatprep.subr.bf16.mxu0 0
      %740 = vmatpush1.bf16.msra.mxu0 0
      %741 = vmatprep.subr.bf16.mxu0 0
      %742 = vmatpush1.bf16.msra.mxu0 0
      %743 = vmatprep.subr.bf16.mxu0 0
      %744 = vmatpush1.bf16.msra.mxu0 0
      %745 = vmatprep.mubr.bf16.mxu0 0
      %746 = vmatmul.mubr.bf16.gmra.mrb[0].mxu0 %v707
      %v747 = vpop.f32.mrb[0].mxu0
      %v748 = vadd.f32 0.0, %v747
      %v749 = vpop.f32.mrb[0].mxu0
      %v750 = vpop.f32.mrb[0].mxu0
      %v751 = vpop.f32.mrb[0].mxu0
      %752 = vdwg.mxu0
      %v753 = vmul.f32 %v748, 0.35355338
      %v754 = vsel %vm705, %v753, -inf
      %755 = vmax.xlane.f32.xlu0 %v754
      %v756 = vpop.xlane.xlu0 %755
      %v757 = vsub.f32 %v753, %v756
      %v758 = vmul.f32 %v757, 1.442695
      %v759 = vpow.pop %v758
      %v760 = vsel %vm705, %v759, 0.0
      %761 = vadd.xlane.f32.xlu0 %v760
      %v762 = vpop.xlane.xlu0 %761
      %v763 = vrcp.pop %v762
      %v764 = vmul.f32 %v759, %v763
      %v765 = vpack.c.bf16 %v764, %v764
      %v766 = vld [vmem:[#allocation3] sm:$0xf]
      %v768 = vsel %vm705, %v765, 0
      %v771 = vsel %vm709, %v766, 0
      %773 = vmatprep.subr.bf16.mxu0 0
      %774 = vmatpush1.bf16.msra.mxu0 %v771
      %775 = vmatprep.subr.bf16.mxu0 0
      %776 = vmatpush1.bf16.msra.mxu0 0
      %777 = vmatprep.subr.bf16.mxu0 0
      %778 = vmatpush1.bf16.msra.mxu0 0
      %779 = vmatprep.subr.bf16.mxu0 0
      %780 = vmatpush1.bf16.msra.mxu0 0
      %781 = vmatprep.subr.bf16.mxu0 0
      %782 = vmatpush1.bf16.msra.mxu0 0
      %783 = vmatprep.subr.bf16.mxu0 0
      %784 = vmatpush1.bf16.msra.mxu0 0
      %785 = vmatprep.subr.bf16.mxu0 0
      %786 = vmatpush1.bf16.msra.mxu0 0
      %787 = vmatprep.subr.bf16.mxu0 0
      %788 = vmatpush1.bf16.msra.mxu0 0
      %789 = vmatprep.subr.bf16.mxu0 0
      %790 = vmatpush1.bf16.msra.mxu0 0
      %791 = vmatprep.subr.bf16.mxu0 0
      %792 = vmatpush1.bf16.msra.mxu0 0
      %793 = vmatprep.subr.bf16.mxu0 0
      %794 = vmatpush1.bf16.msra.mxu0 0
      %795 = vmatprep.subr.bf16.mxu0 0
      %796 = vmatpush1.bf16.msra.mxu0 0
      %797 = vmatprep.subr.bf16.mxu0 0
      %798 = vmatpush1.bf16.msra.mxu0 0
      %799 = vmatprep.subr.bf16.mxu0 0
      %800 = vmatpush1.bf16.msra.mxu0 0
      %801 = vmatprep.subr.bf16.mxu0 0
      %802 = vmatpush1.bf16.msra.mxu0 0
      %803 = vmatprep.subr.bf16.mxu0 0
      %804 = vmatpush1.bf16.msra.mxu0 0
      %805 = vmatprep.mubr.bf16.mxu0 0
      %806 = vmatmul.mubr.bf16.gmra.mrb[0].mxu0 %v768
      %v807 = vpop.f32.mrb[0].mxu0
      %v808 = vadd.f32 0.0, %v807
      %v809 = vpop.f32.mrb[0].mxu0
      %v810 = vpop.f32.mrb[0].mxu0
      %v811 = vpop.f32.mrb[0].mxu0
      %812 = vdwg.mxu0
      %v813 = vpack.c.bf16 %v808, %v808
      %v814 = vld [vmem:[%s8] sm:$0xf]
      %v815 = vld [vmem:[#allocation2] sm:$0xf0]
      %817 = vrot.lane.b32.xlu0 %v703, 120
      %v818 = vpop.permute.xlu0 %817
      %v820 = vrot.slane %v815, 4
      %v822 = vsel %vm705, %v818, 0
      %v825 = vsel %vm709, %v820, 0
      %827 = vmatprep.subr.bf16.mxu0 0
      %828 = vmatpush1.bf16.msra.mxu0 %v825
      %829 = vmatprep.subr.bf16.mxu0 0
      %830 = vmatpush1.bf16.msra.mxu0 0
      %831 = vmatprep.subr.bf16.mxu0 0
      %832 = vmatpush1.bf16.msra.mxu0 0
      %833 = vmatprep.subr.bf16.mxu0 0
      %834 = vmatpush1.bf16.msra.mxu0 0
      %835 = vmatprep.subr.bf16.mxu0 0
      %836 = vmatpush1.bf16.msra.mxu0 0
      %837 = vmatprep.subr.bf16.mxu0 0
      %838 = vmatpush1.bf16.msra.mxu0 0
      %839 = vmatprep.subr.bf16.mxu0 0
      %840 = vmatpush1.bf16.msra.mxu0 0
      %841 = vmatprep.subr.bf16.mxu0 0
      %842 = vmatpush1.bf16.msra.mxu0 0
      %843 = vmatprep.subr.bf16.mxu0 0
      %844 = vmatpush1.bf16.msra.mxu0 0
      %845 = vmatprep.subr.bf16.mxu0 0
      %846 = vmatpush1.bf16.msra.mxu0 0
      %847 = vmatprep.subr.bf16.mxu0 0
      %848 = vmatpush1.bf16.msra.mxu0 0
      %849 = vmatprep.subr.bf16.mxu0 0
      %850 = vmatpush1.bf16.msra.mxu0 0
      %851 = vmatprep.subr.bf16.mxu0 0
      %852 = vmatpush1.bf16.msra.mxu0 0
      %853 = vmatprep.subr.bf16.mxu0 0
      %854 = vmatpush1.bf16.msra.mxu0 0
      %855 = vmatprep.subr.bf16.mxu0 0
      %856 = vmatpush1.bf16.msra.mxu0 0
      %857 = vmatprep.subr.bf16.mxu0 0
      %858 = vmatpush1.bf16.msra.mxu0 0
      %859 = vmatprep.mubr.bf16.mxu0 0
      %860 = vmatmul.mubr.bf16.gmra.mrb[0].mxu0 %v822
      %v861 = vpop.f32.mrb[0].mxu0
      %v862 = vadd.f32 0.0, %v861
      %v863 = vpop.f32.mrb[0].mxu0
      %v864 = vpop.f32.mrb[0].mxu0
      %v865 = vpop.f32.mrb[0].mxu0
      %866 = vdwg.mxu0
      %v867 = vmul.f32 %v862, 0.35355338
      %v868 = vsel %vm705, %v867, -inf
      %869 = vmax.xlane.f32.xlu0 %v868
      %v870 = vpop.xlane.xlu0 %869
      %v871 = vsub.f32 %v867, %v870
      %v872 = vmul.f32 %v871, 1.442695
      %v873 = vpow.pop %v872
      %v874 = vsel %vm705, %v873, 0.0
      %875 = vadd.xlane.f32.xlu0 %v874
      %v876 = vpop.xlane.xlu0 %875
      %v877 = vrcp.pop %v876
      %v878 = vmul.f32 %v873, %v877
      %v879 = vpack.c.bf16 %v878, %v878
      %v881 = vunpack.c.l.b16 %v766
      %v882 = vpack.c.b16 %v881, %v881
      %883 = vrot.lane.b32.xlu0 %v882, 120
      %v884 = vpop.permute.xlu0 %883
      %v886 = vsel %vm705, %v879, 0
      %v889 = vsel %vm709, %v884, 0
      %891 = vmatprep.subr.bf16.mxu0 0
      %892 = vmatpush1.bf16.msra.mxu0 %v889
      %893 = vmatprep.subr.bf16.mxu0 0
      %894 = vmatpush1.bf16.msra.mxu0 0
      %895 = vmatprep.subr.bf16.mxu0 0
      %896 = vmatpush1.bf16.msra.mxu0 0
      %897 = vmatprep.subr.bf16.mxu0 0
      %898 = vmatpush1.bf16.msra.mxu0 0
      %899 = vmatprep.subr.bf16.mxu0 0
      %900 = vmatpush1.bf16.msra.mxu0 0
      %901 = vmatprep.subr.bf16.mxu0 0
      %902 = vmatpush1.bf16.msra.mxu0 0
      %903 = vmatprep.subr.bf16.mxu0 0
      %904 = vmatpush1.bf16.msra.mxu0 0
      %905 = vmatprep.subr.bf16.mxu0 0
      %906 = vmatpush1.bf16.msra.mxu0 0
      %907 = vmatprep.subr.bf16.mxu0 0
      %908 = vmatpush1.bf16.msra.mxu0 0
      %909 = vmatprep.subr.bf16.mxu0 0
      %910 = vmatpush1.bf16.msra.mxu0 0
      %911 = vmatprep.subr.bf16.mxu0 0
      %912 = vmatpush1.bf16.msra.mxu0 0
      %913 = vmatprep.subr.bf16.mxu0 0
      %914 = vmatpush1.bf16.msra.mxu0 0
      %915 = vmatprep.subr.bf16.mxu0 0
      %916 = vmatpush1.bf16.msra.mxu0 0
      %917 = vmatprep.subr.bf16.mxu0 0
      %918 = vmatpush1.bf16.msra.mxu0 0
      %919 = vmatprep.subr.bf16.mxu0 0
      %920 = vmatpush1.bf16.msra.mxu0 0
      %921 = vmatprep.subr.bf16.mxu0 0
      %922 = vmatpush1.bf16.msra.mxu0 0
      %923 = vmatprep.mubr.bf16.mxu0 0
      %924 = vmatmul.mubr.bf16.gmra.mrb[0].mxu0 %v886
      %v925 = vpop.f32.mrb[0].mxu0
      %v926 = vadd.f32 0.0, %v925
      %v927 = vpop.f32.mrb[0].mxu0
      %v928 = vpop.f32.mrb[0].mxu0
      %v929 = vpop.f32.mrb[0].mxu0
      %930 = vdwg.mxu0
      %v931 = vpack.c.bf16 %v926, %v926
      %v932 = vld [vmem:[%s8 + $0x4] sm:$0xf]
      %v934 = vsel %vm705, %v931, 0
      %v937 = vsel %vm709, %v932, 0
      %939 = vmatprep.subr.bf16.mxu0 0
      %940 = vmatpush1.bf16.msra.mxu0 %v937
      %941 = vmatprep.subr.bf16.mxu0 0
      %942 = vmatpush1.bf16.msra.mxu0 0
      %943 = vmatprep.subr.bf16.mxu0 0
      %944 = vmatpush1.bf16.msra.mxu0 0
      %945 = vmatprep.subr.bf16.mxu0 0
      %946 = vmatpush1.bf16.msra.mxu0 0
      %947 = vmatprep.subr.bf16.mxu0 0
      %948 = vmatpush1.bf16.msra.mxu0 0
      %949 = vmatprep.subr.bf16.mxu0 0
      %950 = vmatpush1.bf16.msra.mxu0 0
      %951 = vmatprep.subr.bf16.mxu0 0
      %952 = vmatpush1.bf16.msra.mxu0 0
      %953 = vmatprep.subr.bf16.mxu0 0
      %954 = vmatpush1.bf16.msra.mxu0 0
      %955 = vmatprep.subr.bf16.mxu0 0
      %956 = vmatpush1.bf16.msra.mxu0 0
      %957 = vmatprep.subr.bf16.mxu0 0
      %958 = vmatpush1.bf16.msra.mxu0 0
      %959 = vmatprep.subr.bf16.mxu0 0
      %960 = vmatpush1.bf16.msra.mxu0 0
      %961 = vmatprep.subr.bf16.mxu0 0
      %962 = vmatpush1.bf16.msra.mxu0 0
      %963 = vmatprep.subr.bf16.mxu0 0
      %964 = vmatpush1.bf16.msra.mxu0 0
      %965 = vmatprep.subr.bf16.mxu0 0
      %966 = vmatpush1.bf16.msra.mxu0 0
      %967 = vmatprep.subr.bf16.mxu0 0
      %968 = vmatpush1.bf16.msra.mxu0 0
      %969 = vmatprep.subr.bf16.mxu0 0
      %970 = vmatpush1.bf16.msra.mxu0 0
      %971 = vmatprep.mubr.bf16.mxu0 0
      %972 = vmatmul.mubr.bf16.gmra.mrb[0].mxu0 %v934
      %v973 = vpop.f32.mrb[0].mxu0
      %v974 = vadd.f32 0.0, %v973
      %v975 = vpop.f32.mrb[0].mxu0
      %v976 = vpop.f32.mrb[0].mxu0
      %v977 = vpop.f32.mrb[0].mxu0
      %978 = vdwg.mxu0
      %v980 = vsel %vm705, %v813, 0
      %v983 = vsel %vm709, %v814, 0
      %985 = vmatprep.subr.bf16.mxu0 0
      %986 = vmatpush1.bf16.msra.mxu0 %v983
      %987 = vmatprep.subr.bf16.mxu0 0
      %988 = vmatpush1.bf16.msra.mxu0 0
      %989 = vmatprep.subr.bf16.mxu0 0
      %990 = vmatpush1.bf16.msra.mxu0 0
      %991 = vmatprep.subr.bf16.mxu0 0
      %992 = vmatpush1.bf16.msra.mxu0 0
      %993 = vmatprep.subr.bf16.mxu0 0
      %994 = vmatpush1.bf16.msra.mxu0 0
      %995 = vmatprep.subr.bf16.mxu0 0
      %996 = vmatpush1.bf16.msra.mxu0 0
      %997 = vmatprep.subr.bf16.mxu0 0
      %998 = vmatpush1.bf16.msra.mxu0 0
      %999 = vmatprep.subr.bf16.mxu0 0
      %1000 = vmatpush1.bf16.msra.mxu0 0
      %1001 = vmatprep.subr.bf16.mxu0 0
      %1002 = vmatpush1.bf16.msra.mxu0 0
      %1003 = vmatprep.subr.bf16.mxu0 0
      %1004 = vmatpush1.bf16.msra.mxu0 0
      %1005 = vmatprep.subr.bf16.mxu0 0
      %1006 = vmatpush1.bf16.msra.mxu0 0
      %1007 = vmatprep.subr.bf16.mxu0 0
      %1008 = vmatpush1.bf16.msra.mxu0 0
      %1009 = vmatprep.subr.bf16.mxu0 0
      %1010 = vmatpush1.bf16.msra.mxu0 0
      %1011 = vmatprep.subr.bf16.mxu0 0
      %1012 = vmatpush1.bf16.msra.mxu0 0
      %1013 = vmatprep.subr.bf16.mxu0 0
      %1014 = vmatpush1.bf16.msra.mxu0 0
      %1015 = vmatprep.subr.bf16.mxu0 0
      %1016 = vmatpush1.bf16.msra.mxu0 0
      %1017 = vmatprep.mubr.bf16.mxu0 0
      %1018 = vmatmul.mubr.bf16.gmra.mrb[0].mxu0 %v980
      %v1019 = vpop.f32.mrb[0].mxu0
      %v1020 = vadd.f32 %v974, %v1019
      %v1021 = vpop.f32.mrb[0].mxu0
      %v1022 = vpop.f32.mrb[0].mxu0
      %v1023 = vpop.f32.mrb[0].mxu0
      %1024 = vdwg.mxu0
      %v1025 = vld [vmem:[#allocation2 + $0x8] sm:$0xf]
      %1026 = vrot.lane.b32.xlu0 %v703, 112
      %v1027 = vpop.permute.xlu0 %1026
      %v1029 = vsel %vm705, %v1027, 0
      %v1032 = vsel %vm709, %v1025, 0
      %1034 = vmatprep.subr.bf16.mxu0 0
      %1035 = vmatpush1.bf16.msra.mxu0 %v1032
      %1036 = vmatprep.subr.bf16.mxu0 0
      %1037 = vmatpush1.bf16.msra.mxu0 0
      %1038 = vmatprep.subr.bf16.mxu0 0
      %1039 = vmatpush1.bf16.msra.mxu0 0
      %1040 = vmatprep.subr.bf16.mxu0 0
      %1041 = vmatpush1.bf16.msra.mxu0 0
      %1042 = vmatprep.subr.bf16.mxu0 0
      %1043 = vmatpush1.bf16.msra.mxu0 0
      %1044 = vmatprep.subr.bf16.mxu0 0
      %1045 = vmatpush1.bf16.msra.mxu0 0
      %1046 = vmatprep.subr.bf16.mxu0 0
      %1047 = vmatpush1.bf16.msra.mxu0 0
      %1048 = vmatprep.subr.bf16.mxu0 0
      %1049 = vmatpush1.bf16.msra.mxu0 0
      %1050 = vmatprep.subr.bf16.mxu0 0
      %1051 = vmatpush1.bf16.msra.mxu0 0
      %1052 = vmatprep.subr.bf16.mxu0 0
      %1053 = vmatpush1.bf16.msra.mxu0 0
      %1054 = vmatprep.subr.bf16.mxu0 0
      %1055 = vmatpush1.bf16.msra.mxu0 0
      %1056 = vmatprep.subr.bf16.mxu0 0
      %1057 = vmatpush1.bf16.msra.mxu0 0
      %1058 = vmatprep.subr.bf16.mxu0 0
      %1059 = vmatpush1.bf16.msra.mxu0 0
      %1060 = vmatprep.subr.bf16.mxu0 0
      %1061 = vmatpush1.bf16.msra.mxu0 0
      %1062 = vmatprep.subr.bf16.mxu0 0
      %1063 = vmatpush1.bf16.msra.mxu0 0
      %1064 = vmatprep.subr.bf16.mxu0 0
      %1065 = vmatpush1.bf16.msra.mxu0 0
      %1066 = vmatprep.mubr.bf16.mxu0 0
      %1067 = vmatmul.mubr.bf16.gmra.mrb[0].mxu0 %v1029
      %v1068 = vpop.f32.mrb[0].mxu0
      %v1069 = vadd.f32 0.0, %v1068
      %v1070 = vpop.f32.mrb[0].mxu0
      %v1071 = vpop.f32.mrb[0].mxu0
      %v1072 = vpop.f32.mrb[0].mxu0
      %1073 = vdwg.mxu0
      %v1074 = vmul.f32 %v1069, 0.35355338
      %v1075 = vsel %vm705, %v1074, -inf
      %1076 = vmax.xlane.f32.xlu0 %v1075
      %v1077 = vpop.xlane.xlu0 %1076
      %v1078 = vsub.f32 %v1074, %v1077
      %v1079 = vmul.f32 %v1078, 1.442695
      %v1080 = vpow.pop %v1079
      %v1081 = vsel %vm705, %v1080, 0.0
      %1082 = vadd.xlane.f32.xlu0 %v1081
      %v1083 = vpop.xlane.xlu0 %1082
      %v1084 = vrcp.pop %v1083
      %v1085 = vmul.f32 %v1080, %v1084
      %v1086 = vpack.c.bf16 %v1085, %v1085
      %1087 = vrot.lane.b32.xlu0 %v882, 112
      %v1088 = vpop.permute.xlu0 %1087
      %v1090 = vsel %vm705, %v1086, 0
      %v1093 = vsel %vm709, %v1088, 0
      %1095 = vmatprep.subr.bf16.mxu0 0
      %1096 = vmatpush1.bf16.msra.mxu0 %v1093
      %1097 = vmatprep.subr.bf16.mxu0 0
      %1098 = vmatpush1.bf16.msra.mxu0 0
      %1099 = vmatprep.subr.bf16.mxu0 0
      %1100 = vmatpush1.bf16.msra.mxu0 0
      %1101 = vmatprep.subr.bf16.mxu0 0
      %1102 = vmatpush1.bf16.msra.mxu0 0
      %1103 = vmatprep.subr.bf16.mxu0 0
      %1104 = vmatpush1.bf16.msra.mxu0 0
      %1105 = vmatprep.subr.bf16.mxu0 0
      %1106 = vmatpush1.bf16.msra.mxu0 0
      %1107 = vmatprep.subr.bf16.mxu0 0
      %1108 = vmatpush1.bf16.msra.mxu0 0
      %1109 = vmatprep.subr.bf16.mxu0 0
      %1110 = vmatpush1.bf16.msra.mxu0 0
      %1111 = vmatprep.subr.bf16.mxu0 0
      %1112 = vmatpush1.bf16.msra.mxu0 0
      %1113 = vmatprep.subr.bf16.mxu0 0
      %1114 = vmatpush1.bf16.msra.mxu0 0
      %1115 = vmatprep.subr.bf16.mxu0 0
      %1116 = vmatpush1.bf16.msra.mxu0 0
      %1117 = vmatprep.subr.bf16.mxu0 0
      %1118 = vmatpush1.bf16.msra.mxu0 0
      %1119 = vmatprep.subr.bf16.mxu0 0
      %1120 = vmatpush1.bf16.msra.mxu0 0
      %1121 = vmatprep.subr.bf16.mxu0 0
      %1122 = vmatpush1.bf16.msra.mxu0 0
      %1123 = vmatprep.subr.bf16.mxu0 0
      %1124 = vmatpush1.bf16.msra.mxu0 0
      %1125 = vmatprep.subr.bf16.mxu0 0
      %1126 = vmatpush1.bf16.msra.mxu0 0
      %1127 = vmatprep.mubr.bf16.mxu0 0
      %1128 = vmatmul.mubr.bf16.gmra.mrb[0].mxu0 %v1090
      %v1129 = vpop.f32.mrb[0].mxu0
      %v1130 = vadd.f32 0.0, %v1129
      %v1131 = vpop.f32.mrb[0].mxu0
      %v1132 = vpop.f32.mrb[0].mxu0
      %v1133 = vpop.f32.mrb[0].mxu0
      %1134 = vdwg.mxu0
      %v1135 = vpack.c.bf16 %v1130, %v1130
      %v1136 = vld [vmem:[%s8 + $0x8] sm:$0xf]
      %v1138 = vsel %vm705, %v1135, 0
      %v1141 = vsel %vm709, %v1136, 0
      %1143 = vmatprep.subr.bf16.mxu0 0
      %1144 = vmatpush1.bf16.msra.mxu0 %v1141
      %1145 = vmatprep.subr.bf16.mxu0 0
      %1146 = vmatpush1.bf16.msra.mxu0 0
      %1147 = vmatprep.subr.bf16.mxu0 0
      %1148 = vmatpush1.bf16.msra.mxu0 0
      %1149 = vmatprep.subr.bf16.mxu0 0
      %1150 = vmatpush1.bf16.msra.mxu0 0
      %1151 = vmatprep.subr.bf16.mxu0 0
      %1152 = vmatpush1.bf16.msra.mxu0 0
      %1153 = vmatprep.subr.bf16.mxu0 0
      %1154 = vmatpush1.bf16.msra.mxu0 0
      %1155 = vmatprep.subr.bf16.mxu0 0
      %1156 = vmatpush1.bf16.msra.mxu0 0
      %1157 = vmatprep.subr.bf16.mxu0 0
      %1158 = vmatpush1.bf16.msra.mxu0 0
      %1159 = vmatprep.subr.bf16.mxu0 0
      %1160 = vmatpush1.bf16.msra.mxu0 0
      %1161 = vmatprep.subr.bf16.mxu0 0
      %1162 = vmatpush1.bf16.msra.mxu0 0
      %1163 = vmatprep.subr.bf16.mxu0 0
      %1164 = vmatpush1.bf16.msra.mxu0 0
      %1165 = vmatprep.subr.bf16.mxu0 0
      %1166 = vmatpush1.bf16.msra.mxu0 0
      %1167 = vmatprep.subr.bf16.mxu0 0
      %1168 = vmatpush1.bf16.msra.mxu0 0
      %1169 = vmatprep.subr.bf16.mxu0 0
      %1170 = vmatpush1.bf16.msra.mxu0 0
      %1171 = vmatprep.subr.bf16.mxu0 0
      %1172 = vmatpush1.bf16.msra.mxu0 0
      %1173 = vmatprep.subr.bf16.mxu0 0
      %1174 = vmatpush1.bf16.msra.mxu0 0
      %1175 = vmatprep.mubr.bf16.mxu0 0
      %1176 = vmatmul.mubr.bf16.gmra.mrb[0].mxu0 %v1138
      %v1177 = vpop.f32.mrb[0].mxu0
      %v1178 = vadd.f32 0.0, %v1177
      %v1179 = vpop.f32.mrb[0].mxu0
      %v1180 = vpop.f32.mrb[0].mxu0
      %v1181 = vpop.f32.mrb[0].mxu0
      %1182 = vdwg.mxu0
      %v1183 = vadd.f32 %v1020, %v1178
      %v1184 = vld [vmem:[#allocation2 + $0x8] sm:$0xf0]
      %1185 = vrot.lane.b32.xlu0 %v703, 104
      %v1186 = vpop.permute.xlu0 %1185
      %v1188 = vrot.slane %v1184, 4
      %v1190 = vsel %vm705, %v1186, 0
      %v1193 = vsel %vm709, %v1188, 0
      %1195 = vmatprep.subr.bf16.mxu0 0
      %1196 = vmatpush1.bf16.msra.mxu0 %v1193
      %1197 = vmatprep.subr.bf16.mxu0 0
      %1198 = vmatpush1.bf16.msra.mxu0 0
      %1199 = vmatprep.subr.bf16.mxu0 0
      %1200 = vmatpush1.bf16.msra.mxu0 0
      %1201 = vmatprep.subr.bf16.mxu0 0
      %1202 = vmatpush1.bf16.msra.mxu0 0
      %1203 = vmatprep.subr.bf16.mxu0 0
      %1204 = vmatpush1.bf16.msra.mxu0 0
      %1205 = vmatprep.subr.bf16.mxu0 0
      %1206 = vmatpush1.bf16.msra.mxu0 0
      %1207 = vmatprep.subr.bf16.mxu0 0
      %1208 = vmatpush1.bf16.msra.mxu0 0
      %1209 = vmatprep.subr.bf16.mxu0 0
      %1210 = vmatpush1.bf16.msra.mxu0 0
      %1211 = vmatprep.subr.bf16.mxu0 0
      %1212 = vmatpush1.bf16.msra.mxu0 0
      %1213 = vmatprep.subr.bf16.mxu0 0
      %1214 = vmatpush1.bf16.msra.mxu0 0
      %1215 = vmatprep.subr.bf16.mxu0 0
      %1216 = vmatpush1.bf16.msra.mxu0 0
      %1217 = vmatprep.subr.bf16.mxu0 0
      %1218 = vmatpush1.bf16.msra.mxu0 0
      %1219 = vmatprep.subr.bf16.mxu0 0
      %1220 = vmatpush1.bf16.msra.mxu0 0
      %1221 = vmatprep.subr.bf16.mxu0 0
      %1222 = vmatpush1.bf16.msra.mxu0 0
      %1223 = vmatprep.subr.bf16.mxu0 0
      %1224 = vmatpush1.bf16.msra.mxu0 0
      %1225 = vmatprep.subr.bf16.mxu0 0
      %1226 = vmatpush1.bf16.msra.mxu0 0
      %1227 = vmatprep.mubr.bf16.mxu0 0
      %1228 = vmatmul.mubr.bf16.gmra.mrb[0].mxu0 %v1190
      %v1229 = vpop.f32.mrb[0].mxu0
      %v1230 = vadd.f32 0.0, %v1229
      %v1231 = vpop.f32.mrb[0].mxu0
      %v1232 = vpop.f32.mrb[0].mxu0
      %v1233 = vpop.f32.mrb[0].mxu0
      %1234 = vdwg.mxu0
      %v1235 = vmul.f32 %v1230, 0.35355338
      %v1236 = vsel %vm705, %v1235, -inf
      %1237 = vmax.xlane.f32.xlu0 %v1236
      %v1238 = vpop.xlane.xlu0 %1237
      %v1239 = vsub.f32 %v1235, %v1238
      %v1240 = vmul.f32 %v1239, 1.442695
      %v1241 = vpow.pop %v1240
      %v1242 = vsel %vm705, %v1241, 0.0
      %1243 = vadd.xlane.f32.xlu0 %v1242
      %v1244 = vpop.xlane.xlu0 %1243
      %v1245 = vrcp.pop %v1244
      %v1246 = vmul.f32 %v1241, %v1245
      %v1247 = vpack.c.bf16 %v1246, %v1246
      %1248 = vrot.lane.b32.xlu0 %v882, 104
      %v1249 = vpop.permute.xlu0 %1248
      %v1251 = vsel %vm705, %v1247, 0
      %v1254 = vsel %vm709, %v1249, 0
      %1256 = vmatprep.subr.bf16.mxu0 0
      %1257 = vmatpush1.bf16.msra.mxu0 %v1254
      %1258 = vmatprep.subr.bf16.mxu0 0
      %1259 = vmatpush1.bf16.msra.mxu0 0
      %1260 = vmatprep.subr.bf16.mxu0 0
      %1261 = vmatpush1.bf16.msra.mxu0 0
      %1262 = vmatprep.subr.bf16.mxu0 0
      %1263 = vmatpush1.bf16.msra.mxu0 0
      %1264 = vmatprep.subr.bf16.mxu0 0
      %1265 = vmatpush1.bf16.msra.mxu0 0
      %1266 = vmatprep.subr.bf16.mxu0 0
      %1267 = vmatpush1.bf16.msra.mxu0 0
      %1268 = vmatprep.subr.bf16.mxu0 0
      %1269 = vmatpush1.bf16.msra.mxu0 0
      %1270 = vmatprep.subr.bf16.mxu0 0
      %1271 = vmatpush1.bf16.msra.mxu0 0
      %1272 = vmatprep.subr.bf16.mxu0 0
      %1273 = vmatpush1.bf16.msra.mxu0 0
      %1274 = vmatprep.subr.bf16.mxu0 0
      %1275 = vmatpush1.bf16.msra.mxu0 0
      %1276 = vmatprep.subr.bf16.mxu0 0
      %1277 = vmatpush1.bf16.msra.mxu0 0
      %1278 = vmatprep.subr.bf16.mxu0 0
      %1279 = vmatpush1.bf16.msra.mxu0 0
      %1280 = vmatprep.subr.bf16.mxu0 0
      %1281 = vmatpush1.bf16.msra.mxu0 0
      %1282 = vmatprep.subr.bf16.mxu0 0
      %1283 = vmatpush1.bf16.msra.mxu0 0
      %1284 = vmatprep.subr.bf16.mxu0 0
      %1285 = vmatpush1.bf16.msra.mxu0 0
      %1286 = vmatprep.subr.bf16.mxu0 0
      %1287 = vmatpush1.bf16.msra.mxu0 0
      %1288 = vmatprep.mubr.bf16.mxu0 0
      %1289 = vmatmul.mubr.bf16.gmra.mrb[0].mxu0 %v1251
      %v1290 = vpop.f32.mrb[0].mxu0
      %v1291 = vadd.f32 0.0, %v1290
      %v1292 = vpop.f32.mrb[0].mxu0
      %v1293 = vpop.f32.mrb[0].mxu0
      %v1294 = vpop.f32.mrb[0].mxu0
      %1295 = vdwg.mxu0
      %v1296 = vpack.c.bf16 %v1291, %v1291
      %v1297 = vld [vmem:[%s8 + $0xc] sm:$0xf]
      %v1299 = vsel %vm705, %v1296, 0
      %v1302 = vsel %vm709, %v1297, 0
      %1304 = vmatprep.subr.bf16.mxu0 0
      %1305 = vmatpush1.bf16.msra.mxu0 %v1302
      %1306 = vmatprep.subr.bf16.mxu0 0
      %1307 = vmatpush1.bf16.msra.mxu0 0
      %1308 = vmatprep.subr.bf16.mxu0 0
      %1309 = vmatpush1.bf16.msra.mxu0 0
      %1310 = vmatprep.subr.bf16.mxu0 0
      %1311 = vmatpush1.bf16.msra.mxu0 0
      %1312 = vmatprep.subr.bf16.mxu0 0
      %1313 = vmatpush1.bf16.msra.mxu0 0
      %1314 = vmatprep.subr.bf16.mxu0 0
      %1315 = vmatpush1.bf16.msra.mxu0 0
      %1316 = vmatprep.subr.bf16.mxu0 0
      %1317 = vmatpush1.bf16.msra.mxu0 0
      %1318 = vmatprep.subr.bf16.mxu0 0
      %1319 = vmatpush1.bf16.msra.mxu0 0
      %1320 = vmatprep.subr.bf16.mxu0 0
      %1321 = vmatpush1.bf16.msra.mxu0 0
      %1322 = vmatprep.subr.bf16.mxu0 0
      %1323 = vmatpush1.bf16.msra.mxu0 0
      %1324 = vmatprep.subr.bf16.mxu0 0
      %1325 = vmatpush1.bf16.msra.mxu0 0
      %1326 = vmatprep.subr.bf16.mxu0 0
      %1327 = vmatpush1.bf16.msra.mxu0 0
      %1328 = vmatprep.subr.bf16.mxu0 0
      %1329 = vmatpush1.bf16.msra.mxu0 0
      %1330 = vmatprep.subr.bf16.mxu0 0
      %1331 = vmatpush1.bf16.msra.mxu0 0
      %1332 = vmatprep.subr.bf16.mxu0 0
      %1333 = vmatpush1.bf16.msra.mxu0 0
      %1334 = vmatprep.subr.bf16.mxu0 0
      %1335 = vmatpush1.bf16.msra.mxu0 0
      %1336 = vmatprep.mubr.bf16.mxu0 0
      %1337 = vmatmul.mubr.bf16.gmra.mrb[0].mxu0 %v1299
      %v1338 = vpop.f32.mrb[0].mxu0
      %v1339 = vadd.f32 0.0, %v1338
      %v1340 = vpop.f32.mrb[0].mxu0
      %v1341 = vpop.f32.mrb[0].mxu0
      %v1342 = vpop.f32.mrb[0].mxu0
      %1343 = vdwg.mxu0
      %v1344 = vadd.f32 %v1183, %v1339
      %v1345 = vadd.f32 %v631, %v1344
      %v1346 = vld [vmem:[%s9] sm:$0x1]
      %v1348 = vlaneseq
      %v1349 = vshrl.u32 %v1348, 7
      %v1350 = vsub.s32 0, %v1349
      %v1351 = vrot.slane %v1346, %v1350
      %v1353 = vadd.f32 %v1345, %v1351
      %v1354 = vsel %vm659, %v1353, 0.0
      %1355 = vadd.xlane.f32.xlu0 %v1354
      %v1356 = vpop.xlane.xlu0 %1355
      %v1357 = vrcp.pop 32.0
      %v1358 = vmul.f32 %v1356, %v1357
      %v1359 = vsub.f32 %v1353, %v1358
      %v1360 = vmul.f32 %v1359, %v1359
      %v1361 = vsel %vm659, %v1360, 0.0
      %1362 = vadd.xlane.f32.xlu0 %v1361
      %v1363 = vpop.xlane.xlu0 %1362
      %v1364 = vmul.f32 %v1363, %v1357
      %v1365 = vadd.f32 %v1364, 1e-05
      %v1366 = vrsqrt.pop %v1365
      %v1367 = vmul.f32 %v1359, %v1366
      %v1368 = vld [vmem:[%s10] sm:$0x1]
      %v1370 = vlaneseq
      %v1371 = vshrl.u32 %v1370, 7
      %v1372 = vsub.s32 0, %v1371
      %v1373 = vrot.slane %v1368, %v1372
      %v1375 = vmul.f32 %v1367, %v1373
      %v1376 = vld [vmem:[%s11] sm:$0x1]
      %v1378 = vlaneseq
      %v1379 = vshrl.u32 %v1378, 7
      %v1380 = vsub.s32 0, %v1379
      %v1381 = vrot.slane %v1376, %v1380
      %v1383 = vadd.f32 %v1375, %v1381
      %1384 = vst.msk [vmem:[%s445] sm:$0xff] %vm659, %v1383
      %p1385 = scmp.lt.s32.totalorder %s27, 1
      %s1386 = scalar_select %p1385, %s27, 1
      %p1387 = scmp.lt.s32.totalorder %s28, 0
      %s1388 = scalar_select %p1387, %s28, 0
      %s1389 = sadd.s32 %s1388, %s1386
      %s1390 = smul.addr %s1389, 8
      %s1391 = scalar_lea.vmem %s12, %s1390
      // Predicated region
      $region73: #{cross_attention_decoder_layer.3} parent=67 // pred_check
        %p1392 = pneg %p317
      $region74: #{cross_attention_decoder_layer.3} parent=67 // pred_check_branch
        %1394 = sbr.rel (%p1392) target = $region76
      $region75: #{cross_attention_decoder_layer.3} parent=67 // pred_region
        _
      $region76: #{cross_attention_decoder_layer.3} parent=67 // pred_fallthru
        _
    $region68: #{cross_attention_decoder_layer.3} parent=5 // pred_fallthru
      _
    %p1395 = scmp.le.s32.totalorder 2, %s18
    // Predicated region
    $region77: #{cross_attention_decoder_layer.3} parent=5 // pred_check
      %p1396 = pneg %p1395
    $region78: #{cross_attention_decoder_layer.3} parent=5 // pred_check_branch
      %1398 = sbr.rel (%p1396) target = $region80
    $region79: #{cross_attention_decoder_layer.3} parent=5 // pred_region
      %s1399 = ssub.s32 %s18, 2
      // Predicated region
      $region81: #{cross_attention_decoder_layer.3} parent=79 // pred_check
        %p1400 = pneg %p323
      $region82: #{cross_attention_decoder_layer.3} parent=79 // pred_check_branch
        %1402 = sbr.rel (%p1400) target = $region84
      $region83: #{cross_attention_decoder_layer.3} parent=79 // pred_region
        %p1403 = scmp.lt.s32.totalorder %s29, 1
        %s1404 = scalar_select %p1403, %s29, 1
        %p1405 = scmp.lt.s32.totalorder %s30, 0
        %s1406 = scalar_select %p1405, %s30, 0
        %s1407 = sadd.s32 %s1406, %s1404
        %s1408 = smul.addr %s1407, 8
        %s1409 = scalar_lea.vmem %s12, %s1408
      $region84: #{cross_attention_decoder_layer.3} parent=79 // pred_fallthru
        _
    $region80: #{cross_attention_decoder_layer.3} parent=5 // pred_fallthru
      _
  $region6: #{cross_attention_decoder_layer.3} parent=0 // loop_footer
    %s22 = sadd.s32 1, %s18
  $region7: #{cross_attention_decoder_layer.3} parent=0 // loop_footer_branch
    %17 = sbr.rel target = $region3
  $region8: #{cross_attention_decoder_layer.3} parent=0 // loop_exit
    _

// kernel: cross_attention_decoder_layer.5
$region0: #{cross_attention_decoder_layer.5}
  #allocation0 [shape = 'u32[]', space=smem, size = 0x4, offset = 0x4, fixed_abs, tag = 'smem constant byte address 0x4 - core index']
  #allocation1 [shape = 'u32[144,128]{1,0:T(1,128)}', space=vmem, size = 0x12000, scoped, tag = 'internal scratch']
  %s0 = inlined_call_operand.vmem [shape: f32[16,32], index: 0, kind: input, shape index: {}]
  %s1 = inlined_call_operand.vmem [shape: bf16[32,128], index: 1, kind: input, shape index: {}]
  %s2 = inlined_call_operand.vmem [shape: f32[1,128], index: 2, kind: input, shape index: {}]
  %s3 = inlined_call_operand.vmem [shape: bf16[128,32], index: 3, kind: input, shape index: {}]
  %s4 = inlined_call_operand.vmem [shape: f32[1,32], index: 4, kind: input, shape index: {}]
  %s5 = inlined_call_operand.vmem [shape: f32[1,32], index: 5, kind: input, shape index: {}]
  %s6 = inlined_call_operand.vmem [shape: f32[1,32], index: 6, kind: input, shape index: {}]
  %s7 = inlined_call_operand.hbm [shape: f32[16,32], index: 7, kind: output, shape index: {}]
  %s8 = sld [smem:[#allocation0]]
  $region38: #{cross_attention_decoder_layer.5} parent=0
    _
  %s10 = ssub.s32 1, %s8
  %s11 = scalar_select 0, %s10, %s8
  $region1: #{cross_attention_decoder_layer.5} parent=0
    #allocation2 [shape = 'u8[8192]{0}', space=vmem, size = 0x2000, scoped, tag = 'output window, operand 0, single buffered']
    #allocation3 [shape = 's32[1]{0}', space=sflag, size = 0x4, scoped, tag = 'scoped memory for cross_attention_decoder_layer.5']
    %12 = vsyncpa [#allocation3], 0
    // Predicated region
    $region2: #{cross_attention_decoder_layer.5} parent=1 // pred_check
      _
    $region3: #{cross_attention_decoder_layer.5} parent=1 // pred_check_branch
      %14 = sbr.rel (0) target = $region5
    $region4: #{cross_attention_decoder_layer.5} parent=1 // pred_region
      _
    $region5: #{cross_attention_decoder_layer.5} parent=1 // pred_fallthru
      _
    // Predicated region
    $region6: #{cross_attention_decoder_layer.5} parent=1 // pred_check
      _
    $region7: #{cross_attention_decoder_layer.5} parent=1 // pred_check_branch
      %16 = sbr.rel (0) target = $region9
    $region8: #{cross_attention_decoder_layer.5} parent=1 // pred_region
      _
    $region9: #{cross_attention_decoder_layer.5} parent=1 // pred_fallthru
      _
    // Predicated region
    $region10: #{cross_attention_decoder_layer.5} parent=1 // pred_check
      _
    $region11: #{cross_attention_decoder_layer.5} parent=1 // pred_check_branch
      %18 = sbr.rel (0) target = $region13
    $region12: #{cross_attention_decoder_layer.5} parent=1 // pred_region
      _
    $region13: #{cross_attention_decoder_layer.5} parent=1 // pred_fallthru
      _
    // Predicated region
    $region14: #{cross_attention_decoder_layer.5} parent=1 // pred_check
      _
    $region15: #{cross_attention_decoder_layer.5} parent=1 // pred_check_branch
      %20 = sbr.rel (0) target = $region17
    $region16: #{cross_attention_decoder_layer.5} parent=1 // pred_region
      _
    $region17: #{cross_attention_decoder_layer.5} parent=1 // pred_fallthru
      _
    // Predicated region
    $region18: #{cross_attention_decoder_layer.5} parent=1 // pred_check
      _
    $region19: #{cross_attention_decoder_layer.5} parent=1 // pred_check_branch
      %22 = sbr.rel (0) target = $region21
    $region20: #{cross_attention_decoder_layer.5} parent=1 // pred_region
      _
    $region21: #{cross_attention_decoder_layer.5} parent=1 // pred_fallthru
      _
    // Predicated region
    $region22: #{cross_attention_decoder_layer.5} parent=1 // pred_check
      _
    $region23: #{cross_attention_decoder_layer.5} parent=1 // pred_check_branch
      %24 = sbr.rel (0) target = $region25
    $region24: #{cross_attention_decoder_layer.5} parent=1 // pred_region
      _
    $region25: #{cross_attention_decoder_layer.5} parent=1 // pred_fallthru
      _
    // Predicated region
    $region26: #{cross_attention_decoder_layer.5} parent=1 // pred_check
      _
    $region27: #{cross_attention_decoder_layer.5} parent=1 // pred_check_branch
      %26 = sbr.rel (0) target = $region29
    $region28: #{cross_attention_decoder_layer.5} parent=1 // pred_region
      _
    $region29: #{cross_attention_decoder_layer.5} parent=1 // pred_fallthru
      _
    %v28 = vld [vmem:[%s0] sm:$0xff]
    %v29 = vld [vmem:[%s0 + $0x8] sm:$0xff]
    %v30 = vpack.c.bf16 %v29, %v28
    %v31 = vld [vmem:[%s1] sm:$0xf]
    %v32 = vld [vmem:[%s1 + $0x4] sm:$0xf]
    %v33 = vld [vmem:[%s1 + $0x8] sm:$0xf]
    %v34 = vld [vmem:[%s1 + $0xc] sm:$0xf]
    %v35 = vld [vmem:[%s2] sm:$0x1]
    %v37 = vlaneseq
    %v38 = vshrl.u32 %v37, 7
    %v39 = vsub.s32 0, %v38
    %v40 = vrot.slane %v35, %v39
    %v46 = vunpack.c.l.b16 %v31
    %v47 = vunpack.c.l.b16 %v32
    %v48 = vunpack.c.l.b16 %v33
    %v49 = vunpack.c.l.b16 %v34
    %v50 = vpack.c.b16 %v47, %v46
    %v51 = vpack.c.b16 %v49, %v48
    %vm54 = vcmask 261120
    %v56 = vsel %vm54, %v30, 0
    %58 = vmatprep.subr.bf16.mxu0 0
    %59 = vmatpush1.bf16.msra.mxu0 %v50
    %60 = vmatprep.subr.bf16.mxu0 0
    %61 = vmatpush1.bf16.msra.mxu0 %v51
    %62 = vmatprep.subr.bf16.mxu0 0
    %63 = vmatpush1.bf16.msra.mxu0 0
    %64 = vmatprep.subr.bf16.mxu0 0
    %65 = vmatpush1.bf16.msra.mxu0 0
    %66 = vmatprep.subr.bf16.mxu0 0
    %67 = vmatpush1.bf16.msra.mxu0 0
    %68 = vmatprep.subr.bf16.mxu0 0
    %69 = vmatpush1.bf16.msra.mxu0 0
    %70 = vmatprep.subr.bf16.mxu0 0
    %71 = vmatpush1.bf16.msra.mxu0 0
    %72 = vmatprep.subr.bf16.mxu0 0
    %73 = vmatpush1.bf16.msra.mxu0 0
    %74 = vmatprep.subr.bf16.mxu0 0
    %75 = vmatpush1.bf16.msra.mxu0 0
    %76 = vmatprep.subr.bf16.mxu0 0
    %77 = vmatpush1.bf16.msra.mxu0 0
    %78 = vmatprep.subr.bf16.mxu0 0
    %79 = vmatpush1.bf16.msra.mxu0 0
    %80 = vmatprep.subr.bf16.mxu0 0
    %81 = vmatpush1.bf16.msra.mxu0 0
    %82 = vmatprep.subr.bf16.mxu0 0
    %83 = vmatpush1.bf16.msra.mxu0 0
    %84 = vmatprep.subr.bf16.mxu0 0
    %85 = vmatpush1.bf16.msra.mxu0 0
    %86 = vmatprep.subr.bf16.mxu0 0
    %87 = vmatpush1.bf16.msra.mxu0 0
    %88 = vmatprep.subr.bf16.mxu0 0
    %89 = vmatpush1.bf16.msra.mxu0 0
    %90 = vmatprep.mubr.bf16.mxu0 0
    %91 = vmatmul.mubr.bf16.gmra.mrb[0].mxu0 %v56
    %v92 = vpop.f32.mrb[0].mxu0
    %v93 = vadd.f32 %v40, %v92
    %v94 = vpop.f32.mrb[0].mxu0
    %v95 = vpop.f32.mrb[0].mxu0
    %v96 = vadd.f32 %v40, %v95
    %v97 = vpop.f32.mrb[0].mxu0
    %98 = vdwg.mxu0
    %v99 = vmax.f32 %v93, 0.0
    %v100 = vmax.f32 %v96, 0.0
    %v101 = vpack.c.bf16 %v100, %v99
    %v102 = vld [vmem:[%s3] sm:$0xf]
    %v103 = vld [vmem:[%s3 + $0x4] sm:$0xf]
    %v104 = vld [vmem:[%s3 + $0x8] sm:$0xf]
    %v105 = vld [vmem:[%s3 + $0xc] sm:$0xf]
    %v106 = vld [vmem:[%s3 + $0x10] sm:$0xf]
    %v107 = vld [vmem:[%s3 + $0x14] sm:$0xf]
    %v108 = vld [vmem:[%s3 + $0x18] sm:$0xf]
    %v109 = vld [vmem:[%s3 + $0x1c] sm:$0xf]
    %v110 = vld [vmem:[%s3 + $0x20] sm:$0xf]
    %v111 = vld [vmem:[%s3 + $0x24] sm:$0xf]
    %v112 = vld [vmem:[%s3 + $0x28] sm:$0xf]
    %v113 = vld [vmem:[%s3 + $0x2c] sm:$0xf]
    %v114 = vld [vmem:[%s3 + $0x30] sm:$0xf]
    %v115 = vld [vmem:[%s3 + $0x34] sm:$0xf]
    %v116 = vld [vmem:[%s3 + $0x38] sm:$0xf]
    %v117 = vld [vmem:[%s3 + $0x3c] sm:$0xf]
    %v118 = vld [vmem:[%s4] sm:$0x1]
    %v120 = vlaneseq
    %v121 = vshrl.u32 %v120, 7
    %v122 = vsub.s32 0, %v121
    %v123 = vrot.slane %v118, %v122
    %v141 = vunpack.c.l.b16 %v102
    %v142 = vunpack.c.l.b16 %v103
    %v143 = vunpack.c.l.b16 %v104
    %v144 = vunpack.c.l.b16 %v105
    %v145 = vunpack.c.l.b16 %v106
    %v146 = vunpack.c.l.b16 %v107
    %v147 = vunpack.c.l.b16 %v108
    %v148 = vunpack.c.l.b16 %v109
    %v149 = vunpack.c.l.b16 %v110
    %v150 = vunpack.c.l.b16 %v111
    %v151 = vunpack.c.l.b16 %v112
    %v152 = vunpack.c.l.b16 %v113
    %v153 = vunpack.c.l.b16 %v114
    %v154 = vunpack.c.l.b16 %v115
    %v155 = vunpack.c.l.b16 %v116
    %v156 = vunpack.c.l.b16 %v117
    %v157 = vpack.c.b16 %v142, %v141
    %v158 = vpack.c.b16 %v144, %v143
    %v159 = vpack.c.b16 %v146, %v145
    %v160 = vpack.c.b16 %v148, %v147
    %v161 = vpack.c.b16 %v150, %v149
    %v162 = vpack.c.b16 %v152, %v151
    %v163 = vpack.c.b16 %v154, %v153
    %v164 = vpack.c.b16 %v156, %v155
    %173 = vmatprep.subr.bf16.mxu0 0
    %174 = vmatpush1.bf16.msra.mxu0 %v157
    %175 = vmatprep.subr.bf16.mxu0 0
    %176 = vmatpush1.bf16.msra.mxu0 %v158
    %177 = vmatprep.subr.bf16.mxu0 0
    %178 = vmatpush1.bf16.msra.mxu0 %v159
    %179 = vmatprep.subr.bf16.mxu0 0
    %180 = vmatpush1.bf16.msra.mxu0 %v160
    %181 = vmatprep.subr.bf16.mxu0 0
    %182 = vmatpush1.bf16.msra.mxu0 %v161
    %183 = vmatprep.subr.bf16.mxu0 0
    %184 = vmatpush1.bf16.msra.mxu0 %v162
    %185 = vmatprep.subr.bf16.mxu0 0
    %186 = vmatpush1.bf16.msra.mxu0 %v163
    %187 = vmatprep.subr.bf16.mxu0 0
    %188 = vmatpush1.bf16.msra.mxu0 %v164
    %189 = vmatprep.subr.bf16.mxu0 0
    %190 = vmatpush1.bf16.msra.mxu0 0
    %191 = vmatprep.subr.bf16.mxu0 0
    %192 = vmatpush1.bf16.msra.mxu0 0
    %193 = vmatprep.subr.bf16.mxu0 0
    %194 = vmatpush1.bf16.msra.mxu0 0
    %195 = vmatprep.subr.bf16.mxu0 0
    %196 = vmatpush1.bf16.msra.mxu0 0
    %197 = vmatprep.subr.bf16.mxu0 0
    %198 = vmatpush1.bf16.msra.mxu0 0
    %199 = vmatprep.subr.bf16.mxu0 0
    %200 = vmatpush1.bf16.msra.mxu0 0
    %201 = vmatprep.subr.bf16.mxu0 0
    %202 = vmatpush1.bf16.msra.mxu0 0
    %203 = vmatprep.subr.bf16.mxu0 0
    %204 = vmatpush1.bf16.msra.mxu0 0
    %205 = vmatprep.mubr.bf16.mxu0 0
    %206 = vmatmul.mubr.bf16.gmra.mrb[0].mxu0 %v101
    %v207 = vpop.f32.mrb[0].mxu0
    %v208 = vadd.f32 %v123, %v207
    %v209 = vpop.f32.mrb[0].mxu0
    %v210 = vpop.f32.mrb[0].mxu0
    %v211 = vadd.f32 %v123, %v210
    %v212 = vpop.f32.mrb[0].mxu0
    %213 = vdwg.mxu0
    %v214 = vadd.f32 %v208, %v28
    %v215 = vadd.f32 %v211, %v29
    %v216 = vsel %vm54, %v214, 0.0
    %217 = vadd.xlane.f32.xlu0 %v216
    %v218 = vpop.xlane.xlu0 %217
    %v219 = vsel %vm54, %v215, 0.0
    %220 = vadd.xlane.f32.xlu0 %v219
    %v221 = vpop.xlane.xlu0 %220
    %v222 = vrcp.pop 32.0
    %v223 = vmul.f32 %v218, %v222
    %v224 = vmul.f32 %v221, %v222
    %v225 = vsub.f32 %v214, %v223
    %v226 = vsub.f32 %v215, %v224
    %v227 = vmul.f32 %v225, %v225
    %v228 = vmul.f32 %v226, %v226
    %v229 = vsel %vm54, %v227, 0.0
    %230 = vadd.xlane.f32.xlu0 %v229
    %v231 = vpop.xlane.xlu0 %230
    %v232 = vsel %vm54, %v228, 0.0
    %233 = vadd.xlane.f32.xlu0 %v232
    %v234 = vpop.xlane.xlu0 %233
    %v235 = vmul.f32 %v231, %v222
    %v236 = vmul.f32 %v234, %v222
    %v237 = vadd.f32 %v235, 1e-05
    %v238 = vadd.f32 %v236, 1e-05
    %v239 = vrsqrt.pop %v237
    %v240 = vrsqrt.pop %v238
    %v241 = vmul.f32 %v225, %v239
    %v242 = vmul.f32 %v226, %v240
    %v243 = vld [vmem:[%s5] sm:$0x1]
    %v245 = vlaneseq
    %v246 = vshrl.u32 %v245, 7
    %v247 = vsub.s32 0, %v246
    %v248 = vrot.slane %v243, %v247
    %v250 = vmul.f32 %v241, %v248
    %v251 = vmul.f32 %v242, %v248
    %v252 = vld [vmem:[%s6] sm:$0x1]
    %v254 = vlaneseq
    %v255 = vshrl.u32 %v254, 7
    %v256 = vsub.s32 0, %v255
    %v257 = vrot.slane %v252, %v256
    %v259 = vadd.f32 %v250, %v257
    %v260 = vadd.f32 %v251, %v257
    %261 = vst.msk [vmem:[#allocation2] sm:$0xff] %vm54, %v259
    %262 = vst.msk [vmem:[#allocation2 + $0x8] sm:$0xff] %vm54, %v260
    // Predicated region
    $region30: #{cross_attention_decoder_layer.5} parent=1 // pred_check
      _
    $region31: #{cross_attention_decoder_layer.5} parent=1 // pred_check_branch
      %264 = sbr.rel (0) target = $region33
    $region32: #{cross_attention_decoder_layer.5} parent=1 // pred_region
      %s266 = ssub.s32 256, 256
      %267 = vsyncadd [#allocation3], %s266
      %s268 = sshll.u32 [#allocation2], 4
      %s269 = int_to_ptr.vmem [resolvable:$true] %s268
      %274 = dma.vmem_to_hbm [thread:$0]  %s269, 256, %s7, [#allocation3], 128, 128, 8
    $region33: #{cross_attention_decoder_layer.5} parent=1 // pred_fallthru
      _
    // Predicated region
    $region34: #{cross_attention_decoder_layer.5} parent=1 // pred_check
      _
    $region35: #{cross_attention_decoder_layer.5} parent=1 // pred_check_branch
      %276 = sbr.rel (0) target = $region37
    $region36: #{cross_attention_decoder_layer.5} parent=1 // pred_region
      %277 = dma.done [#allocation3], 256
    $region37: #{cross_attention_decoder_layer.5} parent=1 // pred_fallthru
      _
    %278 = vsyncpa [#allocation3], 1

// kernel: cross_attention_decoder_layer.4
$region0: #{cross_attention_decoder_layer.4}
  #allocation0 [shape = 'u32[]', space=smem, size = 0x4, offset = 0x4, fixed_abs, tag = 'smem constant byte address 0x4 - core index']
  #allocation1 [shape = 'u32[144,128]{1,0:T(1,128)}', space=vmem, size = 0x12000, scoped, tag = 'internal scratch']
  #allocation2 [shape = 'bf16[32,16]{1,0:T(16,128)(2,1)}', space=vmem, size = 0x2000, scoped, tag = 'scratch operand']
  #allocation3 [shape = 'bf16[16,32]{1,0:T(16,128)(2,1)}', space=vmem, size = 0x1000, scoped, tag = 'scratch operand']
  %s0 = inlined_call_operand.vmem [shape: f32[2,8,32], index: 0, kind: input, shape index: {}]
  %s1 = inlined_call_operand.vmem [shape: f32[2,8,32], index: 1, kind: input, shape index: {}]
  %s2 = inlined_call_operand.vmem [shape: f32[2,8,32], index: 2, kind: input, shape index: {}]
  %s3 = inlined_call_operand.vmem [shape: bf16[2,16,32], index: 3, kind: input, shape index: {}]
  %s4 = inlined_call_operand.vmem [shape: bf16[2,16,32], index: 4, kind: input, shape index: {}]
  %s5 = inlined_call_operand.vmem [shape: bf16[32,32], index: 5, kind: input, shape index: {}]
  %s6 = inlined_call_operand.vmem [shape: f32[1,32], index: 6, kind: input, shape index: {}]
  %s7 = inlined_call_operand.vmem [shape: bf16[32,32], index: 7, kind: input, shape index: {}]
  %s8 = inlined_call_operand.vmem [shape: f32[1,32], index: 8, kind: input, shape index: {}]
  %s9 = inlined_call_operand.vmem [shape: bf16[32,32], index: 9, kind: input, shape index: {}]
  %s10 = inlined_call_operand.vmem [shape: f32[1,32], index: 10, kind: input, shape index: {}]
  %s11 = inlined_call_operand.vmem [shape: bf16[32,32], index: 11, kind: input, shape index: {}]
  %s12 = inlined_call_operand.vmem [shape: f32[1,32], index: 12, kind: input, shape index: {}]
  %s13 = inlined_call_operand.vmem [shape: f32[1,32], index: 13, kind: input, shape index: {}]
  %s14 = inlined_call_operand.vmem [shape: f32[1,32], index: 14, kind: input, shape index: {}]
  %s15 = inlined_call_operand.vmem [shape: f32[2,8,32], index: 15, kind: output, shape index: {}]
  %s16 = sld [smem:[#allocation0]]
  $region97: #{cross_attention_decoder_layer.4} parent=0
    _
  %s18 = ssub.s32 1, %s16
  %s19 = scalar_select 0, %s18, %s16
  loop: start=0, step=1, limit=4
  $region2: #{cross_attention_decoder_layer.4} parent=0 // loop_pre_header
    _
  $region3: #{cross_attention_decoder_layer.4} parent=0 // loop_header
    %s21 = sphi 0, %s25
    %p22 = scmp.ge.s32.totalorder %s21, 4
    %s28 = sphi 0, %s40
    %s29 = sphi 0, %s36
    %s30 = sphi 0, %s28
    %s31 = sphi 0, %s29
    %s32 = sphi 0, %s30
    %s33 = sphi 0, %s31
    %s45 = sphi 0, %s47
    %s48 = sphi 0, %s45
    %s49 = sphi 0, %s48
    %s65 = sphi 0, %s49
    %s73 = sphi 0, %s75
    %s76 = sphi 0, %s73
    %s77 = sphi 0, %s76
    %s93 = sphi 0, %s77
    %s101 = sphi 0, %s103
    %s104 = sphi 0, %s101
    %s105 = sphi 0, %s104
    %s121 = sphi 0, %s105
    %s127 = sphi 0, %s129
    %s130 = sphi 0, %s127
    %s131 = sphi 0, %s130
    %s147 = sphi 0, %s131
    %s153 = sphi 0, %s155
    %s156 = sphi 0, %s153
    %s157 = sphi 0, %s156
    %s173 = sphi 0, %s157
    %s177 = sphi 0, %s177
    %s179 = sphi 0, %s177
    %s180 = sphi 0, %s179
    %s194 = sphi 0, %s180
    %s198 = sphi 0, %s198
    %s200 = sphi 0, %s198
    %s201 = sphi 0, %s200
    %s215 = sphi 0, %s201
    %s219 = sphi 0, %s219
    %s221 = sphi 0, %s219
    %s222 = sphi 0, %s221
    %s236 = sphi 0, %s222
    %s240 = sphi 0, %s240
    %s242 = sphi 0, %s240
    %s243 = sphi 0, %s242
    %s257 = sphi 0, %s243
    %s261 = sphi 0, %s261
    %s263 = sphi 0, %s261
    %s264 = sphi 0, %s263
    %s278 = sphi 0, %s264
    %s282 = sphi 0, %s282
    %s284 = sphi 0, %s282
    %s285 = sphi 0, %s284
    %s299 = sphi 0, %s285
    %s303 = sphi 0, %s303
    %s305 = sphi 0, %s303
    %s306 = sphi 0, %s305
    %s320 = sphi 0, %s306
    %s324 = sphi 0, %s324
    %s326 = sphi 0, %s324
    %s327 = sphi 0, %s326
    %s341 = sphi 0, %s327
    %s345 = sphi 0, %s345
    %s347 = sphi 0, %s345
    %s348 = sphi 0, %s347
    %s362 = sphi 0, %s348
    %s366 = sphi 0, %s366
    %s368 = sphi 0, %s366
    %s369 = sphi 0, %s368
    %s383 = sphi 0, %s369
    %s391 = sphi 0, %s393
    %s394 = sphi 0, %s391
    %s395 = sphi 0, %s394
    %s411 = sphi 0, %s395
  $region4: #{cross_attention_decoder_layer.4} parent=0 // loop_header_branch
    %24 = sbr.rel (%p22) target = $region8
  $region5: #{cross_attention_decoder_layer.4} parent=0 // loop_body
    %s26 = ssub.s32 %s21, 1
    %s27 = ssub.s32 %s21, 2
    %s34 = sadd.s32 1, %s29
    %p35 = scmp.ge.s32.totalorder %s34, 1
    %s36 = scalar_select %p35, 0, %s34
    %s37 = sadd.s32 1, %s28
    %s38 = scalar_select %p35, %s37, %s28
    %p39 = scmp.ge.s32.totalorder %s38, 2
    %s40 = scalar_select %p39, 0, %s38
    %s41 = ssub.s32 %s28, %s40
    %s42 = ssub.s32 %s29, %s36
    %s43 = sor.u32 %s41, %s42
    %p44 = scmp.eq.s32.totalorder %s43, 0
    %s46 = sadd.s32 %s45, 1
    %s47 = scalar_select %p44, %s45, %s46
    %p50 = pneg %p44
    %p51 = scmp.eq.s32.totalorder %s21, 1
    %p52 = por %p50, %p51
    %p53 = scmp.ne.s32.totalorder %s45, %s48
    %p54 = scmp.eq.s32.totalorder %s21, 0
    %p55 = por %p53, %p54
    %p56 = scmp.ne.s32.totalorder %s45, %s48
    %p57 = scmp.eq.s32.totalorder %s26, 1
    %p58 = por %p56, %p57
    %p59 = scmp.ne.s32.totalorder %s48, %s49
    %p60 = scmp.eq.s32.totalorder %s26, 0
    %p61 = por %p59, %p60
    %p62 = scmp.ne.s32.totalorder %s48, %s49
    %p63 = scmp.eq.s32.totalorder %s27, 1
    %p64 = por %p62, %p63
    %p66 = scmp.ne.s32.totalorder %s49, %s65
    %p67 = scmp.eq.s32.totalorder %s27, 0
    %p68 = por %p66, %p67
    %s69 = ssub.s32 %s28, %s40
    %s70 = ssub.s32 %s29, %s36
    %s71 = sor.u32 %s69, %s70
    %p72 = scmp.eq.s32.totalorder %s71, 0
    %s74 = sadd.s32 %s73, 1
    %s75 = scalar_select %p72, %s73, %s74
    %p78 = pneg %p72
    %p79 = scmp.eq.s32.totalorder %s21, 1
    %p80 = por %p78, %p79
    %p81 = scmp.ne.s32.totalorder %s73, %s76
    %p82 = scmp.eq.s32.totalorder %s21, 0
    %p83 = por %p81, %p82
    %p84 = scmp.ne.s32.totalorder %s73, %s76
    %p85 = scmp.eq.s32.totalorder %s26, 1
    %p86 = por %p84, %p85
    %p87 = scmp.ne.s32.totalorder %s76, %s77
    %p88 = scmp.eq.s32.totalorder %s26, 0
    %p89 = por %p87, %p88
    %p90 = scmp.ne.s32.totalorder %s76, %s77
    %p91 = scmp.eq.s32.totalorder %s27, 1
    %p92 = por %p90, %p91
    %p94 = scmp.ne.s32.totalorder %s77, %s93
    %p95 = scmp.eq.s32.totalorder %s27, 0
    %p96 = por %p94, %p95
    %s97 = ssub.s32 %s28, %s40
    %s98 = ssub.s32 %s29, %s36
    %s99 = sor.u32 %s97, %s98
    %p100 = scmp.eq.s32.totalorder %s99, 0
    %s102 = sadd.s32 %s101, 1
    %s103 = scalar_select %p100, %s101, %s102
    %p106 = pneg %p100
    %p107 = scmp.eq.s32.totalorder %s21, 1
    %p108 = por %p106, %p107
    %p109 = scmp.ne.s32.totalorder %s101, %s104
    %p110 = scmp.eq.s32.totalorder %s21, 0
    %p111 = por %p109, %p110
    %p112 = scmp.ne.s32.totalorder %s101, %s104
    %p113 = scmp.eq.s32.totalorder %s26, 1
    %p114 = por %p112, %p113
    %p115 = scmp.ne.s32.totalorder %s104, %s105
    %p116 = scmp.eq.s32.totalorder %s26, 0
    %p117 = por %p115, %p116
    %p118 = scmp.ne.s32.totalorder %s104, %s105
    %p119 = scmp.eq.s32.totalorder %s27, 1
    %p120 = por %p118, %p119
    %p122 = scmp.ne.s32.totalorder %s105, %s121
    %p123 = scmp.eq.s32.totalorder %s27, 0
    %p124 = por %p122, %p123
    %s125 = ssub.s32 %s28, %s40
    %p126 = scmp.eq.s32.totalorder %s125, 0
    %s128 = sadd.s32 %s127, 1
    %s129 = scalar_select %p126, %s127, %s128
    %p132 = pneg %p126
    %p133 = scmp.eq.s32.totalorder %s21, 1
    %p134 = por %p132, %p133
    %p135 = scmp.ne.s32.totalorder %s127, %s130
    %p136 = scmp.eq.s32.totalorder %s21, 0
    %p137 = por %p135, %p136
    %p138 = scmp.ne.s32.totalorder %s127, %s130
    %p139 = scmp.eq.s32.totalorder %s26, 1
    %p140 = por %p138, %p139
    %p141 = scmp.ne.s32.totalorder %s130, %s131
    %p142 = scmp.eq.s32.totalorder %s26, 0
    %p143 = por %p141, %p142
    %p144 = scmp.ne.s32.totalorder %s130, %s131
    %p145 = scmp.eq.s32.totalorder %s27, 1
    %p146 = por %p144, %p145
    %p148 = scmp.ne.s32.totalorder %s131, %s147
    %p149 = scmp.eq.s32.totalorder %s27, 0
    %p150 = por %p148, %p149
    %s151 = ssub.s32 %s28, %s40
    %p152 = scmp.eq.s32.totalorder %s151, 0
    %s154 = sadd.s32 %s153, 1
    %s155 = scalar_select %p152, %s153, %s154
    %p158 = pneg %p152
    %p159 = scmp.eq.s32.totalorder %s21, 1
    %p160 = por %p158, %p159
    %p161 = scmp.ne.s32.totalorder %s153, %s156
    %p162 = scmp.eq.s32.totalorder %s21, 0
    %p163 = por %p161, %p162
    %p164 = scmp.ne.s32.totalorder %s153, %s156
    %p165 = scmp.eq.s32.totalorder %s26, 1
    %p166 = por %p164, %p165
    %p167 = scmp.ne.s32.totalorder %s156, %s157
    %p168 = scmp.eq.s32.totalorder %s26, 0
    %p169 = por %p167, %p168
    %p170 = scmp.ne.s32.totalorder %s156, %s157
    %p171 = scmp.eq.s32.totalorder %s27, 1
    %p172 = por %p170, %p171
    %p174 = scmp.ne.s32.totalorder %s157, %s173
    %p175 = scmp.eq.s32.totalorder %s27, 0
    %p176 = por %p174, %p175
    %s178 = sadd.s32 %s177, 1
    %p181 = scmp.eq.s32.totalorder %s21, 1
    %p182 = scmp.ne.s32.totalorder %s177, %s179
    %p183 = scmp.eq.s32.totalorder %s21, 0
    %p184 = por %p182, %p183
    %p185 = scmp.ne.s32.totalorder %s177, %s179
    %p186 = scmp.eq.s32.totalorder %s26, 1
    %p187 = por %p185, %p186
    %p188 = scmp.ne.s32.totalorder %s179, %s180
    %p189 = scmp.eq.s32.totalorder %s26, 0
    %p190 = por %p188, %p189
    %p191 = scmp.ne.s32.totalorder %s179, %s180
    %p192 = scmp.eq.s32.totalorder %s27, 1
    %p193 = por %p191, %p192
    %p195 = scmp.ne.s32.totalorder %s180, %s194
    %p196 = scmp.eq.s32.totalorder %s27, 0
    %p197 = por %p195, %p196
    %s199 = sadd.s32 %s198, 1
    %p202 = scmp.eq.s32.totalorder %s21, 1
    %p203 = scmp.ne.s32.totalorder %s198, %s200
    %p204 = scmp.eq.s32.totalorder %s21, 0
    %p205 = por %p203, %p204
    %p206 = scmp.ne.s32.totalorder %s198, %s200
    %p207 = scmp.eq.s32.totalorder %s26, 1
    %p208 = por %p206, %p207
    %p209 = scmp.ne.s32.totalorder %s200, %s201
    %p210 = scmp.eq.s32.totalorder %s26, 0
    %p211 = por %p209, %p210
    %p212 = scmp.ne.s32.totalorder %s200, %s201
    %p213 = scmp.eq.s32.totalorder %s27, 1
    %p214 = por %p212, %p213
    %p216 = scmp.ne.s32.totalorder %s201, %s215
    %p217 = scmp.eq.s32.totalorder %s27, 0
    %p218 = por %p216, %p217
    %s220 = sadd.s32 %s219, 1
    %p223 = scmp.eq.s32.totalorder %s21, 1
    %p224 = scmp.ne.s32.totalorder %s219, %s221
    %p225 = scmp.eq.s32.totalorder %s21, 0
    %p226 = por %p224, %p225
    %p227 = scmp.ne.s32.totalorder %s219, %s221
    %p228 = scmp.eq.s32.totalorder %s26, 1
    %p229 = por %p227, %p228
    %p230 = scmp.ne.s32.totalorder %s221, %s222
    %p231 = scmp.eq.s32.totalorder %s26, 0
    %p232 = por %p230, %p231
    %p233 = scmp.ne.s32.totalorder %s221, %s222
    %p234 = scmp.eq.s32.totalorder %s27, 1
    %p235 = por %p233, %p234
    %p237 = scmp.ne.s32.totalorder %s222, %s236
    %p238 = scmp.eq.s32.totalorder %s27, 0
    %p239 = por %p237, %p238
    %s241 = sadd.s32 %s240, 1
    %p244 = scmp.eq.s32.totalorder %s21, 1
    %p245 = scmp.ne.s32.totalorder %s240, %s242
    %p246 = scmp.eq.s32.totalorder %s21, 0
    %p247 = por %p245, %p246
    %p248 = scmp.ne.s32.totalorder %s240, %s242
    %p249 = scmp.eq.s32.totalorder %s26, 1
    %p250 = por %p248, %p249
    %p251 = scmp.ne.s32.totalorder %s242, %s243
    %p252 = scmp.eq.s32.totalorder %s26, 0
    %p253 = por %p251, %p252
    %p254 = scmp.ne.s32.totalorder %s242, %s243
    %p255 = scmp.eq.s32.totalorder %s27, 1
    %p256 = por %p254, %p255
    %p258 = scmp.ne.s32.totalorder %s243, %s257
    %p259 = scmp.eq.s32.totalorder %s27, 0
    %p260 = por %p258, %p259
    %s262 = sadd.s32 %s261, 1
    %p265 = scmp.eq.s32.totalorder %s21, 1
    %p266 = scmp.ne.s32.totalorder %s261, %s263
    %p267 = scmp.eq.s32.totalorder %s21, 0
    %p268 = por %p266, %p267
    %p269 = scmp.ne.s32.totalorder %s261, %s263
    %p270 = scmp.eq.s32.totalorder %s26, 1
    %p271 = por %p269, %p270
    %p272 = scmp.ne.s32.totalorder %s263, %s264
    %p273 = scmp.eq.s32.totalorder %s26, 0
    %p274 = por %p272, %p273
    %p275 = scmp.ne.s32.totalorder %s263, %s264
    %p276 = scmp.eq.s32.totalorder %s27, 1
    %p277 = por %p275, %p276
    %p279 = scmp.ne.s32.totalorder %s264, %s278
    %p280 = scmp.eq.s32.totalorder %s27, 0
    %p281 = por %p279, %p280
    %s283 = sadd.s32 %s282, 1
    %p286 = scmp.eq.s32.totalorder %s21, 1
    %p287 = scmp.ne.s32.totalorder %s282, %s284
    %p288 = scmp.eq.s32.totalorder %s21, 0
    %p289 = por %p287, %p288
    %p290 = scmp.ne.s32.totalorder %s282, %s284
    %p291 = scmp.eq.s32.totalorder %s26, 1
    %p292 = por %p290, %p291
    %p293 = scmp.ne.s32.totalorder %s284, %s285
    %p294 = scmp.eq.s32.totalorder %s26, 0
    %p295 = por %p293, %p294
    %p296 = scmp.ne.s32.totalorder %s284, %s285
    %p297 = scmp.eq.s32.totalorder %s27, 1
    %p298 = por %p296, %p297
    %p300 = scmp.ne.s32.totalorder %s285, %s299
    %p301 = scmp.eq.s32.totalorder %s27, 0
    %p302 = por %p300, %p301
    %s304 = sadd.s32 %s303, 1
    %p307 = scmp.eq.s32.totalorder %s21, 1
    %p308 = scmp.ne.s32.totalorder %s303, %s305
    %p309 = scmp.eq.s32.totalorder %s21, 0
    %p310 = por %p308, %p309
    %p311 = scmp.ne.s32.totalorder %s303, %s305
    %p312 = scmp.eq.s32.totalorder %s26, 1
    %p313 = por %p311, %p312
    %p314 = scmp.ne.s32.totalorder %s305, %s306
    %p315 = scmp.eq.s32.totalorder %s26, 0
    %p316 = por %p314, %p315
    %p317 = scmp.ne.s32.totalorder %s305, %s306
    %p318 = scmp.eq.s32.totalorder %s27, 1
    %p319 = por %p317, %p318
    %p321 = scmp.ne.s32.totalorder %s306, %s320
    %p322 = scmp.eq.s32.totalorder %s27, 0
    %p323 = por %p321, %p322
    %s325 = sadd.s32 %s324, 1
    %p328 = scmp.eq.s32.totalorder %s21, 1
    %p329 = scmp.ne.s32.totalorder %s324, %s326
    %p330 = scmp.eq.s32.totalorder %s21, 0
    %p331 = por %p329, %p330
    %p332 = scmp.ne.s32.totalorder %s324, %s326
    %p333 = scmp.eq.s32.totalorder %s26, 1
    %p334 = por %p332, %p333
    %p335 = scmp.ne.s32.totalorder %s326, %s327
    %p336 = scmp.eq.s32.totalorder %s26, 0
    %p337 = por %p335, %p336
    %p338 = scmp.ne.s32.totalorder %s326, %s327
    %p339 = scmp.eq.s32.totalorder %s27, 1
    %p340 = por %p338, %p339
    %p342 = scmp.ne.s32.totalorder %s327, %s341
    %p343 = scmp.eq.s32.totalorder %s27, 0
    %p344 = por %p342, %p343
    %s346 = sadd.s32 %s345, 1
    %p349 = scmp.eq.s32.totalorder %s21, 1
    %p350 = scmp.ne.s32.totalorder %s345, %s347
    %p351 = scmp.eq.s32.totalorder %s21, 0
    %p352 = por %p350, %p351
    %p353 = scmp.ne.s32.totalorder %s345, %s347
    %p354 = scmp.eq.s32.totalorder %s26, 1
    %p355 = por %p353, %p354
    %p356 = scmp.ne.s32.totalorder %s347, %s348
    %p357 = scmp.eq.s32.totalorder %s26, 0
    %p358 = por %p356, %p357
    %p359 = scmp.ne.s32.totalorder %s347, %s348
    %p360 = scmp.eq.s32.totalorder %s27, 1
    %p361 = por %p359, %p360
    %p363 = scmp.ne.s32.totalorder %s348, %s362
    %p364 = scmp.eq.s32.totalorder %s27, 0
    %p365 = por %p363, %p364
    %s367 = sadd.s32 %s366, 1
    %p370 = scmp.eq.s32.totalorder %s21, 1
    %p371 = scmp.ne.s32.totalorder %s366, %s368
    %p372 = scmp.eq.s32.totalorder %s21, 0
    %p373 = por %p371, %p372
    %p374 = scmp.ne.s32.totalorder %s366, %s368
    %p375 = scmp.eq.s32.totalorder %s26, 1
    %p376 = por %p374, %p375
    %p377 = scmp.ne.s32.totalorder %s368, %s369
    %p378 = scmp.eq.s32.totalorder %s26, 0
    %p379 = por %p377, %p378
    %p380 = scmp.ne.s32.totalorder %s368, %s369
    %p381 = scmp.eq.s32.totalorder %s27, 1
    %p382 = por %p380, %p381
    %p384 = scmp.ne.s32.totalorder %s369, %s383
    %p385 = scmp.eq.s32.totalorder %s27, 0
    %p386 = por %p384, %p385
    %s387 = ssub.s32 %s28, %s40
    %s388 = ssub.s32 %s29, %s36
    %s389 = sor.u32 %s387, %s388
    %p390 = scmp.eq.s32.totalorder %s389, 0
    %s392 = sadd.s32 %s391, 1
    %s393 = scalar_select %p390, %s391, %s392
    %p396 = pneg %p390
    %p397 = scmp.eq.s32.totalorder %s21, 1
    %p398 = por %p396, %p397
    %p399 = scmp.ne.s32.totalorder %s391, %s394
    %p400 = scmp.eq.s32.totalorder %s21, 0
    %p401 = por %p399, %p400
    %p402 = scmp.ne.s32.totalorder %s391, %s394
    %p403 = scmp.eq.s32.totalorder %s26, 1
    %p404 = por %p402, %p403
    %p405 = scmp.ne.s32.totalorder %s394, %s395
    %p406 = scmp.eq.s32.totalorder %s26, 0
    %p407 = por %p405, %p406
    %p408 = scmp.ne.s32.totalorder %s394, %s395
    %p409 = scmp.eq.s32.totalorder %s27, 1
    %p410 = por %p408, %p409
    %p412 = scmp.ne.s32.totalorder %s395, %s411
    %p413 = scmp.eq.s32.totalorder %s27, 0
    %p414 = por %p412, %p413
    %p415 = scmp.le.s32.totalorder 1, %s21
    %p416 = scmp.lt.s32.totalorder %s21, 3
    %p417 = pnand %p415, %p416
    %p418 = pneg %p417
    // Predicated region
    $region9: #{cross_attention_decoder_layer.4} parent=5 // pred_check
      _
    $region10: #{cross_attention_decoder_layer.4} parent=5 // pred_check_branch
      %420 = sbr.rel (%p417) target = $region12
    $region11: #{cross_attention_decoder_layer.4} parent=5 // pred_region
      %s421 = ssub.s32 %s21, 1
      // Predicated region
      $region13: #{cross_attention_decoder_layer.4} parent=11 // pred_check
        %p422 = pneg %p190
      $region14: #{cross_attention_decoder_layer.4} parent=11 // pred_check_branch
        %424 = sbr.rel (%p422) target = $region16
      $region15: #{cross_attention_decoder_layer.4} parent=11 // pred_region
        _
      $region16: #{cross_attention_decoder_layer.4} parent=11 // pred_fallthru
        _
      // Predicated region
      $region17: #{cross_attention_decoder_layer.4} parent=11 // pred_check
        %p425 = pneg %p211
      $region18: #{cross_attention_decoder_layer.4} parent=11 // pred_check_branch
        %427 = sbr.rel (%p425) target = $region20
      $region19: #{cross_attention_decoder_layer.4} parent=11 // pred_region
        _
      $region20: #{cross_attention_decoder_layer.4} parent=11 // pred_fallthru
        _
      // Predicated region
      $region21: #{cross_attention_decoder_layer.4} parent=11 // pred_check
        %p428 = pneg %p232
      $region22: #{cross_attention_decoder_layer.4} parent=11 // pred_check_branch
        %430 = sbr.rel (%p428) target = $region24
      $region23: #{cross_attention_decoder_layer.4} parent=11 // pred_region
        _
      $region24: #{cross_attention_decoder_layer.4} parent=11 // pred_fallthru
        _
      // Predicated region
      $region25: #{cross_attention_decoder_layer.4} parent=11 // pred_check
        %p431 = pneg %p253
      $region26: #{cross_attention_decoder_layer.4} parent=11 // pred_check_branch
        %433 = sbr.rel (%p431) target = $region28
      $region27: #{cross_attention_decoder_layer.4} parent=11 // pred_region
        _
      $region28: #{cross_attention_decoder_layer.4} parent=11 // pred_fallthru
        _
      // Predicated region
      $region29: #{cross_attention_decoder_layer.4} parent=11 // pred_check
        %p434 = pneg %p274
      $region30: #{cross_attention_decoder_layer.4} parent=11 // pred_check_branch
        %436 = sbr.rel (%p434) target = $region32
      $region31: #{cross_attention_decoder_layer.4} parent=11 // pred_region
        _
      $region32: #{cross_attention_decoder_layer.4} parent=11 // pred_fallthru
        _
      // Predicated region
      $region33: #{cross_attention_decoder_layer.4} parent=11 // pred_check
        %p437 = pneg %p295
      $region34: #{cross_attention_decoder_layer.4} parent=11 // pred_check_branch
        %439 = sbr.rel (%p437) target = $region36
      $region35: #{cross_attention_decoder_layer.4} parent=11 // pred_region
        _
      $region36: #{cross_attention_decoder_layer.4} parent=11 // pred_fallthru
        _
      // Predicated region
      $region37: #{cross_attention_decoder_layer.4} parent=11 // pred_check
        %p440 = pneg %p316
      $region38: #{cross_attention_decoder_layer.4} parent=11 // pred_check_branch
        %442 = sbr.rel (%p440) target = $region40
      $region39: #{cross_attention_decoder_layer.4} parent=11 // pred_region
        _
      $region40: #{cross_attention_decoder_layer.4} parent=11 // pred_fallthru
        _
      // Predicated region
      $region41: #{cross_attention_decoder_layer.4} parent=11 // pred_check
        %p443 = pneg %p337
      $region42: #{cross_attention_decoder_layer.4} parent=11 // pred_check_branch
        %445 = sbr.rel (%p443) target = $region44
      $region43: #{cross_attention_decoder_layer.4} parent=11 // pred_region
        _
      $region44: #{cross_attention_decoder_layer.4} parent=11 // pred_fallthru
        _
      // Predicated region
      $region45: #{cross_attention_decoder_layer.4} parent=11 // pred_check
        %p446 = pneg %p358
      $region46: #{cross_attention_decoder_layer.4} parent=11 // pred_check_branch
        %448 = sbr.rel (%p446) target = $region48
      $region47: #{cross_attention_decoder_layer.4} parent=11 // pred_region
        _
      $region48: #{cross_attention_decoder_layer.4} parent=11 // pred_fallthru
        _
      // Predicated region
      $region49: #{cross_attention_decoder_layer.4} parent=11 // pred_check
        %p449 = pneg %p379
      $region50: #{cross_attention_decoder_layer.4} parent=11 // pred_check_branch
        %451 = sbr.rel (%p449) target = $region52
      $region51: #{cross_attention_decoder_layer.4} parent=11 // pred_region
        _
      $region52: #{cross_attention_decoder_layer.4} parent=11 // pred_fallthru
        _
    $region12: #{cross_attention_decoder_layer.4} parent=5 // pred_fallthru
      _
    %p452 = scmp.lt.s32.totalorder %s21, 2
    // Predicated region
    $region53: #{cross_attention_decoder_layer.4} parent=5 // pred_check
      %p453 = pneg %p452
    $region54: #{cross_attention_decoder_layer.4} parent=5 // pred_check_branch
      %455 = sbr.rel (%p453) target = $region56
    $region55: #{cross_attention_decoder_layer.4} parent=5 // pred_region
      // Predicated region
      $region57: #{cross_attention_decoder_layer.4} parent=55 // pred_check
        %p456 = pneg %p55
      $region58: #{cross_attention_decoder_layer.4} parent=55 // pred_check_branch
        %458 = sbr.rel (%p456) target = $region60
      $region59: #{cross_attention_decoder_layer.4} parent=55 // pred_region
        %p459 = scmp.lt.s32.totalorder %s28, 1
        %s460 = scalar_select %p459, %s28, 1
        %p461 = scmp.lt.s32.totalorder %s29, 0
        %s462 = scalar_select %p461, %s29, 0
        %s463 = sadd.s32 %s462, %s460
        %s464 = smul.addr %s463, 8
        %s465 = scalar_lea.vmem %s0, %s464
      $region60: #{cross_attention_decoder_layer.4} parent=55 // pred_fallthru
        _
      // Predicated region
      $region61: #{cross_attention_decoder_layer.4} parent=55 // pred_check
        %p466 = pneg %p83
      $region62: #{cross_attention_decoder_layer.4} parent=55 // pred_check_branch
        %468 = sbr.rel (%p466) target = $region64
      $region63: #{cross_attention_decoder_layer.4} parent=55 // pred_region
        %p469 = scmp.lt.s32.totalorder %s28, 1
        %s470 = scalar_select %p469, %s28, 1
        %p471 = scmp.lt.s32.totalorder %s29, 0
        %s472 = scalar_select %p471, %s29, 0
        %s473 = sadd.s32 %s472, %s470
        %s474 = smul.addr %s473, 8
        %s475 = scalar_lea.vmem %s1, %s474
      $region64: #{cross_attention_decoder_layer.4} parent=55 // pred_fallthru
        _
      // Predicated region
      $region65: #{cross_attention_decoder_layer.4} parent=55 // pred_check
        %p476 = pneg %p111
      $region66: #{cross_attention_decoder_layer.4} parent=55 // pred_check_branch
        %478 = sbr.rel (%p476) target = $region68
      $region67: #{cross_attention_decoder_layer.4} parent=55 // pred_region
        %p479 = scmp.lt.s32.totalorder %s28, 1
        %s480 = scalar_select %p479, %s28, 1
        %p481 = scmp.lt.s32.totalorder %s29, 0
        %s482 = scalar_select %p481, %s29, 0
        %s483 = sadd.s32 %s482, %s480
        %s484 = smul.addr %s483, 8
        %s485 = scalar_lea.vmem %s2, %s484
      $region68: #{cross_attention_decoder_layer.4} parent=55 // pred_fallthru
        _
      // Predicated region
      $region69: #{cross_attention_decoder_layer.4} parent=55 // pred_check
        %p486 = pneg %p137
      $region70: #{cross_attention_decoder_layer.4} parent=55 // pred_check_branch
        %488 = sbr.rel (%p486) target = $region72
      $region71: #{cross_attention_decoder_layer.4} parent=55 // pred_region
        %p489 = scmp.lt.s32.totalorder %s28, 1
        %s490 = scalar_select %p489, %s28, 1
        %s491 = smul.addr %s490, 2
        %s492 = smul.addr %s491, 4
        %s493 = scalar_lea.vmem %s3, %s492
      $region72: #{cross_attention_decoder_layer.4} parent=55 // pred_fallthru
        _
      // Predicated region
      $region73: #{cross_attention_decoder_layer.4} parent=55 // pred_check
        %p494 = pneg %p163
      $region74: #{cross_attention_decoder_layer.4} parent=55 // pred_check_branch
        %496 = sbr.rel (%p494) target = $region76
      $region75: #{cross_attention_decoder_layer.4} parent=55 // pred_region
        %p497 = scmp.lt.s32.totalorder %s28, 1
        %s498 = scalar_select %p497, %s28, 1
        %s499 = smul.addr %s498, 2
        %s500 = smul.addr %s499, 4
        %s501 = scalar_lea.vmem %s4, %s500
      $region76: #{cross_attention_decoder_layer.4} parent=55 // pred_fallthru
        _
    $region56: #{cross_attention_decoder_layer.4} parent=5 // pred_fallthru
      _
    %p502 = scmp.le.s32.totalorder 1, %s21
    %p503 = scmp.lt.s32.totalorder %s21, 3
    %p504 = pnand %p502, %p503
    %p505 = pneg %p504
    // Predicated region
    $region77: #{cross_attention_decoder_layer.4} parent=5 // pred_check
      _
    $region78: #{cross_attention_decoder_layer.4} parent=5 // pred_check_branch
      %507 = sbr.rel (%p504) target = $region80
    $region79: #{cross_attention_decoder_layer.4} parent=5 // pred_region
      %s508 = ssub.s32 %s21, 1
      %p509 = scmp.lt.s32.totalorder %s30, 1
      %s510 = scalar_select %p509, %s30, 1
      %p511 = scmp.lt.s32.totalorder %s31, 0
      %s512 = scalar_select %p511, %s31, 0
      %s513 = sadd.s32 %s512, %s510
      %s514 = smul.addr %s513, 8
      %s515 = scalar_lea.vmem %s0, %s514
      %p516 = pneg %p61
      %p517 = pneg %p58
      %p518 = scmp.lt.s32.totalorder %s30, 1
      %s519 = scalar_select %p518, %s30, 1
      %p520 = scmp.lt.s32.totalorder %s31, 0
      %s521 = scalar_select %p520, %s31, 0
      %s522 = sadd.s32 %s521, %s519
      %s523 = smul.addr %s522, 8
      %s524 = scalar_lea.vmem %s1, %s523
      %p525 = pneg %p89
      %p526 = pneg %p86
      %p527 = scmp.lt.s32.totalorder %s30, 1
      %s528 = scalar_select %p527, %s30, 1
      %p529 = scmp.lt.s32.totalorder %s31, 0
      %s530 = scalar_select %p529, %s31, 0
      %s531 = sadd.s32 %s530, %s528
      %s532 = smul.addr %s531, 8
      %s533 = scalar_lea.vmem %s2, %s532
      %p534 = pneg %p117
      %p535 = pneg %p114
      %p536 = scmp.lt.s32.totalorder %s30, 1
      %s537 = scalar_select %p536, %s30, 1
      %s538 = smul.addr %s537, 2
      %s539 = smul.addr %s538, 4
      %s540 = scalar_lea.vmem %s3, %s539
      %p541 = pneg %p143
      %p542 = pneg %p140
      %p543 = scmp.lt.s32.totalorder %s30, 1
      %s544 = scalar_select %p543, %s30, 1
      %s545 = smul.addr %s544, 2
      %s546 = smul.addr %s545, 4
      %s547 = scalar_lea.vmem %s4, %s546
      %p548 = pneg %p169
      %p549 = pneg %p166
      %p550 = pneg %p190
      %p551 = pneg %p187
      %p552 = pneg %p211
      %p553 = pneg %p208
      %p554 = pneg %p232
      %p555 = pneg %p229
      %p556 = pneg %p253
      %p557 = pneg %p250
      %p558 = pneg %p274
      %p559 = pneg %p271
      %p560 = pneg %p295
      %p561 = pneg %p292
      %p562 = pneg %p316
      %p563 = pneg %p313
      %p564 = pneg %p337
      %p565 = pneg %p334
      %p566 = pneg %p358
      %p567 = pneg %p355
      %p568 = pneg %p379
      %p569 = pneg %p376
      %p570 = pneg %p407
      %p571 = pneg %p404
      %p572 = scmp.lt.s32.totalorder %s30, 1
      %s573 = scalar_select %p572, %s30, 1
      %p574 = scmp.lt.s32.totalorder %s31, 0
      %s575 = scalar_select %p574, %s31, 0
      %s576 = sadd.s32 %s575, %s573
      %s577 = smul.addr %s576, 8
      %s578 = scalar_lea.vmem %s15, %s577
      %p579 = scmp.lt.s32.totalorder %s30, 1
      %s580 = scalar_select %p579, %s30, 1
      %p581 = scmp.lt.s32.totalorder %s31, 0
      %s582 = scalar_select %p581, %s31, 0
      %s583 = sadd.s32 %s582, %s580
      %s584 = smul.addr %s583, 8
      %s585 = scalar_lea.vmem %s0, %s584
      %p586 = scmp.lt.s32.totalorder %s30, 1
      %s587 = scalar_select %p586, %s30, 1
      %p588 = scmp.lt.s32.totalorder %s31, 0
      %s589 = scalar_select %p588, %s31, 0
      %s590 = sadd.s32 %s589, %s587
      %s591 = smul.addr %s590, 8
      %s592 = scalar_lea.vmem %s1, %s591
      %p593 = scmp.lt.s32.totalorder %s30, 1
      %s594 = scalar_select %p593, %s30, 1
      %p595 = scmp.lt.s32.totalorder %s31, 0
      %s596 = scalar_select %p595, %s31, 0
      %s597 = sadd.s32 %s596, %s594
      %s598 = smul.addr %s597, 8
      %s599 = scalar_lea.vmem %s2, %s598
      %p600 = scmp.lt.s32.totalorder %s30, 1
      %s601 = scalar_select %p600, %s30, 1
      %s602 = smul.addr %s601, 2
      %s603 = smul.addr %s602, 4
      %s604 = scalar_lea.vmem %s3, %s603
      %p605 = scmp.lt.s32.totalorder %s30, 1
      %s606 = scalar_select %p605, %s30, 1
      %s607 = smul.addr %s606, 2
      %s608 = smul.addr %s607, 4
      %s609 = scalar_lea.vmem %s4, %s608
      %p610 = scmp.lt.s32.totalorder %s30, 1
      %s611 = scalar_select %p610, %s30, 1
      %p612 = scmp.lt.s32.totalorder %s31, 0
      %s613 = scalar_select %p612, %s31, 0
      %s614 = sadd.s32 %s613, %s611
      %s615 = smul.addr %s614, 8
      %s616 = scalar_lea.vmem %s15, %s615
      %p618 = scmp.eq.s32.totalorder %s31, 0
      // Predicated region
      $region81: #{cross_attention_decoder_layer.4} parent=79 // pred_check
        %p619 = pneg %p618
      $region82: #{cross_attention_decoder_layer.4} parent=79 // pred_check_branch
        %621 = sbr.rel (%p619) target = $region84
      $region83: #{cross_attention_decoder_layer.4} parent=79 // pred_region
        %v622 = vld [vmem:[%s604] sm:$0xf]
        %v623 = vld [vmem:[%s604 + $0x4] sm:$0xf]
        %v624 = vld [vmem:[%s609] sm:$0xf]
        %v625 = vld [vmem:[%s609 + $0x4] sm:$0xf]
        %v626 = vadd.bf16 %v622, %v624
        %v627 = vadd.bf16 %v623, %v625
        %v628 = vld [vmem:[%s7] sm:$0xf]
        %v629 = vld [vmem:[%s7 + $0x4] sm:$0xf]
        %v630 = vld [vmem:[%s7 + $0x8] sm:$0xf]
        %v631 = vld [vmem:[%s7 + $0xc] sm:$0xf]
        %v632 = vld [vmem:[%s8] sm:$0x1]
        %v634 = vlaneseq
        %v635 = vshrl.u32 %v634, 7
        %v636 = vsub.s32 0, %v635
        %v637 = vrot.slane %v632, %v636
        %v641 = vunpack.c.l.b16 %v626
        %v642 = vunpack.c.l.b16 %v627
        %v643 = vpack.c.b16 %v642, %v641
        %v648 = vunpack.c.l.b16 %v628
        %v649 = vunpack.c.l.b16 %v629
        %v650 = vunpack.c.l.b16 %v630
        %v651 = vunpack.c.l.b16 %v631
        %v652 = vpack.c.b16 %v649, %v648
        %v653 = vpack.c.b16 %v651, %v650
        %vm656 = vcmask 261120
        %v658 = vsel %vm656, %v643, 0
        %660 = vmatprep.subr.bf16.mxu0 0
        %661 = vmatpush1.bf16.msra.mxu0 %v652
        %662 = vmatprep.subr.bf16.mxu0 0
        %663 = vmatpush1.bf16.msra.mxu0 %v653
        %664 = vmatprep.subr.bf16.mxu0 0
        %665 = vmatpush1.bf16.msra.mxu0 0
        %666 = vmatprep.subr.bf16.mxu0 0
        %667 = vmatpush1.bf16.msra.mxu0 0
        %668 = vmatprep.subr.bf16.mxu0 0
        %669 = vmatpush1.bf16.msra.mxu0 0
        %670 = vmatprep.subr.bf16.mxu0 0
        %671 = vmatpush1.bf16.msra.mxu0 0
        %672 = vmatprep.subr.bf16.mxu0 0
        %673 = vmatpush1.bf16.msra.mxu0 0
        %674 = vmatprep.subr.bf16.mxu0 0
        %675 = vmatpush1.bf16.msra.mxu0 0
        %676 = vmatprep.subr.bf16.mxu0 0
        %677 = vmatpush1.bf16.msra.mxu0 0
        %678 = vmatprep.subr.bf16.mxu0 0
        %679 = vmatpush1.bf16.msra.mxu0 0
        %680 = vmatprep.subr.bf16.mxu0 0
        %681 = vmatpush1.bf16.msra.mxu0 0
        %682 = vmatprep.subr.bf16.mxu0 0
        %683 = vmatpush1.bf16.msra.mxu0 0
        %684 = vmatprep.subr.bf16.mxu0 0
        %685 = vmatpush1.bf16.msra.mxu0 0
        %686 = vmatprep.subr.bf16.mxu0 0
        %687 = vmatpush1.bf16.msra.mxu0 0
        %688 = vmatprep.subr.bf16.mxu0 0
        %689 = vmatpush1.bf16.msra.mxu0 0
        %690 = vmatprep.subr.bf16.mxu0 0
        %691 = vmatpush1.bf16.msra.mxu0 0
        %692 = vmatprep.mubr.bf16.mxu0 0
        %693 = vmatmul.mubr.bf16.gmra.mrb[0].mxu0 %v658
        %v694 = vpop.f32.mrb[0].mxu0
        %v695 = vadd.f32 %v637, %v694
        %v696 = vpop.f32.mrb[0].mxu0
        %v697 = vpop.f32.mrb[0].mxu0
        %v698 = vadd.f32 %v637, %v697
        %v699 = vpop.f32.mrb[0].mxu0
        %700 = vdwg.mxu0
        %v701 = vld [vmem:[%s9] sm:$0xf]
        %v702 = vld [vmem:[%s9 + $0x4] sm:$0xf]
        %v703 = vld [vmem:[%s9 + $0x8] sm:$0xf]
        %v704 = vld [vmem:[%s9 + $0xc] sm:$0xf]
        %v705 = vld [vmem:[%s10] sm:$0x1]
        %v707 = vlaneseq
        %v708 = vshrl.u32 %v707, 7
        %v709 = vsub.s32 0, %v708
        %v710 = vrot.slane %v705, %v709
        %v714 = vunpack.c.l.b16 %v622
        %v715 = vunpack.c.l.b16 %v623
        %v716 = vpack.c.b16 %v715, %v714
        %v721 = vunpack.c.l.b16 %v701
        %v722 = vunpack.c.l.b16 %v702
        %v723 = vunpack.c.l.b16 %v703
        %v724 = vunpack.c.l.b16 %v704
        %v725 = vpack.c.b16 %v722, %v721
        %v726 = vpack.c.b16 %v724, %v723
        %v730 = vsel %vm656, %v716, 0
        %732 = vmatprep.subr.bf16.mxu0 0
        %733 = vmatpush1.bf16.msra.mxu0 %v725
        %734 = vmatprep.subr.bf16.mxu0 0
        %735 = vmatpush1.bf16.msra.mxu0 %v726
        %736 = vmatprep.subr.bf16.mxu0 0
        %737 = vmatpush1.bf16.msra.mxu0 0
        %738 = vmatprep.subr.bf16.mxu0 0
        %739 = vmatpush1.bf16.msra.mxu0 0
        %740 = vmatprep.subr.bf16.mxu0 0
        %741 = vmatpush1.bf16.msra.mxu0 0
        %742 = vmatprep.subr.bf16.mxu0 0
        %743 = vmatpush1.bf16.msra.mxu0 0
        %744 = vmatprep.subr.bf16.mxu0 0
        %745 = vmatpush1.bf16.msra.mxu0 0
        %746 = vmatprep.subr.bf16.mxu0 0
        %747 = vmatpush1.bf16.msra.mxu0 0
        %748 = vmatprep.subr.bf16.mxu0 0
        %749 = vmatpush1.bf16.msra.mxu0 0
        %750 = vmatprep.subr.bf16.mxu0 0
        %751 = vmatpush1.bf16.msra.mxu0 0
        %752 = vmatprep.subr.bf16.mxu0 0
        %753 = vmatpush1.bf16.msra.mxu0 0
        %754 = vmatprep.subr.bf16.mxu0 0
        %755 = vmatpush1.bf16.msra.mxu0 0
        %756 = vmatprep.subr.bf16.mxu0 0
        %757 = vmatpush1.bf16.msra.mxu0 0
        %758 = vmatprep.subr.bf16.mxu0 0
        %759 = vmatpush1.bf16.msra.mxu0 0
        %760 = vmatprep.subr.bf16.mxu0 0
        %761 = vmatpush1.bf16.msra.mxu0 0
        %762 = vmatprep.subr.bf16.mxu0 0
        %763 = vmatpush1.bf16.msra.mxu0 0
        %764 = vmatprep.mubr.bf16.mxu0 0
        %765 = vmatmul.mubr.bf16.gmra.mrb[0].mxu0 %v730
        %v766 = vpop.f32.mrb[0].mxu0
        %v767 = vadd.f32 %v710, %v766
        %v768 = vpop.f32.mrb[0].mxu0
        %v769 = vpop.f32.mrb[0].mxu0
        %v770 = vadd.f32 %v710, %v769
        %v771 = vpop.f32.mrb[0].mxu0
        %772 = vdwg.mxu0
        %773 = vxpose.xlu0.b32.start [1/16] %v695, 128
        %774 = vxpose.xlu0.b32.cont [2/16] %v698, 128
        %775 = vxpose.xlu0.b32.cont [3/16] 0.0, 128
        %776 = vxpose.xlu0.b32.cont [4/16] 0.0, 128
        %777 = vxpose.xlu0.b32.cont [5/16] 0.0, 128
        %778 = vxpose.xlu0.b32.cont [6/16] 0.0, 128
        %779 = vxpose.xlu0.b32.cont [7/16] 0.0, 128
        %780 = vxpose.xlu0.b32.cont [8/16] 0.0, 128
        %781 = vxpose.xlu0.b32.cont [9/16] 0.0, 128
        %782 = vxpose.xlu0.b32.cont [10/16] 0.0, 128
        %783 = vxpose.xlu0.b32.cont [11/16] 0.0, 128
        %784 = vxpose.xlu0.b32.cont [12/16] 0.0, 128
        %785 = vxpose.xlu0.b32.cont [13/16] 0.0, 128
        %786 = vxpose.xlu0.b32.cont [14/16] 0.0, 128
        %787 = vxpose.xlu0.b32.cont [15/16] 0.0, 128
        %788 = vxpose.xlu0.b32.end [16/16] 0.0, 128
        %v789 = vpop.trf.xlu0
        %v790 = vpop.trf.xlu0
        %v791 = vpop.trf.xlu0
        %v792 = vpop.trf.xlu0
        %v793 = vpop.trf.xlu0
        %v794 = vpop.trf.xlu0
        %v795 = vpop.trf.xlu0
        %v796 = vpop.trf.xlu0
        %v797 = vpop.trf.xlu0
        %v798 = vpop.trf.xlu0
        %v799 = vpop.trf.xlu0
        %v800 = vpop.trf.xlu0
        %v801 = vpop.trf.xlu0
        %v802 = vpop.trf.xlu0
        %v803 = vpop.trf.xlu0
        %v804 = vpop.trf.xlu0
        %v805 = vpack.c.bf16 %v790, %v789
        %v806 = vpack.c.bf16 %v792, %v791
        %vm807 = vcmask 130048
        %808 = vst.msk [vmem:[#allocation2] sm:$0xff] %vm807, %v805
        %809 = vst.msk [vmem:[#allocation2 + $0x8] sm:$0xff] %vm807, %v806
        %v810 = vpack.c.bf16 %v770, %v767
        %811 = vst.msk [vmem:[#allocation3] sm:$0xff] %vm656, %v810
      $region84: #{cross_attention_decoder_layer.4} parent=79 // pred_fallthru
        _
      %v812 = vld [vmem:[%s585] sm:$0xff]
      %v813 = vld [vmem:[%s592] sm:$0xff]
      %v814 = vadd.f32 %v812, %v813
      %v815 = vpack.c.bf16 %v814, %v814
      %v816 = vld [vmem:[%s599] sm:$0xff]
      %v817 = vld [vmem:[%s5] sm:$0xf]
      %v818 = vld [vmem:[%s5 + $0x4] sm:$0xf]
      %v819 = vld [vmem:[%s5 + $0x8] sm:$0xf]
      %v820 = vld [vmem:[%s5 + $0xc] sm:$0xf]
      %v821 = vld [vmem:[%s6] sm:$0x1]
      %v823 = vlaneseq
      %v824 = vshrl.u32 %v823, 7
      %v825 = vsub.s32 0, %v824
      %v826 = vrot.slane %v821, %v825
      %v832 = vunpack.c.l.b16 %v817
      %v833 = vunpack.c.l.b16 %v818
      %v834 = vunpack.c.l.b16 %v819
      %v835 = vunpack.c.l.b16 %v820
      %v836 = vpack.c.b16 %v833, %v832
      %v837 = vpack.c.b16 %v835, %v834
      %vm840 = vcmask 261120
      %v842 = vsel %vm840, %v815, 0
      %844 = vmatprep.subr.bf16.mxu0 0
      %845 = vmatpush1.bf16.msra.mxu0 %v836
      %846 = vmatprep.subr.bf16.mxu0 0
      %847 = vmatpush1.bf16.msra.mxu0 %v837
      %848 = vmatprep.subr.bf16.mxu0 0
      %849 = vmatpush1.bf16.msra.mxu0 0
      %850 = vmatprep.subr.bf16.mxu0 0
      %851 = vmatpush1.bf16.msra.mxu0 0
      %852 = vmatprep.subr.bf16.mxu0 0
      %853 = vmatpush1.bf16.msra.mxu0 0
      %854 = vmatprep.subr.bf16.mxu0 0
      %855 = vmatpush1.bf16.msra.mxu0 0
      %856 = vmatprep.subr.bf16.mxu0 0
      %857 = vmatpush1.bf16.msra.mxu0 0
      %858 = vmatprep.subr.bf16.mxu0 0
      %859 = vmatpush1.bf16.msra.mxu0 0
      %860 = vmatprep.subr.bf16.mxu0 0
      %861 = vmatpush1.bf16.msra.mxu0 0
      %862 = vmatprep.subr.bf16.mxu0 0
      %863 = vmatpush1.bf16.msra.mxu0 0
      %864 = vmatprep.subr.bf16.mxu0 0
      %865 = vmatpush1.bf16.msra.mxu0 0
      %866 = vmatprep.subr.bf16.mxu0 0
      %867 = vmatpush1.bf16.msra.mxu0 0
      %868 = vmatprep.subr.bf16.mxu0 0
      %869 = vmatpush1.bf16.msra.mxu0 0
      %870 = vmatprep.subr.bf16.mxu0 0
      %871 = vmatpush1.bf16.msra.mxu0 0
      %872 = vmatprep.subr.bf16.mxu0 0
      %873 = vmatpush1.bf16.msra.mxu0 0
      %874 = vmatprep.subr.bf16.mxu0 0
      %875 = vmatpush1.bf16.msra.mxu0 0
      %876 = vmatprep.mubr.bf16.mxu0 0
      %877 = vmatmul.mubr.bf16.gmra.mrb[0].mxu0 %v842
      %v878 = vpop.f32.mrb[0].mxu0
      %v879 = vadd.f32 %v826, %v878
      %v880 = vpop.f32.mrb[0].mxu0
      %v881 = vpop.f32.mrb[0].mxu0
      %v882 = vpop.f32.mrb[0].mxu0
      %883 = vdwg.mxu0
      %v884 = vpack.c.bf16 %v879, %v879
      %v885 = vld [vmem:[#allocation2] sm:$0xf]
      %vm886 = vcmask 64512
      %v888 = vsel %vm886, %v884, 0
      %vm890 = vcmask 1043456
      %v892 = vsel %vm890, %v885, 0
      %894 = vmatprep.subr.bf16.mxu0 0
      %895 = vmatpush1.bf16.msra.mxu0 %v892
      %896 = vmatprep.subr.bf16.mxu0 0
      %897 = vmatpush1.bf16.msra.mxu0 0
      %898 = vmatprep.subr.bf16.mxu0 0
      %899 = vmatpush1.bf16.msra.mxu0 0
      %900 = vmatprep.subr.bf16.mxu0 0
      %901 = vmatpush1.bf16.msra.mxu0 0
      %902 = vmatprep.subr.bf16.mxu0 0
      %903 = vmatpush1.bf16.msra.mxu0 0
      %904 = vmatprep.subr.bf16.mxu0 0
      %905 = vmatpush1.bf16.msra.mxu0 0
      %906 = vmatprep.subr.bf16.mxu0 0
      %907 = vmatpush1.bf16.msra.mxu0 0
      %908 = vmatprep.subr.bf16.mxu0 0
      %909 = vmatpush1.bf16.msra.mxu0 0
      %910 = vmatprep.subr.bf16.mxu0 0
      %911 = vmatpush1.bf16.msra.mxu0 0
      %912 = vmatprep.subr.bf16.mxu0 0
      %913 = vmatpush1.bf16.msra.mxu0 0
      %914 = vmatprep.subr.bf16.mxu0 0
      %915 = vmatpush1.bf16.msra.mxu0 0
      %916 = vmatprep.subr.bf16.mxu0 0
      %917 = vmatpush1.bf16.msra.mxu0 0
      %918 = vmatprep.subr.bf16.mxu0 0
      %919 = vmatpush1.bf16.msra.mxu0 0
      %920 = vmatprep.subr.bf16.mxu0 0
      %921 = vmatpush1.bf16.msra.mxu0 0
      %922 = vmatprep.subr.bf16.mxu0 0
      %923 = vmatpush1.bf16.msra.mxu0 0
      %924 = vmatprep.subr.bf16.mxu0 0
      %925 = vmatpush1.bf16.msra.mxu0 0
      %926 = vmatprep.mubr.bf16.mxu0 0
      %927 = vmatmul.mubr.bf16.gmra.mrb[0].mxu0 %v888
      %v928 = vpop.f32.mrb[0].mxu0
      %v929 = vadd.f32 0.0, %v928
      %v930 = vpop.f32.mrb[0].mxu0
      %v931 = vpop.f32.mrb[0].mxu0
      %v932 = vpop.f32.mrb[0].mxu0
      %933 = vdwg.mxu0
      %v934 = vmul.f32 %v929, 0.35355338
      %vm935 = vcmask 130048
      %v936 = vsel %vm935, %v934, -inf
      %937 = vmax.xlane.f32.xlu0 %v936
      %v938 = vpop.xlane.xlu0 %937
      %v939 = vsub.f32 %v934, %v938
      %v940 = vmul.f32 %v939, 1.442695
      %v941 = vpow.pop %v940
      %v942 = vsel %vm935, %v941, 0.0
      %943 = vadd.xlane.f32.xlu0 %v942
      %v944 = vpop.xlane.xlu0 %943
      %v945 = vrcp.pop %v944
      %v946 = vmul.f32 %v941, %v945
      %v947 = vpack.c.bf16 %v946, %v946
      %v948 = vld [vmem:[#allocation3] sm:$0xff]
      %v950 = vsel %vm935, %v947, 0
      %952 = vmatprep.subr.bf16.mxu0 0
      %953 = vmatpush1.bf16.msra.mxu0 %v948
      %954 = vmatprep.subr.bf16.mxu0 0
      %955 = vmatpush1.bf16.msra.mxu0 0
      %956 = vmatprep.subr.bf16.mxu0 0
      %957 = vmatpush1.bf16.msra.mxu0 0
      %958 = vmatprep.subr.bf16.mxu0 0
      %959 = vmatpush1.bf16.msra.mxu0 0
      %960 = vmatprep.subr.bf16.mxu0 0
      %961 = vmatpush1.bf16.msra.mxu0 0
      %962 = vmatprep.subr.bf16.mxu0 0
      %963 = vmatpush1.bf16.msra.mxu0 0
      %964 = vmatprep.subr.bf16.mxu0 0
      %965 = vmatpush1.bf16.msra.mxu0 0
      %966 = vmatprep.subr.bf16.mxu0 0
      %967 = vmatpush1.bf16.msra.mxu0 0
      %968 = vmatprep.subr.bf16.mxu0 0
      %969 = vmatpush1.bf16.msra.mxu0 0
      %970 = vmatprep.subr.bf16.mxu0 0
      %971 = vmatpush1.bf16.msra.mxu0 0
      %972 = vmatprep.subr.bf16.mxu0 0
      %973 = vmatpush1.bf16.msra.mxu0 0
      %974 = vmatprep.subr.bf16.mxu0 0
      %975 = vmatpush1.bf16.msra.mxu0 0
      %976 = vmatprep.subr.bf16.mxu0 0
      %977 = vmatpush1.bf16.msra.mxu0 0
      %978 = vmatprep.subr.bf16.mxu0 0
      %979 = vmatpush1.bf16.msra.mxu0 0
      %980 = vmatprep.subr.bf16.mxu0 0
      %981 = vmatpush1.bf16.msra.mxu0 0
      %982 = vmatprep.subr.bf16.mxu0 0
      %983 = vmatpush1.bf16.msra.mxu0 0
      %984 = vmatprep.mubr.bf16.mxu0 0
      %985 = vmatmul.mubr.bf16.gmra.mrb[0].mxu0 %v950
      %v986 = vpop.f32.mrb[0].mxu0
      %v987 = vadd.f32 0.0, %v986
      %v988 = vpop.f32.mrb[0].mxu0
      %v989 = vpop.f32.mrb[0].mxu0
      %v990 = vpop.f32.mrb[0].mxu0
      %991 = vdwg.mxu0
      %v992 = vpack.c.bf16 %v987, %v987
      %v993 = vld [vmem:[%s11] sm:$0xf]
      %v994 = vld [vmem:[#allocation2] sm:$0xf0]
      %996 = vrot.lane.b32.xlu0 %v884, 120
      %v997 = vpop.permute.xlu0 %996
      %v999 = vrot.slane %v994, 4
      %v1001 = vsel %vm886, %v997, 0
      %v1004 = vsel %vm890, %v999, 0
      %1006 = vmatprep.subr.bf16.mxu0 0
      %1007 = vmatpush1.bf16.msra.mxu0 %v1004
      %1008 = vmatprep.subr.bf16.mxu0 0
      %1009 = vmatpush1.bf16.msra.mxu0 0
      %1010 = vmatprep.subr.bf16.mxu0 0
      %1011 = vmatpush1.bf16.msra.mxu0 0
      %1012 = vmatprep.subr.bf16.mxu0 0
      %1013 = vmatpush1.bf16.msra.mxu0 0
      %1014 = vmatprep.subr.bf16.mxu0 0
      %1015 = vmatpush1.bf16.msra.mxu0 0
      %1016 = vmatprep.subr.bf16.mxu0 0
      %1017 = vmatpush1.bf16.msra.mxu0 0
      %1018 = vmatprep.subr.bf16.mxu0 0
      %1019 = vmatpush1.bf16.msra.mxu0 0
      %1020 = vmatprep.subr.bf16.mxu0 0
      %1021 = vmatpush1.bf16.msra.mxu0 0
      %1022 = vmatprep.subr.bf16.mxu0 0
      %1023 = vmatpush1.bf16.msra.mxu0 0
      %1024 = vmatprep.subr.bf16.mxu0 0
      %1025 = vmatpush1.bf16.msra.mxu0 0
      %1026 = vmatprep.subr.bf16.mxu0 0
      %1027 = vmatpush1.bf16.msra.mxu0 0
      %1028 = vmatprep.subr.bf16.mxu0 0
      %1029 = vmatpush1.bf16.msra.mxu0 0
      %1030 = vmatprep.subr.bf16.mxu0 0
      %1031 = vmatpush1.bf16.msra.mxu0 0
      %1032 = vmatprep.subr.bf16.mxu0 0
      %1033 = vmatpush1.bf16.msra.mxu0 0
      %1034 = vmatprep.subr.bf16.mxu0 0
      %1035 = vmatpush1.bf16.msra.mxu0 0
      %1036 = vmatprep.subr.bf16.mxu0 0
      %1037 = vmatpush1.bf16.msra.mxu0 0
      %1038 = vmatprep.mubr.bf16.mxu0 0
      %1039 = vmatmul.mubr.bf16.gmra.mrb[0].mxu0 %v1001
      %v1040 = vpop.f32.mrb[0].mxu0
      %v1041 = vadd.f32 0.0, %v1040
      %v1042 = vpop.f32.mrb[0].mxu0
      %v1043 = vpop.f32.mrb[0].mxu0
      %v1044 = vpop.f32.mrb[0].mxu0
      %1045 = vdwg.mxu0
      %v1046 = vmul.f32 %v1041, 0.35355338
      %v1047 = vsel %vm935, %v1046, -inf
      %1048 = vmax.xlane.f32.xlu0 %v1047
      %v1049 = vpop.xlane.xlu0 %1048
      %v1050 = vsub.f32 %v1046, %v1049
      %v1051 = vmul.f32 %v1050, 1.442695
      %v1052 = vpow.pop %v1051
      %v1053 = vsel %vm935, %v1052, 0.0
      %1054 = vadd.xlane.f32.xlu0 %v1053
      %v1055 = vpop.xlane.xlu0 %1054
      %v1056 = vrcp.pop %v1055
      %v1057 = vmul.f32 %v1052, %v1056
      %v1058 = vpack.c.bf16 %v1057, %v1057
      %1060 = vrot.lane.b32.xlu0 %v948, 120
      %v1061 = vpop.permute.xlu0 %1060
      %v1064 = vsel %vm935, %v1058, 0
      %1066 = vmatprep.subr.bf16.mxu0 0
      %1067 = vmatpush1.bf16.msra.mxu0 %v1061
      %1068 = vmatprep.subr.bf16.mxu0 0
      %1069 = vmatpush1.bf16.msra.mxu0 0
      %1070 = vmatprep.subr.bf16.mxu0 0
      %1071 = vmatpush1.bf16.msra.mxu0 0
      %1072 = vmatprep.subr.bf16.mxu0 0
      %1073 = vmatpush1.bf16.msra.mxu0 0
      %1074 = vmatprep.subr.bf16.mxu0 0
      %1075 = vmatpush1.bf16.msra.mxu0 0
      %1076 = vmatprep.subr.bf16.mxu0 0
      %1077 = vmatpush1.bf16.msra.mxu0 0
      %1078 = vmatprep.subr.bf16.mxu0 0
      %1079 = vmatpush1.bf16.msra.mxu0 0
      %1080 = vmatprep.subr.bf16.mxu0 0
      %1081 = vmatpush1.bf16.msra.mxu0 0
      %1082 = vmatprep.subr.bf16.mxu0 0
      %1083 = vmatpush1.bf16.msra.mxu0 0
      %1084 = vmatprep.subr.bf16.mxu0 0
      %1085 = vmatpush1.bf16.msra.mxu0 0
      %1086 = vmatprep.subr.bf16.mxu0 0
      %1087 = vmatpush1.bf16.msra.mxu0 0
      %1088 = vmatprep.subr.bf16.mxu0 0
      %1089 = vmatpush1.bf16.msra.mxu0 0
      %1090 = vmatprep.subr.bf16.mxu0 0
      %1091 = vmatpush1.bf16.msra.mxu0 0
      %1092 = vmatprep.subr.bf16.mxu0 0
      %1093 = vmatpush1.bf16.msra.mxu0 0
      %1094 = vmatprep.subr.bf16.mxu0 0
      %1095 = vmatpush1.bf16.msra.mxu0 0
      %1096 = vmatprep.subr.bf16.mxu0 0
      %1097 = vmatpush1.bf16.msra.mxu0 0
      %1098 = vmatprep.mubr.bf16.mxu0 0
      %1099 = vmatmul.mubr.bf16.gmra.mrb[0].mxu0 %v1064
      %v1100 = vpop.f32.mrb[0].mxu0
      %v1101 = vadd.f32 0.0, %v1100
      %v1102 = vpop.f32.mrb[0].mxu0
      %v1103 = vpop.f32.mrb[0].mxu0
      %v1104 = vpop.f32.mrb[0].mxu0
      %1105 = vdwg.mxu0
      %v1106 = vpack.c.bf16 %v1101, %v1101
      %v1107 = vld [vmem:[%s11 + $0x4] sm:$0xf]
      %v1109 = vsel %vm886, %v1106, 0
      %v1112 = vsel %vm890, %v1107, 0
      %1114 = vmatprep.subr.bf16.mxu0 0
      %1115 = vmatpush1.bf16.msra.mxu0 %v1112
      %1116 = vmatprep.subr.bf16.mxu0 0
      %1117 = vmatpush1.bf16.msra.mxu0 0
      %1118 = vmatprep.subr.bf16.mxu0 0
      %1119 = vmatpush1.bf16.msra.mxu0 0
      %1120 = vmatprep.subr.bf16.mxu0 0
      %1121 = vmatpush1.bf16.msra.mxu0 0
      %1122 = vmatprep.subr.bf16.mxu0 0
      %1123 = vmatpush1.bf16.msra.mxu0 0
      %1124 = vmatprep.subr.bf16.mxu0 0
      %1125 = vmatpush1.bf16.msra.mxu0 0
      %1126 = vmatprep.subr.bf16.mxu0 0
      %1127 = vmatpush1.bf16.msra.mxu0 0
      %1128 = vmatprep.subr.bf16.mxu0 0
      %1129 = vmatpush1.bf16.msra.mxu0 0
      %1130 = vmatprep.subr.bf16.mxu0 0
      %1131 = vmatpush1.bf16.msra.mxu0 0
      %1132 = vmatprep.subr.bf16.mxu0 0
      %1133 = vmatpush1.bf16.msra.mxu0 0
      %1134 = vmatprep.subr.bf16.mxu0 0
      %1135 = vmatpush1.bf16.msra.mxu0 0
      %1136 = vmatprep.subr.bf16.mxu0 0
      %1137 = vmatpush1.bf16.msra.mxu0 0
      %1138 = vmatprep.subr.bf16.mxu0 0
      %1139 = vmatpush1.bf16.msra.mxu0 0
      %1140 = vmatprep.subr.bf16.mxu0 0
      %1141 = vmatpush1.bf16.msra.mxu0 0
      %1142 = vmatprep.subr.bf16.mxu0 0
      %1143 = vmatpush1.bf16.msra.mxu0 0
      %1144 = vmatprep.subr.bf16.mxu0 0
      %1145 = vmatpush1.bf16.msra.mxu0 0
      %1146 = vmatprep.mubr.bf16.mxu0 0
      %1147 = vmatmul.mubr.bf16.gmra.mrb[0].mxu0 %v1109
      %v1148 = vpop.f32.mrb[0].mxu0
      %v1149 = vadd.f32 0.0, %v1148
      %v1150 = vpop.f32.mrb[0].mxu0
      %v1151 = vpop.f32.mrb[0].mxu0
      %v1152 = vpop.f32.mrb[0].mxu0
      %1153 = vdwg.mxu0
      %v1155 = vsel %vm886, %v992, 0
      %v1158 = vsel %vm890, %v993, 0
      %1160 = vmatprep.subr.bf16.mxu0 0
      %1161 = vmatpush1.bf16.msra.mxu0 %v1158
      %1162 = vmatprep.subr.bf16.mxu0 0
      %1163 = vmatpush1.bf16.msra.mxu0 0
      %1164 = vmatprep.subr.bf16.mxu0 0
      %1165 = vmatpush1.bf16.msra.mxu0 0
      %1166 = vmatprep.subr.bf16.mxu0 0
      %1167 = vmatpush1.bf16.msra.mxu0 0
      %1168 = vmatprep.subr.bf16.mxu0 0
      %1169 = vmatpush1.bf16.msra.mxu0 0
      %1170 = vmatprep.subr.bf16.mxu0 0
      %1171 = vmatpush1.bf16.msra.mxu0 0
      %1172 = vmatprep.subr.bf16.mxu0 0
      %1173 = vmatpush1.bf16.msra.mxu0 0
      %1174 = vmatprep.subr.bf16.mxu0 0
      %1175 = vmatpush1.bf16.msra.mxu0 0
      %1176 = vmatprep.subr.bf16.mxu0 0
      %1177 = vmatpush1.bf16.msra.mxu0 0
      %1178 = vmatprep.subr.bf16.mxu0 0
      %1179 = vmatpush1.bf16.msra.mxu0 0
      %1180 = vmatprep.subr.bf16.mxu0 0
      %1181 = vmatpush1.bf16.msra.mxu0 0
      %1182 = vmatprep.subr.bf16.mxu0 0
      %1183 = vmatpush1.bf16.msra.mxu0 0
      %1184 = vmatprep.subr.bf16.mxu0 0
      %1185 = vmatpush1.bf16.msra.mxu0 0
      %1186 = vmatprep.subr.bf16.mxu0 0
      %1187 = vmatpush1.bf16.msra.mxu0 0
      %1188 = vmatprep.subr.bf16.mxu0 0
      %1189 = vmatpush1.bf16.msra.mxu0 0
      %1190 = vmatprep.subr.bf16.mxu0 0
      %1191 = vmatpush1.bf16.msra.mxu0 0
      %1192 = vmatprep.mubr.bf16.mxu0 0
      %1193 = vmatmul.mubr.bf16.gmra.mrb[0].mxu0 %v1155
      %v1194 = vpop.f32.mrb[0].mxu0
      %v1195 = vadd.f32 %v1149, %v1194
      %v1196 = vpop.f32.mrb[0].mxu0
      %v1197 = vpop.f32.mrb[0].mxu0
      %v1198 = vpop.f32.mrb[0].mxu0
      %1199 = vdwg.mxu0
      %v1200 = vld [vmem:[#allocation2 + $0x8] sm:$0xf]
      %1201 = vrot.lane.b32.xlu0 %v884, 112
      %v1202 = vpop.permute.xlu0 %1201
      %v1204 = vsel %vm886, %v1202, 0
      %v1207 = vsel %vm890, %v1200, 0
      %1209 = vmatprep.subr.bf16.mxu0 0
      %1210 = vmatpush1.bf16.msra.mxu0 %v1207
      %1211 = vmatprep.subr.bf16.mxu0 0
      %1212 = vmatpush1.bf16.msra.mxu0 0
      %1213 = vmatprep.subr.bf16.mxu0 0
      %1214 = vmatpush1.bf16.msra.mxu0 0
      %1215 = vmatprep.subr.bf16.mxu0 0
      %1216 = vmatpush1.bf16.msra.mxu0 0
      %1217 = vmatprep.subr.bf16.mxu0 0
      %1218 = vmatpush1.bf16.msra.mxu0 0
      %1219 = vmatprep.subr.bf16.mxu0 0
      %1220 = vmatpush1.bf16.msra.mxu0 0
      %1221 = vmatprep.subr.bf16.mxu0 0
      %1222 = vmatpush1.bf16.msra.mxu0 0
      %1223 = vmatprep.subr.bf16.mxu0 0
      %1224 = vmatpush1.bf16.msra.mxu0 0
      %1225 = vmatprep.subr.bf16.mxu0 0
      %1226 = vmatpush1.bf16.msra.mxu0 0
      %1227 = vmatprep.subr.bf16.mxu0 0
      %1228 = vmatpush1.bf16.msra.mxu0 0
      %1229 = vmatprep.subr.bf16.mxu0 0
      %1230 = vmatpush1.bf16.msra.mxu0 0
      %1231 = vmatprep.subr.bf16.mxu0 0
      %1232 = vmatpush1.bf16.msra.mxu0 0
      %1233 = vmatprep.subr.bf16.mxu0 0
      %1234 = vmatpush1.bf16.msra.mxu0 0
      %1235 = vmatprep.subr.bf16.mxu0 0
      %1236 = vmatpush1.bf16.msra.mxu0 0
      %1237 = vmatprep.subr.bf16.mxu0 0
      %1238 = vmatpush1.bf16.msra.mxu0 0
      %1239 = vmatprep.subr.bf16.mxu0 0
      %1240 = vmatpush1.bf16.msra.mxu0 0
      %1241 = vmatprep.mubr.bf16.mxu0 0
      %1242 = vmatmul.mubr.bf16.gmra.mrb[0].mxu0 %v1204
      %v1243 = vpop.f32.mrb[0].mxu0
      %v1244 = vadd.f32 0.0, %v1243
      %v1245 = vpop.f32.mrb[0].mxu0
      %v1246 = vpop.f32.mrb[0].mxu0
      %v1247 = vpop.f32.mrb[0].mxu0
      %1248 = vdwg.mxu0
      %v1249 = vmul.f32 %v1244, 0.35355338
      %v1250 = vsel %vm935, %v1249, -inf
      %1251 = vmax.xlane.f32.xlu0 %v1250
      %v1252 = vpop.xlane.xlu0 %1251
      %v1253 = vsub.f32 %v1249, %v1252
      %v1254 = vmul.f32 %v1253, 1.442695
      %v1255 = vpow.pop %v1254
      %v1256 = vsel %vm935, %v1255, 0.0
      %1257 = vadd.xlane.f32.xlu0 %v1256
      %v1258 = vpop.xlane.xlu0 %1257
      %v1259 = vrcp.pop %v1258
      %v1260 = vmul.f32 %v1255, %v1259
      %v1261 = vpack.c.bf16 %v1260, %v1260
      %1262 = vrot.lane.b32.xlu0 %v948, 112
      %v1263 = vpop.permute.xlu0 %1262
      %v1266 = vsel %vm935, %v1261, 0
      %1268 = vmatprep.subr.bf16.mxu0 0
      %1269 = vmatpush1.bf16.msra.mxu0 %v1263
      %1270 = vmatprep.subr.bf16.mxu0 0
      %1271 = vmatpush1.bf16.msra.mxu0 0
      %1272 = vmatprep.subr.bf16.mxu0 0
      %1273 = vmatpush1.bf16.msra.mxu0 0
      %1274 = vmatprep.subr.bf16.mxu0 0
      %1275 = vmatpush1.bf16.msra.mxu0 0
      %1276 = vmatprep.subr.bf16.mxu0 0
      %1277 = vmatpush1.bf16.msra.mxu0 0
      %1278 = vmatprep.subr.bf16.mxu0 0
      %1279 = vmatpush1.bf16.msra.mxu0 0
      %1280 = vmatprep.subr.bf16.mxu0 0
      %1281 = vmatpush1.bf16.msra.mxu0 0
      %1282 = vmatprep.subr.bf16.mxu0 0
      %1283 = vmatpush1.bf16.msra.mxu0 0
      %1284 = vmatprep.subr.bf16.mxu0 0
      %1285 = vmatpush1.bf16.msra.mxu0 0
      %1286 = vmatprep.subr.bf16.mxu0 0
      %1287 = vmatpush1.bf16.msra.mxu0 0
      %1288 = vmatprep.subr.bf16.mxu0 0
      %1289 = vmatpush1.bf16.msra.mxu0 0
      %1290 = vmatprep.subr.bf16.mxu0 0
      %1291 = vmatpush1.bf16.msra.mxu0 0
      %1292 = vmatprep.subr.bf16.mxu0 0
      %1293 = vmatpush1.bf16.msra.mxu0 0
      %1294 = vmatprep.subr.bf16.mxu0 0
      %1295 = vmatpush1.bf16.msra.mxu0 0
      %1296 = vmatprep.subr.bf16.mxu0 0
      %1297 = vmatpush1.bf16.msra.mxu0 0
      %1298 = vmatprep.subr.bf16.mxu0 0
      %1299 = vmatpush1.bf16.msra.mxu0 0
      %1300 = vmatprep.mubr.bf16.mxu0 0
      %1301 = vmatmul.mubr.bf16.gmra.mrb[0].mxu0 %v1266
      %v1302 = vpop.f32.mrb[0].mxu0
      %v1303 = vadd.f32 0.0, %v1302
      %v1304 = vpop.f32.mrb[0].mxu0
      %v1305 = vpop.f32.mrb[0].mxu0
      %v1306 = vpop.f32.mrb[0].mxu0
      %1307 = vdwg.mxu0
      %v1308 = vpack.c.bf16 %v1303, %v1303
      %v1309 = vld [vmem:[%s11 + $0x8] sm:$0xf]
      %v1311 = vsel %vm886, %v1308, 0
      %v1314 = vsel %vm890, %v1309, 0
      %1316 = vmatprep.subr.bf16.mxu0 0
      %1317 = vmatpush1.bf16.msra.mxu0 %v1314
      %1318 = vmatprep.subr.bf16.mxu0 0
      %1319 = vmatpush1.bf16.msra.mxu0 0
      %1320 = vmatprep.subr.bf16.mxu0 0
      %1321 = vmatpush1.bf16.msra.mxu0 0
      %1322 = vmatprep.subr.bf16.mxu0 0
      %1323 = vmatpush1.bf16.msra.mxu0 0
      %1324 = vmatprep.subr.bf16.mxu0 0
      %1325 = vmatpush1.bf16.msra.mxu0 0
      %1326 = vmatprep.subr.bf16.mxu0 0
      %1327 = vmatpush1.bf16.msra.mxu0 0
      %1328 = vmatprep.subr.bf16.mxu0 0
      %1329 = vmatpush1.bf16.msra.mxu0 0
      %1330 = vmatprep.subr.bf16.mxu0 0
      %1331 = vmatpush1.bf16.msra.mxu0 0
      %1332 = vmatprep.subr.bf16.mxu0 0
      %1333 = vmatpush1.bf16.msra.mxu0 0
      %1334 = vmatprep.subr.bf16.mxu0 0
      %1335 = vmatpush1.bf16.msra.mxu0 0
      %1336 = vmatprep.subr.bf16.mxu0 0
      %1337 = vmatpush1.bf16.msra.mxu0 0
      %1338 = vmatprep.subr.bf16.mxu0 0
      %1339 = vmatpush1.bf16.msra.mxu0 0
      %1340 = vmatprep.subr.bf16.mxu0 0
      %1341 = vmatpush1.bf16.msra.mxu0 0
      %1342 = vmatprep.subr.bf16.mxu0 0
      %1343 = vmatpush1.bf16.msra.mxu0 0
      %1344 = vmatprep.subr.bf16.mxu0 0
      %1345 = vmatpush1.bf16.msra.mxu0 0
      %1346 = vmatprep.subr.bf16.mxu0 0
      %1347 = vmatpush1.bf16.msra.mxu0 0
      %1348 = vmatprep.mubr.bf16.mxu0 0
      %1349 = vmatmul.mubr.bf16.gmra.mrb[0].mxu0 %v1311
      %v1350 = vpop.f32.mrb[0].mxu0
      %v1351 = vadd.f32 0.0, %v1350
      %v1352 = vpop.f32.mrb[0].mxu0
      %v1353 = vpop.f32.mrb[0].mxu0
      %v1354 = vpop.f32.mrb[0].mxu0
      %1355 = vdwg.mxu0
      %v1356 = vadd.f32 %v1195, %v1351
      %v1357 = vld [vmem:[#allocation2 + $0x8] sm:$0xf0]
      %1358 = vrot.lane.b32.xlu0 %v884, 104
      %v1359 = vpop.permute.xlu0 %1358
      %v1361 = vrot.slane %v1357, 4
      %v1363 = vsel %vm886, %v1359, 0
      %v1366 = vsel %vm890, %v1361, 0
      %1368 = vmatprep.subr.bf16.mxu0 0
      %1369 = vmatpush1.bf16.msra.mxu0 %v1366
      %1370 = vmatprep.subr.bf16.mxu0 0
      %1371 = vmatpush1.bf16.msra.mxu0 0
      %1372 = vmatprep.subr.bf16.mxu0 0
      %1373 = vmatpush1.bf16.msra.mxu0 0
      %1374 = vmatprep.subr.bf16.mxu0 0
      %1375 = vmatpush1.bf16.msra.mxu0 0
      %1376 = vmatprep.subr.bf16.mxu0 0
      %1377 = vmatpush1.bf16.msra.mxu0 0
      %1378 = vmatprep.subr.bf16.mxu0 0
      %1379 = vmatpush1.bf16.msra.mxu0 0
      %1380 = vmatprep.subr.bf16.mxu0 0
      %1381 = vmatpush1.bf16.msra.mxu0 0
      %1382 = vmatprep.subr.bf16.mxu0 0
      %1383 = vmatpush1.bf16.msra.mxu0 0
      %1384 = vmatprep.subr.bf16.mxu0 0
      %1385 = vmatpush1.bf16.msra.mxu0 0
      %1386 = vmatprep.subr.bf16.mxu0 0
      %1387 = vmatpush1.bf16.msra.mxu0 0
      %1388 = vmatprep.subr.bf16.mxu0 0
      %1389 = vmatpush1.bf16.msra.mxu0 0
      %1390 = vmatprep.subr.bf16.mxu0 0
      %1391 = vmatpush1.bf16.msra.mxu0 0
      %1392 = vmatprep.subr.bf16.mxu0 0
      %1393 = vmatpush1.bf16.msra.mxu0 0
      %1394 = vmatprep.subr.bf16.mxu0 0
      %1395 = vmatpush1.bf16.msra.mxu0 0
      %1396 = vmatprep.subr.bf16.mxu0 0
      %1397 = vmatpush1.bf16.msra.mxu0 0
      %1398 = vmatprep.subr.bf16.mxu0 0
      %1399 = vmatpush1.bf16.msra.mxu0 0
      %1400 = vmatprep.mubr.bf16.mxu0 0
      %1401 = vmatmul.mubr.bf16.gmra.mrb[0].mxu0 %v1363
      %v1402 = vpop.f32.mrb[0].mxu0
      %v1403 = vadd.f32 0.0, %v1402
      %v1404 = vpop.f32.mrb[0].mxu0
      %v1405 = vpop.f32.mrb[0].mxu0
      %v1406 = vpop.f32.mrb[0].mxu0
      %1407 = vdwg.mxu0
      %v1408 = vmul.f32 %v1403, 0.35355338
      %v1409 = vsel %vm935, %v1408, -inf
      %1410 = vmax.xlane.f32.xlu0 %v1409
      %v1411 = vpop.xlane.xlu0 %1410
      %v1412 = vsub.f32 %v1408, %v1411
      %v1413 = vmul.f32 %v1412, 1.442695
      %v1414 = vpow.pop %v1413
      %v1415 = vsel %vm935, %v1414, 0.0
      %1416 = vadd.xlane.f32.xlu0 %v1415
      %v1417 = vpop.xlane.xlu0 %1416
      %v1418 = vrcp.pop %v1417
      %v1419 = vmul.f32 %v1414, %v1418
      %v1420 = vpack.c.bf16 %v1419, %v1419
      %1421 = vrot.lane.b32.xlu0 %v948, 104
      %v1422 = vpop.permute.xlu0 %1421
      %v1425 = vsel %vm935, %v1420, 0
      %1427 = vmatprep.subr.bf16.mxu0 0
      %1428 = vmatpush1.bf16.msra.mxu0 %v1422
      %1429 = vmatprep.subr.bf16.mxu0 0
      %1430 = vmatpush1.bf16.msra.mxu0 0
      %1431 = vmatprep.subr.bf16.mxu0 0
      %1432 = vmatpush1.bf16.msra.mxu0 0
      %1433 = vmatprep.subr.bf16.mxu0 0
      %1434 = vmatpush1.bf16.msra.mxu0 0
      %1435 = vmatprep.subr.bf16.mxu0 0
      %1436 = vmatpush1.bf16.msra.mxu0 0
      %1437 = vmatprep.subr.bf16.mxu0 0
      %1438 = vmatpush1.bf16.msra.mxu0 0
      %1439 = vmatprep.subr.bf16.mxu0 0
      %1440 = vmatpush1.bf16.msra.mxu0 0
      %1441 = vmatprep.subr.bf16.mxu0 0
      %1442 = vmatpush1.bf16.msra.mxu0 0
      %1443 = vmatprep.subr.bf16.mxu0 0
      %1444 = vmatpush1.bf16.msra.mxu0 0
      %1445 = vmatprep.subr.bf16.mxu0 0
      %1446 = vmatpush1.bf16.msra.mxu0 0
      %1447 = vmatprep.subr.bf16.mxu0 0
      %1448 = vmatpush1.bf16.msra.mxu0 0
      %1449 = vmatprep.subr.bf16.mxu0 0
      %1450 = vmatpush1.bf16.msra.mxu0 0
      %1451 = vmatprep.subr.bf16.mxu0 0
      %1452 = vmatpush1.bf16.msra.mxu0 0
      %1453 = vmatprep.subr.bf16.mxu0 0
      %1454 = vmatpush1.bf16.msra.mxu0 0
      %1455 = vmatprep.subr.bf16.mxu0 0
      %1456 = vmatpush1.bf16.msra.mxu0 0
      %1457 = vmatprep.subr.bf16.mxu0 0
      %1458 = vmatpush1.bf16.msra.mxu0 0
      %1459 = vmatprep.mubr.bf16.mxu0 0
      %1460 = vmatmul.mubr.bf16.gmra.mrb[0].mxu0 %v1425
      %v1461 = vpop.f32.mrb[0].mxu0
      %v1462 = vadd.f32 0.0, %v1461
      %v1463 = vpop.f32.mrb[0].mxu0
      %v1464 = vpop.f32.mrb[0].mxu0
      %v1465 = vpop.f32.mrb[0].mxu0
      %1466 = vdwg.mxu0
      %v1467 = vpack.c.bf16 %v1462, %v1462
      %v1468 = vld [vmem:[%s11 + $0xc] sm:$0xf]
      %v1470 = vsel %vm886, %v1467, 0
      %v1473 = vsel %vm890, %v1468, 0
      %1475 = vmatprep.subr.bf16.mxu0 0
      %1476 = vmatpush1.bf16.msra.mxu0 %v1473
      %1477 = vmatprep.subr.bf16.mxu0 0
      %1478 = vmatpush1.bf16.msra.mxu0 0
      %1479 = vmatprep.subr.bf16.mxu0 0
      %1480 = vmatpush1.bf16.msra.mxu0 0
      %1481 = vmatprep.subr.bf16.mxu0 0
      %1482 = vmatpush1.bf16.msra.mxu0 0
      %1483 = vmatprep.subr.bf16.mxu0 0
      %1484 = vmatpush1.bf16.msra.mxu0 0
      %1485 = vmatprep.subr.bf16.mxu0 0
      %1486 = vmatpush1.bf16.msra.mxu0 0
      %1487 = vmatprep.subr.bf16.mxu0 0
      %1488 = vmatpush1.bf16.msra.mxu0 0
      %1489 = vmatprep.subr.bf16.mxu0 0
      %1490 = vmatpush1.bf16.msra.mxu0 0
      %1491 = vmatprep.subr.bf16.mxu0 0
      %1492 = vmatpush1.bf16.msra.mxu0 0
      %1493 = vmatprep.subr.bf16.mxu0 0
      %1494 = vmatpush1.bf16.msra.mxu0 0
      %1495 = vmatprep.subr.bf16.mxu0 0
      %1496 = vmatpush1.bf16.msra.mxu0 0
      %1497 = vmatprep.subr.bf16.mxu0 0
      %1498 = vmatpush1.bf16.msra.mxu0 0
      %1499 = vmatprep.subr.bf16.mxu0 0
      %1500 = vmatpush1.bf16.msra.mxu0 0
      %1501 = vmatprep.subr.bf16.mxu0 0
      %1502 = vmatpush1.bf16.msra.mxu0 0
      %1503 = vmatprep.subr.bf16.mxu0 0
      %1504 = vmatpush1.bf16.msra.mxu0 0
      %1505 = vmatprep.subr.bf16.mxu0 0
      %1506 = vmatpush1.bf16.msra.mxu0 0
      %1507 = vmatprep.mubr.bf16.mxu0 0
      %1508 = vmatmul.mubr.bf16.gmra.mrb[0].mxu0 %v1470
      %v1509 = vpop.f32.mrb[0].mxu0
      %v1510 = vadd.f32 0.0, %v1509
      %v1511 = vpop.f32.mrb[0].mxu0
      %v1512 = vpop.f32.mrb[0].mxu0
      %v1513 = vpop.f32.mrb[0].mxu0
      %1514 = vdwg.mxu0
      %v1515 = vadd.f32 %v1356, %v1510
      %v1516 = vadd.f32 %v816, %v1515
      %v1517 = vld [vmem:[%s12] sm:$0x1]
      %v1519 = vlaneseq
      %v1520 = vshrl.u32 %v1519, 7
      %v1521 = vsub.s32 0, %v1520
      %v1522 = vrot.slane %v1517, %v1521
      %v1524 = vadd.f32 %v1516, %v1522
      %v1525 = vsel %vm840, %v1524, 0.0
      %1526 = vadd.xlane.f32.xlu0 %v1525
      %v1527 = vpop.xlane.xlu0 %1526
      %v1528 = vrcp.pop 32.0
      %v1529 = vmul.f32 %v1527, %v1528
      %v1530 = vsub.f32 %v1524, %v1529
      %v1531 = vmul.f32 %v1530, %v1530
      %v1532 = vsel %vm840, %v1531, 0.0
      %1533 = vadd.xlane.f32.xlu0 %v1532
      %v1534 = vpop.xlane.xlu0 %1533
      %v1535 = vmul.f32 %v1534, %v1528
      %v1536 = vadd.f32 %v1535, 1e-05
      %v1537 = vrsqrt.pop %v1536
      %v1538 = vmul.f32 %v1530, %v1537
      %v1539 = vld [vmem:[%s13] sm:$0x1]
      %v1541 = vlaneseq
      %v1542 = vshrl.u32 %v1541, 7
      %v1543 = vsub.s32 0, %v1542
      %v1544 = vrot.slane %v1539, %v1543
      %v1546 = vmul.f32 %v1538, %v1544
      %v1547 = vld [vmem:[%s14] sm:$0x1]
      %v1549 = vlaneseq
      %v1550 = vshrl.u32 %v1549, 7
      %v1551 = vsub.s32 0, %v1550
      %v1552 = vrot.slane %v1547, %v1551
      %v1554 = vadd.f32 %v1546, %v1552
      %1555 = vst.msk [vmem:[%s616] sm:$0xff] %vm840, %v1554
      %p1556 = scmp.lt.s32.totalorder %s30, 1
      %s1557 = scalar_select %p1556, %s30, 1
      %p1558 = scmp.lt.s32.totalorder %s31, 0
      %s1559 = scalar_select %p1558, %s31, 0
      %s1560 = sadd.s32 %s1559, %s1557
      %s1561 = smul.addr %s1560, 8
      %s1562 = scalar_lea.vmem %s15, %s1561
      // Predicated region
      $region85: #{cross_attention_decoder_layer.4} parent=79 // pred_check
        %p1563 = pneg %p404
      $region86: #{cross_attention_decoder_layer.4} parent=79 // pred_check_branch
        %1565 = sbr.rel (%p1563) target = $region88
      $region87: #{cross_attention_decoder_layer.4} parent=79 // pred_region
        _
      $region88: #{cross_attention_decoder_layer.4} parent=79 // pred_fallthru
        _
    $region80: #{cross_attention_decoder_layer.4} parent=5 // pred_fallthru
      _
    %p1566 = scmp.le.s32.totalorder 2, %s21
    // Predicated region
    $region89: #{cross_attention_decoder_layer.4} parent=5 // pred_check
      %p1567 = pneg %p1566
    $region90: #{cross_attention_decoder_layer.4} parent=5 // pred_check_branch
      %1569 = sbr.rel (%p1567) target = $region92
    $region91: #{cross_attention_decoder_layer.4} parent=5 // pred_region
      %s1570 = ssub.s32 %s21, 2
      // Predicated region
      $region93: #{cross_attention_decoder_layer.4} parent=91 // pred_check
        %p1571 = pneg %p410
      $region94: #{cross_attention_decoder_layer.4} parent=91 // pred_check_branch
        %1573 = sbr.rel (%p1571) target = $region96
      $region95: #{cross_attention_decoder_layer.4} parent=91 // pred_region
        %p1574 = scmp.lt.s32.totalorder %s32, 1
        %s1575 = scalar_select %p1574, %s32, 1
        %p1576 = scmp.lt.s32.totalorder %s33, 0
        %s1577 = scalar_select %p1576, %s33, 0
        %s1578 = sadd.s32 %s1577, %s1575
        %s1579 = smul.addr %s1578, 8
        %s1580 = scalar_lea.vmem %s15, %s1579
      $region96: #{cross_attention_decoder_layer.4} parent=91 // pred_fallthru
        _
    $region92: #{cross_attention_decoder_layer.4} parent=5 // pred_fallthru
      _
  $region6: #{cross_attention_decoder_layer.4} parent=0 // loop_footer
    %s25 = sadd.s32 1, %s21
  $region7: #{cross_attention_decoder_layer.4} parent=0 // loop_footer_branch
    %20 = sbr.rel target = $region3
  $region8: #{cross_attention_decoder_layer.4} parent=0 // loop_exit
    _

// kernel: cross_attention_decoder_layer.3
$region0: #{cross_attention_decoder_layer.3}
  #allocation0 [shape = 'u32[]', space=smem, size = 0x4, offset = 0x4, fixed_abs, tag = 'smem constant byte address 0x4 - core index']
  #allocation1 [shape = 'u32[144,128]{1,0:T(1,128)}', space=vmem, size = 0x12000, scoped, tag = 'internal scratch']
  #allocation2 [shape = 'bf16[32,8]{1,0:T(16,128)(2,1)}', space=vmem, size = 0x2000, scoped, tag = 'scratch operand']
  #allocation3 [shape = 'bf16[8,32]{1,0:T(8,128)(2,1)}', space=vmem, size = 0x800, scoped, tag = 'scratch operand']
  %s0 = inlined_call_operand.vmem [shape: f32[2,8,32], index: 0, kind: input, shape index: {}]
  %s1 = inlined_call_operand.vmem [shape: f32[2,8,32], index: 1, kind: input, shape index: {}]
  %s2 = inlined_call_operand.vmem [shape: bf16[32,32], index: 2, kind: input, shape index: {}]
  %s3 = inlined_call_operand.vmem [shape: f32[1,32], index: 3, kind: input, shape index: {}]
  %s4 = inlined_call_operand.vmem [shape: bf16[32,32], index: 4, kind: input, shape index: {}]
  %s5 = inlined_call_operand.vmem [shape: f32[1,32], index: 5, kind: input, shape index: {}]
  %s6 = inlined_call_operand.vmem [shape: bf16[32,32], index: 6, kind: input, shape index: {}]
  %s7 = inlined_call_operand.vmem [shape: f32[1,32], index: 7, kind: input, shape index: {}]
  %s8 = inlined_call_operand.vmem [shape: bf16[32,32], index: 8, kind: input, shape index: {}]
  %s9 = inlined_call_operand.vmem [shape: f32[1,32], index: 9, kind: input, shape index: {}]
  %s10 = inlined_call_operand.vmem [shape: f32[1,32], index: 10, kind: input, shape index: {}]
  %s11 = inlined_call_operand.vmem [shape: f32[1,32], index: 11, kind: input, shape index: {}]
  %s12 = inlined_call_operand.vmem [shape: f32[2,8,32], index: 12, kind: output, shape index: {}]
  %s13 = sld [smem:[#allocation0]]
  $region85: #{cross_attention_decoder_layer.3} parent=0
    _
  %s15 = ssub.s32 1, %s13
  %s16 = scalar_select 0, %s15, %s13
  loop: start=0, step=1, limit=4
  $region2: #{cross_attention_decoder_layer.3} parent=0 // loop_pre_header
    _
  $region3: #{cross_attention_decoder_layer.3} parent=0 // loop_header
    %s18 = sphi 0, %s22
    %p19 = scmp.ge.s32.totalorder %s18, 4
    %s25 = sphi 0, %s37
    %s26 = sphi 0, %s33
    %s27 = sphi 0, %s25
    %s28 = sphi 0, %s26
    %s29 = sphi 0, %s27
    %s30 = sphi 0, %s28
    %s40 = sphi 0, %s42
    %s43 = sphi 0, %s40
    %s44 = sphi 0, %s43
    %s60 = sphi 0, %s44
    %s66 = sphi 0, %s68
    %s69 = sphi 0, %s66
    %s70 = sphi 0, %s69
    %s86 = sphi 0, %s70
    %s90 = sphi 0, %s90
    %s92 = sphi 0, %s90
    %s93 = sphi 0, %s92
    %s107 = sphi 0, %s93
    %s111 = sphi 0, %s111
    %s113 = sphi 0, %s111
    %s114 = sphi 0, %s113
    %s128 = sphi 0, %s114
    %s132 = sphi 0, %s132
    %s134 = sphi 0, %s132
    %s135 = sphi 0, %s134
    %s149 = sphi 0, %s135
    %s153 = sphi 0, %s153
    %s155 = sphi 0, %s153
    %s156 = sphi 0, %s155
    %s170 = sphi 0, %s156
    %s174 = sphi 0, %s174
    %s176 = sphi 0, %s174
    %s177 = sphi 0, %s176
    %s191 = sphi 0, %s177
    %s195 = sphi 0, %s195
    %s197 = sphi 0, %s195
    %s198 = sphi 0, %s197
    %s212 = sphi 0, %s198
    %s216 = sphi 0, %s216
    %s218 = sphi 0, %s216
    %s219 = sphi 0, %s218
    %s233 = sphi 0, %s219
    %s237 = sphi 0, %s237
    %s239 = sphi 0, %s237
    %s240 = sphi 0, %s239
    %s254 = sphi 0, %s240
    %s258 = sphi 0, %s258
    %s260 = sphi 0, %s258
    %s261 = sphi 0, %s260
    %s275 = sphi 0, %s261
    %s279 = sphi 0, %s279
    %s281 = sphi 0, %s279
    %s282 = sphi 0, %s281
    %s296 = sphi 0, %s282
    %s304 = sphi 0, %s306
    %s307 = sphi 0, %s304
    %s308 = sphi 0, %s307
    %s324 = sphi 0, %s308
  $region4: #{cross_attention_decoder_layer.3} parent=0 // loop_header_branch
    %21 = sbr.rel (%p19) target = $region8
  $region5: #{cross_attention_decoder_layer.3} parent=0 // loop_body
    %s23 = ssub.s32 %s18, 1
    %s24 = ssub.s32 %s18, 2
    %s31 = sadd.s32 1, %s26
    %p32 = scmp.ge.s32.totalorder %s31, 1
    %s33 = scalar_select %p32, 0, %s31
    %s34 = sadd.s32 1, %s25
    %s35 = scalar_select %p32, %s34, %s25
    %p36 = scmp.ge.s32.totalorder %s35, 2
    %s37 = scalar_select %p36, 0, %s35
    %s38 = ssub.s32 %s25, %s37
    %p39 = scmp.eq.s32.totalorder %s38, 0
    %s41 = sadd.s32 %s40, 1
    %s42 = scalar_select %p39, %s40, %s41
    %p45 = pneg %p39
    %p46 = scmp.eq.s32.totalorder %s18, 1
    %p47 = por %p45, %p46
    %p48 = scmp.ne.s32.totalorder %s40, %s43
    %p49 = scmp.eq.s32.totalorder %s18, 0
    %p50 = por %p48, %p49
    %p51 = scmp.ne.s32.totalorder %s40, %s43
    %p52 = scmp.eq.s32.totalorder %s23, 1
    %p53 = por %p51, %p52
    %p54 = scmp.ne.s32.totalorder %s43, %s44
    %p55 = scmp.eq.s32.totalorder %s23, 0
    %p56 = por %p54, %p55
    %p57 = scmp.ne.s32.totalorder %s43, %s44
    %p58 = scmp.eq.s32.totalorder %s24, 1
    %p59 = por %p57, %p58
    %p61 = scmp.ne.s32.totalorder %s44, %s60
    %p62 = scmp.eq.s32.totalorder %s24, 0
    %p63 = por %p61, %p62
    %s64 = ssub.s32 %s25, %s37
    %p65 = scmp.eq.s32.totalorder %s64, 0
    %s67 = sadd.s32 %s66, 1
    %s68 = scalar_select %p65, %s66, %s67
    %p71 = pneg %p65
    %p72 = scmp.eq.s32.totalorder %s18, 1
    %p73 = por %p71, %p72
    %p74 = scmp.ne.s32.totalorder %s66, %s69
    %p75 = scmp.eq.s32.totalorder %s18, 0
    %p76 = por %p74, %p75
    %p77 = scmp.ne.s32.totalorder %s66, %s69
    %p78 = scmp.eq.s32.totalorder %s23, 1
    %p79 = por %p77, %p78
    %p80 = scmp.ne.s32.totalorder %s69, %s70
    %p81 = scmp.eq.s32.totalorder %s23, 0
    %p82 = por %p80, %p81
    %p83 = scmp.ne.s32.totalorder %s69, %s70
    %p84 = scmp.eq.s32.totalorder %s24, 1
    %p85 = por %p83, %p84
    %p87 = scmp.ne.s32.totalorder %s70, %s86
    %p88 = scmp.eq.s32.totalorder %s24, 0
    %p89 = por %p87, %p88
    %s91 = sadd.s32 %s90, 1
    %p94 = scmp.eq.s32.totalorder %s18, 1
    %p95 = scmp.ne.s32.totalorder %s90, %s92
    %p96 = scmp.eq.s32.totalorder %s18, 0
    %p97 = por %p95, %p96
    %p98 = scmp.ne.s32.totalorder %s90, %s92
    %p99 = scmp.eq.s32.totalorder %s23, 1
    %p100 = por %p98, %p99
    %p101 = scmp.ne.s32.totalorder %s92, %s93
    %p102 = scmp.eq.s32.totalorder %s23, 0
    %p103 = por %p101, %p102
    %p104 = scmp.ne.s32.totalorder %s92, %s93
    %p105 = scmp.eq.s32.totalorder %s24, 1
    %p106 = por %p104, %p105
    %p108 = scmp.ne.s32.totalorder %s93, %s107
    %p109 = scmp.eq.s32.totalorder %s24, 0
    %p110 = por %p108, %p109
    %s112 = sadd.s32 %s111, 1
    %p115 = scmp.eq.s32.totalorder %s18, 1
    %p116 = scmp.ne.s32.totalorder %s111, %s113
    %p117 = scmp.eq.s32.totalorder %s18, 0
    %p118 = por %p116, %p117
    %p119 = scmp.ne.s32.totalorder %s111, %s113
    %p120 = scmp.eq.s32.totalorder %s23, 1
    %p121 = por %p119, %p120
    %p122 = scmp.ne.s32.totalorder %s113, %s114
    %p123 = scmp.eq.s32.totalorder %s23, 0
    %p124 = por %p122, %p123
    %p125 = scmp.ne.s32.totalorder %s113, %s114
    %p126 = scmp.eq.s32.totalorder %s24, 1
    %p127 = por %p125, %p126
    %p129 = scmp.ne.s32.totalorder %s114, %s128
    %p130 = scmp.eq.s32.totalorder %s24, 0
    %p131 = por %p129, %p130
    %s133 = sadd.s32 %s132, 1
    %p136 = scmp.eq.s32.totalorder %s18, 1
    %p137 = scmp.ne.s32.totalorder %s132, %s134
    %p138 = scmp.eq.s32.totalorder %s18, 0
    %p139 = por %p137, %p138
    %p140 = scmp.ne.s32.totalorder %s132, %s134
    %p141 = scmp.eq.s32.totalorder %s23, 1
    %p142 = por %p140, %p141
    %p143 = scmp.ne.s32.totalorder %s134, %s135
    %p144 = scmp.eq.s32.totalorder %s23, 0
    %p145 = por %p143, %p144
    %p146 = scmp.ne.s32.totalorder %s134, %s135
    %p147 = scmp.eq.s32.totalorder %s24, 1
    %p148 = por %p146, %p147
    %p150 = scmp.ne.s32.totalorder %s135, %s149
    %p151 = scmp.eq.s32.totalorder %s24, 0
    %p152 = por %p150, %p151
    %s154 = sadd.s32 %s153, 1
    %p157 = scmp.eq.s32.totalorder %s18, 1
    %p158 = scmp.ne.s32.totalorder %s153, %s155
    %p159 = scmp.eq.s32.totalorder %s18, 0
    %p160 = por %p158, %p159
    %p161 = scmp.ne.s32.totalorder %s153, %s155
    %p162 = scmp.eq.s32.totalorder %s23, 1
    %p163 = por %p161, %p162
    %p164 = scmp.ne.s32.totalorder %s155, %s156
    %p165 = scmp.eq.s32.totalorder %s23, 0
    %p166 = por %p164, %p165
    %p167 = scmp.ne.s32.totalorder %s155, %s156
    %p168 = scmp.eq.s32.totalorder %s24, 1
    %p169 = por %p167, %p168
    %p171 = scmp.ne.s32.totalorder %s156, %s170
    %p172 = scmp.eq.s32.totalorder %s24, 0
    %p173 = por %p171, %p172
    %s175 = sadd.s32 %s174, 1
    %p178 = scmp.eq.s32.totalorder %s18, 1
    %p179 = scmp.ne.s32.totalorder %s174, %s176
    %p180 = scmp.eq.s32.totalorder %s18, 0
    %p181 = por %p179, %p180
    %p182 = scmp.ne.s32.totalorder %s174, %s176
    %p183 = scmp.eq.s32.totalorder %s23, 1
    %p184 = por %p182, %p183
    %p185 = scmp.ne.s32.totalorder %s176, %s177
    %p186 = scmp.eq.s32.totalorder %s23, 0
    %p187 = por %p185, %p186
    %p188 = scmp.ne.s32.totalorder %s176, %s177
    %p189 = scmp.eq.s32.totalorder %s24, 1
    %p190 = por %p188, %p189
    %p192 = scmp.ne.s32.totalorder %s177, %s191
    %p193 = scmp.eq.s32.totalorder %s24, 0
    %p194 = por %p192, %p193
    %s196 = sadd.s32 %s195, 1
    %p199 = scmp.eq.s32.totalorder %s18, 1
    %p200 = scmp.ne.s32.totalorder %s195, %s197
    %p201 = scmp.eq.s32.totalorder %s18, 0
    %p202 = por %p200, %p201
    %p203 = scmp.ne.s32.totalorder %s195, %s197
    %p204 = scmp.eq.s32.totalorder %s23, 1
    %p205 = por %p203, %p204
    %p206 = scmp.ne.s32.totalorder %s197, %s198
    %p207 = scmp.eq.s32.totalorder %s23, 0
    %p208 = por %p206, %p207
    %p209 = scmp.ne.s32.totalorder %s197, %s198
    %p210 = scmp.eq.s32.totalorder %s24, 1
    %p211 = por %p209, %p210
    %p213 = scmp.ne.s32.totalorder %s198, %s212
    %p214 = scmp.eq.s32.totalorder %s24, 0
    %p215 = por %p213, %p214
    %s217 = sadd.s32 %s216, 1
    %p220 = scmp.eq.s32.totalorder %s18, 1
    %p221 = scmp.ne.s32.totalorder %s216, %s218
    %p222 = scmp.eq.s32.totalorder %s18, 0
    %p223 = por %p221, %p222
    %p224 = scmp.ne.s32.totalorder %s216, %s218
    %p225 = scmp.eq.s32.totalorder %s23, 1
    %p226 = por %p224, %p225
    %p227 = scmp.ne.s32.totalorder %s218, %s219
    %p228 = scmp.eq.s32.totalorder %s23, 0
    %p229 = por %p227, %p228
    %p230 = scmp.ne.s32.totalorder %s218, %s219
    %p231 = scmp.eq.s32.totalorder %s24, 1
    %p232 = por %p230, %p231
    %p234 = scmp.ne.s32.totalorder %s219, %s233
    %p235 = scmp.eq.s32.totalorder %s24, 0
    %p236 = por %p234, %p235
    %s238 = sadd.s32 %s237, 1
    %p241 = scmp.eq.s32.totalorder %s18, 1
    %p242 = scmp.ne.s32.totalorder %s237, %s239
    %p243 = scmp.eq.s32.totalorder %s18, 0
    %p244 = por %p242, %p243
    %p245 = scmp.ne.s32.totalorder %s237, %s239
    %p246 = scmp.eq.s32.totalorder %s23, 1
    %p247 = por %p245, %p246
    %p248 = scmp.ne.s32.totalorder %s239, %s240
    %p249 = scmp.eq.s32.totalorder %s23, 0
    %p250 = por %p248, %p249
    %p251 = scmp.ne.s32.totalorder %s239, %s240
    %p252 = scmp.eq.s32.totalorder %s24, 1
    %p253 = por %p251, %p252
    %p255 = scmp.ne.s32.totalorder %s240, %s254
    %p256 = scmp.eq.s32.totalorder %s24, 0
    %p257 = por %p255, %p256
    %s259 = sadd.s32 %s258, 1
    %p262 = scmp.eq.s32.totalorder %s18, 1
    %p263 = scmp.ne.s32.totalorder %s258, %s260
    %p264 = scmp.eq.s32.totalorder %s18, 0
    %p265 = por %p263, %p264
    %p266 = scmp.ne.s32.totalorder %s258, %s260
    %p267 = scmp.eq.s32.totalorder %s23, 1
    %p268 = por %p266, %p267
    %p269 = scmp.ne.s32.totalorder %s260, %s261
    %p270 = scmp.eq.s32.totalorder %s23, 0
    %p271 = por %p269, %p270
    %p272 = scmp.ne.s32.totalorder %s260, %s261
    %p273 = scmp.eq.s32.totalorder %s24, 1
    %p274 = por %p272, %p273
    %p276 = scmp.ne.s32.totalorder %s261, %s275
    %p277 = scmp.eq.s32.totalorder %s24, 0
    %p278 = por %p276, %p277
    %s280 = sadd.s32 %s279, 1
    %p283 = scmp.eq.s32.totalorder %s18, 1
    %p284 = scmp.ne.s32.totalorder %s279, %s281
    %p285 = scmp.eq.s32.totalorder %s18, 0
    %p286 = por %p284, %p285
    %p287 = scmp.ne.s32.totalorder %s279, %s281
    %p288 = scmp.eq.s32.totalorder %s23, 1
    %p289 = por %p287, %p288
    %p290 = scmp.ne.s32.totalorder %s281, %s282
    %p291 = scmp.eq.s32.totalorder %s23, 0
    %p292 = por %p290, %p291
    %p293 = scmp.ne.s32.totalorder %s281, %s282
    %p294 = scmp.eq.s32.totalorder %s24, 1
    %p295 = por %p293, %p294
    %p297 = scmp.ne.s32.totalorder %s282, %s296
    %p298 = scmp.eq.s32.totalorder %s24, 0
    %p299 = por %p297, %p298
    %s300 = ssub.s32 %s25, %s37
    %s301 = ssub.s32 %s26, %s33
    %s302 = sor.u32 %s300, %s301
    %p303 = scmp.eq.s32.totalorder %s302, 0
    %s305 = sadd.s32 %s304, 1
    %s306 = scalar_select %p303, %s304, %s305
    %p309 = pneg %p303
    %p310 = scmp.eq.s32.totalorder %s18, 1
    %p311 = por %p309, %p310
    %p312 = scmp.ne.s32.totalorder %s304, %s307
    %p313 = scmp.eq.s32.totalorder %s18, 0
    %p314 = por %p312, %p313
    %p315 = scmp.ne.s32.totalorder %s304, %s307
    %p316 = scmp.eq.s32.totalorder %s23, 1
    %p317 = por %p315, %p316
    %p318 = scmp.ne.s32.totalorder %s307, %s308
    %p319 = scmp.eq.s32.totalorder %s23, 0
    %p320 = por %p318, %p319
    %p321 = scmp.ne.s32.totalorder %s307, %s308
    %p322 = scmp.eq.s32.totalorder %s24, 1
    %p323 = por %p321, %p322
    %p325 = scmp.ne.s32.totalorder %s308, %s324
    %p326 = scmp.eq.s32.totalorder %s24, 0
    %p327 = por %p325, %p326
    %p328 = scmp.le.s32.totalorder 1, %s18
    %p329 = scmp.lt.s32.totalorder %s18, 3
    %p330 = pnand %p328, %p329
    %p331 = pneg %p330
    // Predicated region
    $region9: #{cross_attention_decoder_layer.3} parent=5 // pred_check
      _
    $region10: #{cross_attention_decoder_layer.3} parent=5 // pred_check_branch
      %333 = sbr.rel (%p330) target = $region12
    $region11: #{cross_attention_decoder_layer.3} parent=5 // pred_region
      %s334 = ssub.s32 %s18, 1
      // Predicated region
      $region13: #{cross_attention_decoder_layer.3} parent=11 // pred_check
        %p335 = pneg %p103
      $region14: #{cross_attention_decoder_layer.3} parent=11 // pred_check_branch
        %337 = sbr.rel (%p335) target = $region16
      $region15: #{cross_attention_decoder_layer.3} parent=11 // pred_region
        _
      $region16: #{cross_attention_decoder_layer.3} parent=11 // pred_fallthru
        _
      // Predicated region
      $region17: #{cross_attention_decoder_layer.3} parent=11 // pred_check
        %p338 = pneg %p124
      $region18: #{cross_attention_decoder_layer.3} parent=11 // pred_check_branch
        %340 = sbr.rel (%p338) target = $region20
      $region19: #{cross_attention_decoder_layer.3} parent=11 // pred_region
        _
      $region20: #{cross_attention_decoder_layer.3} parent=11 // pred_fallthru
        _
      // Predicated region
      $region21: #{cross_attention_decoder_layer.3} parent=11 // pred_check
        %p341 = pneg %p145
      $region22: #{cross_attention_decoder_layer.3} parent=11 // pred_check_branch
        %343 = sbr.rel (%p341) target = $region24
      $region23: #{cross_attention_decoder_layer.3} parent=11 // pred_region
        _
      $region24: #{cross_attention_decoder_layer.3} parent=11 // pred_fallthru
        _
      // Predicated region
      $region25: #{cross_attention_decoder_layer.3} parent=11 // pred_check
        %p344 = pneg %p166
      $region26: #{cross_attention_decoder_layer.3} parent=11 // pred_check_branch
        %346 = sbr.rel (%p344) target = $region28
      $region27: #{cross_attention_decoder_layer.3} parent=11 // pred_region
        _
      $region28: #{cross_attention_decoder_layer.3} parent=11 // pred_fallthru
        _
      // Predicated region
      $region29: #{cross_attention_decoder_layer.3} parent=11 // pred_check
        %p347 = pneg %p187
      $region30: #{cross_attention_decoder_layer.3} parent=11 // pred_check_branch
        %349 = sbr.rel (%p347) target = $region32
      $region31: #{cross_attention_decoder_layer.3} parent=11 // pred_region
        _
      $region32: #{cross_attention_decoder_layer.3} parent=11 // pred_fallthru
        _
      // Predicated region
      $region33: #{cross_attention_decoder_layer.3} parent=11 // pred_check
        %p350 = pneg %p208
      $region34: #{cross_attention_decoder_layer.3} parent=11 // pred_check_branch
        %352 = sbr.rel (%p350) target = $region36
      $region35: #{cross_attention_decoder_layer.3} parent=11 // pred_region
        _
      $region36: #{cross_attention_decoder_layer.3} parent=11 // pred_fallthru
        _
      // Predicated region
      $region37: #{cross_attention_decoder_layer.3} parent=11 // pred_check
        %p353 = pneg %p229
      $region38: #{cross_attention_decoder_layer.3} parent=11 // pred_check_branch
        %355 = sbr.rel (%p353) target = $region40
      $region39: #{cross_attention_decoder_layer.3} parent=11 // pred_region
        _
      $region40: #{cross_attention_decoder_layer.3} parent=11 // pred_fallthru
        _
      // Predicated region
      $region41: #{cross_attention_decoder_layer.3} parent=11 // pred_check
        %p356 = pneg %p250
      $region42: #{cross_attention_decoder_layer.3} parent=11 // pred_check_branch
        %358 = sbr.rel (%p356) target = $region44
      $region43: #{cross_attention_decoder_layer.3} parent=11 // pred_region
        _
      $region44: #{cross_attention_decoder_layer.3} parent=11 // pred_fallthru
        _
      // Predicated region
      $region45: #{cross_attention_decoder_layer.3} parent=11 // pred_check
        %p359 = pneg %p271
      $region46: #{cross_attention_decoder_layer.3} parent=11 // pred_check_branch
        %361 = sbr.rel (%p359) target = $region48
      $region47: #{cross_attention_decoder_layer.3} parent=11 // pred_region
        _
      $region48: #{cross_attention_decoder_layer.3} parent=11 // pred_fallthru
        _
      // Predicated region
      $region49: #{cross_attention_decoder_layer.3} parent=11 // pred_check
        %p362 = pneg %p292
      $region50: #{cross_attention_decoder_layer.3} parent=11 // pred_check_branch
        %364 = sbr.rel (%p362) target = $region52
      $region51: #{cross_attention_decoder_layer.3} parent=11 // pred_region
        _
      $region52: #{cross_attention_decoder_layer.3} parent=11 // pred_fallthru
        _
    $region12: #{cross_attention_decoder_layer.3} parent=5 // pred_fallthru
      _
    %p365 = scmp.lt.s32.totalorder %s18, 2
    // Predicated region
    $region53: #{cross_attention_decoder_layer.3} parent=5 // pred_check
      %p366 = pneg %p365
    $region54: #{cross_attention_decoder_layer.3} parent=5 // pred_check_branch
      %368 = sbr.rel (%p366) target = $region56
    $region55: #{cross_attention_decoder_layer.3} parent=5 // pred_region
      // Predicated region
      $region57: #{cross_attention_decoder_layer.3} parent=55 // pred_check
        %p369 = pneg %p50
      $region58: #{cross_attention_decoder_layer.3} parent=55 // pred_check_branch
        %371 = sbr.rel (%p369) target = $region60
      $region59: #{cross_attention_decoder_layer.3} parent=55 // pred_region
        %p372 = scmp.lt.s32.totalorder %s25, 1
        %s373 = scalar_select %p372, %s25, 1
        %s374 = smul.addr %s373, 8
        %s375 = scalar_lea.vmem %s0, %s374
      $region60: #{cross_attention_decoder_layer.3} parent=55 // pred_fallthru
        _
      // Predicated region
      $region61: #{cross_attention_decoder_layer.3} parent=55 // pred_check
        %p376 = pneg %p76
      $region62: #{cross_attention_decoder_layer.3} parent=55 // pred_check_branch
        %378 = sbr.rel (%p376) target = $region64
      $region63: #{cross_attention_decoder_layer.3} parent=55 // pred_region
        %p379 = scmp.lt.s32.totalorder %s25, 1
        %s380 = scalar_select %p379, %s25, 1
        %s381 = smul.addr %s380, 8
        %s382 = scalar_lea.vmem %s1, %s381
      $region64: #{cross_attention_decoder_layer.3} parent=55 // pred_fallthru
        _
    $region56: #{cross_attention_decoder_layer.3} parent=5 // pred_fallthru
      _
    %p383 = scmp.le.s32.totalorder 1, %s18
    %p384 = scmp.lt.s32.totalorder %s18, 3
    %p385 = pnand %p383, %p384
    %p386 = pneg %p385
    // Predicated region
    $region65: #{cross_attention_decoder_layer.3} parent=5 // pred_check
      _
    $region66: #{cross_attention_decoder_layer.3} parent=5 // pred_check_branch
      %388 = sbr.rel (%p385) target = $region68
    $region67: #{cross_attention_decoder_layer.3} parent=5 // pred_region
      %s389 = ssub.s32 %s18, 1
      %p390 = scmp.lt.s32.totalorder %s27, 1
      %s391 = scalar_select %p390, %s27, 1
      %s392 = smul.addr %s391, 8
      %s393 = scalar_lea.vmem %s0, %s392
      %p394 = pneg %p56
      %p395 = pneg %p53
      %p396 = scmp.lt.s32.totalorder %s27, 1
      %s397 = scalar_select %p396, %s27, 1
      %s398 = smul.addr %s397, 8
      %s399 = scalar_lea.vmem %s1, %s398
      %p400 = pneg %p82
      %p401 = pneg %p79
      %p402 = pneg %p103
      %p403 = pneg %p100
      %p404 = pneg %p124
      %p405 = pneg %p121
      %p406 = pneg %p145
      %p407 = pneg %p142
      %p408 = pneg %p166
      %p409 = pneg %p163
      %p410 = pneg %p187
      %p411 = pneg %p184
      %p412 = pneg %p208
      %p413 = pneg %p205
      %p414 = pneg %p229
      %p415 = pneg %p226
      %p416 = pneg %p250
      %p417 = pneg %p247
      %p418 = pneg %p271
      %p419 = pneg %p268
      %p420 = pneg %p292
      %p421 = pneg %p289
      %p422 = pneg %p320
      %p423 = pneg %p317
      %p424 = scmp.lt.s32.totalorder %s27, 1
      %s425 = scalar_select %p424, %s27, 1
      %p426 = scmp.lt.s32.totalorder %s28, 0
      %s427 = scalar_select %p426, %s28, 0
      %s428 = sadd.s32 %s427, %s425
      %s429 = smul.addr %s428, 8
      %s430 = scalar_lea.vmem %s12, %s429
      %p431 = scmp.lt.s32.totalorder %s27, 1
      %s432 = scalar_select %p431, %s27, 1
      %s433 = smul.addr %s432, 8
      %s434 = scalar_lea.vmem %s0, %s433
      %p435 = scmp.lt.s32.totalorder %s27, 1
      %s436 = scalar_select %p435, %s27, 1
      %s437 = smul.addr %s436, 8
      %s438 = scalar_lea.vmem %s1, %s437
      %p439 = scmp.lt.s32.totalorder %s27, 1
      %s440 = scalar_select %p439, %s27, 1
      %p441 = scmp.lt.s32.totalorder %s28, 0
      %s442 = scalar_select %p441, %s28, 0
      %s443 = sadd.s32 %s442, %s440
      %s444 = smul.addr %s443, 8
      %s445 = scalar_lea.vmem %s12, %s444
      %p447 = scmp.eq.s32.totalorder %s28, 0
      // Predicated region
      $region69: #{cross_attention_decoder_layer.3} parent=67 // pred_check
        %p448 = pneg %p447
      $region70: #{cross_attention_decoder_layer.3} parent=67 // pred_check_branch
        %450 = sbr.rel (%p448) target = $region72
      $region71: #{cross_attention_decoder_layer.3} parent=67 // pred_region
        %v451 = vld [vmem:[%s434] sm:$0xff]
        %v452 = vld [vmem:[%s438] sm:$0xff]
        %v453 = vadd.f32 %v451, %v452
        %v454 = vpack.c.bf16 %v453, %v453
        %v455 = vpack.c.bf16 %v451, %v451
        %v456 = vld [vmem:[%s4] sm:$0xf]
        %v457 = vld [vmem:[%s4 + $0x4] sm:$0xf]
        %v458 = vld [vmem:[%s4 + $0x8] sm:$0xf]
        %v459 = vld [vmem:[%s4 + $0xc] sm:$0xf]
        %v460 = vld [vmem:[%s5] sm:$0x1]
        %v462 = vlaneseq
        %v463 = vshrl.u32 %v462, 7
        %v464 = vsub.s32 0, %v463
        %v465 = vrot.slane %v460, %v464
        %v471 = vunpack.c.l.b16 %v456
        %v472 = vunpack.c.l.b16 %v457
        %v473 = vunpack.c.l.b16 %v458
        %v474 = vunpack.c.l.b16 %v459
        %v475 = vpack.c.b16 %v472, %v471
        %v476 = vpack.c.b16 %v474, %v473
        %vm479 = vcmask 261120
        %v481 = vsel %vm479, %v454, 0
        %483 = vmatprep.subr.bf16.mxu0 0
        %484 = vmatpush1.bf16.msra.mxu0 %v475
        %485 = vmatprep.subr.bf16.mxu0 0
        %486 = vmatpush1.bf16.msra.mxu0 %v476
        %487 = vmatprep.subr.bf16.mxu0 0
        %488 = vmatpush1.bf16.msra.mxu0 0
        %489 = vmatprep.subr.bf16.mxu0 0
        %490 = vmatpush1.bf16.msra.mxu0 0
        %491 = vmatprep.subr.bf16.mxu0 0
        %492 = vmatpush1.bf16.msra.mxu0 0
        %493 = vmatprep.subr.bf16.mxu0 0
        %494 = vmatpush1.bf16.msra.mxu0 0
        %495 = vmatprep.subr.bf16.mxu0 0
        %496 = vmatpush1.bf16.msra.mxu0 0
        %497 = vmatprep.subr.bf16.mxu0 0
        %498 = vmatpush1.bf16.msra.mxu0 0
        %499 = vmatprep.subr.bf16.mxu0 0
        %500 = vmatpush1.bf16.msra.mxu0 0
        %501 = vmatprep.subr.bf16.mxu0 0
        %502 = vmatpush1.bf16.msra.mxu0 0
        %503 = vmatprep.subr.bf16.mxu0 0
        %504 = vmatpush1.bf16.msra.mxu0 0
        %505 = vmatprep.subr.bf16.mxu0 0
        %506 = vmatpush1.bf16.msra.mxu0 0
        %507 = vmatprep.subr.bf16.mxu0 0
        %508 = vmatpush1.bf16.msra.mxu0 0
        %509 = vmatprep.subr.bf16.mxu0 0
        %510 = vmatpush1.bf16.msra.mxu0 0
        %511 = vmatprep.subr.bf16.mxu0 0
        %512 = vmatpush1.bf16.msra.mxu0 0
        %513 = vmatprep.subr.bf16.mxu0 0
        %514 = vmatpush1.bf16.msra.mxu0 0
        %515 = vmatprep.mubr.bf16.mxu0 0
        %516 = vmatmul.mubr.bf16.gmra.mrb[0].mxu0 %v481
        %v517 = vpop.f32.mrb[0].mxu0
        %v518 = vadd.f32 %v465, %v517
        %v519 = vpop.f32.mrb[0].mxu0
        %v520 = vpop.f32.mrb[0].mxu0
        %v521 = vpop.f32.mrb[0].mxu0
        %522 = vdwg.mxu0
        %v523 = vld [vmem:[%s6] sm:$0xf]
        %v524 = vld [vmem:[%s6 + $0x4] sm:$0xf]
        %v525 = vld [vmem:[%s6 + $0x8] sm:$0xf]
        %v526 = vld [vmem:[%s6 + $0xc] sm:$0xf]
        %v527 = vld [vmem:[%s7] sm:$0x1]
        %v529 = vlaneseq
        %v530 = vshrl.u32 %v529, 7
        %v531 = vsub.s32 0, %v530
        %v532 = vrot.slane %v527, %v531
        %v538 = vunpack.c.l.b16 %v523
        %v539 = vunpack.c.l.b16 %v524
        %v540 = vunpack.c.l.b16 %v525
        %v541 = vunpack.c.l.b16 %v526
        %v542 = vpack.c.b16 %v539, %v538
        %v543 = vpack.c.b16 %v541, %v540
        %v547 = vsel %vm479, %v455, 0
        %549 = vmatprep.subr.bf16.mxu0 0
        %550 = vmatpush1.bf16.msra.mxu0 %v542
        %551 = vmatprep.subr.bf16.mxu0 0
        %552 = vmatpush1.bf16.msra.mxu0 %v543
        %553 = vmatprep.subr.bf16.mxu0 0
        %554 = vmatpush1.bf16.msra.mxu0 0
        %555 = vmatprep.subr.bf16.mxu0 0
        %556 = vmatpush1.bf16.msra.mxu0 0
        %557 = vmatprep.subr.bf16.mxu0 0
        %558 = vmatpush1.bf16.msra.mxu0 0
        %559 = vmatprep.subr.bf16.mxu0 0
        %560 = vmatpush1.bf16.msra.mxu0 0
        %561 = vmatprep.subr.bf16.mxu0 0
        %562 = vmatpush1.bf16.msra.mxu0 0
        %563 = vmatprep.subr.bf16.mxu0 0
        %564 = vmatpush1.bf16.msra.mxu0 0
        %565 = vmatprep.subr.bf16.mxu0 0
        %566 = vmatpush1.bf16.msra.mxu0 0
        %567 = vmatprep.subr.bf16.mxu0 0
        %568 = vmatpush1.bf16.msra.mxu0 0
        %569 = vmatprep.subr.bf16.mxu0 0
        %570 = vmatpush1.bf16.msra.mxu0 0
        %571 = vmatprep.subr.bf16.mxu0 0
        %572 = vmatpush1.bf16.msra.mxu0 0
        %573 = vmatprep.subr.bf16.mxu0 0
        %574 = vmatpush1.bf16.msra.mxu0 0
        %575 = vmatprep.subr.bf16.mxu0 0
        %576 = vmatpush1.bf16.msra.mxu0 0
        %577 = vmatprep.subr.bf16.mxu0 0
        %578 = vmatpush1.bf16.msra.mxu0 0
        %579 = vmatprep.subr.bf16.mxu0 0
        %580 = vmatpush1.bf16.msra.mxu0 0
        %581 = vmatprep.mubr.bf16.mxu0 0
        %582 = vmatmul.mubr.bf16.gmra.mrb[0].mxu0 %v547
        %v583 = vpop.f32.mrb[0].mxu0
        %v584 = vadd.f32 %v532, %v583
        %v585 = vpop.f32.mrb[0].mxu0
        %v586 = vpop.f32.mrb[0].mxu0
        %v587 = vpop.f32.mrb[0].mxu0
        %588 = vdwg.mxu0
        %589 = vxpose.xlu0.b32.start [1/16] %v518, 128
        %590 = vxpose.xlu0.b32.cont [2/16] 0.0, 128
        %591 = vxpose.xlu0.b32.cont [3/16] 0.0, 128
        %592 = vxpose.xlu0.b32.cont [4/16] 0.0, 128
        %593 = vxpose.xlu0.b32.cont [5/16] 0.0, 128
        %594 = vxpose.xlu0.b32.cont [6/16] 0.0, 128
        %595 = vxpose.xlu0.b32.cont [7/16] 0.0, 128
        %596 = vxpose.xlu0.b32.cont [8/16] 0.0, 128
        %597 = vxpose.xlu0.b32.cont [9/16] 0.0, 128
        %598 = vxpose.xlu0.b32.cont [10/16] 0.0, 128
        %599 = vxpose.xlu0.b32.cont [11/16] 0.0, 128
        %600 = vxpose.xlu0.b32.cont [12/16] 0.0, 128
        %601 = vxpose.xlu0.b32.cont [13/16] 0.0, 128
        %602 = vxpose.xlu0.b32.cont [14/16] 0.0, 128
        %603 = vxpose.xlu0.b32.cont [15/16] 0.0, 128
        %604 = vxpose.xlu0.b32.end [16/16] 0.0, 128
        %v605 = vpop.trf.xlu0
        %v606 = vpop.trf.xlu0
        %v607 = vpop.trf.xlu0
        %v608 = vpop.trf.xlu0
        %v609 = vpop.trf.xlu0
        %v610 = vpop.trf.xlu0
        %v611 = vpop.trf.xlu0
        %v612 = vpop.trf.xlu0
        %v613 = vpop.trf.xlu0
        %v614 = vpop.trf.xlu0
        %v615 = vpop.trf.xlu0
        %v616 = vpop.trf.xlu0
        %v617 = vpop.trf.xlu0
        %v618 = vpop.trf.xlu0
        %v619 = vpop.trf.xlu0
        %v620 = vpop.trf.xlu0
        %v621 = vpack.c.bf16 %v606, %v605
        %v622 = vpack.c.bf16 %v608, %v607
        %vm623 = vcmask 64512
        %624 = vst.msk [vmem:[#allocation2] sm:$0xff] %vm623, %v621
        %625 = vst.msk [vmem:[#allocation2 + $0x8] sm:$0xff] %vm623, %v622
        %v626 = vpack.c.bf16 %v584, %v584
        %vm627 = vcmask 257024
        %628 = vst.msk [vmem:[#allocation3] sm:$0xf] %vm627, %v626
      $region72: #{cross_attention_decoder_layer.3} parent=67 // pred_fallthru
        _
      %s629 = smul.u32 %s28, 8
      %s630 = scalar_lea.vmem %s434, %s629
      %v631 = vld [vmem:[%s630] sm:$0xff]
      %s632 = scalar_lea.vmem %s438, %s629
      %v633 = vld [vmem:[%s632] sm:$0xff]
      %v634 = vadd.f32 %v631, %v633
      %v635 = vpack.c.bf16 %v634, %v634
      %v636 = vld [vmem:[%s2] sm:$0xf]
      %v637 = vld [vmem:[%s2 + $0x4] sm:$0xf]
      %v638 = vld [vmem:[%s2 + $0x8] sm:$0xf]
      %v639 = vld [vmem:[%s2 + $0xc] sm:$0xf]
      %v640 = vld [vmem:[%s3] sm:$0x1]
      %v642 = vlaneseq
      %v643 = vshrl.u32 %v642, 7
      %v644 = vsub.s32 0, %v643
      %v645 = vrot.slane %v640, %v644
      %v651 = vunpack.c.l.b16 %v636
      %v652 = vunpack.c.l.b16 %v637
      %v653 = vunpack.c.l.b16 %v638
      %v654 = vunpack.c.l.b16 %v639
      %v655 = vpack.c.b16 %v652, %v651
      %v656 = vpack.c.b16 %v654, %v653
      %vm659 = vcmask 261120
      %v661 = vsel %vm659, %v635, 0
      %663 = vmatprep.subr.bf16.mxu0 0
      %664 = vmatpush1.bf16.msra.mxu0 %v655
      %665 = vmatprep.subr.bf16.mxu0 0
      %666 = vmatpush1.bf16.msra.mxu0 %v656
      %667 = vmatprep.subr.bf16.mxu0 0
      %668 = vmatpush1.bf16.msra.mxu0 0
      %669 = vmatprep.subr.bf16.mxu0 0
      %670 = vmatpush1.bf16.msra.mxu0 0
      %671 = vmatprep.subr.bf16.mxu0 0
      %672 = vmatpush1.bf16.msra.mxu0 0
      %673 = vmatprep.subr.bf16.mxu0 0
      %674 = vmatpush1.bf16.msra.mxu0 0
      %675 = vmatprep.subr.bf16.mxu0 0
      %676 = vmatpush1.bf16.msra.mxu0 0
      %677 = vmatprep.subr.bf16.mxu0 0
      %678 = vmatpush1.bf16.msra.mxu0 0
      %679 = vmatprep.subr.bf16.mxu0 0
      %680 = vmatpush1.bf16.msra.mxu0 0
      %681 = vmatprep.subr.bf16.mxu0 0
      %682 = vmatpush1.bf16.msra.mxu0 0
      %683 = vmatprep.subr.bf16.mxu0 0
      %684 = vmatpush1.bf16.msra.mxu0 0
      %685 = vmatprep.subr.bf16.mxu0 0
      %686 = vmatpush1.bf16.msra.mxu0 0
      %687 = vmatprep.subr.bf16.mxu0 0
      %688 = vmatpush1.bf16.msra.mxu0 0
      %689 = vmatprep.subr.bf16.mxu0 0
      %690 = vmatpush1.bf16.msra.mxu0 0
      %691 = vmatprep.subr.bf16.mxu0 0
      %692 = vmatpush1.bf16.msra.mxu0 0
      %693 = vmatprep.subr.bf16.mxu0 0
      %694 = vmatpush1.bf16.msra.mxu0 0
      %695 = vmatprep.mubr.bf16.mxu0 0
      %696 = vmatmul.mubr.bf16.gmra.mrb[0].mxu0 %v661
      %v697 = vpop.f32.mrb[0].mxu0
      %v698 = vadd.f32 %v645, %v697
      %v699 = vpop.f32.mrb[0].mxu0
      %v700 = vpop.f32.mrb[0].mxu0
      %v701 = vpop.f32.mrb[0].mxu0
      %702 = vdwg.mxu0
      %v703 = vpack.c.bf16 %v698, %v698
      %v704 = vld [vmem:[#allocation2] sm:$0xf]
      %vm705 = vcmask 64512
      %v707 = vsel %vm705, %v703, 0
      %vm709 = vcmask 1043456
      %v711 = vsel %vm709, %v704, 0
      %713 = vmatprep.subr.bf16.mxu0 0
      %714 = vmatpush1.bf16.msra.mxu0 %v711
      %715 = vmatprep.subr.bf16.mxu0 0
      %716 = vmatpush1.bf16.msra.mxu0 0
      %717 = vmatprep.subr.bf16.mxu0 0
      %718 = vmatpush1.bf16.msra.mxu0 0
      %719 = vmatprep.subr.bf16.mxu0 0
      %720 = vmatpush1.bf16.msra.mxu0 0
      %721 = vmatprep.subr.bf16.mxu0 0
      %722 = vmatpush1.bf16.msra.mxu0 0
      %723 = vmatprep.subr.bf16.mxu0 0
      %724 = vmatpush1.bf16.msra.mxu0 0
      %725 = vmatprep.subr.bf16.mxu0 0
      %726 = vmatpush1.bf16.msra.mxu0 0
      %727 = vmatprep.subr.bf16.mxu0 0
      %728 = vmatpush1.bf16.msra.mxu0 0
      %729 = vmatprep.subr.bf16.mxu0 0
      %730 = vmatpush1.bf16.msra.mxu0 0
      %731 = vmatprep.subr.bf16.mxu0 0
      %732 = vmatpush1.bf16.msra.mxu0 0
      %733 = vmatprep.subr.bf16.mxu0 0
      %734 = vmatpush1.bf16.msra.mxu0 0
      %735 = vmatprep.subr.bf16.mxu0 0
      %736 = vmatpush1.bf16.msra.mxu0 0
      %737 = vmatprep.subr.bf16.mxu0 0
      %738 = vmatpush1.bf16.msra.mxu0 0
      %739 = vmatprep.subr.bf16.mxu0 0
      %740 = vmatpush1.bf16.msra.mxu0 0
      %741 = vmatprep.subr.bf16.mxu0 0
      %742 = vmatpush1.bf16.msra.mxu0 0
      %743 = vmatprep.subr.bf16.mxu0 0
      %744 = vmatpush1.bf16.msra.mxu0 0
      %745 = vmatprep.mubr.bf16.mxu0 0
      %746 = vmatmul.mubr.bf16.gmra.mrb[0].mxu0 %v707
      %v747 = vpop.f32.mrb[0].mxu0
      %v748 = vadd.f32 0.0, %v747
      %v749 = vpop.f32.mrb[0].mxu0
      %v750 = vpop.f32.mrb[0].mxu0
      %v751 = vpop.f32.mrb[0].mxu0
      %752 = vdwg.mxu0
      %v753 = vmul.f32 %v748, 0.35355338
      %v754 = vsel %vm705, %v753, -inf
      %755 = vmax.xlane.f32.xlu0 %v754
      %v756 = vpop.xlane.xlu0 %755
      %v757 = vsub.f32 %v753, %v756
      %v758 = vmul.f32 %v757, 1.442695
      %v759 = vpow.pop %v758
      %v760 = vsel %vm705, %v759, 0.0
      %761 = vadd.xlane.f32.xlu0 %v760
      %v762 = vpop.xlane.xlu0 %761
      %v763 = vrcp.pop %v762
      %v764 = vmul.f32 %v759, %v763
      %v765 = vpack.c.bf16 %v764, %v764
      %v766 = vld [vmem:[#allocation3] sm:$0xf]
      %v768 = vsel %vm705, %v765, 0
      %v771 = vsel %vm709, %v766, 0
      %773 = vmatprep.subr.bf16.mxu0 0
      %774 = vmatpush1.bf16.msra.mxu0 %v771
      %775 = vmatprep.subr.bf16.mxu0 0
      %776 = vmatpush1.bf16.msra.mxu0 0
      %777 = vmatprep.subr.bf16.mxu0 0
      %778 = vmatpush1.bf16.msra.mxu0 0
      %779 = vmatprep.subr.bf16.mxu0 0
      %780 = vmatpush1.bf16.msra.mxu0 0
      %781 = vmatprep.subr.bf16.mxu0 0
      %782 = vmatpush1.bf16.msra.mxu0 0
      %783 = vmatprep.subr.bf16.mxu0 0
      %784 = vmatpush1.bf16.msra.mxu0 0
      %785 = vmatprep.subr.bf16.mxu0 0
      %786 = vmatpush1.bf16.msra.mxu0 0
      %787 = vmatprep.subr.bf16.mxu0 0
      %788 = vmatpush1.bf16.msra.mxu0 0
      %789 = vmatprep.subr.bf16.mxu0 0
      %790 = vmatpush1.bf16.msra.mxu0 0
      %791 = vmatprep.subr.bf16.mxu0 0
      %792 = vmatpush1.bf16.msra.mxu0 0
      %793 = vmatprep.subr.bf16.mxu0 0
      %794 = vmatpush1.bf16.msra.mxu0 0
      %795 = vmatprep.subr.bf16.mxu0 0
      %796 = vmatpush1.bf16.msra.mxu0 0
      %797 = vmatprep.subr.bf16.mxu0 0
      %798 = vmatpush1.bf16.msra.mxu0 0
      %799 = vmatprep.subr.bf16.mxu0 0
      %800 = vmatpush1.bf16.msra.mxu0 0
      %801 = vmatprep.subr.bf16.mxu0 0
      %802 = vmatpush1.bf16.msra.mxu0 0
      %803 = vmatprep.subr.bf16.mxu0 0
      %804 = vmatpush1.bf16.msra.mxu0 0
      %805 = vmatprep.mubr.bf16.mxu0 0
      %806 = vmatmul.mubr.bf16.gmra.mrb[0].mxu0 %v768
      %v807 = vpop.f32.mrb[0].mxu0
      %v808 = vadd.f32 0.0, %v807
      %v809 = vpop.f32.mrb[0].mxu0
      %v810 = vpop.f32.mrb[0].mxu0
      %v811 = vpop.f32.mrb[0].mxu0
      %812 = vdwg.mxu0
      %v813 = vpack.c.bf16 %v808, %v808
      %v814 = vld [vmem:[%s8] sm:$0xf]
      %v815 = vld [vmem:[#allocation2] sm:$0xf0]
      %817 = vrot.lane.b32.xlu0 %v703, 120
      %v818 = vpop.permute.xlu0 %817
      %v820 = vrot.slane %v815, 4
      %v822 = vsel %vm705, %v818, 0
      %v825 = vsel %vm709, %v820, 0
      %827 = vmatprep.subr.bf16.mxu0 0
      %828 = vmatpush1.bf16.msra.mxu0 %v825
      %829 = vmatprep.subr.bf16.mxu0 0
      %830 = vmatpush1.bf16.msra.mxu0 0
      %831 = vmatprep.subr.bf16.mxu0 0
      %832 = vmatpush1.bf16.msra.mxu0 0
      %833 = vmatprep.subr.bf16.mxu0 0
      %834 = vmatpush1.bf16.msra.mxu0 0
      %835 = vmatprep.subr.bf16.mxu0 0
      %836 = vmatpush1.bf16.msra.mxu0 0
      %837 = vmatprep.subr.bf16.mxu0 0
      %838 = vmatpush1.bf16.msra.mxu0 0
      %839 = vmatprep.subr.bf16.mxu0 0
      %840 = vmatpush1.bf16.msra.mxu0 0
      %841 = vmatprep.subr.bf16.mxu0 0
      %842 = vmatpush1.bf16.msra.mxu0 0
      %843 = vmatprep.subr.bf16.mxu0 0
      %844 = vmatpush1.bf16.msra.mxu0 0
      %845 = vmatprep.subr.bf16.mxu0 0
      %846 = vmatpush1.bf16.msra.mxu0 0
      %847 = vmatprep.subr.bf16.mxu0 0
      %848 = vmatpush1.bf16.msra.mxu0 0
      %849 = vmatprep.subr.bf16.mxu0 0
      %850 = vmatpush1.bf16.msra.mxu0 0
      %851 = vmatprep.subr.bf16.mxu0 0
      %852 = vmatpush1.bf16.msra.mxu0 0
      %853 = vmatprep.subr.bf16.mxu0 0
      %854 = vmatpush1.bf16.msra.mxu0 0
      %855 = vmatprep.subr.bf16.mxu0 0
      %856 = vmatpush1.bf16.msra.mxu0 0
      %857 = vmatprep.subr.bf16.mxu0 0
      %858 = vmatpush1.bf16.msra.mxu0 0
      %859 = vmatprep.mubr.bf16.mxu0 0
      %860 = vmatmul.mubr.bf16.gmra.mrb[0].mxu0 %v822
      %v861 = vpop.f32.mrb[0].mxu0
      %v862 = vadd.f32 0.0, %v861
      %v863 = vpop.f32.mrb[0].mxu0
      %v864 = vpop.f32.mrb[0].mxu0
      %v865 = vpop.f32.mrb[0].mxu0
      %866 = vdwg.mxu0
      %v867 = vmul.f32 %v862, 0.35355338
      %v868 = vsel %vm705, %v867, -inf
      %869 = vmax.xlane.f32.xlu0 %v868
      %v870 = vpop.xlane.xlu0 %869
      %v871 = vsub.f32 %v867, %v870
      %v872 = vmul.f32 %v871, 1.442695
      %v873 = vpow.pop %v872
      %v874 = vsel %vm705, %v873, 0.0
      %875 = vadd.xlane.f32.xlu0 %v874
      %v876 = vpop.xlane.xlu0 %875
      %v877 = vrcp.pop %v876
      %v878 = vmul.f32 %v873, %v877
      %v879 = vpack.c.bf16 %v878, %v878
      %v881 = vunpack.c.l.b16 %v766
      %v882 = vpack.c.b16 %v881, %v881
      %883 = vrot.lane.b32.xlu0 %v882, 120
      %v884 = vpop.permute.xlu0 %883
      %v886 = vsel %vm705, %v879, 0
      %v889 = vsel %vm709, %v884, 0
      %891 = vmatprep.subr.bf16.mxu0 0
      %892 = vmatpush1.bf16.msra.mxu0 %v889
      %893 = vmatprep.subr.bf16.mxu0 0
      %894 = vmatpush1.bf16.msra.mxu0 0
      %895 = vmatprep.subr.bf16.mxu0 0
      %896 = vmatpush1.bf16.msra.mxu0 0
      %897 = vmatprep.subr.bf16.mxu0 0
      %898 = vmatpush1.bf16.msra.mxu0 0
      %899 = vmatprep.subr.bf16.mxu0 0
      %900 = vmatpush1.bf16.msra.mxu0 0
      %901 = vmatprep.subr.bf16.mxu0 0
      %902 = vmatpush1.bf16.msra.mxu0 0
      %903 = vmatprep.subr.bf16.mxu0 0
      %904 = vmatpush1.bf16.msra.mxu0 0
      %905 = vmatprep.subr.bf16.mxu0 0
      %906 = vmatpush1.bf16.msra.mxu0 0
      %907 = vmatprep.subr.bf16.mxu0 0
      %908 = vmatpush1.bf16.msra.mxu0 0
      %909 = vmatprep.subr.bf16.mxu0 0
      %910 = vmatpush1.bf16.msra.mxu0 0
      %911 = vmatprep.subr.bf16.mxu0 0
      %912 = vmatpush1.bf16.msra.mxu0 0
      %913 = vmatprep.subr.bf16.mxu0 0
      %914 = vmatpush1.bf16.msra.mxu0 0
      %915 = vmatprep.subr.bf16.mxu0 0
      %916 = vmatpush1.bf16.msra.mxu0 0
      %917 = vmatprep.subr.bf16.mxu0 0
      %918 = vmatpush1.bf16.msra.mxu0 0
      %919 = vmatprep.subr.bf16.mxu0 0
      %920 = vmatpush1.bf16.msra.mxu0 0
      %921 = vmatprep.subr.bf16.mxu0 0
      %922 = vmatpush1.bf16.msra.mxu0 0
      %923 = vmatprep.mubr.bf16.mxu0 0
      %924 = vmatmul.mubr.bf16.gmra.mrb[0].mxu0 %v886
      %v925 = vpop.f32.mrb[0].mxu0
      %v926 = vadd.f32 0.0, %v925
      %v927 = vpop.f32.mrb[0].mxu0
      %v928 = vpop.f32.mrb[0].mxu0
      %v929 = vpop.f32.mrb[0].mxu0
      %930 = vdwg.mxu0
      %v931 = vpack.c.bf16 %v926, %v926
      %v932 = vld [vmem:[%s8 + $0x4] sm:$0xf]
      %v934 = vsel %vm705, %v931, 0
      %v937 = vsel %vm709, %v932, 0
      %939 = vmatprep.subr.bf16.mxu0 0
      %940 = vmatpush1.bf16.msra.mxu0 %v937
      %941 = vmatprep.subr.bf16.mxu0 0
      %942 = vmatpush1.bf16.msra.mxu0 0
      %943 = vmatprep.subr.bf16.mxu0 0
      %944 = vmatpush1.bf16.msra.mxu0 0
      %945 = vmatprep.subr.bf16.mxu0 0
      %946 = vmatpush1.bf16.msra.mxu0 0
      %947 = vmatprep.subr.bf16.mxu0 0
      %948 = vmatpush1.bf16.msra.mxu0 0
      %949 = vmatprep.subr.bf16.mxu0 0
      %950 = vmatpush1.bf16.msra.mxu0 0
      %951 = vmatprep.subr.bf16.mxu0 0
      %952 = vmatpush1.bf16.msra.mxu0 0
      %953 = vmatprep.subr.bf16.mxu0 0
      %954 = vmatpush1.bf16.msra.mxu0 0
      %955 = vmatprep.subr.bf16.mxu0 0
      %956 = vmatpush1.bf16.msra.mxu0 0
      %957 = vmatprep.subr.bf16.mxu0 0
      %958 = vmatpush1.bf16.msra.mxu0 0
      %959 = vmatprep.subr.bf16.mxu0 0
      %960 = vmatpush1.bf16.msra.mxu0 0
      %961 = vmatprep.subr.bf16.mxu0 0
      %962 = vmatpush1.bf16.msra.mxu0 0
      %963 = vmatprep.subr.bf16.mxu0 0
      %964 = vmatpush1.bf16.msra.mxu0 0
      %965 = vmatprep.subr.bf16.mxu0 0
      %966 = vmatpush1.bf16.msra.mxu0 0
      %967 = vmatprep.subr.bf16.mxu0 0
      %968 = vmatpush1.bf16.msra.mxu0 0
      %969 = vmatprep.subr.bf16.mxu0 0
      %970 = vmatpush1.bf16.msra.mxu0 0
      %971 = vmatprep.mubr.bf16.mxu0 0
      %972 = vmatmul.mubr.bf16.gmra.mrb[0].mxu0 %v934
      %v973 = vpop.f32.mrb[0].mxu0
      %v974 = vadd.f32 0.0, %v973
      %v975 = vpop.f32.mrb[0].mxu0
      %v976 = vpop.f32.mrb[0].mxu0
      %v977 = vpop.f32.mrb[0].mxu0
      %978 = vdwg.mxu0
      %v980 = vsel %vm705, %v813, 0
      %v983 = vsel %vm709, %v814, 0
      %985 = vmatprep.subr.bf16.mxu0 0
      %986 = vmatpush1.bf16.msra.mxu0 %v983
      %987 = vmatprep.subr.bf16.mxu0 0
      %988 = vmatpush1.bf16.msra.mxu0 0
      %989 = vmatprep.subr.bf16.mxu0 0
      %990 = vmatpush1.bf16.msra.mxu0 0
      %991 = vmatprep.subr.bf16.mxu0 0
      %992 = vmatpush1.bf16.msra.mxu0 0
      %993 = vmatprep.subr.bf16.mxu0 0
      %994 = vmatpush1.bf16.msra.mxu0 0
      %995 = vmatprep.subr.bf16.mxu0 0
      %996 = vmatpush1.bf16.msra.mxu0 0
      %997 = vmatprep.subr.bf16.mxu0 0
      %998 = vmatpush1.bf16.msra.mxu0 0
      %999 = vmatprep.subr.bf16.mxu0 0
      %1000 = vmatpush1.bf16.msra.mxu0 0
      %1001 = vmatprep.subr.bf16.mxu0 0
      %1002 = vmatpush1.bf16.msra.mxu0 0
      %1003 = vmatprep.subr.bf16.mxu0 0
      %1004 = vmatpush1.bf16.msra.mxu0 0
      %1005 = vmatprep.subr.bf16.mxu0 0
      %1006 = vmatpush1.bf16.msra.mxu0 0
      %1007 = vmatprep.subr.bf16.mxu0 0
      %1008 = vmatpush1.bf16.msra.mxu0 0
      %1009 = vmatprep.subr.bf16.mxu0 0
      %1010 = vmatpush1.bf16.msra.mxu0 0
      %1011 = vmatprep.subr.bf16.mxu0 0
      %1012 = vmatpush1.bf16.msra.mxu0 0
      %1013 = vmatprep.subr.bf16.mxu0 0
      %1014 = vmatpush1.bf16.msra.mxu0 0
      %1015 = vmatprep.subr.bf16.mxu0 0
      %1016 = vmatpush1.bf16.msra.mxu0 0
      %1017 = vmatprep.mubr.bf16.mxu0 0
      %1018 = vmatmul.mubr.bf16.gmra.mrb[0].mxu0 %v980
      %v1019 = vpop.f32.mrb[0].mxu0
      %v1020 = vadd.f32 %v974, %v1019
      %v1021 = vpop.f32.mrb[0].mxu0
      %v1022 = vpop.f32.mrb[0].mxu0
      %v1023 = vpop.f32.mrb[0].mxu0
      %1024 = vdwg.mxu0
      %v1025 = vld [vmem:[#allocation2 + $0x8] sm:$0xf]
      %1026 = vrot.lane.b32.xlu0 %v703, 112
      %v1027 = vpop.permute.xlu0 %1026
      %v1029 = vsel %vm705, %v1027, 0
      %v1032 = vsel %vm709, %v1025, 0
      %1034 = vmatprep.subr.bf16.mxu0 0
      %1035 = vmatpush1.bf16.msra.mxu0 %v1032
      %1036 = vmatprep.subr.bf16.mxu0 0
      %1037 = vmatpush1.bf16.msra.mxu0 0
      %1038 = vmatprep.subr.bf16.mxu0 0
      %1039 = vmatpush1.bf16.msra.mxu0 0
      %1040 = vmatprep.subr.bf16.mxu0 0
      %1041 = vmatpush1.bf16.msra.mxu0 0
      %1042 = vmatprep.subr.bf16.mxu0 0
      %1043 = vmatpush1.bf16.msra.mxu0 0
      %1044 = vmatprep.subr.bf16.mxu0 0
      %1045 = vmatpush1.bf16.msra.mxu0 0
      %1046 = vmatprep.subr.bf16.mxu0 0
      %1047 = vmatpush1.bf16.msra.mxu0 0
      %1048 = vmatprep.subr.bf16.mxu0 0
      %1049 = vmatpush1.bf16.msra.mxu0 0
      %1050 = vmatprep.subr.bf16.mxu0 0
      %1051 = vmatpush1.bf16.msra.mxu0 0
      %1052 = vmatprep.subr.bf16.mxu0 0
      %1053 = vmatpush1.bf16.msra.mxu0 0
      %1054 = vmatprep.subr.bf16.mxu0 0
      %1055 = vmatpush1.bf16.msra.mxu0 0
      %1056 = vmatprep.subr.bf16.mxu0 0
      %1057 = vmatpush1.bf16.msra.mxu0 0
      %1058 = vmatprep.subr.bf16.mxu0 0
      %1059 = vmatpush1.bf16.msra.mxu0 0
      %1060 = vmatprep.subr.bf16.mxu0 0
      %1061 = vmatpush1.bf16.msra.mxu0 0
      %1062 = vmatprep.subr.bf16.mxu0 0
      %1063 = vmatpush1.bf16.msra.mxu0 0
      %1064 = vmatprep.subr.bf16.mxu0 0
      %1065 = vmatpush1.bf16.msra.mxu0 0
      %1066 = vmatprep.mubr.bf16.mxu0 0
      %1067 = vmatmul.mubr.bf16.gmra.mrb[0].mxu0 %v1029
      %v1068 = vpop.f32.mrb[0].mxu0
      %v1069 = vadd.f32 0.0, %v1068
      %v1070 = vpop.f32.mrb[0].mxu0
      %v1071 = vpop.f32.mrb[0].mxu0
      %v1072 = vpop.f32.mrb[0].mxu0
      %1073 = vdwg.mxu0
      %v1074 = vmul.f32 %v1069, 0.35355338
      %v1075 = vsel %vm705, %v1074, -inf
      %1076 = vmax.xlane.f32.xlu0 %v1075
      %v1077 = vpop.xlane.xlu0 %1076
      %v1078 = vsub.f32 %v1074, %v1077
      %v1079 = vmul.f32 %v1078, 1.442695
      %v1080 = vpow.pop %v1079
      %v1081 = vsel %vm705, %v1080, 0.0
      %1082 = vadd.xlane.f32.xlu0 %v1081
      %v1083 = vpop.xlane.xlu0 %1082
      %v1084 = vrcp.pop %v1083
      %v1085 = vmul.f32 %v1080, %v1084
      %v1086 = vpack.c.bf16 %v1085, %v1085
      %1087 = vrot.lane.b32.xlu0 %v882, 112
      %v1088 = vpop.permute.xlu0 %1087
      %v1090 = vsel %vm705, %v1086, 0
      %v1093 = vsel %vm709, %v1088, 0
      %1095 = vmatprep.subr.bf16.mxu0 0
      %1096 = vmatpush1.bf16.msra.mxu0 %v1093
      %1097 = vmatprep.subr.bf16.mxu0 0
      %1098 = vmatpush1.bf16.msra.mxu0 0
      %1099 = vmatprep.subr.bf16.mxu0 0
      %1100 = vmatpush1.bf16.msra.mxu0 0
      %1101 = vmatprep.subr.bf16.mxu0 0
      %1102 = vmatpush1.bf16.msra.mxu0 0
      %1103 = vmatprep.subr.bf16.mxu0 0
      %1104 = vmatpush1.bf16.msra.mxu0 0
      %1105 = vmatprep.subr.bf16.mxu0 0
      %1106 = vmatpush1.bf16.msra.mxu0 0
      %1107 = vmatprep.subr.bf16.mxu0 0
      %1108 = vmatpush1.bf16.msra.mxu0 0
      %1109 = vmatprep.subr.bf16.mxu0 0
      %1110 = vmatpush1.bf16.msra.mxu0 0
      %1111 = vmatprep.subr.bf16.mxu0 0
      %1112 = vmatpush1.bf16.msra.mxu0 0
      %1113 = vmatprep.subr.bf16.mxu0 0
      %1114 = vmatpush1.bf16.msra.mxu0 0
      %1115 = vmatprep.subr.bf16.mxu0 0
      %1116 = vmatpush1.bf16.msra.mxu0 0
      %1117 = vmatprep.subr.bf16.mxu0 0
      %1118 = vmatpush1.bf16.msra.mxu0 0
      %1119 = vmatprep.subr.bf16.mxu0 0
      %1120 = vmatpush1.bf16.msra.mxu0 0
      %1121 = vmatprep.subr.bf16.mxu0 0
      %1122 = vmatpush1.bf16.msra.mxu0 0
      %1123 = vmatprep.subr.bf16.mxu0 0
      %1124 = vmatpush1.bf16.msra.mxu0 0
      %1125 = vmatprep.subr.bf16.mxu0 0
      %1126 = vmatpush1.bf16.msra.mxu0 0
      %1127 = vmatprep.mubr.bf16.mxu0 0
      %1128 = vmatmul.mubr.bf16.gmra.mrb[0].mxu0 %v1090
      %v1129 = vpop.f32.mrb[0].mxu0
      %v1130 = vadd.f32 0.0, %v1129
      %v1131 = vpop.f32.mrb[0].mxu0
      %v1132 = vpop.f32.mrb[0].mxu0
      %v1133 = vpop.f32.mrb[0].mxu0
      %1134 = vdwg.mxu0
      %v1135 = vpack.c.bf16 %v1130, %v1130
      %v1136 = vld [vmem:[%s8 + $0x8] sm:$0xf]
      %v1138 = vsel %vm705, %v1135, 0
      %v1141 = vsel %vm709, %v1136, 0
      %1143 = vmatprep.subr.bf16.mxu0 0
      %1144 = vmatpush1.bf16.msra.mxu0 %v1141
      %1145 = vmatprep.subr.bf16.mxu0 0
      %1146 = vmatpush1.bf16.msra.mxu0 0
      %1147 = vmatprep.subr.bf16.mxu0 0
      %1148 = vmatpush1.bf16.msra.mxu0 0
      %1149 = vmatprep.subr.bf16.mxu0 0
      %1150 = vmatpush1.bf16.msra.mxu0 0
      %1151 = vmatprep.subr.bf16.mxu0 0
      %1152 = vmatpush1.bf16.msra.mxu0 0
      %1153 = vmatprep.subr.bf16.mxu0 0
      %1154 = vmatpush1.bf16.msra.mxu0 0
      %1155 = vmatprep.subr.bf16.mxu0 0
      %1156 = vmatpush1.bf16.msra.mxu0 0
      %1157 = vmatprep.subr.bf16.mxu0 0
      %1158 = vmatpush1.bf16.msra.mxu0 0
      %1159 = vmatprep.subr.bf16.mxu0 0
      %1160 = vmatpush1.bf16.msra.mxu0 0
      %1161 = vmatprep.subr.bf16.mxu0 0
      %1162 = vmatpush1.bf16.msra.mxu0 0
      %1163 = vmatprep.subr.bf16.mxu0 0
      %1164 = vmatpush1.bf16.msra.mxu0 0
      %1165 = vmatprep.subr.bf16.mxu0 0
      %1166 = vmatpush1.bf16.msra.mxu0 0
      %1167 = vmatprep.subr.bf16.mxu0 0
      %1168 = vmatpush1.bf16.msra.mxu0 0
      %1169 = vmatprep.subr.bf16.mxu0 0
      %1170 = vmatpush1.bf16.msra.mxu0 0
      %1171 = vmatprep.subr.bf16.mxu0 0
      %1172 = vmatpush1.bf16.msra.mxu0 0
      %1173 = vmatprep.subr.bf16.mxu0 0
      %1174 = vmatpush1.bf16.msra.mxu0 0
      %1175 = vmatprep.mubr.bf16.mxu0 0
      %1176 = vmatmul.mubr.bf16.gmra.mrb[0].mxu0 %v1138
      %v1177 = vpop.f32.mrb[0].mxu0
      %v1178 = vadd.f32 0.0, %v1177
      %v1179 = vpop.f32.mrb[0].mxu0
      %v1180 = vpop.f32.mrb[0].mxu0
      %v1181 = vpop.f32.mrb[0].mxu0
      %1182 = vdwg.mxu0
      %v1183 = vadd.f32 %v1020, %v1178
      %v1184 = vld [vmem:[#allocation2 + $0x8] sm:$0xf0]
      %1185 = vrot.lane.b32.xlu0 %v703, 104
      %v1186 = vpop.permute.xlu0 %1185
      %v1188 = vrot.slane %v1184, 4
      %v1190 = vsel %vm705, %v1186, 0
      %v1193 = vsel %vm709, %v1188, 0
      %1195 = vmatprep.subr.bf16.mxu0 0
      %1196 = vmatpush1.bf16.msra.mxu0 %v1193
      %1197 = vmatprep.subr.bf16.mxu0 0
      %1198 = vmatpush1.bf16.msra.mxu0 0
      %1199 = vmatprep.subr.bf16.mxu0 0
      %1200 = vmatpush1.bf16.msra.mxu0 0
      %1201 = vmatprep.subr.bf16.mxu0 0
      %1202 = vmatpush1.bf16.msra.mxu0 0
      %1203 = vmatprep.subr.bf16.mxu0 0
      %1204 = vmatpush1.bf16.msra.mxu0 0
      %1205 = vmatprep.subr.bf16.mxu0 0
      %1206 = vmatpush1.bf16.msra.mxu0 0
      %1207 = vmatprep.subr.bf16.mxu0 0
      %1208 = vmatpush1.bf16.msra.mxu0 0
      %1209 = vmatprep.subr.bf16.mxu0 0
      %1210 = vmatpush1.bf16.msra.mxu0 0
      %1211 = vmatprep.subr.bf16.mxu0 0
      %1212 = vmatpush1.bf16.msra.mxu0 0
      %1213 = vmatprep.subr.bf16.mxu0 0
      %1214 = vmatpush1.bf16.msra.mxu0 0
      %1215 = vmatprep.subr.bf16.mxu0 0
      %1216 = vmatpush1.bf16.msra.mxu0 0
      %1217 = vmatprep.subr.bf16.mxu0 0
      %1218 = vmatpush1.bf16.msra.mxu0 0
      %1219 = vmatprep.subr.bf16.mxu0 0
      %1220 = vmatpush1.bf16.msra.mxu0 0
      %1221 = vmatprep.subr.bf16.mxu0 0
      %1222 = vmatpush1.bf16.msra.mxu0 0
      %1223 = vmatprep.subr.bf16.mxu0 0
      %1224 = vmatpush1.bf16.msra.mxu0 0
      %1225 = vmatprep.subr.bf16.mxu0 0
      %1226 = vmatpush1.bf16.msra.mxu0 0
      %1227 = vmatprep.mubr.bf16.mxu0 0
      %1228 = vmatmul.mubr.bf16.gmra.mrb[0].mxu0 %v1190
      %v1229 = vpop.f32.mrb[0].mxu0
      %v1230 = vadd.f32 0.0, %v1229
      %v1231 = vpop.f32.mrb[0].mxu0
      %v1232 = vpop.f32.mrb[0].mxu0
      %v1233 = vpop.f32.mrb[0].mxu0
      %1234 = vdwg.mxu0
      %v1235 = vmul.f32 %v1230, 0.35355338
      %v1236 = vsel %vm705, %v1235, -inf
      %1237 = vmax.xlane.f32.xlu0 %v1236
      %v1238 = vpop.xlane.xlu0 %1237
      %v1239 = vsub.f32 %v1235, %v1238
      %v1240 = vmul.f32 %v1239, 1.442695
      %v1241 = vpow.pop %v1240
      %v1242 = vsel %vm705, %v1241, 0.0
      %1243 = vadd.xlane.f32.xlu0 %v1242
      %v1244 = vpop.xlane.xlu0 %1243
      %v1245 = vrcp.pop %v1244
      %v1246 = vmul.f32 %v1241, %v1245
      %v1247 = vpack.c.bf16 %v1246, %v1246
      %1248 = vrot.lane.b32.xlu0 %v882, 104
      %v1249 = vpop.permute.xlu0 %1248
      %v1251 = vsel %vm705, %v1247, 0
      %v1254 = vsel %vm709, %v1249, 0
      %1256 = vmatprep.subr.bf16.mxu0 0
      %1257 = vmatpush1.bf16.msra.mxu0 %v1254
      %1258 = vmatprep.subr.bf16.mxu0 0
      %1259 = vmatpush1.bf16.msra.mxu0 0
      %1260 = vmatprep.subr.bf16.mxu0 0
      %1261 = vmatpush1.bf16.msra.mxu0 0
      %1262 = vmatprep.subr.bf16.mxu0 0
      %1263 = vmatpush1.bf16.msra.mxu0 0
      %1264 = vmatprep.subr.bf16.mxu0 0
      %1265 = vmatpush1.bf16.msra.mxu0 0
      %1266 = vmatprep.subr.bf16.mxu0 0
      %1267 = vmatpush1.bf16.msra.mxu0 0
      %1268 = vmatprep.subr.bf16.mxu0 0
      %1269 = vmatpush1.bf16.msra.mxu0 0
      %1270 = vmatprep.subr.bf16.mxu0 0
      %1271 = vmatpush1.bf16.msra.mxu0 0
      %1272 = vmatprep.subr.bf16.mxu0 0
      %1273 = vmatpush1.bf16.msra.mxu0 0
      %1274 = vmatprep.subr.bf16.mxu0 0
      %1275 = vmatpush1.bf16.msra.mxu0 0
      %1276 = vmatprep.subr.bf16.mxu0 0
      %1277 = vmatpush1.bf16.msra.mxu0 0
      %1278 = vmatprep.subr.bf16.mxu0 0
      %1279 = vmatpush1.bf16.msra.mxu0 0
      %1280 = vmatprep.subr.bf16.mxu0 0
      %1281 = vmatpush1.bf16.msra.mxu0 0
      %1282 = vmatprep.subr.bf16.mxu0 0
      %1283 = vmatpush1.bf16.msra.mxu0 0
      %1284 = vmatprep.subr.bf16.mxu0 0
      %1285 = vmatpush1.bf16.msra.mxu0 0
      %1286 = vmatprep.subr.bf16.mxu0 0
      %1287 = vmatpush1.bf16.msra.mxu0 0
      %1288 = vmatprep.mubr.bf16.mxu0 0
      %1289 = vmatmul.mubr.bf16.gmra.mrb[0].mxu0 %v1251
      %v1290 = vpop.f32.mrb[0].mxu0
      %v1291 = vadd.f32 0.0, %v1290
      %v1292 = vpop.f32.mrb[0].mxu0
      %v1293 = vpop.f32.mrb[0].mxu0
      %v1294 = vpop.f32.mrb[0].mxu0
      %1295 = vdwg.mxu0
      %v1296 = vpack.c.bf16 %v1291, %v1291
      %v1297 = vld [vmem:[%s8 + $0xc] sm:$0xf]
      %v1299 = vsel %vm705, %v1296, 0
      %v1302 = vsel %vm709, %v1297, 0
      %1304 = vmatprep.subr.bf16.mxu0 0
      %1305 = vmatpush1.bf16.msra.mxu0 %v1302
      %1306 = vmatprep.subr.bf16.mxu0 0
      %1307 = vmatpush1.bf16.msra.mxu0 0
      %1308 = vmatprep.subr.bf16.mxu0 0
      %1309 = vmatpush1.bf16.msra.mxu0 0
      %1310 = vmatprep.subr.bf16.mxu0 0
      %1311 = vmatpush1.bf16.msra.mxu0 0
      %1312 = vmatprep.subr.bf16.mxu0 0
      %1313 = vmatpush1.bf16.msra.mxu0 0
      %1314 = vmatprep.subr.bf16.mxu0 0
      %1315 = vmatpush1.bf16.msra.mxu0 0
      %1316 = vmatprep.subr.bf16.mxu0 0
      %1317 = vmatpush1.bf16.msra.mxu0 0
      %1318 = vmatprep.subr.bf16.mxu0 0
      %1319 = vmatpush1.bf16.msra.mxu0 0
      %1320 = vmatprep.subr.bf16.mxu0 0
      %1321 = vmatpush1.bf16.msra.mxu0 0
      %1322 = vmatprep.subr.bf16.mxu0 0
      %1323 = vmatpush1.bf16.msra.mxu0 0
      %1324 = vmatprep.subr.bf16.mxu0 0
      %1325 = vmatpush1.bf16.msra.mxu0 0
      %1326 = vmatprep.subr.bf16.mxu0 0
      %1327 = vmatpush1.bf16.msra.mxu0 0
      %1328 = vmatprep.subr.bf16.mxu0 0
      %1329 = vmatpush1.bf16.msra.mxu0 0
      %1330 = vmatprep.subr.bf16.mxu0 0
      %1331 = vmatpush1.bf16.msra.mxu0 0
      %1332 = vmatprep.subr.bf16.mxu0 0
      %1333 = vmatpush1.bf16.msra.mxu0 0
      %1334 = vmatprep.subr.bf16.mxu0 0
      %1335 = vmatpush1.bf16.msra.mxu0 0
      %1336 = vmatprep.mubr.bf16.mxu0 0
      %1337 = vmatmul.mubr.bf16.gmra.mrb[0].mxu0 %v1299
      %v1338 = vpop.f32.mrb[0].mxu0
      %v1339 = vadd.f32 0.0, %v1338
      %v1340 = vpop.f32.mrb[0].mxu0
      %v1341 = vpop.f32.mrb[0].mxu0
      %v1342 = vpop.f32.mrb[0].mxu0
      %1343 = vdwg.mxu0
      %v1344 = vadd.f32 %v1183, %v1339
      %v1345 = vadd.f32 %v631, %v1344
      %v1346 = vld [vmem:[%s9] sm:$0x1]
      %v1348 = vlaneseq
      %v1349 = vshrl.u32 %v1348, 7
      %v1350 = vsub.s32 0, %v1349
      %v1351 = vrot.slane %v1346, %v1350
      %v1353 = vadd.f32 %v1345, %v1351
      %v1354 = vsel %vm659, %v1353, 0.0
      %1355 = vadd.xlane.f32.xlu0 %v1354
      %v1356 = vpop.xlane.xlu0 %1355
      %v1357 = vrcp.pop 32.0
      %v1358 = vmul.f32 %v1356, %v1357
      %v1359 = vsub.f32 %v1353, %v1358
      %v1360 = vmul.f32 %v1359, %v1359
      %v1361 = vsel %vm659, %v1360, 0.0
      %1362 = vadd.xlane.f32.xlu0 %v1361
      %v1363 = vpop.xlane.xlu0 %1362
      %v1364 = vmul.f32 %v1363, %v1357
      %v1365 = vadd.f32 %v1364, 1e-05
      %v1366 = vrsqrt.pop %v1365
      %v1367 = vmul.f32 %v1359, %v1366
      %v1368 = vld [vmem:[%s10] sm:$0x1]
      %v1370 = vlaneseq
      %v1371 = vshrl.u32 %v1370, 7
      %v1372 = vsub.s32 0, %v1371
      %v1373 = vrot.slane %v1368, %v1372
      %v1375 = vmul.f32 %v1367, %v1373
      %v1376 = vld [vmem:[%s11] sm:$0x1]
      %v1378 = vlaneseq
      %v1379 = vshrl.u32 %v1378, 7
      %v1380 = vsub.s32 0, %v1379
      %v1381 = vrot.slane %v1376, %v1380
      %v1383 = vadd.f32 %v1375, %v1381
      %1384 = vst.msk [vmem:[%s445] sm:$0xff] %vm659, %v1383
      %p1385 = scmp.lt.s32.totalorder %s27, 1
      %s1386 = scalar_select %p1385, %s27, 1
      %p1387 = scmp.lt.s32.totalorder %s28, 0
      %s1388 = scalar_select %p1387, %s28, 0
      %s1389 = sadd.s32 %s1388, %s1386
      %s1390 = smul.addr %s1389, 8
      %s1391 = scalar_lea.vmem %s12, %s1390
      // Predicated region
      $region73: #{cross_attention_decoder_layer.3} parent=67 // pred_check
        %p1392 = pneg %p317
      $region74: #{cross_attention_decoder_layer.3} parent=67 // pred_check_branch
        %1394 = sbr.rel (%p1392) target = $region76
      $region75: #{cross_attention_decoder_layer.3} parent=67 // pred_region
        _
      $region76: #{cross_attention_decoder_layer.3} parent=67 // pred_fallthru
        _
    $region68: #{cross_attention_decoder_layer.3} parent=5 // pred_fallthru
      _
    %p1395 = scmp.le.s32.totalorder 2, %s18
    // Predicated region
    $region77: #{cross_attention_decoder_layer.3} parent=5 // pred_check
      %p1396 = pneg %p1395
    $region78: #{cross_attention_decoder_layer.3} parent=5 // pred_check_branch
      %1398 = sbr.rel (%p1396) target = $region80
    $region79: #{cross_attention_decoder_layer.3} parent=5 // pred_region
      %s1399 = ssub.s32 %s18, 2
      // Predicated region
      $region81: #{cross_attention_decoder_layer.3} parent=79 // pred_check
        %p1400 = pneg %p323
      $region82: #{cross_attention_decoder_layer.3} parent=79 // pred_check_branch
        %1402 = sbr.rel (%p1400) target = $region84
      $region83: #{cross_attention_decoder_layer.3} parent=79 // pred_region
        %p1403 = scmp.lt.s32.totalorder %s29, 1
        %s1404 = scalar_select %p1403, %s29, 1
        %p1405 = scmp.lt.s32.totalorder %s30, 0
        %s1406 = scalar_select %p1405, %s30, 0
        %s1407 = sadd.s32 %s1406, %s1404
        %s1408 = smul.addr %s1407, 8
        %s1409 = scalar_lea.vmem %s12, %s1408
      $region84: #{cross_attention_decoder_layer.3} parent=79 // pred_fallthru
        _
    $region80: #{cross_attention_decoder_layer.3} parent=5 // pred_fallthru
      _
  $region6: #{cross_attention_decoder_layer.3} parent=0 // loop_footer
    %s22 = sadd.s32 1, %s18
  $region7: #{cross_attention_decoder_layer.3} parent=0 // loop_footer_branch
    %17 = sbr.rel target = $region3
  $region8: #{cross_attention_decoder_layer.3} parent=0 // loop_exit
    _

</llo_original>
